<compile_context>
chip_gen: v7x
topology: tpu7x:2x2x1
jax: 0.10.0
libtpu: 0.0.40
codegen_flags: <defaults>
</compile_context>

<pallas_src>
import numpy as np
import jax
import jax.numpy as jnp
from jax.experimental import pallas as pl
from jax.experimental.pallas import tpu as pltpu


# ----------------------------- Pallas kernel -------------------------------
def _shared_mlp_maxpool_kernel(x_ref, w1_ref, b1_ref, w2_ref, b2_ref,
                               w3_ref, b3_ref, out_ref):
    """x_ref: (nsample, TG, Cin_pad) sample-major rows; out_ref: (TG, 256)."""
    ns, tg, cin = x_ref.shape

    # All points of this tile as one row-major matrix -> three MXU matmuls.
    x = x_ref[...].reshape(ns * tg, cin)                              # (ns*TG, 8)

    h = jnp.dot(x, w1_ref[...], preferred_element_type=jnp.float32) + b1_ref[...]
    h = jnp.maximum(h, 0.0)                                           # (ns*TG, 64)
    h = jnp.dot(h, w2_ref[...], preferred_element_type=jnp.float32) + b2_ref[...]
    h = jnp.maximum(h, 0.0)                                           # (ns*TG, 128)
    h = jnp.dot(h, w3_ref[...], preferred_element_type=jnp.float32) + b3_ref[...]
    h = jnp.maximum(h, 0.0)                                           # (ns*TG, 256)

    # max-pool over nsample: rows are sample-major, so sample i of every group
    # is the contiguous, sublane-aligned row block [i*TG, (i+1)*TG).
    m = h[0:tg, :]
    for i in range(1, ns):                  # ns is small & static -> unrolled
        m = jnp.maximum(m, h[i * tg:(i + 1) * tg, :])
    out_ref[...] = m                                                  # (TG, 256)


def _pick_group_tile(G, cap=256):
    """Largest group-row tile (multiple of 8, dividing G) with modest VMEM use."""
    if G <= cap:
        return G
    for t in range(cap, 7, -8):
        if G % t == 0:
            return t
    return G


def shared_mlp_maxpool_pallas(grouped, params):
    """grouped: (B, S, D, nsample, 3) rotated relative coords -> (B, 256, S, D)."""
    w1, b1, w2, b2, w3, b3 = params
    B, S, D, ns, cin = grouped.shape
    G = B * S * D
    cout = w3.shape[1]

    # sample-major row layout (nsample, G, Cin); pad Cin 3 -> 8 sublanes.
    cin_pad = 8
    x = grouped.reshape(G, ns, cin).transpose(1, 0, 2)                # (ns, G, 3)
    x = jnp.pad(x, ((0, 0), (0, 0), (0, cin_pad - cin)))              # (ns, G, 8)
    w1p = jnp.pad(w1, ((0, cin_pad - cin), (0, 0)))                   # (8, 64)

    tg = _pick_group_tile(G)
    grid = (G // tg,)

    out = pl.pallas_call(
        _shared_mlp_maxpool_kernel,
        out_shape=jax.ShapeDtypeStruct((G, cout), jnp.float32),
        grid_spec=pltpu.PrefetchScalarGridSpec(
            num_scalar_prefetch=0,
            grid=grid,
            in_specs=[
                pl.BlockSpec((ns, tg, cin_pad), lambda g: (0, g, 0)),
                pl.BlockSpec(w1p.shape, lambda g: (0, 0)),
                pl.BlockSpec(b1.shape, lambda g: (0, 0)),
                pl.BlockSpec(w2.shape, lambda g: (0, 0)),
                pl.BlockSpec(b2.shape, lambda g: (0, 0)),
                pl.BlockSpec(w3.shape, lambda g: (0, 0)),
                pl.BlockSpec(b3.shape, lambda g: (0, 0)),
            ],
            out_specs=pl.BlockSpec((tg, cout), lambda g: (g, 0)),
        ),
        compiler_params=pltpu.CompilerParams(
            dimension_semantics=("parallel",)),
    )(x, w1p, b1, w2, b2, w3, b3)                                     # (G, 256)

    return out.reshape(B, S, D, cout).transpose(0, 3, 1, 2)           # (B,256,S,D)


# ------------------------------ glue (JAX) ---------------------------------
def cylinder_query_and_group(seed_xyz, pointcloud, vp_rot, *, nsample,
                             cylinder_radius, hmin, hmax_list):
    """JAX equivalent of CylinderQueryAndGroup (use_xyz=True, rotate_xyz=True).
    Returns rotated seed-relative coordinates, shape (B, S, D, nsample, 3)."""
    B, S, _ = seed_xyz.shape
    N = pointcloud.shape[1]
    pH = jax.lax.Precision.HIGHEST

    # seed-relative coordinates rotated into the approach frame: rel @ R
    rel = pointcloud[:, None, :, :] - seed_xyz[:, :, None, :]         # (B,S,N,3)
    rel_rot = jnp.einsum('bsnc,bscd->bsnd', rel, vp_rot, precision=pH)
    x_r = rel_rot[..., 0]
    d2 = rel_rot[..., 1] ** 2 + rel_rot[..., 2] ** 2
    hmax = jnp.asarray(hmax_list, jnp.float32)

    in_cyl = ((d2[:, :, None, :] < cylinder_radius ** 2)
              & (x_r[:, :, None, :] > hmin)
              & (x_r[:, :, None, :] < hmax[None, None, :, None]))     # (B,S,D,N)

    # TODO(synk): the CUDA cylinder_query is a sequential "take the first
    # nsample hits" scan; reproduced here in plain JAX (stable sort by hit
    # index), not inside the Pallas kernel.
    point_ids = jnp.arange(N, dtype=jnp.int32)
    keys = jnp.where(in_cyl, point_ids[None, None, None, :], jnp.int32(N))
    order = jnp.argsort(keys, axis=-1).astype(jnp.int32)              # hits first
    cand = order[..., :nsample]                                       # (B,S,D,ns)
    cnt = jnp.sum(in_cyl, axis=-1, dtype=jnp.int32)                   # (B,S,D)
    first = jnp.where(cnt > 0, cand[..., 0], 0)                       # pad index
    slot = jnp.arange(nsample, dtype=jnp.int32)
    idx = jnp.where(slot[None, None, None, :] < cnt[..., None], cand,
                    first[..., None])                                 # (B,S,D,ns)

    b_ix = jnp.arange(B)[:, None, None, None]
    s_ix = jnp.arange(S)[None, :, None, None]
    grouped = rel_rot[b_ix, s_ix, idx]                                # (B,S,D,ns,3)
    return grouped


def fuse_conv_bn(w, gamma, beta, mean, var, eps=1e-5):
    """Fold inference-mode BatchNorm into a bias-free 1x1 conv; w is (Cin, Cout)."""
    s = gamma / jnp.sqrt(var + eps)
    return w * s[None, :], (beta - mean * s)[None, :]


def init_params(key, in_dim=3, mlp_dims=(64, 128, 256)):
    """Deterministic synthetic SharedMLP([in_dim,64,128,256], bn=True) params,
    already BN-fused.  Weights stored transposed (Cin, Cout), biases (1, Cout)."""
    dims = (in_dim,) + tuple(mlp_dims)
    keys = jax.random.split(key, 5 * len(mlp_dims))
    params = []
    for li, (cin, cout) in enumerate(zip(dims[:-1], dims[1:])):
        kw, kg, kb, km, kv = keys[5 * li:5 * li + 5]
        scale = 1.0 / np.sqrt(cin)
        w = jax.random.uniform(kw, (cin, cout), jnp.float32, -scale, scale)
        gamma = 1.0 + 0.1 * jax.random.normal(kg, (cout,), jnp.float32)
        beta = 0.1 * jax.random.normal(kb, (cout,), jnp.float32)
        mean = 0.1 * jax.random.normal(km, (cout,), jnp.float32)
        var = 1.0 + 0.1 * jax.random.uniform(kv, (cout,), jnp.float32)
        wf, bf = fuse_conv_bn(w, gamma, beta, mean, var)
        params += [wf, bf]
    return tuple(params)


def cloud_crop_forward(seed_xyz, pointcloud, vp_rot, params, *, nsample,
                       cylinder_radius=0.05, hmin=-0.02,
                       hmax_list=(0.01, 0.02, 0.03, 0.04)):
    """CloudCrop.forward: cylinder group -> SharedMLP -> max-pool over nsample.
    Returns vp_features of shape (B, 256, num_seed, num_depth)."""
    grouped = cylinder_query_and_group(
        seed_xyz, pointcloud, vp_rot, nsample=nsample,
        cylinder_radius=cylinder_radius, hmin=hmin, hmax_list=hmax_list)
    return shared_mlp_maxpool_pallas(grouped, params)


def shared_mlp_maxpool_ref(grouped, params):
    """Pure-JAX reference for the SharedMLP + max-pool stage (f32 math)."""
    w1, b1, w2, b2, w3, b3 = params
    B, S, D, ns, cin = grouped.shape
    pH = jax.lax.Precision.HIGHEST
    x = grouped.reshape(B * S * D * ns, cin)
    h = jnp.maximum(jnp.dot(x, w1, precision=pH) + b1, 0.0)
    h = jnp.maximum(jnp.dot(h, w2, precision=pH) + b2, 0.0)
    h = jnp.maximum(jnp.dot(h, w3, precision=pH) + b3, 0.0)
    out = jnp.max(h.reshape(B * S * D, ns, -1), axis=1)
    return out.reshape(B, S, D, -1).transpose(0, 3, 1, 2)


def _approach_to_rot(towards):
    """Rotation matrices with `towards` as the x-axis (zero in-plane angle)."""
    axis_x = towards / jnp.linalg.norm(towards, axis=-1, keepdims=True)
    zeros = jnp.zeros((axis_x.shape[0],), axis_x.dtype)
    axis_y = jnp.stack([-axis_x[:, 1], axis_x[:, 0], zeros], axis=-1)
    ny = jnp.linalg.norm(axis_y, axis=-1, keepdims=True)
    axis_y = jnp.where(ny < 1e-8,
                       jnp.array([0.0, 1.0, 0.0], axis_x.dtype),
                       axis_y / jnp.maximum(ny, 1e-8))
    axis_z = jnp.cross(axis_x, axis_y)
    return jnp.stack([axis_x, axis_y, axis_z], axis=-1)               # (M,3,3)


if __name__ == "__main__":
    key = jax.random.PRNGKey(0)
    k_pc, k_ap, k_par = jax.random.split(key, 3)

    # small shapes consistent with the module
    B, num_seed, num_point = 2, 16, 128
    nsample, num_depth = 16, 4                 # default hmax_list has 4 depths
    seed_feature_dim = 3                       # grouped-xyz channels (use_xyz)
    mlp_dims = (64, 128, 256)

    # compact point cloud so the 5 cm cylinders actually catch neighbours
    pointcloud = 0.08 * jax.random.normal(k_pc, (B, num_point, 3), jnp.float32)
    seed_xyz = pointcloud[:, :num_seed, :]     # seeds are cloud points
    approach = jax.random.normal(k_ap, (B * num_seed, 3), jnp.float32)
    vp_rot = _approach_to_rot(approach).reshape(B, num_seed, 3, 3)

    params = init_params(k_par, in_dim=seed_feature_dim, mlp_dims=mlp_dims)

    vp_features = cloud_crop_forward(seed_xyz, pointcloud, vp_rot, params,
                                     nsample=nsample)
    jax.block_until_ready(vp_features)

    assert vp_features.shape == (B, mlp_dims[-1], num_seed, num_depth)

    # sanity check against a pure-JAX reference of the MLP + max-pool stage
    grouped = cylinder_query_and_group(
        seed_xyz, pointcloud, vp_rot, nsample=nsample,
        cylinder_radius=0.05, hmin=-0.02, hmax_list=(0.01, 0.02, 0.03, 0.04))
    ref = shared_mlp_maxpool_ref(grouped, params)
    max_err = float(jnp.max(jnp.abs(vp_features - ref)))
    assert jnp.allclose(vp_features, ref, rtol=2e-2, atol=2e-3), max_err

    print("KERNEL_OK")
</pallas_src>

<mosaic_0001>
module attributes {stable_mosaic.version = 11 : i64} {
  func.func @_shared_mlp_maxpool_kernel(%arg0: i32, %arg1: memref<16x128x8xf32, #tpu.memory_space<vmem>>, %arg2: memref<8x64xf32, #tpu.memory_space<vmem>>, %arg3: memref<1x64xf32, #tpu.memory_space<vmem>>, %arg4: memref<64x128xf32, #tpu.memory_space<vmem>>, %arg5: memref<1x128xf32, #tpu.memory_space<vmem>>, %arg6: memref<128x256xf32, #tpu.memory_space<vmem>>, %arg7: memref<1x256xf32, #tpu.memory_space<vmem>>, %arg8: memref<128x256xf32, #tpu.memory_space<vmem>>) attributes {dimension_semantics = [#tpu.dimension_semantics<parallel>], iteration_bounds = array<i64: 1>, scalar_prefetch = 0 : i64, scratch_operands = 0 : i64, tpu.core_type = #tpu.core_type<tc>, window_params = [{transform_indices = @transform_0, window_bounds = array<i64: 16, 128, 8>}, {pipeline_mode = #tpu.pipeline_mode<synchronous>, transform_indices = @transform_1, window_bounds = array<i64: 8, 64>}, {pipeline_mode = #tpu.pipeline_mode<synchronous>, transform_indices = @transform_2, window_bounds = array<i64: 1, 64>}, {pipeline_mode = #tpu.pipeline_mode<synchronous>, transform_indices = @transform_3, window_bounds = array<i64: 64, 128>}, {pipeline_mode = #tpu.pipeline_mode<synchronous>, transform_indices = @transform_4, window_bounds = array<i64: 1, 128>}, {pipeline_mode = #tpu.pipeline_mode<synchronous>, transform_indices = @transform_5, window_bounds = array<i64: 128, 256>}, {pipeline_mode = #tpu.pipeline_mode<synchronous>, transform_indices = @transform_6, window_bounds = array<i64: 1, 256>}, {transform_indices = @transform_7, window_bounds = array<i64: 128, 256>}]} {
    %c0 = arith.constant 0 : index
    %c0_0 = arith.constant 0 : index
    %c0_1 = arith.constant 0 : index
    %0 = vector.load %arg1[%c0, %c0_0, %c0_1] : memref<16x128x8xf32, #tpu.memory_space<vmem>>, vector<16x128x8xf32>
    %1 = vector.shape_cast %0 : vector<16x128x8xf32> to vector<2048x8xf32>
    %c0_2 = arith.constant 0 : index
    %c0_3 = arith.constant 0 : index
    %2 = vector.load %arg2[%c0_2, %c0_3] : memref<8x64xf32, #tpu.memory_space<vmem>>, vector<8x64xf32>
    %cst = arith.constant dense<0.000000e+00> : vector<2048x64xf32>
    %3 = tpu.matmul %1, %2, %cst {dimension_numbers = #tpu.dot_dimension_numbers<[1], [0], [0], [1], [0, 0, 1, 1], [], []>} : vector<2048x8xf32>, vector<8x64xf32>, vector<2048x64xf32> -> vector<2048x64xf32>
    %c0_4 = arith.constant 0 : index
    %c0_5 = arith.constant 0 : index
    %4 = vector.load %arg3[%c0_4, %c0_5] : memref<1x64xf32, #tpu.memory_space<vmem>>, vector<1x64xf32>
    %5 = vector.broadcast %4 : vector<1x64xf32> to vector<2048x64xf32>
    %6 = arith.addf %3, %5 : vector<2048x64xf32>
    %cst_6 = arith.constant 0.000000e+00 : f32
    %7 = vector.broadcast %cst_6 : f32 to vector<2048x64xf32>
    %8 = arith.maximumf %6, %7 : vector<2048x64xf32>
    %c0_7 = arith.constant 0 : index
    %c0_8 = arith.constant 0 : index
    %9 = vector.load %arg4[%c0_7, %c0_8] : memref<64x128xf32, #tpu.memory_space<vmem>>, vector<64x128xf32>
    %cst_9 = arith.constant dense<0.000000e+00> : vector<2048x128xf32>
    %10 = tpu.matmul %8, %9, %cst_9 {dimension_numbers = #tpu.dot_dimension_numbers<[1], [0], [0], [1], [0, 0, 1, 1], [], []>} : vector<2048x64xf32>, vector<64x128xf32>, vector<2048x128xf32> -> vector<2048x128xf32>
    %c0_10 = arith.constant 0 : index
    %c0_11 = arith.constant 0 : index
    %11 = vector.load %arg5[%c0_10, %c0_11] : memref<1x128xf32, #tpu.memory_space<vmem>>, vector<1x128xf32>
    %12 = vector.broadcast %11 : vector<1x128xf32> to vector<2048x128xf32>
    %13 = arith.addf %10, %12 : vector<2048x128xf32>
    %cst_12 = arith.constant 0.000000e+00 : f32
    %14 = vector.broadcast %cst_12 : f32 to vector<2048x128xf32>
    %15 = arith.maximumf %13, %14 : vector<2048x128xf32>
    %c0_13 = arith.constant 0 : index
    %c0_14 = arith.constant 0 : index
    %16 = vector.load %arg6[%c0_13, %c0_14] : memref<128x256xf32, #tpu.memory_space<vmem>>, vector<128x256xf32>
    %cst_15 = arith.constant dense<0.000000e+00> : vector<2048x256xf32>
    %17 = tpu.matmul %15, %16, %cst_15 {dimension_numbers = #tpu.dot_dimension_numbers<[1], [0], [0], [1], [0, 0, 1, 1], [], []>} : vector<2048x128xf32>, vector<128x256xf32>, vector<2048x256xf32> -> vector<2048x256xf32>
    %c0_16 = arith.constant 0 : index
    %c0_17 = arith.constant 0 : index
    %18 = vector.load %arg7[%c0_16, %c0_17] : memref<1x256xf32, #tpu.memory_space<vmem>>, vector<1x256xf32>
    %19 = vector.broadcast %18 : vector<1x256xf32> to vector<2048x256xf32>
    %20 = arith.addf %17, %19 : vector<2048x256xf32>
    %cst_18 = arith.constant 0.000000e+00 : f32
    %21 = vector.broadcast %cst_18 : f32 to vector<2048x256xf32>
    %22 = arith.maximumf %20, %21 : vector<2048x256xf32>
    %23 = vector.extract_strided_slice %22 {offsets = [0, 0], sizes = [128, 256], strides = [1, 1]} : vector<2048x256xf32> to vector<128x256xf32>
    %24 = vector.extract_strided_slice %22 {offsets = [128, 0], sizes = [128, 256], strides = [1, 1]} : vector<2048x256xf32> to vector<128x256xf32>
    %25 = arith.maximumf %23, %24 : vector<128x256xf32>
    %26 = vector.extract_strided_slice %22 {offsets = [256, 0], sizes = [128, 256], strides = [1, 1]} : vector<2048x256xf32> to vector<128x256xf32>
    %27 = arith.maximumf %25, %26 : vector<128x256xf32>
    %28 = vector.extract_strided_slice %22 {offsets = [384, 0], sizes = [128, 256], strides = [1, 1]} : vector<2048x256xf32> to vector<128x256xf32>
    %29 = arith.maximumf %27, %28 : vector<128x256xf32>
    %30 = vector.extract_strided_slice %22 {offsets = [512, 0], sizes = [128, 256], strides = [1, 1]} : vector<2048x256xf32> to vector<128x256xf32>
    %31 = arith.maximumf %29, %30 : vector<128x256xf32>
    %32 = vector.extract_strided_slice %22 {offsets = [640, 0], sizes = [128, 256], strides = [1, 1]} : vector<2048x256xf32> to vector<128x256xf32>
    %33 = arith.maximumf %31, %32 : vector<128x256xf32>
    %34 = vector.extract_strided_slice %22 {offsets = [768, 0], sizes = [128, 256], strides = [1, 1]} : vector<2048x256xf32> to vector<128x256xf32>
    %35 = arith.maximumf %33, %34 : vector<128x256xf32>
    %36 = vector.extract_strided_slice %22 {offsets = [896, 0], sizes = [128, 256], strides = [1, 1]} : vector<2048x256xf32> to vector<128x256xf32>
    %37 = arith.maximumf %35, %36 : vector<128x256xf32>
    %38 = vector.extract_strided_slice %22 {offsets = [1024, 0], sizes = [128, 256], strides = [1, 1]} : vector<2048x256xf32> to vector<128x256xf32>
    %39 = arith.maximumf %37, %38 : vector<128x256xf32>
    %40 = vector.extract_strided_slice %22 {offsets = [1152, 0], sizes = [128, 256], strides = [1, 1]} : vector<2048x256xf32> to vector<128x256xf32>
    %41 = arith.maximumf %39, %40 : vector<128x256xf32>
    %42 = vector.extract_strided_slice %22 {offsets = [1280, 0], sizes = [128, 256], strides = [1, 1]} : vector<2048x256xf32> to vector<128x256xf32>
    %43 = arith.maximumf %41, %42 : vector<128x256xf32>
    %44 = vector.extract_strided_slice %22 {offsets = [1408, 0], sizes = [128, 256], strides = [1, 1]} : vector<2048x256xf32> to vector<128x256xf32>
    %45 = arith.maximumf %43, %44 : vector<128x256xf32>
    %46 = vector.extract_strided_slice %22 {offsets = [1536, 0], sizes = [128, 256], strides = [1, 1]} : vector<2048x256xf32> to vector<128x256xf32>
    %47 = arith.maximumf %45, %46 : vector<128x256xf32>
    %48 = vector.extract_strided_slice %22 {offsets = [1664, 0], sizes = [128, 256], strides = [1, 1]} : vector<2048x256xf32> to vector<128x256xf32>
    %49 = arith.maximumf %47, %48 : vector<128x256xf32>
    %50 = vector.extract_strided_slice %22 {offsets = [1792, 0], sizes = [128, 256], strides = [1, 1]} : vector<2048x256xf32> to vector<128x256xf32>
    %51 = arith.maximumf %49, %50 : vector<128x256xf32>
    %52 = vector.extract_strided_slice %22 {offsets = [1920, 0], sizes = [128, 256], strides = [1, 1]} : vector<2048x256xf32> to vector<128x256xf32>
    %53 = arith.maximumf %51, %52 : vector<128x256xf32>
    %c0_19 = arith.constant 0 : index
    %c0_20 = arith.constant 0 : index
    %54 = vector.load %arg8[%c0_19, %c0_20] : memref<128x256xf32, #tpu.memory_space<vmem>>, vector<128x256xf32>
    tpu.vector_store %arg8[%c0_19, %c0_20], %53 {strides = array<i32>} : memref<128x256xf32, #tpu.memory_space<vmem>>, vector<128x256xf32>,
    return
  }
  func.func @transform_0(%arg0: i32) -> (i32, i32, i32) {
    %c0_i32 = arith.constant 0 : i32
    %c0_i32_0 = arith.constant 0 : i32
    %c0_i32_1 = arith.constant 0 : i32
    return %c0_i32, %arg0, %c0_i32_0 : i32, i32, i32
  }
  func.func @transform_1(%arg0: i32) -> (i32, i32) {
    %c0_i32 = arith.constant 0 : i32
    %c0_i32_0 = arith.constant 0 : i32
    %c0_i32_1 = arith.constant 0 : i32
    return %c0_i32, %c0_i32_0 : i32, i32
  }
  func.func @transform_2(%arg0: i32) -> (i32, i32) {
    %c0_i32 = arith.constant 0 : i32
    %c0_i32_0 = arith.constant 0 : i32
    %c0_i32_1 = arith.constant 0 : i32
    return %c0_i32, %c0_i32_0 : i32, i32
  }
  func.func @transform_3(%arg0: i32) -> (i32, i32) {
    %c0_i32 = arith.constant 0 : i32
    %c0_i32_0 = arith.constant 0 : i32
    %c0_i32_1 = arith.constant 0 : i32
    return %c0_i32, %c0_i32_0 : i32, i32
  }
  func.func @transform_4(%arg0: i32) -> (i32, i32) {
    %c0_i32 = arith.constant 0 : i32
    %c0_i32_0 = arith.constant 0 : i32
    %c0_i32_1 = arith.constant 0 : i32
    return %c0_i32, %c0_i32_0 : i32, i32
  }
  func.func @transform_5(%arg0: i32) -> (i32, i32) {
    %c0_i32 = arith.constant 0 : i32
    %c0_i32_0 = arith.constant 0 : i32
    %c0_i32_1 = arith.constant 0 : i32
    return %c0_i32, %c0_i32_0 : i32, i32
  }
  func.func @transform_6(%arg0: i32) -> (i32, i32) {
    %c0_i32 = arith.constant 0 : i32
    %c0_i32_0 = arith.constant 0 : i32
    %c0_i32_1 = arith.constant 0 : i32
    return %c0_i32, %c0_i32_0 : i32, i32
  }
  func.func @transform_7(%arg0: i32) -> (i32, i32) {
    %c0_i32 = arith.constant 0 : i32
    %c0_i32_0 = arith.constant 0 : i32
    return %arg0, %c0_i32 : i32, i32
  }
}

</mosaic_0001>

<llo_original>
// kernel: tpu_custom_call.1
$region0: #{tpu_custom_call.1}
  #allocation0 [shape = 'u32[]', space=smem, size = 0x4, offset = 0x4, fixed_abs, tag = 'smem constant byte address 0x4 - core index']
  #allocation1 [shape = 'u32[144,128]{1,0:T(1,128)}', space=vmem, size = 0x12000, scoped, tag = 'internal scratch']
  %s0 = inlined_call_operand.vmem [shape: f32[16,128,8], index: 0, kind: input, shape index: {}]
  %s1 = inlined_call_operand.vmem [shape: f32[8,64], index: 1, kind: input, shape index: {}]
  %s2 = inlined_call_operand.vmem [shape: f32[1,64], index: 2, kind: input, shape index: {}]
  %s3 = inlined_call_operand.vmem [shape: f32[64,128], index: 3, kind: input, shape index: {}]
  %s4 = inlined_call_operand.vmem [shape: f32[1,128], index: 4, kind: input, shape index: {}]
  %s5 = inlined_call_operand.vmem [shape: f32[128,256], index: 5, kind: input, shape index: {}]
  %s6 = inlined_call_operand.vmem [shape: f32[1,256], index: 6, kind: input, shape index: {}]
  %s7 = inlined_call_operand.hbm [shape: f32[128,256], index: 7, kind: output, shape index: {}]
  %s8 = sld [smem:[#allocation0]]
  $region38: #{tpu_custom_call.1} parent=0
    _
  %s10 = ssub.s32 1, %s8
  %s11 = scalar_select 0, %s10, %s8
  $region1: #{tpu_custom_call.1} parent=0
    #allocation2 [shape = 'u8[131072]{0}', space=vmem, size = 0x20000, scoped, tag = 'output window, operand 0, single buffered']
    #allocation3 [shape = 's32[1]{0}', space=sflag, size = 0x4, scoped, tag = 'scoped memory for tpu_custom_call.1']
    %12 = vsyncpa [#allocation3], 0
    // Predicated region
    $region2: #{tpu_custom_call.1} parent=1 // pred_check
      _
    $region3: #{tpu_custom_call.1} parent=1 // pred_check_branch
      %14 = sbr.rel (0) target = $region5
    $region4: #{tpu_custom_call.1} parent=1 // pred_region
      _
    $region5: #{tpu_custom_call.1} parent=1 // pred_fallthru
      _
    // Predicated region
    $region6: #{tpu_custom_call.1} parent=1 // pred_check
      _
    $region7: #{tpu_custom_call.1} parent=1 // pred_check_branch
      %16 = sbr.rel (0) target = $region9
    $region8: #{tpu_custom_call.1} parent=1 // pred_region
      _
    $region9: #{tpu_custom_call.1} parent=1 // pred_fallthru
      _
    // Predicated region
    $region10: #{tpu_custom_call.1} parent=1 // pred_check
      _
    $region11: #{tpu_custom_call.1} parent=1 // pred_check_branch
      %18 = sbr.rel (0) target = $region13
    $region12: #{tpu_custom_call.1} parent=1 // pred_region
      _
    $region13: #{tpu_custom_call.1} parent=1 // pred_fallthru
      _
    // Predicated region
    $region14: #{tpu_custom_call.1} parent=1 // pred_check
      _
    $region15: #{tpu_custom_call.1} parent=1 // pred_check_branch
      %20 = sbr.rel (0) target = $region17
    $region16: #{tpu_custom_call.1} parent=1 // pred_region
      _
    $region17: #{tpu_custom_call.1} parent=1 // pred_fallthru
      _
    // Predicated region
    $region18: #{tpu_custom_call.1} parent=1 // pred_check
      _
    $region19: #{tpu_custom_call.1} parent=1 // pred_check_branch
      %22 = sbr.rel (0) target = $region21
    $region20: #{tpu_custom_call.1} parent=1 // pred_region
      _
    $region21: #{tpu_custom_call.1} parent=1 // pred_fallthru
      _
    // Predicated region
    $region22: #{tpu_custom_call.1} parent=1 // pred_check
      _
    $region23: #{tpu_custom_call.1} parent=1 // pred_check_branch
      %24 = sbr.rel (0) target = $region25
    $region24: #{tpu_custom_call.1} parent=1 // pred_region
      _
    $region25: #{tpu_custom_call.1} parent=1 // pred_fallthru
      _
    // Predicated region
    $region26: #{tpu_custom_call.1} parent=1 // pred_check
      _
    $region27: #{tpu_custom_call.1} parent=1 // pred_check_branch
      %26 = sbr.rel (0) target = $region29
    $region28: #{tpu_custom_call.1} parent=1 // pred_region
      _
    $region29: #{tpu_custom_call.1} parent=1 // pred_fallthru
      _
    %v27 = vld [vmem:[%s0] sm:$0xff]
    %v28 = vld [vmem:[%s0 + $0x8] sm:$0xff]
    %v29 = vld [vmem:[%s0 + $0x10] sm:$0xff]
    %v30 = vld [vmem:[%s0 + $0x18] sm:$0xff]
    %v31 = vld [vmem:[%s0 + $0x20] sm:$0xff]
    %v32 = vld [vmem:[%s0 + $0x28] sm:$0xff]
    %v33 = vld [vmem:[%s0 + $0x30] sm:$0xff]
    %v34 = vld [vmem:[%s0 + $0x38] sm:$0xff]
    %v35 = vld [vmem:[%s0 + $0x40] sm:$0xff]
    %v36 = vld [vmem:[%s0 + $0x48] sm:$0xff]
    %v37 = vld [vmem:[%s0 + $0x50] sm:$0xff]
    %v38 = vld [vmem:[%s0 + $0x58] sm:$0xff]
    %v39 = vld [vmem:[%s0 + $0x60] sm:$0xff]
    %v40 = vld [vmem:[%s0 + $0x68] sm:$0xff]
    %v41 = vld [vmem:[%s0 + $0x70] sm:$0xff]
    %v42 = vld [vmem:[%s0 + $0x78] sm:$0xff]
    %v43 = vld [vmem:[%s0 + $0x80] sm:$0xff]
    %v44 = vld [vmem:[%s0 + $0x88] sm:$0xff]
    %v45 = vld [vmem:[%s0 + $0x90] sm:$0xff]
    %v46 = vld [vmem:[%s0 + $0x98] sm:$0xff]
    %v47 = vld [vmem:[%s0 + $0xa0] sm:$0xff]
    %v48 = vld [vmem:[%s0 + $0xa8] sm:$0xff]
    %v49 = vld [vmem:[%s0 + $0xb0] sm:$0xff]
    %v50 = vld [vmem:[%s0 + $0xb8] sm:$0xff]
    %v51 = vld [vmem:[%s0 + $0xc0] sm:$0xff]
    %v52 = vld [vmem:[%s0 + $0xc8] sm:$0xff]
    %v53 = vld [vmem:[%s0 + $0xd0] sm:$0xff]
    %v54 = vld [vmem:[%s0 + $0xd8] sm:$0xff]
    %v55 = vld [vmem:[%s0 + $0xe0] sm:$0xff]
    %v56 = vld [vmem:[%s0 + $0xe8] sm:$0xff]
    %v57 = vld [vmem:[%s0 + $0xf0] sm:$0xff]
    %v58 = vld [vmem:[%s0 + $0xf8] sm:$0xff]
    %v59 = vld [vmem:[%s0 + $0x100] sm:$0xff]
    %v60 = vld [vmem:[%s0 + $0x108] sm:$0xff]
    %v61 = vld [vmem:[%s0 + $0x110] sm:$0xff]
    %v62 = vld [vmem:[%s0 + $0x118] sm:$0xff]
    %v63 = vld [vmem:[%s0 + $0x120] sm:$0xff]
    %v64 = vld [vmem:[%s0 + $0x128] sm:$0xff]
    %v65 = vld [vmem:[%s0 + $0x130] sm:$0xff]
    %v66 = vld [vmem:[%s0 + $0x138] sm:$0xff]
    %v67 = vld [vmem:[%s0 + $0x140] sm:$0xff]
    %v68 = vld [vmem:[%s0 + $0x148] sm:$0xff]
    %v69 = vld [vmem:[%s0 + $0x150] sm:$0xff]
    %v70 = vld [vmem:[%s0 + $0x158] sm:$0xff]
    %v71 = vld [vmem:[%s0 + $0x160] sm:$0xff]
    %v72 = vld [vmem:[%s0 + $0x168] sm:$0xff]
    %v73 = vld [vmem:[%s0 + $0x170] sm:$0xff]
    %v74 = vld [vmem:[%s0 + $0x178] sm:$0xff]
    %v75 = vld [vmem:[%s0 + $0x180] sm:$0xff]
    %v76 = vld [vmem:[%s0 + $0x188] sm:$0xff]
    %v77 = vld [vmem:[%s0 + $0x190] sm:$0xff]
    %v78 = vld [vmem:[%s0 + $0x198] sm:$0xff]
    %v79 = vld [vmem:[%s0 + $0x1a0] sm:$0xff]
    %v80 = vld [vmem:[%s0 + $0x1a8] sm:$0xff]
    %v81 = vld [vmem:[%s0 + $0x1b0] sm:$0xff]
    %v82 = vld [vmem:[%s0 + $0x1b8] sm:$0xff]
    %v83 = vld [vmem:[%s0 + $0x1c0] sm:$0xff]
    %v84 = vld [vmem:[%s0 + $0x1c8] sm:$0xff]
    %v85 = vld [vmem:[%s0 + $0x1d0] sm:$0xff]
    %v86 = vld [vmem:[%s0 + $0x1d8] sm:$0xff]
    %v87 = vld [vmem:[%s0 + $0x1e0] sm:$0xff]
    %v88 = vld [vmem:[%s0 + $0x1e8] sm:$0xff]
    %v89 = vld [vmem:[%s0 + $0x1f0] sm:$0xff]
    %v90 = vld [vmem:[%s0 + $0x1f8] sm:$0xff]
    %v91 = vld [vmem:[%s0 + $0x200] sm:$0xff]
    %v92 = vld [vmem:[%s0 + $0x208] sm:$0xff]
    %v93 = vld [vmem:[%s0 + $0x210] sm:$0xff]
    %v94 = vld [vmem:[%s0 + $0x218] sm:$0xff]
    %v95 = vld [vmem:[%s0 + $0x220] sm:$0xff]
    %v96 = vld [vmem:[%s0 + $0x228] sm:$0xff]
    %v97 = vld [vmem:[%s0 + $0x230] sm:$0xff]
    %v98 = vld [vmem:[%s0 + $0x238] sm:$0xff]
    %v99 = vld [vmem:[%s0 + $0x240] sm:$0xff]
    %v100 = vld [vmem:[%s0 + $0x248] sm:$0xff]
    %v101 = vld [vmem:[%s0 + $0x250] sm:$0xff]
    %v102 = vld [vmem:[%s0 + $0x258] sm:$0xff]
    %v103 = vld [vmem:[%s0 + $0x260] sm:$0xff]
    %v104 = vld [vmem:[%s0 + $0x268] sm:$0xff]
    %v105 = vld [vmem:[%s0 + $0x270] sm:$0xff]
    %v106 = vld [vmem:[%s0 + $0x278] sm:$0xff]
    %v107 = vld [vmem:[%s0 + $0x280] sm:$0xff]
    %v108 = vld [vmem:[%s0 + $0x288] sm:$0xff]
    %v109 = vld [vmem:[%s0 + $0x290] sm:$0xff]
    %v110 = vld [vmem:[%s0 + $0x298] sm:$0xff]
    %v111 = vld [vmem:[%s0 + $0x2a0] sm:$0xff]
    %v112 = vld [vmem:[%s0 + $0x2a8] sm:$0xff]
    %v113 = vld [vmem:[%s0 + $0x2b0] sm:$0xff]
    %v114 = vld [vmem:[%s0 + $0x2b8] sm:$0xff]
    %v115 = vld [vmem:[%s0 + $0x2c0] sm:$0xff]
    %v116 = vld [vmem:[%s0 + $0x2c8] sm:$0xff]
    %v117 = vld [vmem:[%s0 + $0x2d0] sm:$0xff]
    %v118 = vld [vmem:[%s0 + $0x2d8] sm:$0xff]
    %v119 = vld [vmem:[%s0 + $0x2e0] sm:$0xff]
    %v120 = vld [vmem:[%s0 + $0x2e8] sm:$0xff]
    %v121 = vld [vmem:[%s0 + $0x2f0] sm:$0xff]
    %v122 = vld [vmem:[%s0 + $0x2f8] sm:$0xff]
    %v123 = vld [vmem:[%s0 + $0x300] sm:$0xff]
    %v124 = vld [vmem:[%s0 + $0x308] sm:$0xff]
    %v125 = vld [vmem:[%s0 + $0x310] sm:$0xff]
    %v126 = vld [vmem:[%s0 + $0x318] sm:$0xff]
    %v127 = vld [vmem:[%s0 + $0x320] sm:$0xff]
    %v128 = vld [vmem:[%s0 + $0x328] sm:$0xff]
    %v129 = vld [vmem:[%s0 + $0x330] sm:$0xff]
    %v130 = vld [vmem:[%s0 + $0x338] sm:$0xff]
    %v131 = vld [vmem:[%s0 + $0x340] sm:$0xff]
    %v132 = vld [vmem:[%s0 + $0x348] sm:$0xff]
    %v133 = vld [vmem:[%s0 + $0x350] sm:$0xff]
    %v134 = vld [vmem:[%s0 + $0x358] sm:$0xff]
    %v135 = vld [vmem:[%s0 + $0x360] sm:$0xff]
    %v136 = vld [vmem:[%s0 + $0x368] sm:$0xff]
    %v137 = vld [vmem:[%s0 + $0x370] sm:$0xff]
    %v138 = vld [vmem:[%s0 + $0x378] sm:$0xff]
    %v139 = vld [vmem:[%s0 + $0x380] sm:$0xff]
    %v140 = vld [vmem:[%s0 + $0x388] sm:$0xff]
    %v141 = vld [vmem:[%s0 + $0x390] sm:$0xff]
    %v142 = vld [vmem:[%s0 + $0x398] sm:$0xff]
    %v143 = vld [vmem:[%s0 + $0x3a0] sm:$0xff]
    %v144 = vld [vmem:[%s0 + $0x3a8] sm:$0xff]
    %v145 = vld [vmem:[%s0 + $0x3b0] sm:$0xff]
    %v146 = vld [vmem:[%s0 + $0x3b8] sm:$0xff]
    %v147 = vld [vmem:[%s0 + $0x3c0] sm:$0xff]
    %v148 = vld [vmem:[%s0 + $0x3c8] sm:$0xff]
    %v149 = vld [vmem:[%s0 + $0x3d0] sm:$0xff]
    %v150 = vld [vmem:[%s0 + $0x3d8] sm:$0xff]
    %v151 = vld [vmem:[%s0 + $0x3e0] sm:$0xff]
    %v152 = vld [vmem:[%s0 + $0x3e8] sm:$0xff]
    %v153 = vld [vmem:[%s0 + $0x3f0] sm:$0xff]
    %v154 = vld [vmem:[%s0 + $0x3f8] sm:$0xff]
    %v155 = vld [vmem:[%s0 + $0x400] sm:$0xff]
    %v156 = vld [vmem:[%s0 + $0x408] sm:$0xff]
    %v157 = vld [vmem:[%s0 + $0x410] sm:$0xff]
    %v158 = vld [vmem:[%s0 + $0x418] sm:$0xff]
    %v159 = vld [vmem:[%s0 + $0x420] sm:$0xff]
    %v160 = vld [vmem:[%s0 + $0x428] sm:$0xff]
    %v161 = vld [vmem:[%s0 + $0x430] sm:$0xff]
    %v162 = vld [vmem:[%s0 + $0x438] sm:$0xff]
    %v163 = vld [vmem:[%s0 + $0x440] sm:$0xff]
    %v164 = vld [vmem:[%s0 + $0x448] sm:$0xff]
    %v165 = vld [vmem:[%s0 + $0x450] sm:$0xff]
    %v166 = vld [vmem:[%s0 + $0x458] sm:$0xff]
    %v167 = vld [vmem:[%s0 + $0x460] sm:$0xff]
    %v168 = vld [vmem:[%s0 + $0x468] sm:$0xff]
    %v169 = vld [vmem:[%s0 + $0x470] sm:$0xff]
    %v170 = vld [vmem:[%s0 + $0x478] sm:$0xff]
    %v171 = vld [vmem:[%s0 + $0x480] sm:$0xff]
    %v172 = vld [vmem:[%s0 + $0x488] sm:$0xff]
    %v173 = vld [vmem:[%s0 + $0x490] sm:$0xff]
    %v174 = vld [vmem:[%s0 + $0x498] sm:$0xff]
    %v175 = vld [vmem:[%s0 + $0x4a0] sm:$0xff]
    %v176 = vld [vmem:[%s0 + $0x4a8] sm:$0xff]
    %v177 = vld [vmem:[%s0 + $0x4b0] sm:$0xff]
    %v178 = vld [vmem:[%s0 + $0x4b8] sm:$0xff]
    %v179 = vld [vmem:[%s0 + $0x4c0] sm:$0xff]
    %v180 = vld [vmem:[%s0 + $0x4c8] sm:$0xff]
    %v181 = vld [vmem:[%s0 + $0x4d0] sm:$0xff]
    %v182 = vld [vmem:[%s0 + $0x4d8] sm:$0xff]
    %v183 = vld [vmem:[%s0 + $0x4e0] sm:$0xff]
    %v184 = vld [vmem:[%s0 + $0x4e8] sm:$0xff]
    %v185 = vld [vmem:[%s0 + $0x4f0] sm:$0xff]
    %v186 = vld [vmem:[%s0 + $0x4f8] sm:$0xff]
    %v187 = vld [vmem:[%s0 + $0x500] sm:$0xff]
    %v188 = vld [vmem:[%s0 + $0x508] sm:$0xff]
    %v189 = vld [vmem:[%s0 + $0x510] sm:$0xff]
    %v190 = vld [vmem:[%s0 + $0x518] sm:$0xff]
    %v191 = vld [vmem:[%s0 + $0x520] sm:$0xff]
    %v192 = vld [vmem:[%s0 + $0x528] sm:$0xff]
    %v193 = vld [vmem:[%s0 + $0x530] sm:$0xff]
    %v194 = vld [vmem:[%s0 + $0x538] sm:$0xff]
    %v195 = vld [vmem:[%s0 + $0x540] sm:$0xff]
    %v196 = vld [vmem:[%s0 + $0x548] sm:$0xff]
    %v197 = vld [vmem:[%s0 + $0x550] sm:$0xff]
    %v198 = vld [vmem:[%s0 + $0x558] sm:$0xff]
    %v199 = vld [vmem:[%s0 + $0x560] sm:$0xff]
    %v200 = vld [vmem:[%s0 + $0x568] sm:$0xff]
    %v201 = vld [vmem:[%s0 + $0x570] sm:$0xff]
    %v202 = vld [vmem:[%s0 + $0x578] sm:$0xff]
    %v203 = vld [vmem:[%s0 + $0x580] sm:$0xff]
    %v204 = vld [vmem:[%s0 + $0x588] sm:$0xff]
    %v205 = vld [vmem:[%s0 + $0x590] sm:$0xff]
    %v206 = vld [vmem:[%s0 + $0x598] sm:$0xff]
    %v207 = vld [vmem:[%s0 + $0x5a0] sm:$0xff]
    %v208 = vld [vmem:[%s0 + $0x5a8] sm:$0xff]
    %v209 = vld [vmem:[%s0 + $0x5b0] sm:$0xff]
    %v210 = vld [vmem:[%s0 + $0x5b8] sm:$0xff]
    %v211 = vld [vmem:[%s0 + $0x5c0] sm:$0xff]
    %v212 = vld [vmem:[%s0 + $0x5c8] sm:$0xff]
    %v213 = vld [vmem:[%s0 + $0x5d0] sm:$0xff]
    %v214 = vld [vmem:[%s0 + $0x5d8] sm:$0xff]
    %v215 = vld [vmem:[%s0 + $0x5e0] sm:$0xff]
    %v216 = vld [vmem:[%s0 + $0x5e8] sm:$0xff]
    %v217 = vld [vmem:[%s0 + $0x5f0] sm:$0xff]
    %v218 = vld [vmem:[%s0 + $0x5f8] sm:$0xff]
    %v219 = vld [vmem:[%s0 + $0x600] sm:$0xff]
    %v220 = vld [vmem:[%s0 + $0x608] sm:$0xff]
    %v221 = vld [vmem:[%s0 + $0x610] sm:$0xff]
    %v222 = vld [vmem:[%s0 + $0x618] sm:$0xff]
    %v223 = vld [vmem:[%s0 + $0x620] sm:$0xff]
    %v224 = vld [vmem:[%s0 + $0x628] sm:$0xff]
    %v225 = vld [vmem:[%s0 + $0x630] sm:$0xff]
    %v226 = vld [vmem:[%s0 + $0x638] sm:$0xff]
    %v227 = vld [vmem:[%s0 + $0x640] sm:$0xff]
    %v228 = vld [vmem:[%s0 + $0x648] sm:$0xff]
    %v229 = vld [vmem:[%s0 + $0x650] sm:$0xff]
    %v230 = vld [vmem:[%s0 + $0x658] sm:$0xff]
    %v231 = vld [vmem:[%s0 + $0x660] sm:$0xff]
    %v232 = vld [vmem:[%s0 + $0x668] sm:$0xff]
    %v233 = vld [vmem:[%s0 + $0x670] sm:$0xff]
    %v234 = vld [vmem:[%s0 + $0x678] sm:$0xff]
    %v235 = vld [vmem:[%s0 + $0x680] sm:$0xff]
    %v236 = vld [vmem:[%s0 + $0x688] sm:$0xff]
    %v237 = vld [vmem:[%s0 + $0x690] sm:$0xff]
    %v238 = vld [vmem:[%s0 + $0x698] sm:$0xff]
    %v239 = vld [vmem:[%s0 + $0x6a0] sm:$0xff]
    %v240 = vld [vmem:[%s0 + $0x6a8] sm:$0xff]
    %v241 = vld [vmem:[%s0 + $0x6b0] sm:$0xff]
    %v242 = vld [vmem:[%s0 + $0x6b8] sm:$0xff]
    %v243 = vld [vmem:[%s0 + $0x6c0] sm:$0xff]
    %v244 = vld [vmem:[%s0 + $0x6c8] sm:$0xff]
    %v245 = vld [vmem:[%s0 + $0x6d0] sm:$0xff]
    %v246 = vld [vmem:[%s0 + $0x6d8] sm:$0xff]
    %v247 = vld [vmem:[%s0 + $0x6e0] sm:$0xff]
    %v248 = vld [vmem:[%s0 + $0x6e8] sm:$0xff]
    %v249 = vld [vmem:[%s0 + $0x6f0] sm:$0xff]
    %v250 = vld [vmem:[%s0 + $0x6f8] sm:$0xff]
    %v251 = vld [vmem:[%s0 + $0x700] sm:$0xff]
    %v252 = vld [vmem:[%s0 + $0x708] sm:$0xff]
    %v253 = vld [vmem:[%s0 + $0x710] sm:$0xff]
    %v254 = vld [vmem:[%s0 + $0x718] sm:$0xff]
    %v255 = vld [vmem:[%s0 + $0x720] sm:$0xff]
    %v256 = vld [vmem:[%s0 + $0x728] sm:$0xff]
    %v257 = vld [vmem:[%s0 + $0x730] sm:$0xff]
    %v258 = vld [vmem:[%s0 + $0x738] sm:$0xff]
    %v259 = vld [vmem:[%s0 + $0x740] sm:$0xff]
    %v260 = vld [vmem:[%s0 + $0x748] sm:$0xff]
    %v261 = vld [vmem:[%s0 + $0x750] sm:$0xff]
    %v262 = vld [vmem:[%s0 + $0x758] sm:$0xff]
    %v263 = vld [vmem:[%s0 + $0x760] sm:$0xff]
    %v264 = vld [vmem:[%s0 + $0x768] sm:$0xff]
    %v265 = vld [vmem:[%s0 + $0x770] sm:$0xff]
    %v266 = vld [vmem:[%s0 + $0x778] sm:$0xff]
    %v267 = vld [vmem:[%s0 + $0x780] sm:$0xff]
    %v268 = vld [vmem:[%s0 + $0x788] sm:$0xff]
    %v269 = vld [vmem:[%s0 + $0x790] sm:$0xff]
    %v270 = vld [vmem:[%s0 + $0x798] sm:$0xff]
    %v271 = vld [vmem:[%s0 + $0x7a0] sm:$0xff]
    %v272 = vld [vmem:[%s0 + $0x7a8] sm:$0xff]
    %v273 = vld [vmem:[%s0 + $0x7b0] sm:$0xff]
    %v274 = vld [vmem:[%s0 + $0x7b8] sm:$0xff]
    %v275 = vld [vmem:[%s0 + $0x7c0] sm:$0xff]
    %v276 = vld [vmem:[%s0 + $0x7c8] sm:$0xff]
    %v277 = vld [vmem:[%s0 + $0x7d0] sm:$0xff]
    %v278 = vld [vmem:[%s0 + $0x7d8] sm:$0xff]
    %v279 = vld [vmem:[%s0 + $0x7e0] sm:$0xff]
    %v280 = vld [vmem:[%s0 + $0x7e8] sm:$0xff]
    %v281 = vld [vmem:[%s0 + $0x7f0] sm:$0xff]
    %v282 = vld [vmem:[%s0 + $0x7f8] sm:$0xff]
    %v283 = vld [vmem:[%s1] sm:$0xff]
    %v284 = vld [vmem:[%s2] sm:$0x1]
    %v286 = vlaneseq
    %v287 = vshrl.u32 %v286, 7
    %v288 = vsub.s32 0, %v287
    %v289 = vrot.slane %v284, %v288
    %vm291 = vcmask 64512
    %v293 = vsel %vm291, %v27, 0
    %v296 = vsel %vm291, %v28, 0
    %v299 = vsel %vm291, %v29, 0
    %v302 = vsel %vm291, %v30, 0
    %v305 = vsel %vm291, %v31, 0
    %v308 = vsel %vm291, %v32, 0
    %v311 = vsel %vm291, %v33, 0
    %v314 = vsel %vm291, %v34, 0
    %v317 = vsel %vm291, %v35, 0
    %v320 = vsel %vm291, %v36, 0
    %v323 = vsel %vm291, %v37, 0
    %v326 = vsel %vm291, %v38, 0
    %v329 = vsel %vm291, %v39, 0
    %v332 = vsel %vm291, %v40, 0
    %v335 = vsel %vm291, %v41, 0
    %v338 = vsel %vm291, %v42, 0
    %v341 = vsel %vm291, %v43, 0
    %v344 = vsel %vm291, %v44, 0
    %v347 = vsel %vm291, %v45, 0
    %v350 = vsel %vm291, %v46, 0
    %v353 = vsel %vm291, %v47, 0
    %v356 = vsel %vm291, %v48, 0
    %v359 = vsel %vm291, %v49, 0
    %v362 = vsel %vm291, %v50, 0
    %v365 = vsel %vm291, %v51, 0
    %v368 = vsel %vm291, %v52, 0
    %v371 = vsel %vm291, %v53, 0
    %v374 = vsel %vm291, %v54, 0
    %v377 = vsel %vm291, %v55, 0
    %v380 = vsel %vm291, %v56, 0
    %v383 = vsel %vm291, %v57, 0
    %v386 = vsel %vm291, %v58, 0
    %v389 = vsel %vm291, %v59, 0
    %v392 = vsel %vm291, %v60, 0
    %v395 = vsel %vm291, %v61, 0
    %v398 = vsel %vm291, %v62, 0
    %v401 = vsel %vm291, %v63, 0
    %v404 = vsel %vm291, %v64, 0
    %v407 = vsel %vm291, %v65, 0
    %v410 = vsel %vm291, %v66, 0
    %v413 = vsel %vm291, %v67, 0
    %v416 = vsel %vm291, %v68, 0
    %v419 = vsel %vm291, %v69, 0
    %v422 = vsel %vm291, %v70, 0
    %v425 = vsel %vm291, %v71, 0
    %v428 = vsel %vm291, %v72, 0
    %v431 = vsel %vm291, %v73, 0
    %v434 = vsel %vm291, %v74, 0
    %v437 = vsel %vm291, %v75, 0
    %v440 = vsel %vm291, %v76, 0
    %v443 = vsel %vm291, %v77, 0
    %v446 = vsel %vm291, %v78, 0
    %v449 = vsel %vm291, %v79, 0
    %v452 = vsel %vm291, %v80, 0
    %v455 = vsel %vm291, %v81, 0
    %v458 = vsel %vm291, %v82, 0
    %v461 = vsel %vm291, %v83, 0
    %v464 = vsel %vm291, %v84, 0
    %v467 = vsel %vm291, %v85, 0
    %v470 = vsel %vm291, %v86, 0
    %v473 = vsel %vm291, %v87, 0
    %v476 = vsel %vm291, %v88, 0
    %v479 = vsel %vm291, %v89, 0
    %v482 = vsel %vm291, %v90, 0
    %v485 = vsel %vm291, %v91, 0
    %v488 = vsel %vm291, %v92, 0
    %v491 = vsel %vm291, %v93, 0
    %v494 = vsel %vm291, %v94, 0
    %v497 = vsel %vm291, %v95, 0
    %v500 = vsel %vm291, %v96, 0
    %v503 = vsel %vm291, %v97, 0
    %v506 = vsel %vm291, %v98, 0
    %v509 = vsel %vm291, %v99, 0
    %v512 = vsel %vm291, %v100, 0
    %v515 = vsel %vm291, %v101, 0
    %v518 = vsel %vm291, %v102, 0
    %v521 = vsel %vm291, %v103, 0
    %v524 = vsel %vm291, %v104, 0
    %v527 = vsel %vm291, %v105, 0
    %v530 = vsel %vm291, %v106, 0
    %v533 = vsel %vm291, %v107, 0
    %v536 = vsel %vm291, %v108, 0
    %v539 = vsel %vm291, %v109, 0
    %v542 = vsel %vm291, %v110, 0
    %v545 = vsel %vm291, %v111, 0
    %v548 = vsel %vm291, %v112, 0
    %v551 = vsel %vm291, %v113, 0
    %v554 = vsel %vm291, %v114, 0
    %v557 = vsel %vm291, %v115, 0
    %v560 = vsel %vm291, %v116, 0
    %v563 = vsel %vm291, %v117, 0
    %v566 = vsel %vm291, %v118, 0
    %v569 = vsel %vm291, %v119, 0
    %v572 = vsel %vm291, %v120, 0
    %v575 = vsel %vm291, %v121, 0
    %v578 = vsel %vm291, %v122, 0
    %v581 = vsel %vm291, %v123, 0
    %v584 = vsel %vm291, %v124, 0
    %v587 = vsel %vm291, %v125, 0
    %v590 = vsel %vm291, %v126, 0
    %v593 = vsel %vm291, %v127, 0
    %v596 = vsel %vm291, %v128, 0
    %v599 = vsel %vm291, %v129, 0
    %v602 = vsel %vm291, %v130, 0
    %v605 = vsel %vm291, %v131, 0
    %v608 = vsel %vm291, %v132, 0
    %v611 = vsel %vm291, %v133, 0
    %v614 = vsel %vm291, %v134, 0
    %v617 = vsel %vm291, %v135, 0
    %v620 = vsel %vm291, %v136, 0
    %v623 = vsel %vm291, %v137, 0
    %v626 = vsel %vm291, %v138, 0
    %v629 = vsel %vm291, %v139, 0
    %v632 = vsel %vm291, %v140, 0
    %v635 = vsel %vm291, %v141, 0
    %v638 = vsel %vm291, %v142, 0
    %v641 = vsel %vm291, %v143, 0
    %v644 = vsel %vm291, %v144, 0
    %v647 = vsel %vm291, %v145, 0
    %v650 = vsel %vm291, %v146, 0
    %v653 = vsel %vm291, %v147, 0
    %v656 = vsel %vm291, %v148, 0
    %v659 = vsel %vm291, %v149, 0
    %v662 = vsel %vm291, %v150, 0
    %v665 = vsel %vm291, %v151, 0
    %v668 = vsel %vm291, %v152, 0
    %v671 = vsel %vm291, %v153, 0
    %v674 = vsel %vm291, %v154, 0
    %v677 = vsel %vm291, %v155, 0
    %v680 = vsel %vm291, %v156, 0
    %v683 = vsel %vm291, %v157, 0
    %v686 = vsel %vm291, %v158, 0
    %v689 = vsel %vm291, %v159, 0
    %v692 = vsel %vm291, %v160, 0
    %v695 = vsel %vm291, %v161, 0
    %v698 = vsel %vm291, %v162, 0
    %v701 = vsel %vm291, %v163, 0
    %v704 = vsel %vm291, %v164, 0
    %v707 = vsel %vm291, %v165, 0
    %v710 = vsel %vm291, %v166, 0
    %v713 = vsel %vm291, %v167, 0
    %v716 = vsel %vm291, %v168, 0
    %v719 = vsel %vm291, %v169, 0
    %v722 = vsel %vm291, %v170, 0
    %v725 = vsel %vm291, %v171, 0
    %v728 = vsel %vm291, %v172, 0
    %v731 = vsel %vm291, %v173, 0
    %v734 = vsel %vm291, %v174, 0
    %v737 = vsel %vm291, %v175, 0
    %v740 = vsel %vm291, %v176, 0
    %v743 = vsel %vm291, %v177, 0
    %v746 = vsel %vm291, %v178, 0
    %v749 = vsel %vm291, %v179, 0
    %v752 = vsel %vm291, %v180, 0
    %v755 = vsel %vm291, %v181, 0
    %v758 = vsel %vm291, %v182, 0
    %v761 = vsel %vm291, %v183, 0
    %v764 = vsel %vm291, %v184, 0
    %v767 = vsel %vm291, %v185, 0
    %v770 = vsel %vm291, %v186, 0
    %v773 = vsel %vm291, %v187, 0
    %v776 = vsel %vm291, %v188, 0
    %v779 = vsel %vm291, %v189, 0
    %v782 = vsel %vm291, %v190, 0
    %v785 = vsel %vm291, %v191, 0
    %v788 = vsel %vm291, %v192, 0
    %v791 = vsel %vm291, %v193, 0
    %v794 = vsel %vm291, %v194, 0
    %v797 = vsel %vm291, %v195, 0
    %v800 = vsel %vm291, %v196, 0
    %v803 = vsel %vm291, %v197, 0
    %v806 = vsel %vm291, %v198, 0
    %v809 = vsel %vm291, %v199, 0
    %v812 = vsel %vm291, %v200, 0
    %v815 = vsel %vm291, %v201, 0
    %v818 = vsel %vm291, %v202, 0
    %v821 = vsel %vm291, %v203, 0
    %v824 = vsel %vm291, %v204, 0
    %v827 = vsel %vm291, %v205, 0
    %v830 = vsel %vm291, %v206, 0
    %v833 = vsel %vm291, %v207, 0
    %v836 = vsel %vm291, %v208, 0
    %v839 = vsel %vm291, %v209, 0
    %v842 = vsel %vm291, %v210, 0
    %v845 = vsel %vm291, %v211, 0
    %v848 = vsel %vm291, %v212, 0
    %v851 = vsel %vm291, %v213, 0
    %v854 = vsel %vm291, %v214, 0
    %v857 = vsel %vm291, %v215, 0
    %v860 = vsel %vm291, %v216, 0
    %v863 = vsel %vm291, %v217, 0
    %v866 = vsel %vm291, %v218, 0
    %v869 = vsel %vm291, %v219, 0
    %v872 = vsel %vm291, %v220, 0
    %v875 = vsel %vm291, %v221, 0
    %v878 = vsel %vm291, %v222, 0
    %v881 = vsel %vm291, %v223, 0
    %v884 = vsel %vm291, %v224, 0
    %v887 = vsel %vm291, %v225, 0
    %v890 = vsel %vm291, %v226, 0
    %v893 = vsel %vm291, %v227, 0
    %v896 = vsel %vm291, %v228, 0
    %v899 = vsel %vm291, %v229, 0
    %v902 = vsel %vm291, %v230, 0
    %v905 = vsel %vm291, %v231, 0
    %v908 = vsel %vm291, %v232, 0
    %v911 = vsel %vm291, %v233, 0
    %v914 = vsel %vm291, %v234, 0
    %v917 = vsel %vm291, %v235, 0
    %v920 = vsel %vm291, %v236, 0
    %v923 = vsel %vm291, %v237, 0
    %v926 = vsel %vm291, %v238, 0
    %v929 = vsel %vm291, %v239, 0
    %v932 = vsel %vm291, %v240, 0
    %v935 = vsel %vm291, %v241, 0
    %v938 = vsel %vm291, %v242, 0
    %v941 = vsel %vm291, %v243, 0
    %v944 = vsel %vm291, %v244, 0
    %v947 = vsel %vm291, %v245, 0
    %v950 = vsel %vm291, %v246, 0
    %v953 = vsel %vm291, %v247, 0
    %v956 = vsel %vm291, %v248, 0
    %v959 = vsel %vm291, %v249, 0
    %v962 = vsel %vm291, %v250, 0
    %v965 = vsel %vm291, %v251, 0
    %v968 = vsel %vm291, %v252, 0
    %v971 = vsel %vm291, %v253, 0
    %v974 = vsel %vm291, %v254, 0
    %v977 = vsel %vm291, %v255, 0
    %v980 = vsel %vm291, %v256, 0
    %v983 = vsel %vm291, %v257, 0
    %v986 = vsel %vm291, %v258, 0
    %v989 = vsel %vm291, %v259, 0
    %v992 = vsel %vm291, %v260, 0
    %v995 = vsel %vm291, %v261, 0
    %v998 = vsel %vm291, %v262, 0
    %v1001 = vsel %vm291, %v263, 0
    %v1004 = vsel %vm291, %v264, 0
    %v1007 = vsel %vm291, %v265, 0
    %v1010 = vsel %vm291, %v266, 0
    %v1013 = vsel %vm291, %v267, 0
    %v1016 = vsel %vm291, %v268, 0
    %v1019 = vsel %vm291, %v269, 0
    %v1022 = vsel %vm291, %v270, 0
    %v1025 = vsel %vm291, %v271, 0
    %v1028 = vsel %vm291, %v272, 0
    %v1031 = vsel %vm291, %v273, 0
    %v1034 = vsel %vm291, %v274, 0
    %v1037 = vsel %vm291, %v275, 0
    %v1040 = vsel %vm291, %v276, 0
    %v1043 = vsel %vm291, %v277, 0
    %v1046 = vsel %vm291, %v278, 0
    %v1049 = vsel %vm291, %v279, 0
    %v1052 = vsel %vm291, %v280, 0
    %v1055 = vsel %vm291, %v281, 0
    %v1058 = vsel %vm291, %v282, 0
    %1060 = vmatprep.subr.mxu0 0.0
    %1061 = vmatpush1.msra.mxu0 %v283
    %1062 = vmatprep.subr.mxu0 0.0
    %1063 = vmatpush1.msra.mxu0 0.0
    %1064 = vmatprep.subr.mxu0 0.0
    %1065 = vmatpush1.msra.mxu0 0.0
    %1066 = vmatprep.subr.mxu0 0.0
    %1067 = vmatpush1.msra.mxu0 0.0
    %1068 = vmatprep.subr.mxu0 0.0
    %1069 = vmatpush1.msra.mxu0 0.0
    %1070 = vmatprep.subr.mxu0 0.0
    %1071 = vmatpush1.msra.mxu0 0.0
    %1072 = vmatprep.subr.mxu0 0.0
    %1073 = vmatpush1.msra.mxu0 0.0
    %1074 = vmatprep.subr.mxu0 0.0
    %1075 = vmatpush1.msra.mxu0 0.0
    %1076 = vmatprep.subr.mxu0 0.0
    %1077 = vmatpush1.msra.mxu0 0.0
    %1078 = vmatprep.subr.mxu0 0.0
    %1079 = vmatpush1.msra.mxu0 0.0
    %1080 = vmatprep.subr.mxu0 0.0
    %1081 = vmatpush1.msra.mxu0 0.0
    %1082 = vmatprep.subr.mxu0 0.0
    %1083 = vmatpush1.msra.mxu0 0.0
    %1084 = vmatprep.subr.mxu0 0.0
    %1085 = vmatpush1.msra.mxu0 0.0
    %1086 = vmatprep.subr.mxu0 0.0
    %1087 = vmatpush1.msra.mxu0 0.0
    %1088 = vmatprep.subr.mxu0 0.0
    %1089 = vmatpush1.msra.mxu0 0.0
    %1090 = vmatprep.subr.mxu0 0.0
    %1091 = vmatpush1.msra.mxu0 0.0
    %1092 = vmatprep.subr.mxu0 0.0
    %1093 = vmatpush1.msra.mxu0 0.0
    %1094 = vmatprep.subr.mxu0 0.0
    %1095 = vmatpush1.msra.mxu0 0.0
    %1096 = vmatprep.subr.mxu0 0.0
    %1097 = vmatpush1.msra.mxu0 0.0
    %1098 = vmatprep.subr.mxu0 0.0
    %1099 = vmatpush1.msra.mxu0 0.0
    %1100 = vmatprep.subr.mxu0 0.0
    %1101 = vmatpush1.msra.mxu0 0.0
    %1102 = vmatprep.subr.mxu0 0.0
    %1103 = vmatpush1.msra.mxu0 0.0
    %1104 = vmatprep.subr.mxu0 0.0
    %1105 = vmatpush1.msra.mxu0 0.0
    %1106 = vmatprep.subr.mxu0 0.0
    %1107 = vmatpush1.msra.mxu0 0.0
    %1108 = vmatprep.subr.mxu0 0.0
    %1109 = vmatpush1.msra.mxu0 0.0
    %1110 = vmatprep.subr.mxu0 0.0
    %1111 = vmatpush1.msra.mxu0 0.0
    %1112 = vmatprep.subr.mxu0 0.0
    %1113 = vmatpush1.msra.mxu0 0.0
    %1114 = vmatprep.subr.mxu0 0.0
    %1115 = vmatpush1.msra.mxu0 0.0
    %1116 = vmatprep.subr.mxu0 0.0
    %1117 = vmatpush1.msra.mxu0 0.0
    %1118 = vmatprep.subr.mxu0 0.0
    %1119 = vmatpush1.msra.mxu0 0.0
    %1120 = vmatprep.subr.mxu0 0.0
    %1121 = vmatpush1.msra.mxu0 0.0
    %1122 = vmatprep.subr.mxu0 0.0
    %1123 = vmatpush1.msra.mxu0 0.0
    %1124 = vmatprep.mubr.f32.mxu0 0.0
    %1125 = vmatmul.mubr.f32.gmra.mrb[0].mxu0 %v293
    %v1126 = vpop.f32.mrb[0].mxu0
    %v1127 = vadd.f32 %v289, %v1126
    %v1128 = vpop.f32.mrb[0].mxu0
    %1129 = vmatprep.mubr.f32.mxu0 0.0
    %1130 = vmatmul.mubr.f32.gmra.mrb[0].mxu0 %v296
    %v1131 = vpop.f32.mrb[0].mxu0
    %v1132 = vadd.f32 %v289, %v1131
    %v1133 = vpop.f32.mrb[0].mxu0
    %1134 = vmatprep.mubr.f32.mxu0 0.0
    %1135 = vmatmul.mubr.f32.gmra.mrb[0].mxu0 %v299
    %v1136 = vpop.f32.mrb[0].mxu0
    %v1137 = vadd.f32 %v289, %v1136
    %v1138 = vpop.f32.mrb[0].mxu0
    %1139 = vmatprep.mubr.f32.mxu0 0.0
    %1140 = vmatmul.mubr.f32.gmra.mrb[0].mxu0 %v302
    %v1141 = vpop.f32.mrb[0].mxu0
    %v1142 = vadd.f32 %v289, %v1141
    %v1143 = vpop.f32.mrb[0].mxu0
    %1144 = vmatprep.mubr.f32.mxu0 0.0
    %1145 = vmatmul.mubr.f32.gmra.mrb[0].mxu0 %v305
    %v1146 = vpop.f32.mrb[0].mxu0
    %v1147 = vadd.f32 %v289, %v1146
    %v1148 = vpop.f32.mrb[0].mxu0
    %1149 = vmatprep.mubr.f32.mxu0 0.0
    %1150 = vmatmul.mubr.f32.gmra.mrb[0].mxu0 %v308
    %v1151 = vpop.f32.mrb[0].mxu0
    %v1152 = vadd.f32 %v289, %v1151
    %v1153 = vpop.f32.mrb[0].mxu0
    %1154 = vmatprep.mubr.f32.mxu0 0.0
    %1155 = vmatmul.mubr.f32.gmra.mrb[0].mxu0 %v311
    %v1156 = vpop.f32.mrb[0].mxu0
    %v1157 = vadd.f32 %v289, %v1156
    %v1158 = vpop.f32.mrb[0].mxu0
    %1159 = vmatprep.mubr.f32.mxu0 0.0
    %1160 = vmatmul.mubr.f32.gmra.mrb[0].mxu0 %v314
    %v1161 = vpop.f32.mrb[0].mxu0
    %v1162 = vadd.f32 %v289, %v1161
    %v1163 = vpop.f32.mrb[0].mxu0
    %1164 = vmatprep.mubr.f32.mxu0 0.0
    %1165 = vmatmul.mubr.f32.gmra.mrb[0].mxu0 %v317
    %v1166 = vpop.f32.mrb[0].mxu0
    %v1167 = vadd.f32 %v289, %v1166
    %v1168 = vpop.f32.mrb[0].mxu0
    %1169 = vmatprep.mubr.f32.mxu0 0.0
    %1170 = vmatmul.mubr.f32.gmra.mrb[0].mxu0 %v320
    %v1171 = vpop.f32.mrb[0].mxu0
    %v1172 = vadd.f32 %v289, %v1171
    %v1173 = vpop.f32.mrb[0].mxu0
    %1174 = vmatprep.mubr.f32.mxu0 0.0
    %1175 = vmatmul.mubr.f32.gmra.mrb[0].mxu0 %v323
    %v1176 = vpop.f32.mrb[0].mxu0
    %v1177 = vadd.f32 %v289, %v1176
    %v1178 = vpop.f32.mrb[0].mxu0
    %1179 = vmatprep.mubr.f32.mxu0 0.0
    %1180 = vmatmul.mubr.f32.gmra.mrb[0].mxu0 %v326
    %v1181 = vpop.f32.mrb[0].mxu0
    %v1182 = vadd.f32 %v289, %v1181
    %v1183 = vpop.f32.mrb[0].mxu0
    %1184 = vmatprep.mubr.f32.mxu0 0.0
    %1185 = vmatmul.mubr.f32.gmra.mrb[0].mxu0 %v329
    %v1186 = vpop.f32.mrb[0].mxu0
    %v1187 = vadd.f32 %v289, %v1186
    %v1188 = vpop.f32.mrb[0].mxu0
    %1189 = vmatprep.mubr.f32.mxu0 0.0
    %1190 = vmatmul.mubr.f32.gmra.mrb[0].mxu0 %v332
    %v1191 = vpop.f32.mrb[0].mxu0
    %v1192 = vadd.f32 %v289, %v1191
    %v1193 = vpop.f32.mrb[0].mxu0
    %1194 = vmatprep.mubr.f32.mxu0 0.0
    %1195 = vmatmul.mubr.f32.gmra.mrb[0].mxu0 %v335
    %v1196 = vpop.f32.mrb[0].mxu0
    %v1197 = vadd.f32 %v289, %v1196
    %v1198 = vpop.f32.mrb[0].mxu0
    %1199 = vmatprep.mubr.f32.mxu0 0.0
    %1200 = vmatmul.mubr.f32.gmra.mrb[0].mxu0 %v338
    %v1201 = vpop.f32.mrb[0].mxu0
    %v1202 = vadd.f32 %v289, %v1201
    %v1203 = vpop.f32.mrb[0].mxu0
    %1204 = vmatprep.mubr.f32.mxu0 0.0
    %1205 = vmatmul.mubr.f32.gmra.mrb[0].mxu0 %v341
    %v1206 = vpop.f32.mrb[0].mxu0
    %v1207 = vadd.f32 %v289, %v1206
    %v1208 = vpop.f32.mrb[0].mxu0
    %1209 = vmatprep.mubr.f32.mxu0 0.0
    %1210 = vmatmul.mubr.f32.gmra.mrb[0].mxu0 %v344
    %v1211 = vpop.f32.mrb[0].mxu0
    %v1212 = vadd.f32 %v289, %v1211
    %v1213 = vpop.f32.mrb[0].mxu0
    %1214 = vmatprep.mubr.f32.mxu0 0.0
    %1215 = vmatmul.mubr.f32.gmra.mrb[0].mxu0 %v347
    %v1216 = vpop.f32.mrb[0].mxu0
    %v1217 = vadd.f32 %v289, %v1216
    %v1218 = vpop.f32.mrb[0].mxu0
    %1219 = vmatprep.mubr.f32.mxu0 0.0
    %1220 = vmatmul.mubr.f32.gmra.mrb[0].mxu0 %v350
    %v1221 = vpop.f32.mrb[0].mxu0
    %v1222 = vadd.f32 %v289, %v1221
    %v1223 = vpop.f32.mrb[0].mxu0
    %1224 = vmatprep.mubr.f32.mxu0 0.0
    %1225 = vmatmul.mubr.f32.gmra.mrb[0].mxu0 %v353
    %v1226 = vpop.f32.mrb[0].mxu0
    %v1227 = vadd.f32 %v289, %v1226
    %v1228 = vpop.f32.mrb[0].mxu0
    %1229 = vmatprep.mubr.f32.mxu0 0.0
    %1230 = vmatmul.mubr.f32.gmra.mrb[0].mxu0 %v356
    %v1231 = vpop.f32.mrb[0].mxu0
    %v1232 = vadd.f32 %v289, %v1231
    %v1233 = vpop.f32.mrb[0].mxu0
    %1234 = vmatprep.mubr.f32.mxu0 0.0
    %1235 = vmatmul.mubr.f32.gmra.mrb[0].mxu0 %v359
    %v1236 = vpop.f32.mrb[0].mxu0
    %v1237 = vadd.f32 %v289, %v1236
    %v1238 = vpop.f32.mrb[0].mxu0
    %1239 = vmatprep.mubr.f32.mxu0 0.0
    %1240 = vmatmul.mubr.f32.gmra.mrb[0].mxu0 %v362
    %v1241 = vpop.f32.mrb[0].mxu0
    %v1242 = vadd.f32 %v289, %v1241
    %v1243 = vpop.f32.mrb[0].mxu0
    %1244 = vmatprep.mubr.f32.mxu0 0.0
    %1245 = vmatmul.mubr.f32.gmra.mrb[0].mxu0 %v365
    %v1246 = vpop.f32.mrb[0].mxu0
    %v1247 = vadd.f32 %v289, %v1246
    %v1248 = vpop.f32.mrb[0].mxu0
    %1249 = vmatprep.mubr.f32.mxu0 0.0
    %1250 = vmatmul.mubr.f32.gmra.mrb[0].mxu0 %v368
    %v1251 = vpop.f32.mrb[0].mxu0
    %v1252 = vadd.f32 %v289, %v1251
    %v1253 = vpop.f32.mrb[0].mxu0
    %1254 = vmatprep.mubr.f32.mxu0 0.0
    %1255 = vmatmul.mubr.f32.gmra.mrb[0].mxu0 %v371
    %v1256 = vpop.f32.mrb[0].mxu0
    %v1257 = vadd.f32 %v289, %v1256
    %v1258 = vpop.f32.mrb[0].mxu0
    %1259 = vmatprep.mubr.f32.mxu0 0.0
    %1260 = vmatmul.mubr.f32.gmra.mrb[0].mxu0 %v374
    %v1261 = vpop.f32.mrb[0].mxu0
    %v1262 = vadd.f32 %v289, %v1261
    %v1263 = vpop.f32.mrb[0].mxu0
    %1264 = vmatprep.mubr.f32.mxu0 0.0
    %1265 = vmatmul.mubr.f32.gmra.mrb[0].mxu0 %v377
    %v1266 = vpop.f32.mrb[0].mxu0
    %v1267 = vadd.f32 %v289, %v1266
    %v1268 = vpop.f32.mrb[0].mxu0
    %1269 = vmatprep.mubr.f32.mxu0 0.0
    %1270 = vmatmul.mubr.f32.gmra.mrb[0].mxu0 %v380
    %v1271 = vpop.f32.mrb[0].mxu0
    %v1272 = vadd.f32 %v289, %v1271
    %v1273 = vpop.f32.mrb[0].mxu0
    %1274 = vmatprep.mubr.f32.mxu0 0.0
    %1275 = vmatmul.mubr.f32.gmra.mrb[0].mxu0 %v383
    %v1276 = vpop.f32.mrb[0].mxu0
    %v1277 = vadd.f32 %v289, %v1276
    %v1278 = vpop.f32.mrb[0].mxu0
    %1279 = vmatprep.mubr.f32.mxu0 0.0
    %1280 = vmatmul.mubr.f32.gmra.mrb[0].mxu0 %v386
    %v1281 = vpop.f32.mrb[0].mxu0
    %v1282 = vadd.f32 %v289, %v1281
    %v1283 = vpop.f32.mrb[0].mxu0
    %1284 = vmatprep.mubr.f32.mxu0 0.0
    %1285 = vmatmul.mubr.f32.gmra.mrb[0].mxu0 %v389
    %v1286 = vpop.f32.mrb[0].mxu0
    %v1287 = vadd.f32 %v289, %v1286
    %v1288 = vpop.f32.mrb[0].mxu0
    %1289 = vmatprep.mubr.f32.mxu0 0.0
    %1290 = vmatmul.mubr.f32.gmra.mrb[0].mxu0 %v392
    %v1291 = vpop.f32.mrb[0].mxu0
    %v1292 = vadd.f32 %v289, %v1291
    %v1293 = vpop.f32.mrb[0].mxu0
    %1294 = vmatprep.mubr.f32.mxu0 0.0
    %1295 = vmatmul.mubr.f32.gmra.mrb[0].mxu0 %v395
    %v1296 = vpop.f32.mrb[0].mxu0
    %v1297 = vadd.f32 %v289, %v1296
    %v1298 = vpop.f32.mrb[0].mxu0
    %1299 = vmatprep.mubr.f32.mxu0 0.0
    %1300 = vmatmul.mubr.f32.gmra.mrb[0].mxu0 %v398
    %v1301 = vpop.f32.mrb[0].mxu0
    %v1302 = vadd.f32 %v289, %v1301
    %v1303 = vpop.f32.mrb[0].mxu0
    %1304 = vmatprep.mubr.f32.mxu0 0.0
    %1305 = vmatmul.mubr.f32.gmra.mrb[0].mxu0 %v401
    %v1306 = vpop.f32.mrb[0].mxu0
    %v1307 = vadd.f32 %v289, %v1306
    %v1308 = vpop.f32.mrb[0].mxu0
    %1309 = vmatprep.mubr.f32.mxu0 0.0
    %1310 = vmatmul.mubr.f32.gmra.mrb[0].mxu0 %v404
    %v1311 = vpop.f32.mrb[0].mxu0
    %v1312 = vadd.f32 %v289, %v1311
    %v1313 = vpop.f32.mrb[0].mxu0
    %1314 = vmatprep.mubr.f32.mxu0 0.0
    %1315 = vmatmul.mubr.f32.gmra.mrb[0].mxu0 %v407
    %v1316 = vpop.f32.mrb[0].mxu0
    %v1317 = vadd.f32 %v289, %v1316
    %v1318 = vpop.f32.mrb[0].mxu0
    %1319 = vmatprep.mubr.f32.mxu0 0.0
    %1320 = vmatmul.mubr.f32.gmra.mrb[0].mxu0 %v410
    %v1321 = vpop.f32.mrb[0].mxu0
    %v1322 = vadd.f32 %v289, %v1321
    %v1323 = vpop.f32.mrb[0].mxu0
    %1324 = vmatprep.mubr.f32.mxu0 0.0
    %1325 = vmatmul.mubr.f32.gmra.mrb[0].mxu0 %v413
    %v1326 = vpop.f32.mrb[0].mxu0
    %v1327 = vadd.f32 %v289, %v1326
    %v1328 = vpop.f32.mrb[0].mxu0
    %1329 = vmatprep.mubr.f32.mxu0 0.0
    %1330 = vmatmul.mubr.f32.gmra.mrb[0].mxu0 %v416
    %v1331 = vpop.f32.mrb[0].mxu0
    %v1332 = vadd.f32 %v289, %v1331
    %v1333 = vpop.f32.mrb[0].mxu0
    %1334 = vmatprep.mubr.f32.mxu0 0.0
    %1335 = vmatmul.mubr.f32.gmra.mrb[0].mxu0 %v419
    %v1336 = vpop.f32.mrb[0].mxu0
    %v1337 = vadd.f32 %v289, %v1336
    %v1338 = vpop.f32.mrb[0].mxu0
    %1339 = vmatprep.mubr.f32.mxu0 0.0
    %1340 = vmatmul.mubr.f32.gmra.mrb[0].mxu0 %v422
    %v1341 = vpop.f32.mrb[0].mxu0
    %v1342 = vadd.f32 %v289, %v1341
    %v1343 = vpop.f32.mrb[0].mxu0
    %1344 = vmatprep.mubr.f32.mxu0 0.0
    %1345 = vmatmul.mubr.f32.gmra.mrb[0].mxu0 %v425
    %v1346 = vpop.f32.mrb[0].mxu0
    %v1347 = vadd.f32 %v289, %v1346
    %v1348 = vpop.f32.mrb[0].mxu0
    %1349 = vmatprep.mubr.f32.mxu0 0.0
    %1350 = vmatmul.mubr.f32.gmra.mrb[0].mxu0 %v428
    %v1351 = vpop.f32.mrb[0].mxu0
    %v1352 = vadd.f32 %v289, %v1351
    %v1353 = vpop.f32.mrb[0].mxu0
    %1354 = vmatprep.mubr.f32.mxu0 0.0
    %1355 = vmatmul.mubr.f32.gmra.mrb[0].mxu0 %v431
    %v1356 = vpop.f32.mrb[0].mxu0
    %v1357 = vadd.f32 %v289, %v1356
    %v1358 = vpop.f32.mrb[0].mxu0
    %1359 = vmatprep.mubr.f32.mxu0 0.0
    %1360 = vmatmul.mubr.f32.gmra.mrb[0].mxu0 %v434
    %v1361 = vpop.f32.mrb[0].mxu0
    %v1362 = vadd.f32 %v289, %v1361
    %v1363 = vpop.f32.mrb[0].mxu0
    %1364 = vmatprep.mubr.f32.mxu0 0.0
    %1365 = vmatmul.mubr.f32.gmra.mrb[0].mxu0 %v437
    %v1366 = vpop.f32.mrb[0].mxu0
    %v1367 = vadd.f32 %v289, %v1366
    %v1368 = vpop.f32.mrb[0].mxu0
    %1369 = vmatprep.mubr.f32.mxu0 0.0
    %1370 = vmatmul.mubr.f32.gmra.mrb[0].mxu0 %v440
    %v1371 = vpop.f32.mrb[0].mxu0
    %v1372 = vadd.f32 %v289, %v1371
    %v1373 = vpop.f32.mrb[0].mxu0
    %1374 = vmatprep.mubr.f32.mxu0 0.0
    %1375 = vmatmul.mubr.f32.gmra.mrb[0].mxu0 %v443
    %v1376 = vpop.f32.mrb[0].mxu0
    %v1377 = vadd.f32 %v289, %v1376
    %v1378 = vpop.f32.mrb[0].mxu0
    %1379 = vmatprep.mubr.f32.mxu0 0.0
    %1380 = vmatmul.mubr.f32.gmra.mrb[0].mxu0 %v446
    %v1381 = vpop.f32.mrb[0].mxu0
    %v1382 = vadd.f32 %v289, %v1381
    %v1383 = vpop.f32.mrb[0].mxu0
    %1384 = vmatprep.mubr.f32.mxu0 0.0
    %1385 = vmatmul.mubr.f32.gmra.mrb[0].mxu0 %v449
    %v1386 = vpop.f32.mrb[0].mxu0
    %v1387 = vadd.f32 %v289, %v1386
    %v1388 = vpop.f32.mrb[0].mxu0
    %1389 = vmatprep.mubr.f32.mxu0 0.0
    %1390 = vmatmul.mubr.f32.gmra.mrb[0].mxu0 %v452
    %v1391 = vpop.f32.mrb[0].mxu0
    %v1392 = vadd.f32 %v289, %v1391
    %v1393 = vpop.f32.mrb[0].mxu0
    %1394 = vmatprep.mubr.f32.mxu0 0.0
    %1395 = vmatmul.mubr.f32.gmra.mrb[0].mxu0 %v455
    %v1396 = vpop.f32.mrb[0].mxu0
    %v1397 = vadd.f32 %v289, %v1396
    %v1398 = vpop.f32.mrb[0].mxu0
    %1399 = vmatprep.mubr.f32.mxu0 0.0
    %1400 = vmatmul.mubr.f32.gmra.mrb[0].mxu0 %v458
    %v1401 = vpop.f32.mrb[0].mxu0
    %v1402 = vadd.f32 %v289, %v1401
    %v1403 = vpop.f32.mrb[0].mxu0
    %1404 = vmatprep.mubr.f32.mxu0 0.0
    %1405 = vmatmul.mubr.f32.gmra.mrb[0].mxu0 %v461
    %v1406 = vpop.f32.mrb[0].mxu0
    %v1407 = vadd.f32 %v289, %v1406
    %v1408 = vpop.f32.mrb[0].mxu0
    %1409 = vmatprep.mubr.f32.mxu0 0.0
    %1410 = vmatmul.mubr.f32.gmra.mrb[0].mxu0 %v464
    %v1411 = vpop.f32.mrb[0].mxu0
    %v1412 = vadd.f32 %v289, %v1411
    %v1413 = vpop.f32.mrb[0].mxu0
    %1414 = vmatprep.mubr.f32.mxu0 0.0
    %1415 = vmatmul.mubr.f32.gmra.mrb[0].mxu0 %v467
    %v1416 = vpop.f32.mrb[0].mxu0
    %v1417 = vadd.f32 %v289, %v1416
    %v1418 = vpop.f32.mrb[0].mxu0
    %1419 = vmatprep.mubr.f32.mxu0 0.0
    %1420 = vmatmul.mubr.f32.gmra.mrb[0].mxu0 %v470
    %v1421 = vpop.f32.mrb[0].mxu0
    %v1422 = vadd.f32 %v289, %v1421
    %v1423 = vpop.f32.mrb[0].mxu0
    %1424 = vmatprep.mubr.f32.mxu0 0.0
    %1425 = vmatmul.mubr.f32.gmra.mrb[0].mxu0 %v473
    %v1426 = vpop.f32.mrb[0].mxu0
    %v1427 = vadd.f32 %v289, %v1426
    %v1428 = vpop.f32.mrb[0].mxu0
    %1429 = vmatprep.mubr.f32.mxu0 0.0
    %1430 = vmatmul.mubr.f32.gmra.mrb[0].mxu0 %v476
    %v1431 = vpop.f32.mrb[0].mxu0
    %v1432 = vadd.f32 %v289, %v1431
    %v1433 = vpop.f32.mrb[0].mxu0
    %1434 = vmatprep.mubr.f32.mxu0 0.0
    %1435 = vmatmul.mubr.f32.gmra.mrb[0].mxu0 %v479
    %v1436 = vpop.f32.mrb[0].mxu0
    %v1437 = vadd.f32 %v289, %v1436
    %v1438 = vpop.f32.mrb[0].mxu0
    %1439 = vmatprep.mubr.f32.mxu0 0.0
    %1440 = vmatmul.mubr.f32.gmra.mrb[0].mxu0 %v482
    %v1441 = vpop.f32.mrb[0].mxu0
    %v1442 = vadd.f32 %v289, %v1441
    %v1443 = vpop.f32.mrb[0].mxu0
    %1444 = vmatprep.mubr.f32.mxu0 0.0
    %1445 = vmatmul.mubr.f32.gmra.mrb[0].mxu0 %v485
    %v1446 = vpop.f32.mrb[0].mxu0
    %v1447 = vadd.f32 %v289, %v1446
    %v1448 = vpop.f32.mrb[0].mxu0
    %1449 = vmatprep.mubr.f32.mxu0 0.0
    %1450 = vmatmul.mubr.f32.gmra.mrb[0].mxu0 %v488
    %v1451 = vpop.f32.mrb[0].mxu0
    %v1452 = vadd.f32 %v289, %v1451
    %v1453 = vpop.f32.mrb[0].mxu0
    %1454 = vmatprep.mubr.f32.mxu0 0.0
    %1455 = vmatmul.mubr.f32.gmra.mrb[0].mxu0 %v491
    %v1456 = vpop.f32.mrb[0].mxu0
    %v1457 = vadd.f32 %v289, %v1456
    %v1458 = vpop.f32.mrb[0].mxu0
    %1459 = vmatprep.mubr.f32.mxu0 0.0
    %1460 = vmatmul.mubr.f32.gmra.mrb[0].mxu0 %v494
    %v1461 = vpop.f32.mrb[0].mxu0
    %v1462 = vadd.f32 %v289, %v1461
    %v1463 = vpop.f32.mrb[0].mxu0
    %1464 = vmatprep.mubr.f32.mxu0 0.0
    %1465 = vmatmul.mubr.f32.gmra.mrb[0].mxu0 %v497
    %v1466 = vpop.f32.mrb[0].mxu0
    %v1467 = vadd.f32 %v289, %v1466
    %v1468 = vpop.f32.mrb[0].mxu0
    %1469 = vmatprep.mubr.f32.mxu0 0.0
    %1470 = vmatmul.mubr.f32.gmra.mrb[0].mxu0 %v500
    %v1471 = vpop.f32.mrb[0].mxu0
    %v1472 = vadd.f32 %v289, %v1471
    %v1473 = vpop.f32.mrb[0].mxu0
    %1474 = vmatprep.mubr.f32.mxu0 0.0
    %1475 = vmatmul.mubr.f32.gmra.mrb[0].mxu0 %v503
    %v1476 = vpop.f32.mrb[0].mxu0
    %v1477 = vadd.f32 %v289, %v1476
    %v1478 = vpop.f32.mrb[0].mxu0
    %1479 = vmatprep.mubr.f32.mxu0 0.0
    %1480 = vmatmul.mubr.f32.gmra.mrb[0].mxu0 %v506
    %v1481 = vpop.f32.mrb[0].mxu0
    %v1482 = vadd.f32 %v289, %v1481
    %v1483 = vpop.f32.mrb[0].mxu0
    %1484 = vmatprep.mubr.f32.mxu0 0.0
    %1485 = vmatmul.mubr.f32.gmra.mrb[0].mxu0 %v509
    %v1486 = vpop.f32.mrb[0].mxu0
    %v1487 = vadd.f32 %v289, %v1486
    %v1488 = vpop.f32.mrb[0].mxu0
    %1489 = vmatprep.mubr.f32.mxu0 0.0
    %1490 = vmatmul.mubr.f32.gmra.mrb[0].mxu0 %v512
    %v1491 = vpop.f32.mrb[0].mxu0
    %v1492 = vadd.f32 %v289, %v1491
    %v1493 = vpop.f32.mrb[0].mxu0
    %1494 = vmatprep.mubr.f32.mxu0 0.0
    %1495 = vmatmul.mubr.f32.gmra.mrb[0].mxu0 %v515
    %v1496 = vpop.f32.mrb[0].mxu0
    %v1497 = vadd.f32 %v289, %v1496
    %v1498 = vpop.f32.mrb[0].mxu0
    %1499 = vmatprep.mubr.f32.mxu0 0.0
    %1500 = vmatmul.mubr.f32.gmra.mrb[0].mxu0 %v518
    %v1501 = vpop.f32.mrb[0].mxu0
    %v1502 = vadd.f32 %v289, %v1501
    %v1503 = vpop.f32.mrb[0].mxu0
    %1504 = vmatprep.mubr.f32.mxu0 0.0
    %1505 = vmatmul.mubr.f32.gmra.mrb[0].mxu0 %v521
    %v1506 = vpop.f32.mrb[0].mxu0
    %v1507 = vadd.f32 %v289, %v1506
    %v1508 = vpop.f32.mrb[0].mxu0
    %1509 = vmatprep.mubr.f32.mxu0 0.0
    %1510 = vmatmul.mubr.f32.gmra.mrb[0].mxu0 %v524
    %v1511 = vpop.f32.mrb[0].mxu0
    %v1512 = vadd.f32 %v289, %v1511
    %v1513 = vpop.f32.mrb[0].mxu0
    %1514 = vmatprep.mubr.f32.mxu0 0.0
    %1515 = vmatmul.mubr.f32.gmra.mrb[0].mxu0 %v527
    %v1516 = vpop.f32.mrb[0].mxu0
    %v1517 = vadd.f32 %v289, %v1516
    %v1518 = vpop.f32.mrb[0].mxu0
    %1519 = vmatprep.mubr.f32.mxu0 0.0
    %1520 = vmatmul.mubr.f32.gmra.mrb[0].mxu0 %v530
    %v1521 = vpop.f32.mrb[0].mxu0
    %v1522 = vadd.f32 %v289, %v1521
    %v1523 = vpop.f32.mrb[0].mxu0
    %1524 = vmatprep.mubr.f32.mxu0 0.0
    %1525 = vmatmul.mubr.f32.gmra.mrb[0].mxu0 %v533
    %v1526 = vpop.f32.mrb[0].mxu0
    %v1527 = vadd.f32 %v289, %v1526
    %v1528 = vpop.f32.mrb[0].mxu0
    %1529 = vmatprep.mubr.f32.mxu0 0.0
    %1530 = vmatmul.mubr.f32.gmra.mrb[0].mxu0 %v536
    %v1531 = vpop.f32.mrb[0].mxu0
    %v1532 = vadd.f32 %v289, %v1531
    %v1533 = vpop.f32.mrb[0].mxu0
    %1534 = vmatprep.mubr.f32.mxu0 0.0
    %1535 = vmatmul.mubr.f32.gmra.mrb[0].mxu0 %v539
    %v1536 = vpop.f32.mrb[0].mxu0
    %v1537 = vadd.f32 %v289, %v1536
    %v1538 = vpop.f32.mrb[0].mxu0
    %1539 = vmatprep.mubr.f32.mxu0 0.0
    %1540 = vmatmul.mubr.f32.gmra.mrb[0].mxu0 %v542
    %v1541 = vpop.f32.mrb[0].mxu0
    %v1542 = vadd.f32 %v289, %v1541
    %v1543 = vpop.f32.mrb[0].mxu0
    %1544 = vmatprep.mubr.f32.mxu0 0.0
    %1545 = vmatmul.mubr.f32.gmra.mrb[0].mxu0 %v545
    %v1546 = vpop.f32.mrb[0].mxu0
    %v1547 = vadd.f32 %v289, %v1546
    %v1548 = vpop.f32.mrb[0].mxu0
    %1549 = vmatprep.mubr.f32.mxu0 0.0
    %1550 = vmatmul.mubr.f32.gmra.mrb[0].mxu0 %v548
    %v1551 = vpop.f32.mrb[0].mxu0
    %v1552 = vadd.f32 %v289, %v1551
    %v1553 = vpop.f32.mrb[0].mxu0
    %1554 = vmatprep.mubr.f32.mxu0 0.0
    %1555 = vmatmul.mubr.f32.gmra.mrb[0].mxu0 %v551
    %v1556 = vpop.f32.mrb[0].mxu0
    %v1557 = vadd.f32 %v289, %v1556
    %v1558 = vpop.f32.mrb[0].mxu0
    %1559 = vmatprep.mubr.f32.mxu0 0.0
    %1560 = vmatmul.mubr.f32.gmra.mrb[0].mxu0 %v554
    %v1561 = vpop.f32.mrb[0].mxu0
    %v1562 = vadd.f32 %v289, %v1561
    %v1563 = vpop.f32.mrb[0].mxu0
    %1564 = vmatprep.mubr.f32.mxu0 0.0
    %1565 = vmatmul.mubr.f32.gmra.mrb[0].mxu0 %v557
    %v1566 = vpop.f32.mrb[0].mxu0
    %v1567 = vadd.f32 %v289, %v1566
    %v1568 = vpop.f32.mrb[0].mxu0
    %1569 = vmatprep.mubr.f32.mxu0 0.0
    %1570 = vmatmul.mubr.f32.gmra.mrb[0].mxu0 %v560
    %v1571 = vpop.f32.mrb[0].mxu0
    %v1572 = vadd.f32 %v289, %v1571
    %v1573 = vpop.f32.mrb[0].mxu0
    %1574 = vmatprep.mubr.f32.mxu0 0.0
    %1575 = vmatmul.mubr.f32.gmra.mrb[0].mxu0 %v563
    %v1576 = vpop.f32.mrb[0].mxu0
    %v1577 = vadd.f32 %v289, %v1576
    %v1578 = vpop.f32.mrb[0].mxu0
    %1579 = vmatprep.mubr.f32.mxu0 0.0
    %1580 = vmatmul.mubr.f32.gmra.mrb[0].mxu0 %v566
    %v1581 = vpop.f32.mrb[0].mxu0
    %v1582 = vadd.f32 %v289, %v1581
    %v1583 = vpop.f32.mrb[0].mxu0
    %1584 = vmatprep.mubr.f32.mxu0 0.0
    %1585 = vmatmul.mubr.f32.gmra.mrb[0].mxu0 %v569
    %v1586 = vpop.f32.mrb[0].mxu0
    %v1587 = vadd.f32 %v289, %v1586
    %v1588 = vpop.f32.mrb[0].mxu0
    %1589 = vmatprep.mubr.f32.mxu0 0.0
    %1590 = vmatmul.mubr.f32.gmra.mrb[0].mxu0 %v572
    %v1591 = vpop.f32.mrb[0].mxu0
    %v1592 = vadd.f32 %v289, %v1591
    %v1593 = vpop.f32.mrb[0].mxu0
    %1594 = vmatprep.mubr.f32.mxu0 0.0
    %1595 = vmatmul.mubr.f32.gmra.mrb[0].mxu0 %v575
    %v1596 = vpop.f32.mrb[0].mxu0
    %v1597 = vadd.f32 %v289, %v1596
    %v1598 = vpop.f32.mrb[0].mxu0
    %1599 = vmatprep.mubr.f32.mxu0 0.0
    %1600 = vmatmul.mubr.f32.gmra.mrb[0].mxu0 %v578
    %v1601 = vpop.f32.mrb[0].mxu0
    %v1602 = vadd.f32 %v289, %v1601
    %v1603 = vpop.f32.mrb[0].mxu0
    %1604 = vmatprep.mubr.f32.mxu0 0.0
    %1605 = vmatmul.mubr.f32.gmra.mrb[0].mxu0 %v581
    %v1606 = vpop.f32.mrb[0].mxu0
    %v1607 = vadd.f32 %v289, %v1606
    %v1608 = vpop.f32.mrb[0].mxu0
    %1609 = vmatprep.mubr.f32.mxu0 0.0
    %1610 = vmatmul.mubr.f32.gmra.mrb[0].mxu0 %v584
    %v1611 = vpop.f32.mrb[0].mxu0
    %v1612 = vadd.f32 %v289, %v1611
    %v1613 = vpop.f32.mrb[0].mxu0
    %1614 = vmatprep.mubr.f32.mxu0 0.0
    %1615 = vmatmul.mubr.f32.gmra.mrb[0].mxu0 %v587
    %v1616 = vpop.f32.mrb[0].mxu0
    %v1617 = vadd.f32 %v289, %v1616
    %v1618 = vpop.f32.mrb[0].mxu0
    %1619 = vmatprep.mubr.f32.mxu0 0.0
    %1620 = vmatmul.mubr.f32.gmra.mrb[0].mxu0 %v590
    %v1621 = vpop.f32.mrb[0].mxu0
    %v1622 = vadd.f32 %v289, %v1621
    %v1623 = vpop.f32.mrb[0].mxu0
    %1624 = vmatprep.mubr.f32.mxu0 0.0
    %1625 = vmatmul.mubr.f32.gmra.mrb[0].mxu0 %v593
    %v1626 = vpop.f32.mrb[0].mxu0
    %v1627 = vadd.f32 %v289, %v1626
    %v1628 = vpop.f32.mrb[0].mxu0
    %1629 = vmatprep.mubr.f32.mxu0 0.0
    %1630 = vmatmul.mubr.f32.gmra.mrb[0].mxu0 %v596
    %v1631 = vpop.f32.mrb[0].mxu0
    %v1632 = vadd.f32 %v289, %v1631
    %v1633 = vpop.f32.mrb[0].mxu0
    %1634 = vmatprep.mubr.f32.mxu0 0.0
    %1635 = vmatmul.mubr.f32.gmra.mrb[0].mxu0 %v599
    %v1636 = vpop.f32.mrb[0].mxu0
    %v1637 = vadd.f32 %v289, %v1636
    %v1638 = vpop.f32.mrb[0].mxu0
    %1639 = vmatprep.mubr.f32.mxu0 0.0
    %1640 = vmatmul.mubr.f32.gmra.mrb[0].mxu0 %v602
    %v1641 = vpop.f32.mrb[0].mxu0
    %v1642 = vadd.f32 %v289, %v1641
    %v1643 = vpop.f32.mrb[0].mxu0
    %1644 = vmatprep.mubr.f32.mxu0 0.0
    %1645 = vmatmul.mubr.f32.gmra.mrb[0].mxu0 %v605
    %v1646 = vpop.f32.mrb[0].mxu0
    %v1647 = vadd.f32 %v289, %v1646
    %v1648 = vpop.f32.mrb[0].mxu0
    %1649 = vmatprep.mubr.f32.mxu0 0.0
    %1650 = vmatmul.mubr.f32.gmra.mrb[0].mxu0 %v608
    %v1651 = vpop.f32.mrb[0].mxu0
    %v1652 = vadd.f32 %v289, %v1651
    %v1653 = vpop.f32.mrb[0].mxu0
    %1654 = vmatprep.mubr.f32.mxu0 0.0
    %1655 = vmatmul.mubr.f32.gmra.mrb[0].mxu0 %v611
    %v1656 = vpop.f32.mrb[0].mxu0
    %v1657 = vadd.f32 %v289, %v1656
    %v1658 = vpop.f32.mrb[0].mxu0
    %1659 = vmatprep.mubr.f32.mxu0 0.0
    %1660 = vmatmul.mubr.f32.gmra.mrb[0].mxu0 %v614
    %v1661 = vpop.f32.mrb[0].mxu0
    %v1662 = vadd.f32 %v289, %v1661
    %v1663 = vpop.f32.mrb[0].mxu0
    %1664 = vmatprep.mubr.f32.mxu0 0.0
    %1665 = vmatmul.mubr.f32.gmra.mrb[0].mxu0 %v617
    %v1666 = vpop.f32.mrb[0].mxu0
    %v1667 = vadd.f32 %v289, %v1666
    %v1668 = vpop.f32.mrb[0].mxu0
    %1669 = vmatprep.mubr.f32.mxu0 0.0
    %1670 = vmatmul.mubr.f32.gmra.mrb[0].mxu0 %v620
    %v1671 = vpop.f32.mrb[0].mxu0
    %v1672 = vadd.f32 %v289, %v1671
    %v1673 = vpop.f32.mrb[0].mxu0
    %1674 = vmatprep.mubr.f32.mxu0 0.0
    %1675 = vmatmul.mubr.f32.gmra.mrb[0].mxu0 %v623
    %v1676 = vpop.f32.mrb[0].mxu0
    %v1677 = vadd.f32 %v289, %v1676
    %v1678 = vpop.f32.mrb[0].mxu0
    %1679 = vmatprep.mubr.f32.mxu0 0.0
    %1680 = vmatmul.mubr.f32.gmra.mrb[0].mxu0 %v626
    %v1681 = vpop.f32.mrb[0].mxu0
    %v1682 = vadd.f32 %v289, %v1681
    %v1683 = vpop.f32.mrb[0].mxu0
    %1684 = vmatprep.mubr.f32.mxu0 0.0
    %1685 = vmatmul.mubr.f32.gmra.mrb[0].mxu0 %v629
    %v1686 = vpop.f32.mrb[0].mxu0
    %v1687 = vadd.f32 %v289, %v1686
    %v1688 = vpop.f32.mrb[0].mxu0
    %1689 = vmatprep.mubr.f32.mxu0 0.0
    %1690 = vmatmul.mubr.f32.gmra.mrb[0].mxu0 %v632
    %v1691 = vpop.f32.mrb[0].mxu0
    %v1692 = vadd.f32 %v289, %v1691
    %v1693 = vpop.f32.mrb[0].mxu0
    %1694 = vmatprep.mubr.f32.mxu0 0.0
    %1695 = vmatmul.mubr.f32.gmra.mrb[0].mxu0 %v635
    %v1696 = vpop.f32.mrb[0].mxu0
    %v1697 = vadd.f32 %v289, %v1696
    %v1698 = vpop.f32.mrb[0].mxu0
    %1699 = vmatprep.mubr.f32.mxu0 0.0
    %1700 = vmatmul.mubr.f32.gmra.mrb[0].mxu0 %v638
    %v1701 = vpop.f32.mrb[0].mxu0
    %v1702 = vadd.f32 %v289, %v1701
    %v1703 = vpop.f32.mrb[0].mxu0
    %1704 = vmatprep.mubr.f32.mxu0 0.0
    %1705 = vmatmul.mubr.f32.gmra.mrb[0].mxu0 %v641
    %v1706 = vpop.f32.mrb[0].mxu0
    %v1707 = vadd.f32 %v289, %v1706
    %v1708 = vpop.f32.mrb[0].mxu0
    %1709 = vmatprep.mubr.f32.mxu0 0.0
    %1710 = vmatmul.mubr.f32.gmra.mrb[0].mxu0 %v644
    %v1711 = vpop.f32.mrb[0].mxu0
    %v1712 = vadd.f32 %v289, %v1711
    %v1713 = vpop.f32.mrb[0].mxu0
    %1714 = vmatprep.mubr.f32.mxu0 0.0
    %1715 = vmatmul.mubr.f32.gmra.mrb[0].mxu0 %v647
    %v1716 = vpop.f32.mrb[0].mxu0
    %v1717 = vadd.f32 %v289, %v1716
    %v1718 = vpop.f32.mrb[0].mxu0
    %1719 = vmatprep.mubr.f32.mxu0 0.0
    %1720 = vmatmul.mubr.f32.gmra.mrb[0].mxu0 %v650
    %v1721 = vpop.f32.mrb[0].mxu0
    %v1722 = vadd.f32 %v289, %v1721
    %v1723 = vpop.f32.mrb[0].mxu0
    %1724 = vmatprep.mubr.f32.mxu0 0.0
    %1725 = vmatmul.mubr.f32.gmra.mrb[0].mxu0 %v653
    %v1726 = vpop.f32.mrb[0].mxu0
    %v1727 = vadd.f32 %v289, %v1726
    %v1728 = vpop.f32.mrb[0].mxu0
    %1729 = vmatprep.mubr.f32.mxu0 0.0
    %1730 = vmatmul.mubr.f32.gmra.mrb[0].mxu0 %v656
    %v1731 = vpop.f32.mrb[0].mxu0
    %v1732 = vadd.f32 %v289, %v1731
    %v1733 = vpop.f32.mrb[0].mxu0
    %1734 = vmatprep.mubr.f32.mxu0 0.0
    %1735 = vmatmul.mubr.f32.gmra.mrb[0].mxu0 %v659
    %v1736 = vpop.f32.mrb[0].mxu0
    %v1737 = vadd.f32 %v289, %v1736
    %v1738 = vpop.f32.mrb[0].mxu0
    %1739 = vmatprep.mubr.f32.mxu0 0.0
    %1740 = vmatmul.mubr.f32.gmra.mrb[0].mxu0 %v662
    %v1741 = vpop.f32.mrb[0].mxu0
    %v1742 = vadd.f32 %v289, %v1741
    %v1743 = vpop.f32.mrb[0].mxu0
    %1744 = vmatprep.mubr.f32.mxu0 0.0
    %1745 = vmatmul.mubr.f32.gmra.mrb[0].mxu0 %v665
    %v1746 = vpop.f32.mrb[0].mxu0
    %v1747 = vadd.f32 %v289, %v1746
    %v1748 = vpop.f32.mrb[0].mxu0
    %1749 = vmatprep.mubr.f32.mxu0 0.0
    %1750 = vmatmul.mubr.f32.gmra.mrb[0].mxu0 %v668
    %v1751 = vpop.f32.mrb[0].mxu0
    %v1752 = vadd.f32 %v289, %v1751
    %v1753 = vpop.f32.mrb[0].mxu0
    %1754 = vmatprep.mubr.f32.mxu0 0.0
    %1755 = vmatmul.mubr.f32.gmra.mrb[0].mxu0 %v671
    %v1756 = vpop.f32.mrb[0].mxu0
    %v1757 = vadd.f32 %v289, %v1756
    %v1758 = vpop.f32.mrb[0].mxu0
    %1759 = vmatprep.mubr.f32.mxu0 0.0
    %1760 = vmatmul.mubr.f32.gmra.mrb[0].mxu0 %v674
    %v1761 = vpop.f32.mrb[0].mxu0
    %v1762 = vadd.f32 %v289, %v1761
    %v1763 = vpop.f32.mrb[0].mxu0
    %1764 = vmatprep.mubr.f32.mxu0 0.0
    %1765 = vmatmul.mubr.f32.gmra.mrb[0].mxu0 %v677
    %v1766 = vpop.f32.mrb[0].mxu0
    %v1767 = vadd.f32 %v289, %v1766
    %v1768 = vpop.f32.mrb[0].mxu0
    %1769 = vmatprep.mubr.f32.mxu0 0.0
    %1770 = vmatmul.mubr.f32.gmra.mrb[0].mxu0 %v680
    %v1771 = vpop.f32.mrb[0].mxu0
    %v1772 = vadd.f32 %v289, %v1771
    %v1773 = vpop.f32.mrb[0].mxu0
    %1774 = vmatprep.mubr.f32.mxu0 0.0
    %1775 = vmatmul.mubr.f32.gmra.mrb[0].mxu0 %v683
    %v1776 = vpop.f32.mrb[0].mxu0
    %v1777 = vadd.f32 %v289, %v1776
    %v1778 = vpop.f32.mrb[0].mxu0
    %1779 = vmatprep.mubr.f32.mxu0 0.0
    %1780 = vmatmul.mubr.f32.gmra.mrb[0].mxu0 %v686
    %v1781 = vpop.f32.mrb[0].mxu0
    %v1782 = vadd.f32 %v289, %v1781
    %v1783 = vpop.f32.mrb[0].mxu0
    %1784 = vmatprep.mubr.f32.mxu0 0.0
    %1785 = vmatmul.mubr.f32.gmra.mrb[0].mxu0 %v689
    %v1786 = vpop.f32.mrb[0].mxu0
    %v1787 = vadd.f32 %v289, %v1786
    %v1788 = vpop.f32.mrb[0].mxu0
    %1789 = vmatprep.mubr.f32.mxu0 0.0
    %1790 = vmatmul.mubr.f32.gmra.mrb[0].mxu0 %v692
    %v1791 = vpop.f32.mrb[0].mxu0
    %v1792 = vadd.f32 %v289, %v1791
    %v1793 = vpop.f32.mrb[0].mxu0
    %1794 = vmatprep.mubr.f32.mxu0 0.0
    %1795 = vmatmul.mubr.f32.gmra.mrb[0].mxu0 %v695
    %v1796 = vpop.f32.mrb[0].mxu0
    %v1797 = vadd.f32 %v289, %v1796
    %v1798 = vpop.f32.mrb[0].mxu0
    %1799 = vmatprep.mubr.f32.mxu0 0.0
    %1800 = vmatmul.mubr.f32.gmra.mrb[0].mxu0 %v698
    %v1801 = vpop.f32.mrb[0].mxu0
    %v1802 = vadd.f32 %v289, %v1801
    %v1803 = vpop.f32.mrb[0].mxu0
    %1804 = vmatprep.mubr.f32.mxu0 0.0
    %1805 = vmatmul.mubr.f32.gmra.mrb[0].mxu0 %v701
    %v1806 = vpop.f32.mrb[0].mxu0
    %v1807 = vadd.f32 %v289, %v1806
    %v1808 = vpop.f32.mrb[0].mxu0
    %1809 = vmatprep.mubr.f32.mxu0 0.0
    %1810 = vmatmul.mubr.f32.gmra.mrb[0].mxu0 %v704
    %v1811 = vpop.f32.mrb[0].mxu0
    %v1812 = vadd.f32 %v289, %v1811
    %v1813 = vpop.f32.mrb[0].mxu0
    %1814 = vmatprep.mubr.f32.mxu0 0.0
    %1815 = vmatmul.mubr.f32.gmra.mrb[0].mxu0 %v707
    %v1816 = vpop.f32.mrb[0].mxu0
    %v1817 = vadd.f32 %v289, %v1816
    %v1818 = vpop.f32.mrb[0].mxu0
    %1819 = vmatprep.mubr.f32.mxu0 0.0
    %1820 = vmatmul.mubr.f32.gmra.mrb[0].mxu0 %v710
    %v1821 = vpop.f32.mrb[0].mxu0
    %v1822 = vadd.f32 %v289, %v1821
    %v1823 = vpop.f32.mrb[0].mxu0
    %1824 = vmatprep.mubr.f32.mxu0 0.0
    %1825 = vmatmul.mubr.f32.gmra.mrb[0].mxu0 %v713
    %v1826 = vpop.f32.mrb[0].mxu0
    %v1827 = vadd.f32 %v289, %v1826
    %v1828 = vpop.f32.mrb[0].mxu0
    %1829 = vmatprep.mubr.f32.mxu0 0.0
    %1830 = vmatmul.mubr.f32.gmra.mrb[0].mxu0 %v716
    %v1831 = vpop.f32.mrb[0].mxu0
    %v1832 = vadd.f32 %v289, %v1831
    %v1833 = vpop.f32.mrb[0].mxu0
    %1834 = vmatprep.mubr.f32.mxu0 0.0
    %1835 = vmatmul.mubr.f32.gmra.mrb[0].mxu0 %v719
    %v1836 = vpop.f32.mrb[0].mxu0
    %v1837 = vadd.f32 %v289, %v1836
    %v1838 = vpop.f32.mrb[0].mxu0
    %1839 = vmatprep.mubr.f32.mxu0 0.0
    %1840 = vmatmul.mubr.f32.gmra.mrb[0].mxu0 %v722
    %v1841 = vpop.f32.mrb[0].mxu0
    %v1842 = vadd.f32 %v289, %v1841
    %v1843 = vpop.f32.mrb[0].mxu0
    %1844 = vmatprep.mubr.f32.mxu0 0.0
    %1845 = vmatmul.mubr.f32.gmra.mrb[0].mxu0 %v725
    %v1846 = vpop.f32.mrb[0].mxu0
    %v1847 = vadd.f32 %v289, %v1846
    %v1848 = vpop.f32.mrb[0].mxu0
    %1849 = vmatprep.mubr.f32.mxu0 0.0
    %1850 = vmatmul.mubr.f32.gmra.mrb[0].mxu0 %v728
    %v1851 = vpop.f32.mrb[0].mxu0
    %v1852 = vadd.f32 %v289, %v1851
    %v1853 = vpop.f32.mrb[0].mxu0
    %1854 = vmatprep.mubr.f32.mxu0 0.0
    %1855 = vmatmul.mubr.f32.gmra.mrb[0].mxu0 %v731
    %v1856 = vpop.f32.mrb[0].mxu0
    %v1857 = vadd.f32 %v289, %v1856
    %v1858 = vpop.f32.mrb[0].mxu0
    %1859 = vmatprep.mubr.f32.mxu0 0.0
    %1860 = vmatmul.mubr.f32.gmra.mrb[0].mxu0 %v734
    %v1861 = vpop.f32.mrb[0].mxu0
    %v1862 = vadd.f32 %v289, %v1861
    %v1863 = vpop.f32.mrb[0].mxu0
    %1864 = vmatprep.mubr.f32.mxu0 0.0
    %1865 = vmatmul.mubr.f32.gmra.mrb[0].mxu0 %v737
    %v1866 = vpop.f32.mrb[0].mxu0
    %v1867 = vadd.f32 %v289, %v1866
    %v1868 = vpop.f32.mrb[0].mxu0
    %1869 = vmatprep.mubr.f32.mxu0 0.0
    %1870 = vmatmul.mubr.f32.gmra.mrb[0].mxu0 %v740
    %v1871 = vpop.f32.mrb[0].mxu0
    %v1872 = vadd.f32 %v289, %v1871
    %v1873 = vpop.f32.mrb[0].mxu0
    %1874 = vmatprep.mubr.f32.mxu0 0.0
    %1875 = vmatmul.mubr.f32.gmra.mrb[0].mxu0 %v743
    %v1876 = vpop.f32.mrb[0].mxu0
    %v1877 = vadd.f32 %v289, %v1876
    %v1878 = vpop.f32.mrb[0].mxu0
    %1879 = vmatprep.mubr.f32.mxu0 0.0
    %1880 = vmatmul.mubr.f32.gmra.mrb[0].mxu0 %v746
    %v1881 = vpop.f32.mrb[0].mxu0
    %v1882 = vadd.f32 %v289, %v1881
    %v1883 = vpop.f32.mrb[0].mxu0
    %1884 = vmatprep.mubr.f32.mxu0 0.0
    %1885 = vmatmul.mubr.f32.gmra.mrb[0].mxu0 %v749
    %v1886 = vpop.f32.mrb[0].mxu0
    %v1887 = vadd.f32 %v289, %v1886
    %v1888 = vpop.f32.mrb[0].mxu0
    %1889 = vmatprep.mubr.f32.mxu0 0.0
    %1890 = vmatmul.mubr.f32.gmra.mrb[0].mxu0 %v752
    %v1891 = vpop.f32.mrb[0].mxu0
    %v1892 = vadd.f32 %v289, %v1891
    %v1893 = vpop.f32.mrb[0].mxu0
    %1894 = vmatprep.mubr.f32.mxu0 0.0
    %1895 = vmatmul.mubr.f32.gmra.mrb[0].mxu0 %v755
    %v1896 = vpop.f32.mrb[0].mxu0
    %v1897 = vadd.f32 %v289, %v1896
    %v1898 = vpop.f32.mrb[0].mxu0
    %1899 = vmatprep.mubr.f32.mxu0 0.0
    %1900 = vmatmul.mubr.f32.gmra.mrb[0].mxu0 %v758
    %v1901 = vpop.f32.mrb[0].mxu0
    %v1902 = vadd.f32 %v289, %v1901
    %v1903 = vpop.f32.mrb[0].mxu0
    %1904 = vmatprep.mubr.f32.mxu0 0.0
    %1905 = vmatmul.mubr.f32.gmra.mrb[0].mxu0 %v761
    %v1906 = vpop.f32.mrb[0].mxu0
    %v1907 = vadd.f32 %v289, %v1906
    %v1908 = vpop.f32.mrb[0].mxu0
    %1909 = vmatprep.mubr.f32.mxu0 0.0
    %1910 = vmatmul.mubr.f32.gmra.mrb[0].mxu0 %v764
    %v1911 = vpop.f32.mrb[0].mxu0
    %v1912 = vadd.f32 %v289, %v1911
    %v1913 = vpop.f32.mrb[0].mxu0
    %1914 = vmatprep.mubr.f32.mxu0 0.0
    %1915 = vmatmul.mubr.f32.gmra.mrb[0].mxu0 %v767
    %v1916 = vpop.f32.mrb[0].mxu0
    %v1917 = vadd.f32 %v289, %v1916
    %v1918 = vpop.f32.mrb[0].mxu0
    %1919 = vmatprep.mubr.f32.mxu0 0.0
    %1920 = vmatmul.mubr.f32.gmra.mrb[0].mxu0 %v770
    %v1921 = vpop.f32.mrb[0].mxu0
    %v1922 = vadd.f32 %v289, %v1921
    %v1923 = vpop.f32.mrb[0].mxu0
    %1924 = vmatprep.mubr.f32.mxu0 0.0
    %1925 = vmatmul.mubr.f32.gmra.mrb[0].mxu0 %v773
    %v1926 = vpop.f32.mrb[0].mxu0
    %v1927 = vadd.f32 %v289, %v1926
    %v1928 = vpop.f32.mrb[0].mxu0
    %1929 = vmatprep.mubr.f32.mxu0 0.0
    %1930 = vmatmul.mubr.f32.gmra.mrb[0].mxu0 %v776
    %v1931 = vpop.f32.mrb[0].mxu0
    %v1932 = vadd.f32 %v289, %v1931
    %v1933 = vpop.f32.mrb[0].mxu0
    %1934 = vmatprep.mubr.f32.mxu0 0.0
    %1935 = vmatmul.mubr.f32.gmra.mrb[0].mxu0 %v779
    %v1936 = vpop.f32.mrb[0].mxu0
    %v1937 = vadd.f32 %v289, %v1936
    %v1938 = vpop.f32.mrb[0].mxu0
    %1939 = vmatprep.mubr.f32.mxu0 0.0
    %1940 = vmatmul.mubr.f32.gmra.mrb[0].mxu0 %v782
    %v1941 = vpop.f32.mrb[0].mxu0
    %v1942 = vadd.f32 %v289, %v1941
    %v1943 = vpop.f32.mrb[0].mxu0
    %1944 = vmatprep.mubr.f32.mxu0 0.0
    %1945 = vmatmul.mubr.f32.gmra.mrb[0].mxu0 %v785
    %v1946 = vpop.f32.mrb[0].mxu0
    %v1947 = vadd.f32 %v289, %v1946
    %v1948 = vpop.f32.mrb[0].mxu0
    %1949 = vmatprep.mubr.f32.mxu0 0.0
    %1950 = vmatmul.mubr.f32.gmra.mrb[0].mxu0 %v788
    %v1951 = vpop.f32.mrb[0].mxu0
    %v1952 = vadd.f32 %v289, %v1951
    %v1953 = vpop.f32.mrb[0].mxu0
    %1954 = vmatprep.mubr.f32.mxu0 0.0
    %1955 = vmatmul.mubr.f32.gmra.mrb[0].mxu0 %v791
    %v1956 = vpop.f32.mrb[0].mxu0
    %v1957 = vadd.f32 %v289, %v1956
    %v1958 = vpop.f32.mrb[0].mxu0
    %1959 = vmatprep.mubr.f32.mxu0 0.0
    %1960 = vmatmul.mubr.f32.gmra.mrb[0].mxu0 %v794
    %v1961 = vpop.f32.mrb[0].mxu0
    %v1962 = vadd.f32 %v289, %v1961
    %v1963 = vpop.f32.mrb[0].mxu0
    %1964 = vmatprep.mubr.f32.mxu0 0.0
    %1965 = vmatmul.mubr.f32.gmra.mrb[0].mxu0 %v797
    %v1966 = vpop.f32.mrb[0].mxu0
    %v1967 = vadd.f32 %v289, %v1966
    %v1968 = vpop.f32.mrb[0].mxu0
    %1969 = vmatprep.mubr.f32.mxu0 0.0
    %1970 = vmatmul.mubr.f32.gmra.mrb[0].mxu0 %v800
    %v1971 = vpop.f32.mrb[0].mxu0
    %v1972 = vadd.f32 %v289, %v1971
    %v1973 = vpop.f32.mrb[0].mxu0
    %1974 = vmatprep.mubr.f32.mxu0 0.0
    %1975 = vmatmul.mubr.f32.gmra.mrb[0].mxu0 %v803
    %v1976 = vpop.f32.mrb[0].mxu0
    %v1977 = vadd.f32 %v289, %v1976
    %v1978 = vpop.f32.mrb[0].mxu0
    %1979 = vmatprep.mubr.f32.mxu0 0.0
    %1980 = vmatmul.mubr.f32.gmra.mrb[0].mxu0 %v806
    %v1981 = vpop.f32.mrb[0].mxu0
    %v1982 = vadd.f32 %v289, %v1981
    %v1983 = vpop.f32.mrb[0].mxu0
    %1984 = vmatprep.mubr.f32.mxu0 0.0
    %1985 = vmatmul.mubr.f32.gmra.mrb[0].mxu0 %v809
    %v1986 = vpop.f32.mrb[0].mxu0
    %v1987 = vadd.f32 %v289, %v1986
    %v1988 = vpop.f32.mrb[0].mxu0
    %1989 = vmatprep.mubr.f32.mxu0 0.0
    %1990 = vmatmul.mubr.f32.gmra.mrb[0].mxu0 %v812
    %v1991 = vpop.f32.mrb[0].mxu0
    %v1992 = vadd.f32 %v289, %v1991
    %v1993 = vpop.f32.mrb[0].mxu0
    %1994 = vmatprep.mubr.f32.mxu0 0.0
    %1995 = vmatmul.mubr.f32.gmra.mrb[0].mxu0 %v815
    %v1996 = vpop.f32.mrb[0].mxu0
    %v1997 = vadd.f32 %v289, %v1996
    %v1998 = vpop.f32.mrb[0].mxu0
    %1999 = vmatprep.mubr.f32.mxu0 0.0
    %2000 = vmatmul.mubr.f32.gmra.mrb[0].mxu0 %v818
    %v2001 = vpop.f32.mrb[0].mxu0
    %v2002 = vadd.f32 %v289, %v2001
    %v2003 = vpop.f32.mrb[0].mxu0
    %2004 = vmatprep.mubr.f32.mxu0 0.0
    %2005 = vmatmul.mubr.f32.gmra.mrb[0].mxu0 %v821
    %v2006 = vpop.f32.mrb[0].mxu0
    %v2007 = vadd.f32 %v289, %v2006
    %v2008 = vpop.f32.mrb[0].mxu0
    %2009 = vmatprep.mubr.f32.mxu0 0.0
    %2010 = vmatmul.mubr.f32.gmra.mrb[0].mxu0 %v824
    %v2011 = vpop.f32.mrb[0].mxu0
    %v2012 = vadd.f32 %v289, %v2011
    %v2013 = vpop.f32.mrb[0].mxu0
    %2014 = vmatprep.mubr.f32.mxu0 0.0
    %2015 = vmatmul.mubr.f32.gmra.mrb[0].mxu0 %v827
    %v2016 = vpop.f32.mrb[0].mxu0
    %v2017 = vadd.f32 %v289, %v2016
    %v2018 = vpop.f32.mrb[0].mxu0
    %2019 = vmatprep.mubr.f32.mxu0 0.0
    %2020 = vmatmul.mubr.f32.gmra.mrb[0].mxu0 %v830
    %v2021 = vpop.f32.mrb[0].mxu0
    %v2022 = vadd.f32 %v289, %v2021
    %v2023 = vpop.f32.mrb[0].mxu0
    %2024 = vmatprep.mubr.f32.mxu0 0.0
    %2025 = vmatmul.mubr.f32.gmra.mrb[0].mxu0 %v833
    %v2026 = vpop.f32.mrb[0].mxu0
    %v2027 = vadd.f32 %v289, %v2026
    %v2028 = vpop.f32.mrb[0].mxu0
    %2029 = vmatprep.mubr.f32.mxu0 0.0
    %2030 = vmatmul.mubr.f32.gmra.mrb[0].mxu0 %v836
    %v2031 = vpop.f32.mrb[0].mxu0
    %v2032 = vadd.f32 %v289, %v2031
    %v2033 = vpop.f32.mrb[0].mxu0
    %2034 = vmatprep.mubr.f32.mxu0 0.0
    %2035 = vmatmul.mubr.f32.gmra.mrb[0].mxu0 %v839
    %v2036 = vpop.f32.mrb[0].mxu0
    %v2037 = vadd.f32 %v289, %v2036
    %v2038 = vpop.f32.mrb[0].mxu0
    %2039 = vmatprep.mubr.f32.mxu0 0.0
    %2040 = vmatmul.mubr.f32.gmra.mrb[0].mxu0 %v842
    %v2041 = vpop.f32.mrb[0].mxu0
    %v2042 = vadd.f32 %v289, %v2041
    %v2043 = vpop.f32.mrb[0].mxu0
    %2044 = vmatprep.mubr.f32.mxu0 0.0
    %2045 = vmatmul.mubr.f32.gmra.mrb[0].mxu0 %v845
    %v2046 = vpop.f32.mrb[0].mxu0
    %v2047 = vadd.f32 %v289, %v2046
    %v2048 = vpop.f32.mrb[0].mxu0
    %2049 = vmatprep.mubr.f32.mxu0 0.0
    %2050 = vmatmul.mubr.f32.gmra.mrb[0].mxu0 %v848
    %v2051 = vpop.f32.mrb[0].mxu0
    %v2052 = vadd.f32 %v289, %v2051
    %v2053 = vpop.f32.mrb[0].mxu0
    %2054 = vmatprep.mubr.f32.mxu0 0.0
    %2055 = vmatmul.mubr.f32.gmra.mrb[0].mxu0 %v851
    %v2056 = vpop.f32.mrb[0].mxu0
    %v2057 = vadd.f32 %v289, %v2056
    %v2058 = vpop.f32.mrb[0].mxu0
    %2059 = vmatprep.mubr.f32.mxu0 0.0
    %2060 = vmatmul.mubr.f32.gmra.mrb[0].mxu0 %v854
    %v2061 = vpop.f32.mrb[0].mxu0
    %v2062 = vadd.f32 %v289, %v2061
    %v2063 = vpop.f32.mrb[0].mxu0
    %2064 = vmatprep.mubr.f32.mxu0 0.0
    %2065 = vmatmul.mubr.f32.gmra.mrb[0].mxu0 %v857
    %v2066 = vpop.f32.mrb[0].mxu0
    %v2067 = vadd.f32 %v289, %v2066
    %v2068 = vpop.f32.mrb[0].mxu0
    %2069 = vmatprep.mubr.f32.mxu0 0.0
    %2070 = vmatmul.mubr.f32.gmra.mrb[0].mxu0 %v860
    %v2071 = vpop.f32.mrb[0].mxu0
    %v2072 = vadd.f32 %v289, %v2071
    %v2073 = vpop.f32.mrb[0].mxu0
    %2074 = vmatprep.mubr.f32.mxu0 0.0
    %2075 = vmatmul.mubr.f32.gmra.mrb[0].mxu0 %v863
    %v2076 = vpop.f32.mrb[0].mxu0
    %v2077 = vadd.f32 %v289, %v2076
    %v2078 = vpop.f32.mrb[0].mxu0
    %2079 = vmatprep.mubr.f32.mxu0 0.0
    %2080 = vmatmul.mubr.f32.gmra.mrb[0].mxu0 %v866
    %v2081 = vpop.f32.mrb[0].mxu0
    %v2082 = vadd.f32 %v289, %v2081
    %v2083 = vpop.f32.mrb[0].mxu0
    %2084 = vmatprep.mubr.f32.mxu0 0.0
    %2085 = vmatmul.mubr.f32.gmra.mrb[0].mxu0 %v869
    %v2086 = vpop.f32.mrb[0].mxu0
    %v2087 = vadd.f32 %v289, %v2086
    %v2088 = vpop.f32.mrb[0].mxu0
    %2089 = vmatprep.mubr.f32.mxu0 0.0
    %2090 = vmatmul.mubr.f32.gmra.mrb[0].mxu0 %v872
    %v2091 = vpop.f32.mrb[0].mxu0
    %v2092 = vadd.f32 %v289, %v2091
    %v2093 = vpop.f32.mrb[0].mxu0
    %2094 = vmatprep.mubr.f32.mxu0 0.0
    %2095 = vmatmul.mubr.f32.gmra.mrb[0].mxu0 %v875
    %v2096 = vpop.f32.mrb[0].mxu0
    %v2097 = vadd.f32 %v289, %v2096
    %v2098 = vpop.f32.mrb[0].mxu0
    %2099 = vmatprep.mubr.f32.mxu0 0.0
    %2100 = vmatmul.mubr.f32.gmra.mrb[0].mxu0 %v878
    %v2101 = vpop.f32.mrb[0].mxu0
    %v2102 = vadd.f32 %v289, %v2101
    %v2103 = vpop.f32.mrb[0].mxu0
    %2104 = vmatprep.mubr.f32.mxu0 0.0
    %2105 = vmatmul.mubr.f32.gmra.mrb[0].mxu0 %v881
    %v2106 = vpop.f32.mrb[0].mxu0
    %v2107 = vadd.f32 %v289, %v2106
    %v2108 = vpop.f32.mrb[0].mxu0
    %2109 = vmatprep.mubr.f32.mxu0 0.0
    %2110 = vmatmul.mubr.f32.gmra.mrb[0].mxu0 %v884
    %v2111 = vpop.f32.mrb[0].mxu0
    %v2112 = vadd.f32 %v289, %v2111
    %v2113 = vpop.f32.mrb[0].mxu0
    %2114 = vmatprep.mubr.f32.mxu0 0.0
    %2115 = vmatmul.mubr.f32.gmra.mrb[0].mxu0 %v887
    %v2116 = vpop.f32.mrb[0].mxu0
    %v2117 = vadd.f32 %v289, %v2116
    %v2118 = vpop.f32.mrb[0].mxu0
    %2119 = vmatprep.mubr.f32.mxu0 0.0
    %2120 = vmatmul.mubr.f32.gmra.mrb[0].mxu0 %v890
    %v2121 = vpop.f32.mrb[0].mxu0
    %v2122 = vadd.f32 %v289, %v2121
    %v2123 = vpop.f32.mrb[0].mxu0
    %2124 = vmatprep.mubr.f32.mxu0 0.0
    %2125 = vmatmul.mubr.f32.gmra.mrb[0].mxu0 %v893
    %v2126 = vpop.f32.mrb[0].mxu0
    %v2127 = vadd.f32 %v289, %v2126
    %v2128 = vpop.f32.mrb[0].mxu0
    %2129 = vmatprep.mubr.f32.mxu0 0.0
    %2130 = vmatmul.mubr.f32.gmra.mrb[0].mxu0 %v896
    %v2131 = vpop.f32.mrb[0].mxu0
    %v2132 = vadd.f32 %v289, %v2131
    %v2133 = vpop.f32.mrb[0].mxu0
    %2134 = vmatprep.mubr.f32.mxu0 0.0
    %2135 = vmatmul.mubr.f32.gmra.mrb[0].mxu0 %v899
    %v2136 = vpop.f32.mrb[0].mxu0
    %v2137 = vadd.f32 %v289, %v2136
    %v2138 = vpop.f32.mrb[0].mxu0
    %2139 = vmatprep.mubr.f32.mxu0 0.0
    %2140 = vmatmul.mubr.f32.gmra.mrb[0].mxu0 %v902
    %v2141 = vpop.f32.mrb[0].mxu0
    %v2142 = vadd.f32 %v289, %v2141
    %v2143 = vpop.f32.mrb[0].mxu0
    %2144 = vmatprep.mubr.f32.mxu0 0.0
    %2145 = vmatmul.mubr.f32.gmra.mrb[0].mxu0 %v905
    %v2146 = vpop.f32.mrb[0].mxu0
    %v2147 = vadd.f32 %v289, %v2146
    %v2148 = vpop.f32.mrb[0].mxu0
    %2149 = vmatprep.mubr.f32.mxu0 0.0
    %2150 = vmatmul.mubr.f32.gmra.mrb[0].mxu0 %v908
    %v2151 = vpop.f32.mrb[0].mxu0
    %v2152 = vadd.f32 %v289, %v2151
    %v2153 = vpop.f32.mrb[0].mxu0
    %2154 = vmatprep.mubr.f32.mxu0 0.0
    %2155 = vmatmul.mubr.f32.gmra.mrb[0].mxu0 %v911
    %v2156 = vpop.f32.mrb[0].mxu0
    %v2157 = vadd.f32 %v289, %v2156
    %v2158 = vpop.f32.mrb[0].mxu0
    %2159 = vmatprep.mubr.f32.mxu0 0.0
    %2160 = vmatmul.mubr.f32.gmra.mrb[0].mxu0 %v914
    %v2161 = vpop.f32.mrb[0].mxu0
    %v2162 = vadd.f32 %v289, %v2161
    %v2163 = vpop.f32.mrb[0].mxu0
    %2164 = vmatprep.mubr.f32.mxu0 0.0
    %2165 = vmatmul.mubr.f32.gmra.mrb[0].mxu0 %v917
    %v2166 = vpop.f32.mrb[0].mxu0
    %v2167 = vadd.f32 %v289, %v2166
    %v2168 = vpop.f32.mrb[0].mxu0
    %2169 = vmatprep.mubr.f32.mxu0 0.0
    %2170 = vmatmul.mubr.f32.gmra.mrb[0].mxu0 %v920
    %v2171 = vpop.f32.mrb[0].mxu0
    %v2172 = vadd.f32 %v289, %v2171
    %v2173 = vpop.f32.mrb[0].mxu0
    %2174 = vmatprep.mubr.f32.mxu0 0.0
    %2175 = vmatmul.mubr.f32.gmra.mrb[0].mxu0 %v923
    %v2176 = vpop.f32.mrb[0].mxu0
    %v2177 = vadd.f32 %v289, %v2176
    %v2178 = vpop.f32.mrb[0].mxu0
    %2179 = vmatprep.mubr.f32.mxu0 0.0
    %2180 = vmatmul.mubr.f32.gmra.mrb[0].mxu0 %v926
    %v2181 = vpop.f32.mrb[0].mxu0
    %v2182 = vadd.f32 %v289, %v2181
    %v2183 = vpop.f32.mrb[0].mxu0
    %2184 = vmatprep.mubr.f32.mxu0 0.0
    %2185 = vmatmul.mubr.f32.gmra.mrb[0].mxu0 %v929
    %v2186 = vpop.f32.mrb[0].mxu0
    %v2187 = vadd.f32 %v289, %v2186
    %v2188 = vpop.f32.mrb[0].mxu0
    %2189 = vmatprep.mubr.f32.mxu0 0.0
    %2190 = vmatmul.mubr.f32.gmra.mrb[0].mxu0 %v932
    %v2191 = vpop.f32.mrb[0].mxu0
    %v2192 = vadd.f32 %v289, %v2191
    %v2193 = vpop.f32.mrb[0].mxu0
    %2194 = vmatprep.mubr.f32.mxu0 0.0
    %2195 = vmatmul.mubr.f32.gmra.mrb[0].mxu0 %v935
    %v2196 = vpop.f32.mrb[0].mxu0
    %v2197 = vadd.f32 %v289, %v2196
    %v2198 = vpop.f32.mrb[0].mxu0
    %2199 = vmatprep.mubr.f32.mxu0 0.0
    %2200 = vmatmul.mubr.f32.gmra.mrb[0].mxu0 %v938
    %v2201 = vpop.f32.mrb[0].mxu0
    %v2202 = vadd.f32 %v289, %v2201
    %v2203 = vpop.f32.mrb[0].mxu0
    %2204 = vmatprep.mubr.f32.mxu0 0.0
    %2205 = vmatmul.mubr.f32.gmra.mrb[0].mxu0 %v941
    %v2206 = vpop.f32.mrb[0].mxu0
    %v2207 = vadd.f32 %v289, %v2206
    %v2208 = vpop.f32.mrb[0].mxu0
    %2209 = vmatprep.mubr.f32.mxu0 0.0
    %2210 = vmatmul.mubr.f32.gmra.mrb[0].mxu0 %v944
    %v2211 = vpop.f32.mrb[0].mxu0
    %v2212 = vadd.f32 %v289, %v2211
    %v2213 = vpop.f32.mrb[0].mxu0
    %2214 = vmatprep.mubr.f32.mxu0 0.0
    %2215 = vmatmul.mubr.f32.gmra.mrb[0].mxu0 %v947
    %v2216 = vpop.f32.mrb[0].mxu0
    %v2217 = vadd.f32 %v289, %v2216
    %v2218 = vpop.f32.mrb[0].mxu0
    %2219 = vmatprep.mubr.f32.mxu0 0.0
    %2220 = vmatmul.mubr.f32.gmra.mrb[0].mxu0 %v950
    %v2221 = vpop.f32.mrb[0].mxu0
    %v2222 = vadd.f32 %v289, %v2221
    %v2223 = vpop.f32.mrb[0].mxu0
    %2224 = vmatprep.mubr.f32.mxu0 0.0
    %2225 = vmatmul.mubr.f32.gmra.mrb[0].mxu0 %v953
    %v2226 = vpop.f32.mrb[0].mxu0
    %v2227 = vadd.f32 %v289, %v2226
    %v2228 = vpop.f32.mrb[0].mxu0
    %2229 = vmatprep.mubr.f32.mxu0 0.0
    %2230 = vmatmul.mubr.f32.gmra.mrb[0].mxu0 %v956
    %v2231 = vpop.f32.mrb[0].mxu0
    %v2232 = vadd.f32 %v289, %v2231
    %v2233 = vpop.f32.mrb[0].mxu0
    %2234 = vmatprep.mubr.f32.mxu0 0.0
    %2235 = vmatmul.mubr.f32.gmra.mrb[0].mxu0 %v959
    %v2236 = vpop.f32.mrb[0].mxu0
    %v2237 = vadd.f32 %v289, %v2236
    %v2238 = vpop.f32.mrb[0].mxu0
    %2239 = vmatprep.mubr.f32.mxu0 0.0
    %2240 = vmatmul.mubr.f32.gmra.mrb[0].mxu0 %v962
    %v2241 = vpop.f32.mrb[0].mxu0
    %v2242 = vadd.f32 %v289, %v2241
    %v2243 = vpop.f32.mrb[0].mxu0
    %2244 = vmatprep.mubr.f32.mxu0 0.0
    %2245 = vmatmul.mubr.f32.gmra.mrb[0].mxu0 %v965
    %v2246 = vpop.f32.mrb[0].mxu0
    %v2247 = vadd.f32 %v289, %v2246
    %v2248 = vpop.f32.mrb[0].mxu0
    %2249 = vmatprep.mubr.f32.mxu0 0.0
    %2250 = vmatmul.mubr.f32.gmra.mrb[0].mxu0 %v968
    %v2251 = vpop.f32.mrb[0].mxu0
    %v2252 = vadd.f32 %v289, %v2251
    %v2253 = vpop.f32.mrb[0].mxu0
    %2254 = vmatprep.mubr.f32.mxu0 0.0
    %2255 = vmatmul.mubr.f32.gmra.mrb[0].mxu0 %v971
    %v2256 = vpop.f32.mrb[0].mxu0
    %v2257 = vadd.f32 %v289, %v2256
    %v2258 = vpop.f32.mrb[0].mxu0
    %2259 = vmatprep.mubr.f32.mxu0 0.0
    %2260 = vmatmul.mubr.f32.gmra.mrb[0].mxu0 %v974
    %v2261 = vpop.f32.mrb[0].mxu0
    %v2262 = vadd.f32 %v289, %v2261
    %v2263 = vpop.f32.mrb[0].mxu0
    %2264 = vmatprep.mubr.f32.mxu0 0.0
    %2265 = vmatmul.mubr.f32.gmra.mrb[0].mxu0 %v977
    %v2266 = vpop.f32.mrb[0].mxu0
    %v2267 = vadd.f32 %v289, %v2266
    %v2268 = vpop.f32.mrb[0].mxu0
    %2269 = vmatprep.mubr.f32.mxu0 0.0
    %2270 = vmatmul.mubr.f32.gmra.mrb[0].mxu0 %v980
    %v2271 = vpop.f32.mrb[0].mxu0
    %v2272 = vadd.f32 %v289, %v2271
    %v2273 = vpop.f32.mrb[0].mxu0
    %2274 = vmatprep.mubr.f32.mxu0 0.0
    %2275 = vmatmul.mubr.f32.gmra.mrb[0].mxu0 %v983
    %v2276 = vpop.f32.mrb[0].mxu0
    %v2277 = vadd.f32 %v289, %v2276
    %v2278 = vpop.f32.mrb[0].mxu0
    %2279 = vmatprep.mubr.f32.mxu0 0.0
    %2280 = vmatmul.mubr.f32.gmra.mrb[0].mxu0 %v986
    %v2281 = vpop.f32.mrb[0].mxu0
    %v2282 = vadd.f32 %v289, %v2281
    %v2283 = vpop.f32.mrb[0].mxu0
    %2284 = vmatprep.mubr.f32.mxu0 0.0
    %2285 = vmatmul.mubr.f32.gmra.mrb[0].mxu0 %v989
    %v2286 = vpop.f32.mrb[0].mxu0
    %v2287 = vadd.f32 %v289, %v2286
    %v2288 = vpop.f32.mrb[0].mxu0
    %2289 = vmatprep.mubr.f32.mxu0 0.0
    %2290 = vmatmul.mubr.f32.gmra.mrb[0].mxu0 %v992
    %v2291 = vpop.f32.mrb[0].mxu0
    %v2292 = vadd.f32 %v289, %v2291
    %v2293 = vpop.f32.mrb[0].mxu0
    %2294 = vmatprep.mubr.f32.mxu0 0.0
    %2295 = vmatmul.mubr.f32.gmra.mrb[0].mxu0 %v995
    %v2296 = vpop.f32.mrb[0].mxu0
    %v2297 = vadd.f32 %v289, %v2296
    %v2298 = vpop.f32.mrb[0].mxu0
    %2299 = vmatprep.mubr.f32.mxu0 0.0
    %2300 = vmatmul.mubr.f32.gmra.mrb[0].mxu0 %v998
    %v2301 = vpop.f32.mrb[0].mxu0
    %v2302 = vadd.f32 %v289, %v2301
    %v2303 = vpop.f32.mrb[0].mxu0
    %2304 = vmatprep.mubr.f32.mxu0 0.0
    %2305 = vmatmul.mubr.f32.gmra.mrb[0].mxu0 %v1001
    %v2306 = vpop.f32.mrb[0].mxu0
    %v2307 = vadd.f32 %v289, %v2306
    %v2308 = vpop.f32.mrb[0].mxu0
    %2309 = vmatprep.mubr.f32.mxu0 0.0
    %2310 = vmatmul.mubr.f32.gmra.mrb[0].mxu0 %v1004
    %v2311 = vpop.f32.mrb[0].mxu0
    %v2312 = vadd.f32 %v289, %v2311
    %v2313 = vpop.f32.mrb[0].mxu0
    %2314 = vmatprep.mubr.f32.mxu0 0.0
    %2315 = vmatmul.mubr.f32.gmra.mrb[0].mxu0 %v1007
    %v2316 = vpop.f32.mrb[0].mxu0
    %v2317 = vadd.f32 %v289, %v2316
    %v2318 = vpop.f32.mrb[0].mxu0
    %2319 = vmatprep.mubr.f32.mxu0 0.0
    %2320 = vmatmul.mubr.f32.gmra.mrb[0].mxu0 %v1010
    %v2321 = vpop.f32.mrb[0].mxu0
    %v2322 = vadd.f32 %v289, %v2321
    %v2323 = vpop.f32.mrb[0].mxu0
    %2324 = vmatprep.mubr.f32.mxu0 0.0
    %2325 = vmatmul.mubr.f32.gmra.mrb[0].mxu0 %v1013
    %v2326 = vpop.f32.mrb[0].mxu0
    %v2327 = vadd.f32 %v289, %v2326
    %v2328 = vpop.f32.mrb[0].mxu0
    %2329 = vmatprep.mubr.f32.mxu0 0.0
    %2330 = vmatmul.mubr.f32.gmra.mrb[0].mxu0 %v1016
    %v2331 = vpop.f32.mrb[0].mxu0
    %v2332 = vadd.f32 %v289, %v2331
    %v2333 = vpop.f32.mrb[0].mxu0
    %2334 = vmatprep.mubr.f32.mxu0 0.0
    %2335 = vmatmul.mubr.f32.gmra.mrb[0].mxu0 %v1019
    %v2336 = vpop.f32.mrb[0].mxu0
    %v2337 = vadd.f32 %v289, %v2336
    %v2338 = vpop.f32.mrb[0].mxu0
    %2339 = vmatprep.mubr.f32.mxu0 0.0
    %2340 = vmatmul.mubr.f32.gmra.mrb[0].mxu0 %v1022
    %v2341 = vpop.f32.mrb[0].mxu0
    %v2342 = vadd.f32 %v289, %v2341
    %v2343 = vpop.f32.mrb[0].mxu0
    %2344 = vmatprep.mubr.f32.mxu0 0.0
    %2345 = vmatmul.mubr.f32.gmra.mrb[0].mxu0 %v1025
    %v2346 = vpop.f32.mrb[0].mxu0
    %v2347 = vadd.f32 %v289, %v2346
    %v2348 = vpop.f32.mrb[0].mxu0
    %2349 = vmatprep.mubr.f32.mxu0 0.0
    %2350 = vmatmul.mubr.f32.gmra.mrb[0].mxu0 %v1028
    %v2351 = vpop.f32.mrb[0].mxu0
    %v2352 = vadd.f32 %v289, %v2351
    %v2353 = vpop.f32.mrb[0].mxu0
    %2354 = vmatprep.mubr.f32.mxu0 0.0
    %2355 = vmatmul.mubr.f32.gmra.mrb[0].mxu0 %v1031
    %v2356 = vpop.f32.mrb[0].mxu0
    %v2357 = vadd.f32 %v289, %v2356
    %v2358 = vpop.f32.mrb[0].mxu0
    %2359 = vmatprep.mubr.f32.mxu0 0.0
    %2360 = vmatmul.mubr.f32.gmra.mrb[0].mxu0 %v1034
    %v2361 = vpop.f32.mrb[0].mxu0
    %v2362 = vadd.f32 %v289, %v2361
    %v2363 = vpop.f32.mrb[0].mxu0
    %2364 = vmatprep.mubr.f32.mxu0 0.0
    %2365 = vmatmul.mubr.f32.gmra.mrb[0].mxu0 %v1037
    %v2366 = vpop.f32.mrb[0].mxu0
    %v2367 = vadd.f32 %v289, %v2366
    %v2368 = vpop.f32.mrb[0].mxu0
    %2369 = vmatprep.mubr.f32.mxu0 0.0
    %2370 = vmatmul.mubr.f32.gmra.mrb[0].mxu0 %v1040
    %v2371 = vpop.f32.mrb[0].mxu0
    %v2372 = vadd.f32 %v289, %v2371
    %v2373 = vpop.f32.mrb[0].mxu0
    %2374 = vmatprep.mubr.f32.mxu0 0.0
    %2375 = vmatmul.mubr.f32.gmra.mrb[0].mxu0 %v1043
    %v2376 = vpop.f32.mrb[0].mxu0
    %v2377 = vadd.f32 %v289, %v2376
    %v2378 = vpop.f32.mrb[0].mxu0
    %2379 = vmatprep.mubr.f32.mxu0 0.0
    %2380 = vmatmul.mubr.f32.gmra.mrb[0].mxu0 %v1046
    %v2381 = vpop.f32.mrb[0].mxu0
    %v2382 = vadd.f32 %v289, %v2381
    %v2383 = vpop.f32.mrb[0].mxu0
    %2384 = vmatprep.mubr.f32.mxu0 0.0
    %2385 = vmatmul.mubr.f32.gmra.mrb[0].mxu0 %v1049
    %v2386 = vpop.f32.mrb[0].mxu0
    %v2387 = vadd.f32 %v289, %v2386
    %v2388 = vpop.f32.mrb[0].mxu0
    %2389 = vmatprep.mubr.f32.mxu0 0.0
    %2390 = vmatmul.mubr.f32.gmra.mrb[0].mxu0 %v1052
    %v2391 = vpop.f32.mrb[0].mxu0
    %v2392 = vadd.f32 %v289, %v2391
    %v2393 = vpop.f32.mrb[0].mxu0
    %2394 = vmatprep.mubr.f32.mxu0 0.0
    %2395 = vmatmul.mubr.f32.gmra.mrb[0].mxu0 %v1055
    %v2396 = vpop.f32.mrb[0].mxu0
    %v2397 = vadd.f32 %v289, %v2396
    %v2398 = vpop.f32.mrb[0].mxu0
    %2399 = vmatprep.mubr.f32.mxu0 0.0
    %2400 = vmatmul.mubr.f32.gmra.mrb[0].mxu0 %v1058
    %v2401 = vpop.f32.mrb[0].mxu0
    %v2402 = vadd.f32 %v289, %v2401
    %v2403 = vpop.f32.mrb[0].mxu0
    %2404 = vdwg.mxu0
    %v2405 = vmax.f32 %v1127, 0.0
    %v2406 = vmax.f32 %v1132, 0.0
    %v2407 = vmax.f32 %v1137, 0.0
    %v2408 = vmax.f32 %v1142, 0.0
    %v2409 = vmax.f32 %v1147, 0.0
    %v2410 = vmax.f32 %v1152, 0.0
    %v2411 = vmax.f32 %v1157, 0.0
    %v2412 = vmax.f32 %v1162, 0.0
    %v2413 = vmax.f32 %v1167, 0.0
    %v2414 = vmax.f32 %v1172, 0.0
    %v2415 = vmax.f32 %v1177, 0.0
    %v2416 = vmax.f32 %v1182, 0.0
    %v2417 = vmax.f32 %v1187, 0.0
    %v2418 = vmax.f32 %v1192, 0.0
    %v2419 = vmax.f32 %v1197, 0.0
    %v2420 = vmax.f32 %v1202, 0.0
    %v2421 = vmax.f32 %v1207, 0.0
    %v2422 = vmax.f32 %v1212, 0.0
    %v2423 = vmax.f32 %v1217, 0.0
    %v2424 = vmax.f32 %v1222, 0.0
    %v2425 = vmax.f32 %v1227, 0.0
    %v2426 = vmax.f32 %v1232, 0.0
    %v2427 = vmax.f32 %v1237, 0.0
    %v2428 = vmax.f32 %v1242, 0.0
    %v2429 = vmax.f32 %v1247, 0.0
    %v2430 = vmax.f32 %v1252, 0.0
    %v2431 = vmax.f32 %v1257, 0.0
    %v2432 = vmax.f32 %v1262, 0.0
    %v2433 = vmax.f32 %v1267, 0.0
    %v2434 = vmax.f32 %v1272, 0.0
    %v2435 = vmax.f32 %v1277, 0.0
    %v2436 = vmax.f32 %v1282, 0.0
    %v2437 = vmax.f32 %v1287, 0.0
    %v2438 = vmax.f32 %v1292, 0.0
    %v2439 = vmax.f32 %v1297, 0.0
    %v2440 = vmax.f32 %v1302, 0.0
    %v2441 = vmax.f32 %v1307, 0.0
    %v2442 = vmax.f32 %v1312, 0.0
    %v2443 = vmax.f32 %v1317, 0.0
    %v2444 = vmax.f32 %v1322, 0.0
    %v2445 = vmax.f32 %v1327, 0.0
    %v2446 = vmax.f32 %v1332, 0.0
    %v2447 = vmax.f32 %v1337, 0.0
    %v2448 = vmax.f32 %v1342, 0.0
    %v2449 = vmax.f32 %v1347, 0.0
    %v2450 = vmax.f32 %v1352, 0.0
    %v2451 = vmax.f32 %v1357, 0.0
    %v2452 = vmax.f32 %v1362, 0.0
    %v2453 = vmax.f32 %v1367, 0.0
    %v2454 = vmax.f32 %v1372, 0.0
    %v2455 = vmax.f32 %v1377, 0.0
    %v2456 = vmax.f32 %v1382, 0.0
    %v2457 = vmax.f32 %v1387, 0.0
    %v2458 = vmax.f32 %v1392, 0.0
    %v2459 = vmax.f32 %v1397, 0.0
    %v2460 = vmax.f32 %v1402, 0.0
    %v2461 = vmax.f32 %v1407, 0.0
    %v2462 = vmax.f32 %v1412, 0.0
    %v2463 = vmax.f32 %v1417, 0.0
    %v2464 = vmax.f32 %v1422, 0.0
    %v2465 = vmax.f32 %v1427, 0.0
    %v2466 = vmax.f32 %v1432, 0.0
    %v2467 = vmax.f32 %v1437, 0.0
    %v2468 = vmax.f32 %v1442, 0.0
    %v2469 = vmax.f32 %v1447, 0.0
    %v2470 = vmax.f32 %v1452, 0.0
    %v2471 = vmax.f32 %v1457, 0.0
    %v2472 = vmax.f32 %v1462, 0.0
    %v2473 = vmax.f32 %v1467, 0.0
    %v2474 = vmax.f32 %v1472, 0.0
    %v2475 = vmax.f32 %v1477, 0.0
    %v2476 = vmax.f32 %v1482, 0.0
    %v2477 = vmax.f32 %v1487, 0.0
    %v2478 = vmax.f32 %v1492, 0.0
    %v2479 = vmax.f32 %v1497, 0.0
    %v2480 = vmax.f32 %v1502, 0.0
    %v2481 = vmax.f32 %v1507, 0.0
    %v2482 = vmax.f32 %v1512, 0.0
    %v2483 = vmax.f32 %v1517, 0.0
    %v2484 = vmax.f32 %v1522, 0.0
    %v2485 = vmax.f32 %v1527, 0.0
    %v2486 = vmax.f32 %v1532, 0.0
    %v2487 = vmax.f32 %v1537, 0.0
    %v2488 = vmax.f32 %v1542, 0.0
    %v2489 = vmax.f32 %v1547, 0.0
    %v2490 = vmax.f32 %v1552, 0.0
    %v2491 = vmax.f32 %v1557, 0.0
    %v2492 = vmax.f32 %v1562, 0.0
    %v2493 = vmax.f32 %v1567, 0.0
    %v2494 = vmax.f32 %v1572, 0.0
    %v2495 = vmax.f32 %v1577, 0.0
    %v2496 = vmax.f32 %v1582, 0.0
    %v2497 = vmax.f32 %v1587, 0.0
    %v2498 = vmax.f32 %v1592, 0.0
    %v2499 = vmax.f32 %v1597, 0.0
    %v2500 = vmax.f32 %v1602, 0.0
    %v2501 = vmax.f32 %v1607, 0.0
    %v2502 = vmax.f32 %v1612, 0.0
    %v2503 = vmax.f32 %v1617, 0.0
    %v2504 = vmax.f32 %v1622, 0.0
    %v2505 = vmax.f32 %v1627, 0.0
    %v2506 = vmax.f32 %v1632, 0.0
    %v2507 = vmax.f32 %v1637, 0.0
    %v2508 = vmax.f32 %v1642, 0.0
    %v2509 = vmax.f32 %v1647, 0.0
    %v2510 = vmax.f32 %v1652, 0.0
    %v2511 = vmax.f32 %v1657, 0.0
    %v2512 = vmax.f32 %v1662, 0.0
    %v2513 = vmax.f32 %v1667, 0.0
    %v2514 = vmax.f32 %v1672, 0.0
    %v2515 = vmax.f32 %v1677, 0.0
    %v2516 = vmax.f32 %v1682, 0.0
    %v2517 = vmax.f32 %v1687, 0.0
    %v2518 = vmax.f32 %v1692, 0.0
    %v2519 = vmax.f32 %v1697, 0.0
    %v2520 = vmax.f32 %v1702, 0.0
    %v2521 = vmax.f32 %v1707, 0.0
    %v2522 = vmax.f32 %v1712, 0.0
    %v2523 = vmax.f32 %v1717, 0.0
    %v2524 = vmax.f32 %v1722, 0.0
    %v2525 = vmax.f32 %v1727, 0.0
    %v2526 = vmax.f32 %v1732, 0.0
    %v2527 = vmax.f32 %v1737, 0.0
    %v2528 = vmax.f32 %v1742, 0.0
    %v2529 = vmax.f32 %v1747, 0.0
    %v2530 = vmax.f32 %v1752, 0.0
    %v2531 = vmax.f32 %v1757, 0.0
    %v2532 = vmax.f32 %v1762, 0.0
    %v2533 = vmax.f32 %v1767, 0.0
    %v2534 = vmax.f32 %v1772, 0.0
    %v2535 = vmax.f32 %v1777, 0.0
    %v2536 = vmax.f32 %v1782, 0.0
    %v2537 = vmax.f32 %v1787, 0.0
    %v2538 = vmax.f32 %v1792, 0.0
    %v2539 = vmax.f32 %v1797, 0.0
    %v2540 = vmax.f32 %v1802, 0.0
    %v2541 = vmax.f32 %v1807, 0.0
    %v2542 = vmax.f32 %v1812, 0.0
    %v2543 = vmax.f32 %v1817, 0.0
    %v2544 = vmax.f32 %v1822, 0.0
    %v2545 = vmax.f32 %v1827, 0.0
    %v2546 = vmax.f32 %v1832, 0.0
    %v2547 = vmax.f32 %v1837, 0.0
    %v2548 = vmax.f32 %v1842, 0.0
    %v2549 = vmax.f32 %v1847, 0.0
    %v2550 = vmax.f32 %v1852, 0.0
    %v2551 = vmax.f32 %v1857, 0.0
    %v2552 = vmax.f32 %v1862, 0.0
    %v2553 = vmax.f32 %v1867, 0.0
    %v2554 = vmax.f32 %v1872, 0.0
    %v2555 = vmax.f32 %v1877, 0.0
    %v2556 = vmax.f32 %v1882, 0.0
    %v2557 = vmax.f32 %v1887, 0.0
    %v2558 = vmax.f32 %v1892, 0.0
    %v2559 = vmax.f32 %v1897, 0.0
    %v2560 = vmax.f32 %v1902, 0.0
    %v2561 = vmax.f32 %v1907, 0.0
    %v2562 = vmax.f32 %v1912, 0.0
    %v2563 = vmax.f32 %v1917, 0.0
    %v2564 = vmax.f32 %v1922, 0.0
    %v2565 = vmax.f32 %v1927, 0.0
    %v2566 = vmax.f32 %v1932, 0.0
    %v2567 = vmax.f32 %v1937, 0.0
    %v2568 = vmax.f32 %v1942, 0.0
    %v2569 = vmax.f32 %v1947, 0.0
    %v2570 = vmax.f32 %v1952, 0.0
    %v2571 = vmax.f32 %v1957, 0.0
    %v2572 = vmax.f32 %v1962, 0.0
    %v2573 = vmax.f32 %v1967, 0.0
    %v2574 = vmax.f32 %v1972, 0.0
    %v2575 = vmax.f32 %v1977, 0.0
    %v2576 = vmax.f32 %v1982, 0.0
    %v2577 = vmax.f32 %v1987, 0.0
    %v2578 = vmax.f32 %v1992, 0.0
    %v2579 = vmax.f32 %v1997, 0.0
    %v2580 = vmax.f32 %v2002, 0.0
    %v2581 = vmax.f32 %v2007, 0.0
    %v2582 = vmax.f32 %v2012, 0.0
    %v2583 = vmax.f32 %v2017, 0.0
    %v2584 = vmax.f32 %v2022, 0.0
    %v2585 = vmax.f32 %v2027, 0.0
    %v2586 = vmax.f32 %v2032, 0.0
    %v2587 = vmax.f32 %v2037, 0.0
    %v2588 = vmax.f32 %v2042, 0.0
    %v2589 = vmax.f32 %v2047, 0.0
    %v2590 = vmax.f32 %v2052, 0.0
    %v2591 = vmax.f32 %v2057, 0.0
    %v2592 = vmax.f32 %v2062, 0.0
    %v2593 = vmax.f32 %v2067, 0.0
    %v2594 = vmax.f32 %v2072, 0.0
    %v2595 = vmax.f32 %v2077, 0.0
    %v2596 = vmax.f32 %v2082, 0.0
    %v2597 = vmax.f32 %v2087, 0.0
    %v2598 = vmax.f32 %v2092, 0.0
    %v2599 = vmax.f32 %v2097, 0.0
    %v2600 = vmax.f32 %v2102, 0.0
    %v2601 = vmax.f32 %v2107, 0.0
    %v2602 = vmax.f32 %v2112, 0.0
    %v2603 = vmax.f32 %v2117, 0.0
    %v2604 = vmax.f32 %v2122, 0.0
    %v2605 = vmax.f32 %v2127, 0.0
    %v2606 = vmax.f32 %v2132, 0.0
    %v2607 = vmax.f32 %v2137, 0.0
    %v2608 = vmax.f32 %v2142, 0.0
    %v2609 = vmax.f32 %v2147, 0.0
    %v2610 = vmax.f32 %v2152, 0.0
    %v2611 = vmax.f32 %v2157, 0.0
    %v2612 = vmax.f32 %v2162, 0.0
    %v2613 = vmax.f32 %v2167, 0.0
    %v2614 = vmax.f32 %v2172, 0.0
    %v2615 = vmax.f32 %v2177, 0.0
    %v2616 = vmax.f32 %v2182, 0.0
    %v2617 = vmax.f32 %v2187, 0.0
    %v2618 = vmax.f32 %v2192, 0.0
    %v2619 = vmax.f32 %v2197, 0.0
    %v2620 = vmax.f32 %v2202, 0.0
    %v2621 = vmax.f32 %v2207, 0.0
    %v2622 = vmax.f32 %v2212, 0.0
    %v2623 = vmax.f32 %v2217, 0.0
    %v2624 = vmax.f32 %v2222, 0.0
    %v2625 = vmax.f32 %v2227, 0.0
    %v2626 = vmax.f32 %v2232, 0.0
    %v2627 = vmax.f32 %v2237, 0.0
    %v2628 = vmax.f32 %v2242, 0.0
    %v2629 = vmax.f32 %v2247, 0.0
    %v2630 = vmax.f32 %v2252, 0.0
    %v2631 = vmax.f32 %v2257, 0.0
    %v2632 = vmax.f32 %v2262, 0.0
    %v2633 = vmax.f32 %v2267, 0.0
    %v2634 = vmax.f32 %v2272, 0.0
    %v2635 = vmax.f32 %v2277, 0.0
    %v2636 = vmax.f32 %v2282, 0.0
    %v2637 = vmax.f32 %v2287, 0.0
    %v2638 = vmax.f32 %v2292, 0.0
    %v2639 = vmax.f32 %v2297, 0.0
    %v2640 = vmax.f32 %v2302, 0.0
    %v2641 = vmax.f32 %v2307, 0.0
    %v2642 = vmax.f32 %v2312, 0.0
    %v2643 = vmax.f32 %v2317, 0.0
    %v2644 = vmax.f32 %v2322, 0.0
    %v2645 = vmax.f32 %v2327, 0.0
    %v2646 = vmax.f32 %v2332, 0.0
    %v2647 = vmax.f32 %v2337, 0.0
    %v2648 = vmax.f32 %v2342, 0.0
    %v2649 = vmax.f32 %v2347, 0.0
    %v2650 = vmax.f32 %v2352, 0.0
    %v2651 = vmax.f32 %v2357, 0.0
    %v2652 = vmax.f32 %v2362, 0.0
    %v2653 = vmax.f32 %v2367, 0.0
    %v2654 = vmax.f32 %v2372, 0.0
    %v2655 = vmax.f32 %v2377, 0.0
    %v2656 = vmax.f32 %v2382, 0.0
    %v2657 = vmax.f32 %v2387, 0.0
    %v2658 = vmax.f32 %v2392, 0.0
    %v2659 = vmax.f32 %v2397, 0.0
    %v2660 = vmax.f32 %v2402, 0.0
    %v2661 = vld [vmem:[%s3] sm:$0xff]
    %v2662 = vld [vmem:[%s3 + $0x8] sm:$0xff]
    %v2663 = vld [vmem:[%s3 + $0x10] sm:$0xff]
    %v2664 = vld [vmem:[%s3 + $0x18] sm:$0xff]
    %v2665 = vld [vmem:[%s3 + $0x20] sm:$0xff]
    %v2666 = vld [vmem:[%s3 + $0x28] sm:$0xff]
    %v2667 = vld [vmem:[%s3 + $0x30] sm:$0xff]
    %v2668 = vld [vmem:[%s3 + $0x38] sm:$0xff]
    %v2669 = vld [vmem:[%s4] sm:$0x1]
    %v2671 = vlaneseq
    %v2672 = vshrl.u32 %v2671, 7
    %v2673 = vsub.s32 0, %v2672
    %v2674 = vrot.slane %v2669, %v2673
    %vm2676 = vcmask 523264
    %v2678 = vsel %vm2676, %v2405, 0
    %v2681 = vsel %vm2676, %v2406, 0
    %v2684 = vsel %vm2676, %v2407, 0
    %v2687 = vsel %vm2676, %v2408, 0
    %v2690 = vsel %vm2676, %v2409, 0
    %v2693 = vsel %vm2676, %v2410, 0
    %v2696 = vsel %vm2676, %v2411, 0
    %v2699 = vsel %vm2676, %v2412, 0
    %v2702 = vsel %vm2676, %v2413, 0
    %v2705 = vsel %vm2676, %v2414, 0
    %v2708 = vsel %vm2676, %v2415, 0
    %v2711 = vsel %vm2676, %v2416, 0
    %v2714 = vsel %vm2676, %v2417, 0
    %v2717 = vsel %vm2676, %v2418, 0
    %v2720 = vsel %vm2676, %v2419, 0
    %v2723 = vsel %vm2676, %v2420, 0
    %v2726 = vsel %vm2676, %v2421, 0
    %v2729 = vsel %vm2676, %v2422, 0
    %v2732 = vsel %vm2676, %v2423, 0
    %v2735 = vsel %vm2676, %v2424, 0
    %v2738 = vsel %vm2676, %v2425, 0
    %v2741 = vsel %vm2676, %v2426, 0
    %v2744 = vsel %vm2676, %v2427, 0
    %v2747 = vsel %vm2676, %v2428, 0
    %v2750 = vsel %vm2676, %v2429, 0
    %v2753 = vsel %vm2676, %v2430, 0
    %v2756 = vsel %vm2676, %v2431, 0
    %v2759 = vsel %vm2676, %v2432, 0
    %v2762 = vsel %vm2676, %v2433, 0
    %v2765 = vsel %vm2676, %v2434, 0
    %v2768 = vsel %vm2676, %v2435, 0
    %v2771 = vsel %vm2676, %v2436, 0
    %v2774 = vsel %vm2676, %v2437, 0
    %v2777 = vsel %vm2676, %v2438, 0
    %v2780 = vsel %vm2676, %v2439, 0
    %v2783 = vsel %vm2676, %v2440, 0
    %v2786 = vsel %vm2676, %v2441, 0
    %v2789 = vsel %vm2676, %v2442, 0
    %v2792 = vsel %vm2676, %v2443, 0
    %v2795 = vsel %vm2676, %v2444, 0
    %v2798 = vsel %vm2676, %v2445, 0
    %v2801 = vsel %vm2676, %v2446, 0
    %v2804 = vsel %vm2676, %v2447, 0
    %v2807 = vsel %vm2676, %v2448, 0
    %v2810 = vsel %vm2676, %v2449, 0
    %v2813 = vsel %vm2676, %v2450, 0
    %v2816 = vsel %vm2676, %v2451, 0
    %v2819 = vsel %vm2676, %v2452, 0
    %v2822 = vsel %vm2676, %v2453, 0
    %v2825 = vsel %vm2676, %v2454, 0
    %v2828 = vsel %vm2676, %v2455, 0
    %v2831 = vsel %vm2676, %v2456, 0
    %v2834 = vsel %vm2676, %v2457, 0
    %v2837 = vsel %vm2676, %v2458, 0
    %v2840 = vsel %vm2676, %v2459, 0
    %v2843 = vsel %vm2676, %v2460, 0
    %v2846 = vsel %vm2676, %v2461, 0
    %v2849 = vsel %vm2676, %v2462, 0
    %v2852 = vsel %vm2676, %v2463, 0
    %v2855 = vsel %vm2676, %v2464, 0
    %v2858 = vsel %vm2676, %v2465, 0
    %v2861 = vsel %vm2676, %v2466, 0
    %v2864 = vsel %vm2676, %v2467, 0
    %v2867 = vsel %vm2676, %v2468, 0
    %v2870 = vsel %vm2676, %v2469, 0
    %v2873 = vsel %vm2676, %v2470, 0
    %v2876 = vsel %vm2676, %v2471, 0
    %v2879 = vsel %vm2676, %v2472, 0
    %v2882 = vsel %vm2676, %v2473, 0
    %v2885 = vsel %vm2676, %v2474, 0
    %v2888 = vsel %vm2676, %v2475, 0
    %v2891 = vsel %vm2676, %v2476, 0
    %v2894 = vsel %vm2676, %v2477, 0
    %v2897 = vsel %vm2676, %v2478, 0
    %v2900 = vsel %vm2676, %v2479, 0
    %v2903 = vsel %vm2676, %v2480, 0
    %v2906 = vsel %vm2676, %v2481, 0
    %v2909 = vsel %vm2676, %v2482, 0
    %v2912 = vsel %vm2676, %v2483, 0
    %v2915 = vsel %vm2676, %v2484, 0
    %v2918 = vsel %vm2676, %v2485, 0
    %v2921 = vsel %vm2676, %v2486, 0
    %v2924 = vsel %vm2676, %v2487, 0
    %v2927 = vsel %vm2676, %v2488, 0
    %v2930 = vsel %vm2676, %v2489, 0
    %v2933 = vsel %vm2676, %v2490, 0
    %v2936 = vsel %vm2676, %v2491, 0
    %v2939 = vsel %vm2676, %v2492, 0
    %v2942 = vsel %vm2676, %v2493, 0
    %v2945 = vsel %vm2676, %v2494, 0
    %v2948 = vsel %vm2676, %v2495, 0
    %v2951 = vsel %vm2676, %v2496, 0
    %v2954 = vsel %vm2676, %v2497, 0
    %v2957 = vsel %vm2676, %v2498, 0
    %v2960 = vsel %vm2676, %v2499, 0
    %v2963 = vsel %vm2676, %v2500, 0
    %v2966 = vsel %vm2676, %v2501, 0
    %v2969 = vsel %vm2676, %v2502, 0
    %v2972 = vsel %vm2676, %v2503, 0
    %v2975 = vsel %vm2676, %v2504, 0
    %v2978 = vsel %vm2676, %v2505, 0
    %v2981 = vsel %vm2676, %v2506, 0
    %v2984 = vsel %vm2676, %v2507, 0
    %v2987 = vsel %vm2676, %v2508, 0
    %v2990 = vsel %vm2676, %v2509, 0
    %v2993 = vsel %vm2676, %v2510, 0
    %v2996 = vsel %vm2676, %v2511, 0
    %v2999 = vsel %vm2676, %v2512, 0
    %v3002 = vsel %vm2676, %v2513, 0
    %v3005 = vsel %vm2676, %v2514, 0
    %v3008 = vsel %vm2676, %v2515, 0
    %v3011 = vsel %vm2676, %v2516, 0
    %v3014 = vsel %vm2676, %v2517, 0
    %v3017 = vsel %vm2676, %v2518, 0
    %v3020 = vsel %vm2676, %v2519, 0
    %v3023 = vsel %vm2676, %v2520, 0
    %v3026 = vsel %vm2676, %v2521, 0
    %v3029 = vsel %vm2676, %v2522, 0
    %v3032 = vsel %vm2676, %v2523, 0
    %v3035 = vsel %vm2676, %v2524, 0
    %v3038 = vsel %vm2676, %v2525, 0
    %v3041 = vsel %vm2676, %v2526, 0
    %v3044 = vsel %vm2676, %v2527, 0
    %v3047 = vsel %vm2676, %v2528, 0
    %v3050 = vsel %vm2676, %v2529, 0
    %v3053 = vsel %vm2676, %v2530, 0
    %v3056 = vsel %vm2676, %v2531, 0
    %v3059 = vsel %vm2676, %v2532, 0
    %v3062 = vsel %vm2676, %v2533, 0
    %v3065 = vsel %vm2676, %v2534, 0
    %v3068 = vsel %vm2676, %v2535, 0
    %v3071 = vsel %vm2676, %v2536, 0
    %v3074 = vsel %vm2676, %v2537, 0
    %v3077 = vsel %vm2676, %v2538, 0
    %v3080 = vsel %vm2676, %v2539, 0
    %v3083 = vsel %vm2676, %v2540, 0
    %v3086 = vsel %vm2676, %v2541, 0
    %v3089 = vsel %vm2676, %v2542, 0
    %v3092 = vsel %vm2676, %v2543, 0
    %v3095 = vsel %vm2676, %v2544, 0
    %v3098 = vsel %vm2676, %v2545, 0
    %v3101 = vsel %vm2676, %v2546, 0
    %v3104 = vsel %vm2676, %v2547, 0
    %v3107 = vsel %vm2676, %v2548, 0
    %v3110 = vsel %vm2676, %v2549, 0
    %v3113 = vsel %vm2676, %v2550, 0
    %v3116 = vsel %vm2676, %v2551, 0
    %v3119 = vsel %vm2676, %v2552, 0
    %v3122 = vsel %vm2676, %v2553, 0
    %v3125 = vsel %vm2676, %v2554, 0
    %v3128 = vsel %vm2676, %v2555, 0
    %v3131 = vsel %vm2676, %v2556, 0
    %v3134 = vsel %vm2676, %v2557, 0
    %v3137 = vsel %vm2676, %v2558, 0
    %v3140 = vsel %vm2676, %v2559, 0
    %v3143 = vsel %vm2676, %v2560, 0
    %v3146 = vsel %vm2676, %v2561, 0
    %v3149 = vsel %vm2676, %v2562, 0
    %v3152 = vsel %vm2676, %v2563, 0
    %v3155 = vsel %vm2676, %v2564, 0
    %v3158 = vsel %vm2676, %v2565, 0
    %v3161 = vsel %vm2676, %v2566, 0
    %v3164 = vsel %vm2676, %v2567, 0
    %v3167 = vsel %vm2676, %v2568, 0
    %v3170 = vsel %vm2676, %v2569, 0
    %v3173 = vsel %vm2676, %v2570, 0
    %v3176 = vsel %vm2676, %v2571, 0
    %v3179 = vsel %vm2676, %v2572, 0
    %v3182 = vsel %vm2676, %v2573, 0
    %v3185 = vsel %vm2676, %v2574, 0
    %v3188 = vsel %vm2676, %v2575, 0
    %v3191 = vsel %vm2676, %v2576, 0
    %v3194 = vsel %vm2676, %v2577, 0
    %v3197 = vsel %vm2676, %v2578, 0
    %v3200 = vsel %vm2676, %v2579, 0
    %v3203 = vsel %vm2676, %v2580, 0
    %v3206 = vsel %vm2676, %v2581, 0
    %v3209 = vsel %vm2676, %v2582, 0
    %v3212 = vsel %vm2676, %v2583, 0
    %v3215 = vsel %vm2676, %v2584, 0
    %v3218 = vsel %vm2676, %v2585, 0
    %v3221 = vsel %vm2676, %v2586, 0
    %v3224 = vsel %vm2676, %v2587, 0
    %v3227 = vsel %vm2676, %v2588, 0
    %v3230 = vsel %vm2676, %v2589, 0
    %v3233 = vsel %vm2676, %v2590, 0
    %v3236 = vsel %vm2676, %v2591, 0
    %v3239 = vsel %vm2676, %v2592, 0
    %v3242 = vsel %vm2676, %v2593, 0
    %v3245 = vsel %vm2676, %v2594, 0
    %v3248 = vsel %vm2676, %v2595, 0
    %v3251 = vsel %vm2676, %v2596, 0
    %v3254 = vsel %vm2676, %v2597, 0
    %v3257 = vsel %vm2676, %v2598, 0
    %v3260 = vsel %vm2676, %v2599, 0
    %v3263 = vsel %vm2676, %v2600, 0
    %v3266 = vsel %vm2676, %v2601, 0
    %v3269 = vsel %vm2676, %v2602, 0
    %v3272 = vsel %vm2676, %v2603, 0
    %v3275 = vsel %vm2676, %v2604, 0
    %v3278 = vsel %vm2676, %v2605, 0
    %v3281 = vsel %vm2676, %v2606, 0
    %v3284 = vsel %vm2676, %v2607, 0
    %v3287 = vsel %vm2676, %v2608, 0
    %v3290 = vsel %vm2676, %v2609, 0
    %v3293 = vsel %vm2676, %v2610, 0
    %v3296 = vsel %vm2676, %v2611, 0
    %v3299 = vsel %vm2676, %v2612, 0
    %v3302 = vsel %vm2676, %v2613, 0
    %v3305 = vsel %vm2676, %v2614, 0
    %v3308 = vsel %vm2676, %v2615, 0
    %v3311 = vsel %vm2676, %v2616, 0
    %v3314 = vsel %vm2676, %v2617, 0
    %v3317 = vsel %vm2676, %v2618, 0
    %v3320 = vsel %vm2676, %v2619, 0
    %v3323 = vsel %vm2676, %v2620, 0
    %v3326 = vsel %vm2676, %v2621, 0
    %v3329 = vsel %vm2676, %v2622, 0
    %v3332 = vsel %vm2676, %v2623, 0
    %v3335 = vsel %vm2676, %v2624, 0
    %v3338 = vsel %vm2676, %v2625, 0
    %v3341 = vsel %vm2676, %v2626, 0
    %v3344 = vsel %vm2676, %v2627, 0
    %v3347 = vsel %vm2676, %v2628, 0
    %v3350 = vsel %vm2676, %v2629, 0
    %v3353 = vsel %vm2676, %v2630, 0
    %v3356 = vsel %vm2676, %v2631, 0
    %v3359 = vsel %vm2676, %v2632, 0
    %v3362 = vsel %vm2676, %v2633, 0
    %v3365 = vsel %vm2676, %v2634, 0
    %v3368 = vsel %vm2676, %v2635, 0
    %v3371 = vsel %vm2676, %v2636, 0
    %v3374 = vsel %vm2676, %v2637, 0
    %v3377 = vsel %vm2676, %v2638, 0
    %v3380 = vsel %vm2676, %v2639, 0
    %v3383 = vsel %vm2676, %v2640, 0
    %v3386 = vsel %vm2676, %v2641, 0
    %v3389 = vsel %vm2676, %v2642, 0
    %v3392 = vsel %vm2676, %v2643, 0
    %v3395 = vsel %vm2676, %v2644, 0
    %v3398 = vsel %vm2676, %v2645, 0
    %v3401 = vsel %vm2676, %v2646, 0
    %v3404 = vsel %vm2676, %v2647, 0
    %v3407 = vsel %vm2676, %v2648, 0
    %v3410 = vsel %vm2676, %v2649, 0
    %v3413 = vsel %vm2676, %v2650, 0
    %v3416 = vsel %vm2676, %v2651, 0
    %v3419 = vsel %vm2676, %v2652, 0
    %v3422 = vsel %vm2676, %v2653, 0
    %v3425 = vsel %vm2676, %v2654, 0
    %v3428 = vsel %vm2676, %v2655, 0
    %v3431 = vsel %vm2676, %v2656, 0
    %v3434 = vsel %vm2676, %v2657, 0
    %v3437 = vsel %vm2676, %v2658, 0
    %v3440 = vsel %vm2676, %v2659, 0
    %v3443 = vsel %vm2676, %v2660, 0
    %3445 = vmatprep.subr.mxu0 0.0
    %3446 = vmatpush1.msra.mxu0 %v2661
    %3447 = vmatprep.subr.mxu0 0.0
    %3448 = vmatpush1.msra.mxu0 %v2662
    %3449 = vmatprep.subr.mxu0 0.0
    %3450 = vmatpush1.msra.mxu0 %v2663
    %3451 = vmatprep.subr.mxu0 0.0
    %3452 = vmatpush1.msra.mxu0 %v2664
    %3453 = vmatprep.subr.mxu0 0.0
    %3454 = vmatpush1.msra.mxu0 %v2665
    %3455 = vmatprep.subr.mxu0 0.0
    %3456 = vmatpush1.msra.mxu0 %v2666
    %3457 = vmatprep.subr.mxu0 0.0
    %3458 = vmatpush1.msra.mxu0 %v2667
    %3459 = vmatprep.subr.mxu0 0.0
    %3460 = vmatpush1.msra.mxu0 %v2668
    %3461 = vmatprep.subr.mxu0 0.0
    %3462 = vmatpush1.msra.mxu0 0.0
    %3463 = vmatprep.subr.mxu0 0.0
    %3464 = vmatpush1.msra.mxu0 0.0
    %3465 = vmatprep.subr.mxu0 0.0
    %3466 = vmatpush1.msra.mxu0 0.0
    %3467 = vmatprep.subr.mxu0 0.0
    %3468 = vmatpush1.msra.mxu0 0.0
    %3469 = vmatprep.subr.mxu0 0.0
    %3470 = vmatpush1.msra.mxu0 0.0
    %3471 = vmatprep.subr.mxu0 0.0
    %3472 = vmatpush1.msra.mxu0 0.0
    %3473 = vmatprep.subr.mxu0 0.0
    %3474 = vmatpush1.msra.mxu0 0.0
    %3475 = vmatprep.subr.mxu0 0.0
    %3476 = vmatpush1.msra.mxu0 0.0
    %3477 = vmatprep.subr.mxu0 0.0
    %3478 = vmatpush1.msra.mxu0 0.0
    %3479 = vmatprep.subr.mxu0 0.0
    %3480 = vmatpush1.msra.mxu0 0.0
    %3481 = vmatprep.subr.mxu0 0.0
    %3482 = vmatpush1.msra.mxu0 0.0
    %3483 = vmatprep.subr.mxu0 0.0
    %3484 = vmatpush1.msra.mxu0 0.0
    %3485 = vmatprep.subr.mxu0 0.0
    %3486 = vmatpush1.msra.mxu0 0.0
    %3487 = vmatprep.subr.mxu0 0.0
    %3488 = vmatpush1.msra.mxu0 0.0
    %3489 = vmatprep.subr.mxu0 0.0
    %3490 = vmatpush1.msra.mxu0 0.0
    %3491 = vmatprep.subr.mxu0 0.0
    %3492 = vmatpush1.msra.mxu0 0.0
    %3493 = vmatprep.subr.mxu0 0.0
    %3494 = vmatpush1.msra.mxu0 0.0
    %3495 = vmatprep.subr.mxu0 0.0
    %3496 = vmatpush1.msra.mxu0 0.0
    %3497 = vmatprep.subr.mxu0 0.0
    %3498 = vmatpush1.msra.mxu0 0.0
    %3499 = vmatprep.subr.mxu0 0.0
    %3500 = vmatpush1.msra.mxu0 0.0
    %3501 = vmatprep.subr.mxu0 0.0
    %3502 = vmatpush1.msra.mxu0 0.0
    %3503 = vmatprep.subr.mxu0 0.0
    %3504 = vmatpush1.msra.mxu0 0.0
    %3505 = vmatprep.subr.mxu0 0.0
    %3506 = vmatpush1.msra.mxu0 0.0
    %3507 = vmatprep.subr.mxu0 0.0
    %3508 = vmatpush1.msra.mxu0 0.0
    %3509 = vmatprep.mubr.f32.mxu0 0.0
    %3510 = vmatmul.mubr.f32.gmra.mrb[0].mxu0 %v2678
    %v3511 = vpop.f32.mrb[0].mxu0
    %v3512 = vadd.f32 %v2674, %v3511
    %v3513 = vpop.f32.mrb[0].mxu0
    %3514 = vmatprep.mubr.f32.mxu0 0.0
    %3515 = vmatmul.mubr.f32.gmra.mrb[0].mxu0 %v2681
    %v3516 = vpop.f32.mrb[0].mxu0
    %v3517 = vadd.f32 %v2674, %v3516
    %v3518 = vpop.f32.mrb[0].mxu0
    %3519 = vmatprep.mubr.f32.mxu0 0.0
    %3520 = vmatmul.mubr.f32.gmra.mrb[0].mxu0 %v2684
    %v3521 = vpop.f32.mrb[0].mxu0
    %v3522 = vadd.f32 %v2674, %v3521
    %v3523 = vpop.f32.mrb[0].mxu0
    %3524 = vmatprep.mubr.f32.mxu0 0.0
    %3525 = vmatmul.mubr.f32.gmra.mrb[0].mxu0 %v2687
    %v3526 = vpop.f32.mrb[0].mxu0
    %v3527 = vadd.f32 %v2674, %v3526
    %v3528 = vpop.f32.mrb[0].mxu0
    %3529 = vmatprep.mubr.f32.mxu0 0.0
    %3530 = vmatmul.mubr.f32.gmra.mrb[0].mxu0 %v2690
    %v3531 = vpop.f32.mrb[0].mxu0
    %v3532 = vadd.f32 %v2674, %v3531
    %v3533 = vpop.f32.mrb[0].mxu0
    %3534 = vmatprep.mubr.f32.mxu0 0.0
    %3535 = vmatmul.mubr.f32.gmra.mrb[0].mxu0 %v2693
    %v3536 = vpop.f32.mrb[0].mxu0
    %v3537 = vadd.f32 %v2674, %v3536
    %v3538 = vpop.f32.mrb[0].mxu0
    %3539 = vmatprep.mubr.f32.mxu0 0.0
    %3540 = vmatmul.mubr.f32.gmra.mrb[0].mxu0 %v2696
    %v3541 = vpop.f32.mrb[0].mxu0
    %v3542 = vadd.f32 %v2674, %v3541
    %v3543 = vpop.f32.mrb[0].mxu0
    %3544 = vmatprep.mubr.f32.mxu0 0.0
    %3545 = vmatmul.mubr.f32.gmra.mrb[0].mxu0 %v2699
    %v3546 = vpop.f32.mrb[0].mxu0
    %v3547 = vadd.f32 %v2674, %v3546
    %v3548 = vpop.f32.mrb[0].mxu0
    %3549 = vmatprep.mubr.f32.mxu0 0.0
    %3550 = vmatmul.mubr.f32.gmra.mrb[0].mxu0 %v2702
    %v3551 = vpop.f32.mrb[0].mxu0
    %v3552 = vadd.f32 %v2674, %v3551
    %v3553 = vpop.f32.mrb[0].mxu0
    %3554 = vmatprep.mubr.f32.mxu0 0.0
    %3555 = vmatmul.mubr.f32.gmra.mrb[0].mxu0 %v2705
    %v3556 = vpop.f32.mrb[0].mxu0
    %v3557 = vadd.f32 %v2674, %v3556
    %v3558 = vpop.f32.mrb[0].mxu0
    %3559 = vmatprep.mubr.f32.mxu0 0.0
    %3560 = vmatmul.mubr.f32.gmra.mrb[0].mxu0 %v2708
    %v3561 = vpop.f32.mrb[0].mxu0
    %v3562 = vadd.f32 %v2674, %v3561
    %v3563 = vpop.f32.mrb[0].mxu0
    %3564 = vmatprep.mubr.f32.mxu0 0.0
    %3565 = vmatmul.mubr.f32.gmra.mrb[0].mxu0 %v2711
    %v3566 = vpop.f32.mrb[0].mxu0
    %v3567 = vadd.f32 %v2674, %v3566
    %v3568 = vpop.f32.mrb[0].mxu0
    %3569 = vmatprep.mubr.f32.mxu0 0.0
    %3570 = vmatmul.mubr.f32.gmra.mrb[0].mxu0 %v2714
    %v3571 = vpop.f32.mrb[0].mxu0
    %v3572 = vadd.f32 %v2674, %v3571
    %v3573 = vpop.f32.mrb[0].mxu0
    %3574 = vmatprep.mubr.f32.mxu0 0.0
    %3575 = vmatmul.mubr.f32.gmra.mrb[0].mxu0 %v2717
    %v3576 = vpop.f32.mrb[0].mxu0
    %v3577 = vadd.f32 %v2674, %v3576
    %v3578 = vpop.f32.mrb[0].mxu0
    %3579 = vmatprep.mubr.f32.mxu0 0.0
    %3580 = vmatmul.mubr.f32.gmra.mrb[0].mxu0 %v2720
    %v3581 = vpop.f32.mrb[0].mxu0
    %v3582 = vadd.f32 %v2674, %v3581
    %v3583 = vpop.f32.mrb[0].mxu0
    %3584 = vmatprep.mubr.f32.mxu0 0.0
    %3585 = vmatmul.mubr.f32.gmra.mrb[0].mxu0 %v2723
    %v3586 = vpop.f32.mrb[0].mxu0
    %v3587 = vadd.f32 %v2674, %v3586
    %v3588 = vpop.f32.mrb[0].mxu0
    %3589 = vmatprep.mubr.f32.mxu0 0.0
    %3590 = vmatmul.mubr.f32.gmra.mrb[0].mxu0 %v2726
    %v3591 = vpop.f32.mrb[0].mxu0
    %v3592 = vadd.f32 %v2674, %v3591
    %v3593 = vpop.f32.mrb[0].mxu0
    %3594 = vmatprep.mubr.f32.mxu0 0.0
    %3595 = vmatmul.mubr.f32.gmra.mrb[0].mxu0 %v2729
    %v3596 = vpop.f32.mrb[0].mxu0
    %v3597 = vadd.f32 %v2674, %v3596
    %v3598 = vpop.f32.mrb[0].mxu0
    %3599 = vmatprep.mubr.f32.mxu0 0.0
    %3600 = vmatmul.mubr.f32.gmra.mrb[0].mxu0 %v2732
    %v3601 = vpop.f32.mrb[0].mxu0
    %v3602 = vadd.f32 %v2674, %v3601
    %v3603 = vpop.f32.mrb[0].mxu0
    %3604 = vmatprep.mubr.f32.mxu0 0.0
    %3605 = vmatmul.mubr.f32.gmra.mrb[0].mxu0 %v2735
    %v3606 = vpop.f32.mrb[0].mxu0
    %v3607 = vadd.f32 %v2674, %v3606
    %v3608 = vpop.f32.mrb[0].mxu0
    %3609 = vmatprep.mubr.f32.mxu0 0.0
    %3610 = vmatmul.mubr.f32.gmra.mrb[0].mxu0 %v2738
    %v3611 = vpop.f32.mrb[0].mxu0
    %v3612 = vadd.f32 %v2674, %v3611
    %v3613 = vpop.f32.mrb[0].mxu0
    %3614 = vmatprep.mubr.f32.mxu0 0.0
    %3615 = vmatmul.mubr.f32.gmra.mrb[0].mxu0 %v2741
    %v3616 = vpop.f32.mrb[0].mxu0
    %v3617 = vadd.f32 %v2674, %v3616
    %v3618 = vpop.f32.mrb[0].mxu0
    %3619 = vmatprep.mubr.f32.mxu0 0.0
    %3620 = vmatmul.mubr.f32.gmra.mrb[0].mxu0 %v2744
    %v3621 = vpop.f32.mrb[0].mxu0
    %v3622 = vadd.f32 %v2674, %v3621
    %v3623 = vpop.f32.mrb[0].mxu0
    %3624 = vmatprep.mubr.f32.mxu0 0.0
    %3625 = vmatmul.mubr.f32.gmra.mrb[0].mxu0 %v2747
    %v3626 = vpop.f32.mrb[0].mxu0
    %v3627 = vadd.f32 %v2674, %v3626
    %v3628 = vpop.f32.mrb[0].mxu0
    %3629 = vmatprep.mubr.f32.mxu0 0.0
    %3630 = vmatmul.mubr.f32.gmra.mrb[0].mxu0 %v2750
    %v3631 = vpop.f32.mrb[0].mxu0
    %v3632 = vadd.f32 %v2674, %v3631
    %v3633 = vpop.f32.mrb[0].mxu0
    %3634 = vmatprep.mubr.f32.mxu0 0.0
    %3635 = vmatmul.mubr.f32.gmra.mrb[0].mxu0 %v2753
    %v3636 = vpop.f32.mrb[0].mxu0
    %v3637 = vadd.f32 %v2674, %v3636
    %v3638 = vpop.f32.mrb[0].mxu0
    %3639 = vmatprep.mubr.f32.mxu0 0.0
    %3640 = vmatmul.mubr.f32.gmra.mrb[0].mxu0 %v2756
    %v3641 = vpop.f32.mrb[0].mxu0
    %v3642 = vadd.f32 %v2674, %v3641
    %v3643 = vpop.f32.mrb[0].mxu0
    %3644 = vmatprep.mubr.f32.mxu0 0.0
    %3645 = vmatmul.mubr.f32.gmra.mrb[0].mxu0 %v2759
    %v3646 = vpop.f32.mrb[0].mxu0
    %v3647 = vadd.f32 %v2674, %v3646
    %v3648 = vpop.f32.mrb[0].mxu0
    %3649 = vmatprep.mubr.f32.mxu0 0.0
    %3650 = vmatmul.mubr.f32.gmra.mrb[0].mxu0 %v2762
    %v3651 = vpop.f32.mrb[0].mxu0
    %v3652 = vadd.f32 %v2674, %v3651
    %v3653 = vpop.f32.mrb[0].mxu0
    %3654 = vmatprep.mubr.f32.mxu0 0.0
    %3655 = vmatmul.mubr.f32.gmra.mrb[0].mxu0 %v2765
    %v3656 = vpop.f32.mrb[0].mxu0
    %v3657 = vadd.f32 %v2674, %v3656
    %v3658 = vpop.f32.mrb[0].mxu0
    %3659 = vmatprep.mubr.f32.mxu0 0.0
    %3660 = vmatmul.mubr.f32.gmra.mrb[0].mxu0 %v2768
    %v3661 = vpop.f32.mrb[0].mxu0
    %v3662 = vadd.f32 %v2674, %v3661
    %v3663 = vpop.f32.mrb[0].mxu0
    %3664 = vmatprep.mubr.f32.mxu0 0.0
    %3665 = vmatmul.mubr.f32.gmra.mrb[0].mxu0 %v2771
    %v3666 = vpop.f32.mrb[0].mxu0
    %v3667 = vadd.f32 %v2674, %v3666
    %v3668 = vpop.f32.mrb[0].mxu0
    %3669 = vmatprep.mubr.f32.mxu0 0.0
    %3670 = vmatmul.mubr.f32.gmra.mrb[0].mxu0 %v2774
    %v3671 = vpop.f32.mrb[0].mxu0
    %v3672 = vadd.f32 %v2674, %v3671
    %v3673 = vpop.f32.mrb[0].mxu0
    %3674 = vmatprep.mubr.f32.mxu0 0.0
    %3675 = vmatmul.mubr.f32.gmra.mrb[0].mxu0 %v2777
    %v3676 = vpop.f32.mrb[0].mxu0
    %v3677 = vadd.f32 %v2674, %v3676
    %v3678 = vpop.f32.mrb[0].mxu0
    %3679 = vmatprep.mubr.f32.mxu0 0.0
    %3680 = vmatmul.mubr.f32.gmra.mrb[0].mxu0 %v2780
    %v3681 = vpop.f32.mrb[0].mxu0
    %v3682 = vadd.f32 %v2674, %v3681
    %v3683 = vpop.f32.mrb[0].mxu0
    %3684 = vmatprep.mubr.f32.mxu0 0.0
    %3685 = vmatmul.mubr.f32.gmra.mrb[0].mxu0 %v2783
    %v3686 = vpop.f32.mrb[0].mxu0
    %v3687 = vadd.f32 %v2674, %v3686
    %v3688 = vpop.f32.mrb[0].mxu0
    %3689 = vmatprep.mubr.f32.mxu0 0.0
    %3690 = vmatmul.mubr.f32.gmra.mrb[0].mxu0 %v2786
    %v3691 = vpop.f32.mrb[0].mxu0
    %v3692 = vadd.f32 %v2674, %v3691
    %v3693 = vpop.f32.mrb[0].mxu0
    %3694 = vmatprep.mubr.f32.mxu0 0.0
    %3695 = vmatmul.mubr.f32.gmra.mrb[0].mxu0 %v2789
    %v3696 = vpop.f32.mrb[0].mxu0
    %v3697 = vadd.f32 %v2674, %v3696
    %v3698 = vpop.f32.mrb[0].mxu0
    %3699 = vmatprep.mubr.f32.mxu0 0.0
    %3700 = vmatmul.mubr.f32.gmra.mrb[0].mxu0 %v2792
    %v3701 = vpop.f32.mrb[0].mxu0
    %v3702 = vadd.f32 %v2674, %v3701
    %v3703 = vpop.f32.mrb[0].mxu0
    %3704 = vmatprep.mubr.f32.mxu0 0.0
    %3705 = vmatmul.mubr.f32.gmra.mrb[0].mxu0 %v2795
    %v3706 = vpop.f32.mrb[0].mxu0
    %v3707 = vadd.f32 %v2674, %v3706
    %v3708 = vpop.f32.mrb[0].mxu0
    %3709 = vmatprep.mubr.f32.mxu0 0.0
    %3710 = vmatmul.mubr.f32.gmra.mrb[0].mxu0 %v2798
    %v3711 = vpop.f32.mrb[0].mxu0
    %v3712 = vadd.f32 %v2674, %v3711
    %v3713 = vpop.f32.mrb[0].mxu0
    %3714 = vmatprep.mubr.f32.mxu0 0.0
    %3715 = vmatmul.mubr.f32.gmra.mrb[0].mxu0 %v2801
    %v3716 = vpop.f32.mrb[0].mxu0
    %v3717 = vadd.f32 %v2674, %v3716
    %v3718 = vpop.f32.mrb[0].mxu0
    %3719 = vmatprep.mubr.f32.mxu0 0.0
    %3720 = vmatmul.mubr.f32.gmra.mrb[0].mxu0 %v2804
    %v3721 = vpop.f32.mrb[0].mxu0
    %v3722 = vadd.f32 %v2674, %v3721
    %v3723 = vpop.f32.mrb[0].mxu0
    %3724 = vmatprep.mubr.f32.mxu0 0.0
    %3725 = vmatmul.mubr.f32.gmra.mrb[0].mxu0 %v2807
    %v3726 = vpop.f32.mrb[0].mxu0
    %v3727 = vadd.f32 %v2674, %v3726
    %v3728 = vpop.f32.mrb[0].mxu0
    %3729 = vmatprep.mubr.f32.mxu0 0.0
    %3730 = vmatmul.mubr.f32.gmra.mrb[0].mxu0 %v2810
    %v3731 = vpop.f32.mrb[0].mxu0
    %v3732 = vadd.f32 %v2674, %v3731
    %v3733 = vpop.f32.mrb[0].mxu0
    %3734 = vmatprep.mubr.f32.mxu0 0.0
    %3735 = vmatmul.mubr.f32.gmra.mrb[0].mxu0 %v2813
    %v3736 = vpop.f32.mrb[0].mxu0
    %v3737 = vadd.f32 %v2674, %v3736
    %v3738 = vpop.f32.mrb[0].mxu0
    %3739 = vmatprep.mubr.f32.mxu0 0.0
    %3740 = vmatmul.mubr.f32.gmra.mrb[0].mxu0 %v2816
    %v3741 = vpop.f32.mrb[0].mxu0
    %v3742 = vadd.f32 %v2674, %v3741
    %v3743 = vpop.f32.mrb[0].mxu0
    %3744 = vmatprep.mubr.f32.mxu0 0.0
    %3745 = vmatmul.mubr.f32.gmra.mrb[0].mxu0 %v2819
    %v3746 = vpop.f32.mrb[0].mxu0
    %v3747 = vadd.f32 %v2674, %v3746
    %v3748 = vpop.f32.mrb[0].mxu0
    %3749 = vmatprep.mubr.f32.mxu0 0.0
    %3750 = vmatmul.mubr.f32.gmra.mrb[0].mxu0 %v2822
    %v3751 = vpop.f32.mrb[0].mxu0
    %v3752 = vadd.f32 %v2674, %v3751
    %v3753 = vpop.f32.mrb[0].mxu0
    %3754 = vmatprep.mubr.f32.mxu0 0.0
    %3755 = vmatmul.mubr.f32.gmra.mrb[0].mxu0 %v2825
    %v3756 = vpop.f32.mrb[0].mxu0
    %v3757 = vadd.f32 %v2674, %v3756
    %v3758 = vpop.f32.mrb[0].mxu0
    %3759 = vmatprep.mubr.f32.mxu0 0.0
    %3760 = vmatmul.mubr.f32.gmra.mrb[0].mxu0 %v2828
    %v3761 = vpop.f32.mrb[0].mxu0
    %v3762 = vadd.f32 %v2674, %v3761
    %v3763 = vpop.f32.mrb[0].mxu0
    %3764 = vmatprep.mubr.f32.mxu0 0.0
    %3765 = vmatmul.mubr.f32.gmra.mrb[0].mxu0 %v2831
    %v3766 = vpop.f32.mrb[0].mxu0
    %v3767 = vadd.f32 %v2674, %v3766
    %v3768 = vpop.f32.mrb[0].mxu0
    %3769 = vmatprep.mubr.f32.mxu0 0.0
    %3770 = vmatmul.mubr.f32.gmra.mrb[0].mxu0 %v2834
    %v3771 = vpop.f32.mrb[0].mxu0
    %v3772 = vadd.f32 %v2674, %v3771
    %v3773 = vpop.f32.mrb[0].mxu0
    %3774 = vmatprep.mubr.f32.mxu0 0.0
    %3775 = vmatmul.mubr.f32.gmra.mrb[0].mxu0 %v2837
    %v3776 = vpop.f32.mrb[0].mxu0
    %v3777 = vadd.f32 %v2674, %v3776
    %v3778 = vpop.f32.mrb[0].mxu0
    %3779 = vmatprep.mubr.f32.mxu0 0.0
    %3780 = vmatmul.mubr.f32.gmra.mrb[0].mxu0 %v2840
    %v3781 = vpop.f32.mrb[0].mxu0
    %v3782 = vadd.f32 %v2674, %v3781
    %v3783 = vpop.f32.mrb[0].mxu0
    %3784 = vmatprep.mubr.f32.mxu0 0.0
    %3785 = vmatmul.mubr.f32.gmra.mrb[0].mxu0 %v2843
    %v3786 = vpop.f32.mrb[0].mxu0
    %v3787 = vadd.f32 %v2674, %v3786
    %v3788 = vpop.f32.mrb[0].mxu0
    %3789 = vmatprep.mubr.f32.mxu0 0.0
    %3790 = vmatmul.mubr.f32.gmra.mrb[0].mxu0 %v2846
    %v3791 = vpop.f32.mrb[0].mxu0
    %v3792 = vadd.f32 %v2674, %v3791
    %v3793 = vpop.f32.mrb[0].mxu0
    %3794 = vmatprep.mubr.f32.mxu0 0.0
    %3795 = vmatmul.mubr.f32.gmra.mrb[0].mxu0 %v2849
    %v3796 = vpop.f32.mrb[0].mxu0
    %v3797 = vadd.f32 %v2674, %v3796
    %v3798 = vpop.f32.mrb[0].mxu0
    %3799 = vmatprep.mubr.f32.mxu0 0.0
    %3800 = vmatmul.mubr.f32.gmra.mrb[0].mxu0 %v2852
    %v3801 = vpop.f32.mrb[0].mxu0
    %v3802 = vadd.f32 %v2674, %v3801
    %v3803 = vpop.f32.mrb[0].mxu0
    %3804 = vmatprep.mubr.f32.mxu0 0.0
    %3805 = vmatmul.mubr.f32.gmra.mrb[0].mxu0 %v2855
    %v3806 = vpop.f32.mrb[0].mxu0
    %v3807 = vadd.f32 %v2674, %v3806
    %v3808 = vpop.f32.mrb[0].mxu0
    %3809 = vmatprep.mubr.f32.mxu0 0.0
    %3810 = vmatmul.mubr.f32.gmra.mrb[0].mxu0 %v2858
    %v3811 = vpop.f32.mrb[0].mxu0
    %v3812 = vadd.f32 %v2674, %v3811
    %v3813 = vpop.f32.mrb[0].mxu0
    %3814 = vmatprep.mubr.f32.mxu0 0.0
    %3815 = vmatmul.mubr.f32.gmra.mrb[0].mxu0 %v2861
    %v3816 = vpop.f32.mrb[0].mxu0
    %v3817 = vadd.f32 %v2674, %v3816
    %v3818 = vpop.f32.mrb[0].mxu0
    %3819 = vmatprep.mubr.f32.mxu0 0.0
    %3820 = vmatmul.mubr.f32.gmra.mrb[0].mxu0 %v2864
    %v3821 = vpop.f32.mrb[0].mxu0
    %v3822 = vadd.f32 %v2674, %v3821
    %v3823 = vpop.f32.mrb[0].mxu0
    %3824 = vmatprep.mubr.f32.mxu0 0.0
    %3825 = vmatmul.mubr.f32.gmra.mrb[0].mxu0 %v2867
    %v3826 = vpop.f32.mrb[0].mxu0
    %v3827 = vadd.f32 %v2674, %v3826
    %v3828 = vpop.f32.mrb[0].mxu0
    %3829 = vmatprep.mubr.f32.mxu0 0.0
    %3830 = vmatmul.mubr.f32.gmra.mrb[0].mxu0 %v2870
    %v3831 = vpop.f32.mrb[0].mxu0
    %v3832 = vadd.f32 %v2674, %v3831
    %v3833 = vpop.f32.mrb[0].mxu0
    %3834 = vmatprep.mubr.f32.mxu0 0.0
    %3835 = vmatmul.mubr.f32.gmra.mrb[0].mxu0 %v2873
    %v3836 = vpop.f32.mrb[0].mxu0
    %v3837 = vadd.f32 %v2674, %v3836
    %v3838 = vpop.f32.mrb[0].mxu0
    %3839 = vmatprep.mubr.f32.mxu0 0.0
    %3840 = vmatmul.mubr.f32.gmra.mrb[0].mxu0 %v2876
    %v3841 = vpop.f32.mrb[0].mxu0
    %v3842 = vadd.f32 %v2674, %v3841
    %v3843 = vpop.f32.mrb[0].mxu0
    %3844 = vmatprep.mubr.f32.mxu0 0.0
    %3845 = vmatmul.mubr.f32.gmra.mrb[0].mxu0 %v2879
    %v3846 = vpop.f32.mrb[0].mxu0
    %v3847 = vadd.f32 %v2674, %v3846
    %v3848 = vpop.f32.mrb[0].mxu0
    %3849 = vmatprep.mubr.f32.mxu0 0.0
    %3850 = vmatmul.mubr.f32.gmra.mrb[0].mxu0 %v2882
    %v3851 = vpop.f32.mrb[0].mxu0
    %v3852 = vadd.f32 %v2674, %v3851
    %v3853 = vpop.f32.mrb[0].mxu0
    %3854 = vmatprep.mubr.f32.mxu0 0.0
    %3855 = vmatmul.mubr.f32.gmra.mrb[0].mxu0 %v2885
    %v3856 = vpop.f32.mrb[0].mxu0
    %v3857 = vadd.f32 %v2674, %v3856
    %v3858 = vpop.f32.mrb[0].mxu0
    %3859 = vmatprep.mubr.f32.mxu0 0.0
    %3860 = vmatmul.mubr.f32.gmra.mrb[0].mxu0 %v2888
    %v3861 = vpop.f32.mrb[0].mxu0
    %v3862 = vadd.f32 %v2674, %v3861
    %v3863 = vpop.f32.mrb[0].mxu0
    %3864 = vmatprep.mubr.f32.mxu0 0.0
    %3865 = vmatmul.mubr.f32.gmra.mrb[0].mxu0 %v2891
    %v3866 = vpop.f32.mrb[0].mxu0
    %v3867 = vadd.f32 %v2674, %v3866
    %v3868 = vpop.f32.mrb[0].mxu0
    %3869 = vmatprep.mubr.f32.mxu0 0.0
    %3870 = vmatmul.mubr.f32.gmra.mrb[0].mxu0 %v2894
    %v3871 = vpop.f32.mrb[0].mxu0
    %v3872 = vadd.f32 %v2674, %v3871
    %v3873 = vpop.f32.mrb[0].mxu0
    %3874 = vmatprep.mubr.f32.mxu0 0.0
    %3875 = vmatmul.mubr.f32.gmra.mrb[0].mxu0 %v2897
    %v3876 = vpop.f32.mrb[0].mxu0
    %v3877 = vadd.f32 %v2674, %v3876
    %v3878 = vpop.f32.mrb[0].mxu0
    %3879 = vmatprep.mubr.f32.mxu0 0.0
    %3880 = vmatmul.mubr.f32.gmra.mrb[0].mxu0 %v2900
    %v3881 = vpop.f32.mrb[0].mxu0
    %v3882 = vadd.f32 %v2674, %v3881
    %v3883 = vpop.f32.mrb[0].mxu0
    %3884 = vmatprep.mubr.f32.mxu0 0.0
    %3885 = vmatmul.mubr.f32.gmra.mrb[0].mxu0 %v2903
    %v3886 = vpop.f32.mrb[0].mxu0
    %v3887 = vadd.f32 %v2674, %v3886
    %v3888 = vpop.f32.mrb[0].mxu0
    %3889 = vmatprep.mubr.f32.mxu0 0.0
    %3890 = vmatmul.mubr.f32.gmra.mrb[0].mxu0 %v2906
    %v3891 = vpop.f32.mrb[0].mxu0
    %v3892 = vadd.f32 %v2674, %v3891
    %v3893 = vpop.f32.mrb[0].mxu0
    %3894 = vmatprep.mubr.f32.mxu0 0.0
    %3895 = vmatmul.mubr.f32.gmra.mrb[0].mxu0 %v2909
    %v3896 = vpop.f32.mrb[0].mxu0
    %v3897 = vadd.f32 %v2674, %v3896
    %v3898 = vpop.f32.mrb[0].mxu0
    %3899 = vmatprep.mubr.f32.mxu0 0.0
    %3900 = vmatmul.mubr.f32.gmra.mrb[0].mxu0 %v2912
    %v3901 = vpop.f32.mrb[0].mxu0
    %v3902 = vadd.f32 %v2674, %v3901
    %v3903 = vpop.f32.mrb[0].mxu0
    %3904 = vmatprep.mubr.f32.mxu0 0.0
    %3905 = vmatmul.mubr.f32.gmra.mrb[0].mxu0 %v2915
    %v3906 = vpop.f32.mrb[0].mxu0
    %v3907 = vadd.f32 %v2674, %v3906
    %v3908 = vpop.f32.mrb[0].mxu0
    %3909 = vmatprep.mubr.f32.mxu0 0.0
    %3910 = vmatmul.mubr.f32.gmra.mrb[0].mxu0 %v2918
    %v3911 = vpop.f32.mrb[0].mxu0
    %v3912 = vadd.f32 %v2674, %v3911
    %v3913 = vpop.f32.mrb[0].mxu0
    %3914 = vmatprep.mubr.f32.mxu0 0.0
    %3915 = vmatmul.mubr.f32.gmra.mrb[0].mxu0 %v2921
    %v3916 = vpop.f32.mrb[0].mxu0
    %v3917 = vadd.f32 %v2674, %v3916
    %v3918 = vpop.f32.mrb[0].mxu0
    %3919 = vmatprep.mubr.f32.mxu0 0.0
    %3920 = vmatmul.mubr.f32.gmra.mrb[0].mxu0 %v2924
    %v3921 = vpop.f32.mrb[0].mxu0
    %v3922 = vadd.f32 %v2674, %v3921
    %v3923 = vpop.f32.mrb[0].mxu0
    %3924 = vmatprep.mubr.f32.mxu0 0.0
    %3925 = vmatmul.mubr.f32.gmra.mrb[0].mxu0 %v2927
    %v3926 = vpop.f32.mrb[0].mxu0
    %v3927 = vadd.f32 %v2674, %v3926
    %v3928 = vpop.f32.mrb[0].mxu0
    %3929 = vmatprep.mubr.f32.mxu0 0.0
    %3930 = vmatmul.mubr.f32.gmra.mrb[0].mxu0 %v2930
    %v3931 = vpop.f32.mrb[0].mxu0
    %v3932 = vadd.f32 %v2674, %v3931
    %v3933 = vpop.f32.mrb[0].mxu0
    %3934 = vmatprep.mubr.f32.mxu0 0.0
    %3935 = vmatmul.mubr.f32.gmra.mrb[0].mxu0 %v2933
    %v3936 = vpop.f32.mrb[0].mxu0
    %v3937 = vadd.f32 %v2674, %v3936
    %v3938 = vpop.f32.mrb[0].mxu0
    %3939 = vmatprep.mubr.f32.mxu0 0.0
    %3940 = vmatmul.mubr.f32.gmra.mrb[0].mxu0 %v2936
    %v3941 = vpop.f32.mrb[0].mxu0
    %v3942 = vadd.f32 %v2674, %v3941
    %v3943 = vpop.f32.mrb[0].mxu0
    %3944 = vmatprep.mubr.f32.mxu0 0.0
    %3945 = vmatmul.mubr.f32.gmra.mrb[0].mxu0 %v2939
    %v3946 = vpop.f32.mrb[0].mxu0
    %v3947 = vadd.f32 %v2674, %v3946
    %v3948 = vpop.f32.mrb[0].mxu0
    %3949 = vmatprep.mubr.f32.mxu0 0.0
    %3950 = vmatmul.mubr.f32.gmra.mrb[0].mxu0 %v2942
    %v3951 = vpop.f32.mrb[0].mxu0
    %v3952 = vadd.f32 %v2674, %v3951
    %v3953 = vpop.f32.mrb[0].mxu0
    %3954 = vmatprep.mubr.f32.mxu0 0.0
    %3955 = vmatmul.mubr.f32.gmra.mrb[0].mxu0 %v2945
    %v3956 = vpop.f32.mrb[0].mxu0
    %v3957 = vadd.f32 %v2674, %v3956
    %v3958 = vpop.f32.mrb[0].mxu0
    %3959 = vmatprep.mubr.f32.mxu0 0.0
    %3960 = vmatmul.mubr.f32.gmra.mrb[0].mxu0 %v2948
    %v3961 = vpop.f32.mrb[0].mxu0
    %v3962 = vadd.f32 %v2674, %v3961
    %v3963 = vpop.f32.mrb[0].mxu0
    %3964 = vmatprep.mubr.f32.mxu0 0.0
    %3965 = vmatmul.mubr.f32.gmra.mrb[0].mxu0 %v2951
    %v3966 = vpop.f32.mrb[0].mxu0
    %v3967 = vadd.f32 %v2674, %v3966
    %v3968 = vpop.f32.mrb[0].mxu0
    %3969 = vmatprep.mubr.f32.mxu0 0.0
    %3970 = vmatmul.mubr.f32.gmra.mrb[0].mxu0 %v2954
    %v3971 = vpop.f32.mrb[0].mxu0
    %v3972 = vadd.f32 %v2674, %v3971
    %v3973 = vpop.f32.mrb[0].mxu0
    %3974 = vmatprep.mubr.f32.mxu0 0.0
    %3975 = vmatmul.mubr.f32.gmra.mrb[0].mxu0 %v2957
    %v3976 = vpop.f32.mrb[0].mxu0
    %v3977 = vadd.f32 %v2674, %v3976
    %v3978 = vpop.f32.mrb[0].mxu0
    %3979 = vmatprep.mubr.f32.mxu0 0.0
    %3980 = vmatmul.mubr.f32.gmra.mrb[0].mxu0 %v2960
    %v3981 = vpop.f32.mrb[0].mxu0
    %v3982 = vadd.f32 %v2674, %v3981
    %v3983 = vpop.f32.mrb[0].mxu0
    %3984 = vmatprep.mubr.f32.mxu0 0.0
    %3985 = vmatmul.mubr.f32.gmra.mrb[0].mxu0 %v2963
    %v3986 = vpop.f32.mrb[0].mxu0
    %v3987 = vadd.f32 %v2674, %v3986
    %v3988 = vpop.f32.mrb[0].mxu0
    %3989 = vmatprep.mubr.f32.mxu0 0.0
    %3990 = vmatmul.mubr.f32.gmra.mrb[0].mxu0 %v2966
    %v3991 = vpop.f32.mrb[0].mxu0
    %v3992 = vadd.f32 %v2674, %v3991
    %v3993 = vpop.f32.mrb[0].mxu0
    %3994 = vmatprep.mubr.f32.mxu0 0.0
    %3995 = vmatmul.mubr.f32.gmra.mrb[0].mxu0 %v2969
    %v3996 = vpop.f32.mrb[0].mxu0
    %v3997 = vadd.f32 %v2674, %v3996
    %v3998 = vpop.f32.mrb[0].mxu0
    %3999 = vmatprep.mubr.f32.mxu0 0.0
    %4000 = vmatmul.mubr.f32.gmra.mrb[0].mxu0 %v2972
    %v4001 = vpop.f32.mrb[0].mxu0
    %v4002 = vadd.f32 %v2674, %v4001
    %v4003 = vpop.f32.mrb[0].mxu0
    %4004 = vmatprep.mubr.f32.mxu0 0.0
    %4005 = vmatmul.mubr.f32.gmra.mrb[0].mxu0 %v2975
    %v4006 = vpop.f32.mrb[0].mxu0
    %v4007 = vadd.f32 %v2674, %v4006
    %v4008 = vpop.f32.mrb[0].mxu0
    %4009 = vmatprep.mubr.f32.mxu0 0.0
    %4010 = vmatmul.mubr.f32.gmra.mrb[0].mxu0 %v2978
    %v4011 = vpop.f32.mrb[0].mxu0
    %v4012 = vadd.f32 %v2674, %v4011
    %v4013 = vpop.f32.mrb[0].mxu0
    %4014 = vmatprep.mubr.f32.mxu0 0.0
    %4015 = vmatmul.mubr.f32.gmra.mrb[0].mxu0 %v2981
    %v4016 = vpop.f32.mrb[0].mxu0
    %v4017 = vadd.f32 %v2674, %v4016
    %v4018 = vpop.f32.mrb[0].mxu0
    %4019 = vmatprep.mubr.f32.mxu0 0.0
    %4020 = vmatmul.mubr.f32.gmra.mrb[0].mxu0 %v2984
    %v4021 = vpop.f32.mrb[0].mxu0
    %v4022 = vadd.f32 %v2674, %v4021
    %v4023 = vpop.f32.mrb[0].mxu0
    %4024 = vmatprep.mubr.f32.mxu0 0.0
    %4025 = vmatmul.mubr.f32.gmra.mrb[0].mxu0 %v2987
    %v4026 = vpop.f32.mrb[0].mxu0
    %v4027 = vadd.f32 %v2674, %v4026
    %v4028 = vpop.f32.mrb[0].mxu0
    %4029 = vmatprep.mubr.f32.mxu0 0.0
    %4030 = vmatmul.mubr.f32.gmra.mrb[0].mxu0 %v2990
    %v4031 = vpop.f32.mrb[0].mxu0
    %v4032 = vadd.f32 %v2674, %v4031
    %v4033 = vpop.f32.mrb[0].mxu0
    %4034 = vmatprep.mubr.f32.mxu0 0.0
    %4035 = vmatmul.mubr.f32.gmra.mrb[0].mxu0 %v2993
    %v4036 = vpop.f32.mrb[0].mxu0
    %v4037 = vadd.f32 %v2674, %v4036
    %v4038 = vpop.f32.mrb[0].mxu0
    %4039 = vmatprep.mubr.f32.mxu0 0.0
    %4040 = vmatmul.mubr.f32.gmra.mrb[0].mxu0 %v2996
    %v4041 = vpop.f32.mrb[0].mxu0
    %v4042 = vadd.f32 %v2674, %v4041
    %v4043 = vpop.f32.mrb[0].mxu0
    %4044 = vmatprep.mubr.f32.mxu0 0.0
    %4045 = vmatmul.mubr.f32.gmra.mrb[0].mxu0 %v2999
    %v4046 = vpop.f32.mrb[0].mxu0
    %v4047 = vadd.f32 %v2674, %v4046
    %v4048 = vpop.f32.mrb[0].mxu0
    %4049 = vmatprep.mubr.f32.mxu0 0.0
    %4050 = vmatmul.mubr.f32.gmra.mrb[0].mxu0 %v3002
    %v4051 = vpop.f32.mrb[0].mxu0
    %v4052 = vadd.f32 %v2674, %v4051
    %v4053 = vpop.f32.mrb[0].mxu0
    %4054 = vmatprep.mubr.f32.mxu0 0.0
    %4055 = vmatmul.mubr.f32.gmra.mrb[0].mxu0 %v3005
    %v4056 = vpop.f32.mrb[0].mxu0
    %v4057 = vadd.f32 %v2674, %v4056
    %v4058 = vpop.f32.mrb[0].mxu0
    %4059 = vmatprep.mubr.f32.mxu0 0.0
    %4060 = vmatmul.mubr.f32.gmra.mrb[0].mxu0 %v3008
    %v4061 = vpop.f32.mrb[0].mxu0
    %v4062 = vadd.f32 %v2674, %v4061
    %v4063 = vpop.f32.mrb[0].mxu0
    %4064 = vmatprep.mubr.f32.mxu0 0.0
    %4065 = vmatmul.mubr.f32.gmra.mrb[0].mxu0 %v3011
    %v4066 = vpop.f32.mrb[0].mxu0
    %v4067 = vadd.f32 %v2674, %v4066
    %v4068 = vpop.f32.mrb[0].mxu0
    %4069 = vmatprep.mubr.f32.mxu0 0.0
    %4070 = vmatmul.mubr.f32.gmra.mrb[0].mxu0 %v3014
    %v4071 = vpop.f32.mrb[0].mxu0
    %v4072 = vadd.f32 %v2674, %v4071
    %v4073 = vpop.f32.mrb[0].mxu0
    %4074 = vmatprep.mubr.f32.mxu0 0.0
    %4075 = vmatmul.mubr.f32.gmra.mrb[0].mxu0 %v3017
    %v4076 = vpop.f32.mrb[0].mxu0
    %v4077 = vadd.f32 %v2674, %v4076
    %v4078 = vpop.f32.mrb[0].mxu0
    %4079 = vmatprep.mubr.f32.mxu0 0.0
    %4080 = vmatmul.mubr.f32.gmra.mrb[0].mxu0 %v3020
    %v4081 = vpop.f32.mrb[0].mxu0
    %v4082 = vadd.f32 %v2674, %v4081
    %v4083 = vpop.f32.mrb[0].mxu0
    %4084 = vmatprep.mubr.f32.mxu0 0.0
    %4085 = vmatmul.mubr.f32.gmra.mrb[0].mxu0 %v3023
    %v4086 = vpop.f32.mrb[0].mxu0
    %v4087 = vadd.f32 %v2674, %v4086
    %v4088 = vpop.f32.mrb[0].mxu0
    %4089 = vmatprep.mubr.f32.mxu0 0.0
    %4090 = vmatmul.mubr.f32.gmra.mrb[0].mxu0 %v3026
    %v4091 = vpop.f32.mrb[0].mxu0
    %v4092 = vadd.f32 %v2674, %v4091
    %v4093 = vpop.f32.mrb[0].mxu0
    %4094 = vmatprep.mubr.f32.mxu0 0.0
    %4095 = vmatmul.mubr.f32.gmra.mrb[0].mxu0 %v3029
    %v4096 = vpop.f32.mrb[0].mxu0
    %v4097 = vadd.f32 %v2674, %v4096
    %v4098 = vpop.f32.mrb[0].mxu0
    %4099 = vmatprep.mubr.f32.mxu0 0.0
    %4100 = vmatmul.mubr.f32.gmra.mrb[0].mxu0 %v3032
    %v4101 = vpop.f32.mrb[0].mxu0
    %v4102 = vadd.f32 %v2674, %v4101
    %v4103 = vpop.f32.mrb[0].mxu0
    %4104 = vmatprep.mubr.f32.mxu0 0.0
    %4105 = vmatmul.mubr.f32.gmra.mrb[0].mxu0 %v3035
    %v4106 = vpop.f32.mrb[0].mxu0
    %v4107 = vadd.f32 %v2674, %v4106
    %v4108 = vpop.f32.mrb[0].mxu0
    %4109 = vmatprep.mubr.f32.mxu0 0.0
    %4110 = vmatmul.mubr.f32.gmra.mrb[0].mxu0 %v3038
    %v4111 = vpop.f32.mrb[0].mxu0
    %v4112 = vadd.f32 %v2674, %v4111
    %v4113 = vpop.f32.mrb[0].mxu0
    %4114 = vmatprep.mubr.f32.mxu0 0.0
    %4115 = vmatmul.mubr.f32.gmra.mrb[0].mxu0 %v3041
    %v4116 = vpop.f32.mrb[0].mxu0
    %v4117 = vadd.f32 %v2674, %v4116
    %v4118 = vpop.f32.mrb[0].mxu0
    %4119 = vmatprep.mubr.f32.mxu0 0.0
    %4120 = vmatmul.mubr.f32.gmra.mrb[0].mxu0 %v3044
    %v4121 = vpop.f32.mrb[0].mxu0
    %v4122 = vadd.f32 %v2674, %v4121
    %v4123 = vpop.f32.mrb[0].mxu0
    %4124 = vmatprep.mubr.f32.mxu0 0.0
    %4125 = vmatmul.mubr.f32.gmra.mrb[0].mxu0 %v3047
    %v4126 = vpop.f32.mrb[0].mxu0
    %v4127 = vadd.f32 %v2674, %v4126
    %v4128 = vpop.f32.mrb[0].mxu0
    %4129 = vmatprep.mubr.f32.mxu0 0.0
    %4130 = vmatmul.mubr.f32.gmra.mrb[0].mxu0 %v3050
    %v4131 = vpop.f32.mrb[0].mxu0
    %v4132 = vadd.f32 %v2674, %v4131
    %v4133 = vpop.f32.mrb[0].mxu0
    %4134 = vmatprep.mubr.f32.mxu0 0.0
    %4135 = vmatmul.mubr.f32.gmra.mrb[0].mxu0 %v3053
    %v4136 = vpop.f32.mrb[0].mxu0
    %v4137 = vadd.f32 %v2674, %v4136
    %v4138 = vpop.f32.mrb[0].mxu0
    %4139 = vmatprep.mubr.f32.mxu0 0.0
    %4140 = vmatmul.mubr.f32.gmra.mrb[0].mxu0 %v3056
    %v4141 = vpop.f32.mrb[0].mxu0
    %v4142 = vadd.f32 %v2674, %v4141
    %v4143 = vpop.f32.mrb[0].mxu0
    %4144 = vmatprep.mubr.f32.mxu0 0.0
    %4145 = vmatmul.mubr.f32.gmra.mrb[0].mxu0 %v3059
    %v4146 = vpop.f32.mrb[0].mxu0
    %v4147 = vadd.f32 %v2674, %v4146
    %v4148 = vpop.f32.mrb[0].mxu0
    %4149 = vmatprep.mubr.f32.mxu0 0.0
    %4150 = vmatmul.mubr.f32.gmra.mrb[0].mxu0 %v3062
    %v4151 = vpop.f32.mrb[0].mxu0
    %v4152 = vadd.f32 %v2674, %v4151
    %v4153 = vpop.f32.mrb[0].mxu0
    %4154 = vmatprep.mubr.f32.mxu0 0.0
    %4155 = vmatmul.mubr.f32.gmra.mrb[0].mxu0 %v3065
    %v4156 = vpop.f32.mrb[0].mxu0
    %v4157 = vadd.f32 %v2674, %v4156
    %v4158 = vpop.f32.mrb[0].mxu0
    %4159 = vmatprep.mubr.f32.mxu0 0.0
    %4160 = vmatmul.mubr.f32.gmra.mrb[0].mxu0 %v3068
    %v4161 = vpop.f32.mrb[0].mxu0
    %v4162 = vadd.f32 %v2674, %v4161
    %v4163 = vpop.f32.mrb[0].mxu0
    %4164 = vmatprep.mubr.f32.mxu0 0.0
    %4165 = vmatmul.mubr.f32.gmra.mrb[0].mxu0 %v3071
    %v4166 = vpop.f32.mrb[0].mxu0
    %v4167 = vadd.f32 %v2674, %v4166
    %v4168 = vpop.f32.mrb[0].mxu0
    %4169 = vmatprep.mubr.f32.mxu0 0.0
    %4170 = vmatmul.mubr.f32.gmra.mrb[0].mxu0 %v3074
    %v4171 = vpop.f32.mrb[0].mxu0
    %v4172 = vadd.f32 %v2674, %v4171
    %v4173 = vpop.f32.mrb[0].mxu0
    %4174 = vmatprep.mubr.f32.mxu0 0.0
    %4175 = vmatmul.mubr.f32.gmra.mrb[0].mxu0 %v3077
    %v4176 = vpop.f32.mrb[0].mxu0
    %v4177 = vadd.f32 %v2674, %v4176
    %v4178 = vpop.f32.mrb[0].mxu0
    %4179 = vmatprep.mubr.f32.mxu0 0.0
    %4180 = vmatmul.mubr.f32.gmra.mrb[0].mxu0 %v3080
    %v4181 = vpop.f32.mrb[0].mxu0
    %v4182 = vadd.f32 %v2674, %v4181
    %v4183 = vpop.f32.mrb[0].mxu0
    %4184 = vmatprep.mubr.f32.mxu0 0.0
    %4185 = vmatmul.mubr.f32.gmra.mrb[0].mxu0 %v3083
    %v4186 = vpop.f32.mrb[0].mxu0
    %v4187 = vadd.f32 %v2674, %v4186
    %v4188 = vpop.f32.mrb[0].mxu0
    %4189 = vmatprep.mubr.f32.mxu0 0.0
    %4190 = vmatmul.mubr.f32.gmra.mrb[0].mxu0 %v3086
    %v4191 = vpop.f32.mrb[0].mxu0
    %v4192 = vadd.f32 %v2674, %v4191
    %v4193 = vpop.f32.mrb[0].mxu0
    %4194 = vmatprep.mubr.f32.mxu0 0.0
    %4195 = vmatmul.mubr.f32.gmra.mrb[0].mxu0 %v3089
    %v4196 = vpop.f32.mrb[0].mxu0
    %v4197 = vadd.f32 %v2674, %v4196
    %v4198 = vpop.f32.mrb[0].mxu0
    %4199 = vmatprep.mubr.f32.mxu0 0.0
    %4200 = vmatmul.mubr.f32.gmra.mrb[0].mxu0 %v3092
    %v4201 = vpop.f32.mrb[0].mxu0
    %v4202 = vadd.f32 %v2674, %v4201
    %v4203 = vpop.f32.mrb[0].mxu0
    %4204 = vmatprep.mubr.f32.mxu0 0.0
    %4205 = vmatmul.mubr.f32.gmra.mrb[0].mxu0 %v3095
    %v4206 = vpop.f32.mrb[0].mxu0
    %v4207 = vadd.f32 %v2674, %v4206
    %v4208 = vpop.f32.mrb[0].mxu0
    %4209 = vmatprep.mubr.f32.mxu0 0.0
    %4210 = vmatmul.mubr.f32.gmra.mrb[0].mxu0 %v3098
    %v4211 = vpop.f32.mrb[0].mxu0
    %v4212 = vadd.f32 %v2674, %v4211
    %v4213 = vpop.f32.mrb[0].mxu0
    %4214 = vmatprep.mubr.f32.mxu0 0.0
    %4215 = vmatmul.mubr.f32.gmra.mrb[0].mxu0 %v3101
    %v4216 = vpop.f32.mrb[0].mxu0
    %v4217 = vadd.f32 %v2674, %v4216
    %v4218 = vpop.f32.mrb[0].mxu0
    %4219 = vmatprep.mubr.f32.mxu0 0.0
    %4220 = vmatmul.mubr.f32.gmra.mrb[0].mxu0 %v3104
    %v4221 = vpop.f32.mrb[0].mxu0
    %v4222 = vadd.f32 %v2674, %v4221
    %v4223 = vpop.f32.mrb[0].mxu0
    %4224 = vmatprep.mubr.f32.mxu0 0.0
    %4225 = vmatmul.mubr.f32.gmra.mrb[0].mxu0 %v3107
    %v4226 = vpop.f32.mrb[0].mxu0
    %v4227 = vadd.f32 %v2674, %v4226
    %v4228 = vpop.f32.mrb[0].mxu0
    %4229 = vmatprep.mubr.f32.mxu0 0.0
    %4230 = vmatmul.mubr.f32.gmra.mrb[0].mxu0 %v3110
    %v4231 = vpop.f32.mrb[0].mxu0
    %v4232 = vadd.f32 %v2674, %v4231
    %v4233 = vpop.f32.mrb[0].mxu0
    %4234 = vmatprep.mubr.f32.mxu0 0.0
    %4235 = vmatmul.mubr.f32.gmra.mrb[0].mxu0 %v3113
    %v4236 = vpop.f32.mrb[0].mxu0
    %v4237 = vadd.f32 %v2674, %v4236
    %v4238 = vpop.f32.mrb[0].mxu0
    %4239 = vmatprep.mubr.f32.mxu0 0.0
    %4240 = vmatmul.mubr.f32.gmra.mrb[0].mxu0 %v3116
    %v4241 = vpop.f32.mrb[0].mxu0
    %v4242 = vadd.f32 %v2674, %v4241
    %v4243 = vpop.f32.mrb[0].mxu0
    %4244 = vmatprep.mubr.f32.mxu0 0.0
    %4245 = vmatmul.mubr.f32.gmra.mrb[0].mxu0 %v3119
    %v4246 = vpop.f32.mrb[0].mxu0
    %v4247 = vadd.f32 %v2674, %v4246
    %v4248 = vpop.f32.mrb[0].mxu0
    %4249 = vmatprep.mubr.f32.mxu0 0.0
    %4250 = vmatmul.mubr.f32.gmra.mrb[0].mxu0 %v3122
    %v4251 = vpop.f32.mrb[0].mxu0
    %v4252 = vadd.f32 %v2674, %v4251
    %v4253 = vpop.f32.mrb[0].mxu0
    %4254 = vmatprep.mubr.f32.mxu0 0.0
    %4255 = vmatmul.mubr.f32.gmra.mrb[0].mxu0 %v3125
    %v4256 = vpop.f32.mrb[0].mxu0
    %v4257 = vadd.f32 %v2674, %v4256
    %v4258 = vpop.f32.mrb[0].mxu0
    %4259 = vmatprep.mubr.f32.mxu0 0.0
    %4260 = vmatmul.mubr.f32.gmra.mrb[0].mxu0 %v3128
    %v4261 = vpop.f32.mrb[0].mxu0
    %v4262 = vadd.f32 %v2674, %v4261
    %v4263 = vpop.f32.mrb[0].mxu0
    %4264 = vmatprep.mubr.f32.mxu0 0.0
    %4265 = vmatmul.mubr.f32.gmra.mrb[0].mxu0 %v3131
    %v4266 = vpop.f32.mrb[0].mxu0
    %v4267 = vadd.f32 %v2674, %v4266
    %v4268 = vpop.f32.mrb[0].mxu0
    %4269 = vmatprep.mubr.f32.mxu0 0.0
    %4270 = vmatmul.mubr.f32.gmra.mrb[0].mxu0 %v3134
    %v4271 = vpop.f32.mrb[0].mxu0
    %v4272 = vadd.f32 %v2674, %v4271
    %v4273 = vpop.f32.mrb[0].mxu0
    %4274 = vmatprep.mubr.f32.mxu0 0.0
    %4275 = vmatmul.mubr.f32.gmra.mrb[0].mxu0 %v3137
    %v4276 = vpop.f32.mrb[0].mxu0
    %v4277 = vadd.f32 %v2674, %v4276
    %v4278 = vpop.f32.mrb[0].mxu0
    %4279 = vmatprep.mubr.f32.mxu0 0.0
    %4280 = vmatmul.mubr.f32.gmra.mrb[0].mxu0 %v3140
    %v4281 = vpop.f32.mrb[0].mxu0
    %v4282 = vadd.f32 %v2674, %v4281
    %v4283 = vpop.f32.mrb[0].mxu0
    %4284 = vmatprep.mubr.f32.mxu0 0.0
    %4285 = vmatmul.mubr.f32.gmra.mrb[0].mxu0 %v3143
    %v4286 = vpop.f32.mrb[0].mxu0
    %v4287 = vadd.f32 %v2674, %v4286
    %v4288 = vpop.f32.mrb[0].mxu0
    %4289 = vmatprep.mubr.f32.mxu0 0.0
    %4290 = vmatmul.mubr.f32.gmra.mrb[0].mxu0 %v3146
    %v4291 = vpop.f32.mrb[0].mxu0
    %v4292 = vadd.f32 %v2674, %v4291
    %v4293 = vpop.f32.mrb[0].mxu0
    %4294 = vmatprep.mubr.f32.mxu0 0.0
    %4295 = vmatmul.mubr.f32.gmra.mrb[0].mxu0 %v3149
    %v4296 = vpop.f32.mrb[0].mxu0
    %v4297 = vadd.f32 %v2674, %v4296
    %v4298 = vpop.f32.mrb[0].mxu0
    %4299 = vmatprep.mubr.f32.mxu0 0.0
    %4300 = vmatmul.mubr.f32.gmra.mrb[0].mxu0 %v3152
    %v4301 = vpop.f32.mrb[0].mxu0
    %v4302 = vadd.f32 %v2674, %v4301
    %v4303 = vpop.f32.mrb[0].mxu0
    %4304 = vmatprep.mubr.f32.mxu0 0.0
    %4305 = vmatmul.mubr.f32.gmra.mrb[0].mxu0 %v3155
    %v4306 = vpop.f32.mrb[0].mxu0
    %v4307 = vadd.f32 %v2674, %v4306
    %v4308 = vpop.f32.mrb[0].mxu0
    %4309 = vmatprep.mubr.f32.mxu0 0.0
    %4310 = vmatmul.mubr.f32.gmra.mrb[0].mxu0 %v3158
    %v4311 = vpop.f32.mrb[0].mxu0
    %v4312 = vadd.f32 %v2674, %v4311
    %v4313 = vpop.f32.mrb[0].mxu0
    %4314 = vmatprep.mubr.f32.mxu0 0.0
    %4315 = vmatmul.mubr.f32.gmra.mrb[0].mxu0 %v3161
    %v4316 = vpop.f32.mrb[0].mxu0
    %v4317 = vadd.f32 %v2674, %v4316
    %v4318 = vpop.f32.mrb[0].mxu0
    %4319 = vmatprep.mubr.f32.mxu0 0.0
    %4320 = vmatmul.mubr.f32.gmra.mrb[0].mxu0 %v3164
    %v4321 = vpop.f32.mrb[0].mxu0
    %v4322 = vadd.f32 %v2674, %v4321
    %v4323 = vpop.f32.mrb[0].mxu0
    %4324 = vmatprep.mubr.f32.mxu0 0.0
    %4325 = vmatmul.mubr.f32.gmra.mrb[0].mxu0 %v3167
    %v4326 = vpop.f32.mrb[0].mxu0
    %v4327 = vadd.f32 %v2674, %v4326
    %v4328 = vpop.f32.mrb[0].mxu0
    %4329 = vmatprep.mubr.f32.mxu0 0.0
    %4330 = vmatmul.mubr.f32.gmra.mrb[0].mxu0 %v3170
    %v4331 = vpop.f32.mrb[0].mxu0
    %v4332 = vadd.f32 %v2674, %v4331
    %v4333 = vpop.f32.mrb[0].mxu0
    %4334 = vmatprep.mubr.f32.mxu0 0.0
    %4335 = vmatmul.mubr.f32.gmra.mrb[0].mxu0 %v3173
    %v4336 = vpop.f32.mrb[0].mxu0
    %v4337 = vadd.f32 %v2674, %v4336
    %v4338 = vpop.f32.mrb[0].mxu0
    %4339 = vmatprep.mubr.f32.mxu0 0.0
    %4340 = vmatmul.mubr.f32.gmra.mrb[0].mxu0 %v3176
    %v4341 = vpop.f32.mrb[0].mxu0
    %v4342 = vadd.f32 %v2674, %v4341
    %v4343 = vpop.f32.mrb[0].mxu0
    %4344 = vmatprep.mubr.f32.mxu0 0.0
    %4345 = vmatmul.mubr.f32.gmra.mrb[0].mxu0 %v3179
    %v4346 = vpop.f32.mrb[0].mxu0
    %v4347 = vadd.f32 %v2674, %v4346
    %v4348 = vpop.f32.mrb[0].mxu0
    %4349 = vmatprep.mubr.f32.mxu0 0.0
    %4350 = vmatmul.mubr.f32.gmra.mrb[0].mxu0 %v3182
    %v4351 = vpop.f32.mrb[0].mxu0
    %v4352 = vadd.f32 %v2674, %v4351
    %v4353 = vpop.f32.mrb[0].mxu0
    %4354 = vmatprep.mubr.f32.mxu0 0.0
    %4355 = vmatmul.mubr.f32.gmra.mrb[0].mxu0 %v3185
    %v4356 = vpop.f32.mrb[0].mxu0
    %v4357 = vadd.f32 %v2674, %v4356
    %v4358 = vpop.f32.mrb[0].mxu0
    %4359 = vmatprep.mubr.f32.mxu0 0.0
    %4360 = vmatmul.mubr.f32.gmra.mrb[0].mxu0 %v3188
    %v4361 = vpop.f32.mrb[0].mxu0
    %v4362 = vadd.f32 %v2674, %v4361
    %v4363 = vpop.f32.mrb[0].mxu0
    %4364 = vmatprep.mubr.f32.mxu0 0.0
    %4365 = vmatmul.mubr.f32.gmra.mrb[0].mxu0 %v3191
    %v4366 = vpop.f32.mrb[0].mxu0
    %v4367 = vadd.f32 %v2674, %v4366
    %v4368 = vpop.f32.mrb[0].mxu0
    %4369 = vmatprep.mubr.f32.mxu0 0.0
    %4370 = vmatmul.mubr.f32.gmra.mrb[0].mxu0 %v3194
    %v4371 = vpop.f32.mrb[0].mxu0
    %v4372 = vadd.f32 %v2674, %v4371
    %v4373 = vpop.f32.mrb[0].mxu0
    %4374 = vmatprep.mubr.f32.mxu0 0.0
    %4375 = vmatmul.mubr.f32.gmra.mrb[0].mxu0 %v3197
    %v4376 = vpop.f32.mrb[0].mxu0
    %v4377 = vadd.f32 %v2674, %v4376
    %v4378 = vpop.f32.mrb[0].mxu0
    %4379 = vmatprep.mubr.f32.mxu0 0.0
    %4380 = vmatmul.mubr.f32.gmra.mrb[0].mxu0 %v3200
    %v4381 = vpop.f32.mrb[0].mxu0
    %v4382 = vadd.f32 %v2674, %v4381
    %v4383 = vpop.f32.mrb[0].mxu0
    %4384 = vmatprep.mubr.f32.mxu0 0.0
    %4385 = vmatmul.mubr.f32.gmra.mrb[0].mxu0 %v3203
    %v4386 = vpop.f32.mrb[0].mxu0
    %v4387 = vadd.f32 %v2674, %v4386
    %v4388 = vpop.f32.mrb[0].mxu0
    %4389 = vmatprep.mubr.f32.mxu0 0.0
    %4390 = vmatmul.mubr.f32.gmra.mrb[0].mxu0 %v3206
    %v4391 = vpop.f32.mrb[0].mxu0
    %v4392 = vadd.f32 %v2674, %v4391
    %v4393 = vpop.f32.mrb[0].mxu0
    %4394 = vmatprep.mubr.f32.mxu0 0.0
    %4395 = vmatmul.mubr.f32.gmra.mrb[0].mxu0 %v3209
    %v4396 = vpop.f32.mrb[0].mxu0
    %v4397 = vadd.f32 %v2674, %v4396
    %v4398 = vpop.f32.mrb[0].mxu0
    %4399 = vmatprep.mubr.f32.mxu0 0.0
    %4400 = vmatmul.mubr.f32.gmra.mrb[0].mxu0 %v3212
    %v4401 = vpop.f32.mrb[0].mxu0
    %v4402 = vadd.f32 %v2674, %v4401
    %v4403 = vpop.f32.mrb[0].mxu0
    %4404 = vmatprep.mubr.f32.mxu0 0.0
    %4405 = vmatmul.mubr.f32.gmra.mrb[0].mxu0 %v3215
    %v4406 = vpop.f32.mrb[0].mxu0
    %v4407 = vadd.f32 %v2674, %v4406
    %v4408 = vpop.f32.mrb[0].mxu0
    %4409 = vmatprep.mubr.f32.mxu0 0.0
    %4410 = vmatmul.mubr.f32.gmra.mrb[0].mxu0 %v3218
    %v4411 = vpop.f32.mrb[0].mxu0
    %v4412 = vadd.f32 %v2674, %v4411
    %v4413 = vpop.f32.mrb[0].mxu0
    %4414 = vmatprep.mubr.f32.mxu0 0.0
    %4415 = vmatmul.mubr.f32.gmra.mrb[0].mxu0 %v3221
    %v4416 = vpop.f32.mrb[0].mxu0
    %v4417 = vadd.f32 %v2674, %v4416
    %v4418 = vpop.f32.mrb[0].mxu0
    %4419 = vmatprep.mubr.f32.mxu0 0.0
    %4420 = vmatmul.mubr.f32.gmra.mrb[0].mxu0 %v3224
    %v4421 = vpop.f32.mrb[0].mxu0
    %v4422 = vadd.f32 %v2674, %v4421
    %v4423 = vpop.f32.mrb[0].mxu0
    %4424 = vmatprep.mubr.f32.mxu0 0.0
    %4425 = vmatmul.mubr.f32.gmra.mrb[0].mxu0 %v3227
    %v4426 = vpop.f32.mrb[0].mxu0
    %v4427 = vadd.f32 %v2674, %v4426
    %v4428 = vpop.f32.mrb[0].mxu0
    %4429 = vmatprep.mubr.f32.mxu0 0.0
    %4430 = vmatmul.mubr.f32.gmra.mrb[0].mxu0 %v3230
    %v4431 = vpop.f32.mrb[0].mxu0
    %v4432 = vadd.f32 %v2674, %v4431
    %v4433 = vpop.f32.mrb[0].mxu0
    %4434 = vmatprep.mubr.f32.mxu0 0.0
    %4435 = vmatmul.mubr.f32.gmra.mrb[0].mxu0 %v3233
    %v4436 = vpop.f32.mrb[0].mxu0
    %v4437 = vadd.f32 %v2674, %v4436
    %v4438 = vpop.f32.mrb[0].mxu0
    %4439 = vmatprep.mubr.f32.mxu0 0.0
    %4440 = vmatmul.mubr.f32.gmra.mrb[0].mxu0 %v3236
    %v4441 = vpop.f32.mrb[0].mxu0
    %v4442 = vadd.f32 %v2674, %v4441
    %v4443 = vpop.f32.mrb[0].mxu0
    %4444 = vmatprep.mubr.f32.mxu0 0.0
    %4445 = vmatmul.mubr.f32.gmra.mrb[0].mxu0 %v3239
    %v4446 = vpop.f32.mrb[0].mxu0
    %v4447 = vadd.f32 %v2674, %v4446
    %v4448 = vpop.f32.mrb[0].mxu0
    %4449 = vmatprep.mubr.f32.mxu0 0.0
    %4450 = vmatmul.mubr.f32.gmra.mrb[0].mxu0 %v3242
    %v4451 = vpop.f32.mrb[0].mxu0
    %v4452 = vadd.f32 %v2674, %v4451
    %v4453 = vpop.f32.mrb[0].mxu0
    %4454 = vmatprep.mubr.f32.mxu0 0.0
    %4455 = vmatmul.mubr.f32.gmra.mrb[0].mxu0 %v3245
    %v4456 = vpop.f32.mrb[0].mxu0
    %v4457 = vadd.f32 %v2674, %v4456
    %v4458 = vpop.f32.mrb[0].mxu0
    %4459 = vmatprep.mubr.f32.mxu0 0.0
    %4460 = vmatmul.mubr.f32.gmra.mrb[0].mxu0 %v3248
    %v4461 = vpop.f32.mrb[0].mxu0
    %v4462 = vadd.f32 %v2674, %v4461
    %v4463 = vpop.f32.mrb[0].mxu0
    %4464 = vmatprep.mubr.f32.mxu0 0.0
    %4465 = vmatmul.mubr.f32.gmra.mrb[0].mxu0 %v3251
    %v4466 = vpop.f32.mrb[0].mxu0
    %v4467 = vadd.f32 %v2674, %v4466
    %v4468 = vpop.f32.mrb[0].mxu0
    %4469 = vmatprep.mubr.f32.mxu0 0.0
    %4470 = vmatmul.mubr.f32.gmra.mrb[0].mxu0 %v3254
    %v4471 = vpop.f32.mrb[0].mxu0
    %v4472 = vadd.f32 %v2674, %v4471
    %v4473 = vpop.f32.mrb[0].mxu0
    %4474 = vmatprep.mubr.f32.mxu0 0.0
    %4475 = vmatmul.mubr.f32.gmra.mrb[0].mxu0 %v3257
    %v4476 = vpop.f32.mrb[0].mxu0
    %v4477 = vadd.f32 %v2674, %v4476
    %v4478 = vpop.f32.mrb[0].mxu0
    %4479 = vmatprep.mubr.f32.mxu0 0.0
    %4480 = vmatmul.mubr.f32.gmra.mrb[0].mxu0 %v3260
    %v4481 = vpop.f32.mrb[0].mxu0
    %v4482 = vadd.f32 %v2674, %v4481
    %v4483 = vpop.f32.mrb[0].mxu0
    %4484 = vmatprep.mubr.f32.mxu0 0.0
    %4485 = vmatmul.mubr.f32.gmra.mrb[0].mxu0 %v3263
    %v4486 = vpop.f32.mrb[0].mxu0
    %v4487 = vadd.f32 %v2674, %v4486
    %v4488 = vpop.f32.mrb[0].mxu0
    %4489 = vmatprep.mubr.f32.mxu0 0.0
    %4490 = vmatmul.mubr.f32.gmra.mrb[0].mxu0 %v3266
    %v4491 = vpop.f32.mrb[0].mxu0
    %v4492 = vadd.f32 %v2674, %v4491
    %v4493 = vpop.f32.mrb[0].mxu0
    %4494 = vmatprep.mubr.f32.mxu0 0.0
    %4495 = vmatmul.mubr.f32.gmra.mrb[0].mxu0 %v3269
    %v4496 = vpop.f32.mrb[0].mxu0
    %v4497 = vadd.f32 %v2674, %v4496
    %v4498 = vpop.f32.mrb[0].mxu0
    %4499 = vmatprep.mubr.f32.mxu0 0.0
    %4500 = vmatmul.mubr.f32.gmra.mrb[0].mxu0 %v3272
    %v4501 = vpop.f32.mrb[0].mxu0
    %v4502 = vadd.f32 %v2674, %v4501
    %v4503 = vpop.f32.mrb[0].mxu0
    %4504 = vmatprep.mubr.f32.mxu0 0.0
    %4505 = vmatmul.mubr.f32.gmra.mrb[0].mxu0 %v3275
    %v4506 = vpop.f32.mrb[0].mxu0
    %v4507 = vadd.f32 %v2674, %v4506
    %v4508 = vpop.f32.mrb[0].mxu0
    %4509 = vmatprep.mubr.f32.mxu0 0.0
    %4510 = vmatmul.mubr.f32.gmra.mrb[0].mxu0 %v3278
    %v4511 = vpop.f32.mrb[0].mxu0
    %v4512 = vadd.f32 %v2674, %v4511
    %v4513 = vpop.f32.mrb[0].mxu0
    %4514 = vmatprep.mubr.f32.mxu0 0.0
    %4515 = vmatmul.mubr.f32.gmra.mrb[0].mxu0 %v3281
    %v4516 = vpop.f32.mrb[0].mxu0
    %v4517 = vadd.f32 %v2674, %v4516
    %v4518 = vpop.f32.mrb[0].mxu0
    %4519 = vmatprep.mubr.f32.mxu0 0.0
    %4520 = vmatmul.mubr.f32.gmra.mrb[0].mxu0 %v3284
    %v4521 = vpop.f32.mrb[0].mxu0
    %v4522 = vadd.f32 %v2674, %v4521
    %v4523 = vpop.f32.mrb[0].mxu0
    %4524 = vmatprep.mubr.f32.mxu0 0.0
    %4525 = vmatmul.mubr.f32.gmra.mrb[0].mxu0 %v3287
    %v4526 = vpop.f32.mrb[0].mxu0
    %v4527 = vadd.f32 %v2674, %v4526
    %v4528 = vpop.f32.mrb[0].mxu0
    %4529 = vmatprep.mubr.f32.mxu0 0.0
    %4530 = vmatmul.mubr.f32.gmra.mrb[0].mxu0 %v3290
    %v4531 = vpop.f32.mrb[0].mxu0
    %v4532 = vadd.f32 %v2674, %v4531
    %v4533 = vpop.f32.mrb[0].mxu0
    %4534 = vmatprep.mubr.f32.mxu0 0.0
    %4535 = vmatmul.mubr.f32.gmra.mrb[0].mxu0 %v3293
    %v4536 = vpop.f32.mrb[0].mxu0
    %v4537 = vadd.f32 %v2674, %v4536
    %v4538 = vpop.f32.mrb[0].mxu0
    %4539 = vmatprep.mubr.f32.mxu0 0.0
    %4540 = vmatmul.mubr.f32.gmra.mrb[0].mxu0 %v3296
    %v4541 = vpop.f32.mrb[0].mxu0
    %v4542 = vadd.f32 %v2674, %v4541
    %v4543 = vpop.f32.mrb[0].mxu0
    %4544 = vmatprep.mubr.f32.mxu0 0.0
    %4545 = vmatmul.mubr.f32.gmra.mrb[0].mxu0 %v3299
    %v4546 = vpop.f32.mrb[0].mxu0
    %v4547 = vadd.f32 %v2674, %v4546
    %v4548 = vpop.f32.mrb[0].mxu0
    %4549 = vmatprep.mubr.f32.mxu0 0.0
    %4550 = vmatmul.mubr.f32.gmra.mrb[0].mxu0 %v3302
    %v4551 = vpop.f32.mrb[0].mxu0
    %v4552 = vadd.f32 %v2674, %v4551
    %v4553 = vpop.f32.mrb[0].mxu0
    %4554 = vmatprep.mubr.f32.mxu0 0.0
    %4555 = vmatmul.mubr.f32.gmra.mrb[0].mxu0 %v3305
    %v4556 = vpop.f32.mrb[0].mxu0
    %v4557 = vadd.f32 %v2674, %v4556
    %v4558 = vpop.f32.mrb[0].mxu0
    %4559 = vmatprep.mubr.f32.mxu0 0.0
    %4560 = vmatmul.mubr.f32.gmra.mrb[0].mxu0 %v3308
    %v4561 = vpop.f32.mrb[0].mxu0
    %v4562 = vadd.f32 %v2674, %v4561
    %v4563 = vpop.f32.mrb[0].mxu0
    %4564 = vmatprep.mubr.f32.mxu0 0.0
    %4565 = vmatmul.mubr.f32.gmra.mrb[0].mxu0 %v3311
    %v4566 = vpop.f32.mrb[0].mxu0
    %v4567 = vadd.f32 %v2674, %v4566
    %v4568 = vpop.f32.mrb[0].mxu0
    %4569 = vmatprep.mubr.f32.mxu0 0.0
    %4570 = vmatmul.mubr.f32.gmra.mrb[0].mxu0 %v3314
    %v4571 = vpop.f32.mrb[0].mxu0
    %v4572 = vadd.f32 %v2674, %v4571
    %v4573 = vpop.f32.mrb[0].mxu0
    %4574 = vmatprep.mubr.f32.mxu0 0.0
    %4575 = vmatmul.mubr.f32.gmra.mrb[0].mxu0 %v3317
    %v4576 = vpop.f32.mrb[0].mxu0
    %v4577 = vadd.f32 %v2674, %v4576
    %v4578 = vpop.f32.mrb[0].mxu0
    %4579 = vmatprep.mubr.f32.mxu0 0.0
    %4580 = vmatmul.mubr.f32.gmra.mrb[0].mxu0 %v3320
    %v4581 = vpop.f32.mrb[0].mxu0
    %v4582 = vadd.f32 %v2674, %v4581
    %v4583 = vpop.f32.mrb[0].mxu0
    %4584 = vmatprep.mubr.f32.mxu0 0.0
    %4585 = vmatmul.mubr.f32.gmra.mrb[0].mxu0 %v3323
    %v4586 = vpop.f32.mrb[0].mxu0
    %v4587 = vadd.f32 %v2674, %v4586
    %v4588 = vpop.f32.mrb[0].mxu0
    %4589 = vmatprep.mubr.f32.mxu0 0.0
    %4590 = vmatmul.mubr.f32.gmra.mrb[0].mxu0 %v3326
    %v4591 = vpop.f32.mrb[0].mxu0
    %v4592 = vadd.f32 %v2674, %v4591
    %v4593 = vpop.f32.mrb[0].mxu0
    %4594 = vmatprep.mubr.f32.mxu0 0.0
    %4595 = vmatmul.mubr.f32.gmra.mrb[0].mxu0 %v3329
    %v4596 = vpop.f32.mrb[0].mxu0
    %v4597 = vadd.f32 %v2674, %v4596
    %v4598 = vpop.f32.mrb[0].mxu0
    %4599 = vmatprep.mubr.f32.mxu0 0.0
    %4600 = vmatmul.mubr.f32.gmra.mrb[0].mxu0 %v3332
    %v4601 = vpop.f32.mrb[0].mxu0
    %v4602 = vadd.f32 %v2674, %v4601
    %v4603 = vpop.f32.mrb[0].mxu0
    %4604 = vmatprep.mubr.f32.mxu0 0.0
    %4605 = vmatmul.mubr.f32.gmra.mrb[0].mxu0 %v3335
    %v4606 = vpop.f32.mrb[0].mxu0
    %v4607 = vadd.f32 %v2674, %v4606
    %v4608 = vpop.f32.mrb[0].mxu0
    %4609 = vmatprep.mubr.f32.mxu0 0.0
    %4610 = vmatmul.mubr.f32.gmra.mrb[0].mxu0 %v3338
    %v4611 = vpop.f32.mrb[0].mxu0
    %v4612 = vadd.f32 %v2674, %v4611
    %v4613 = vpop.f32.mrb[0].mxu0
    %4614 = vmatprep.mubr.f32.mxu0 0.0
    %4615 = vmatmul.mubr.f32.gmra.mrb[0].mxu0 %v3341
    %v4616 = vpop.f32.mrb[0].mxu0
    %v4617 = vadd.f32 %v2674, %v4616
    %v4618 = vpop.f32.mrb[0].mxu0
    %4619 = vmatprep.mubr.f32.mxu0 0.0
    %4620 = vmatmul.mubr.f32.gmra.mrb[0].mxu0 %v3344
    %v4621 = vpop.f32.mrb[0].mxu0
    %v4622 = vadd.f32 %v2674, %v4621
    %v4623 = vpop.f32.mrb[0].mxu0
    %4624 = vmatprep.mubr.f32.mxu0 0.0
    %4625 = vmatmul.mubr.f32.gmra.mrb[0].mxu0 %v3347
    %v4626 = vpop.f32.mrb[0].mxu0
    %v4627 = vadd.f32 %v2674, %v4626
    %v4628 = vpop.f32.mrb[0].mxu0
    %4629 = vmatprep.mubr.f32.mxu0 0.0
    %4630 = vmatmul.mubr.f32.gmra.mrb[0].mxu0 %v3350
    %v4631 = vpop.f32.mrb[0].mxu0
    %v4632 = vadd.f32 %v2674, %v4631
    %v4633 = vpop.f32.mrb[0].mxu0
    %4634 = vmatprep.mubr.f32.mxu0 0.0
    %4635 = vmatmul.mubr.f32.gmra.mrb[0].mxu0 %v3353
    %v4636 = vpop.f32.mrb[0].mxu0
    %v4637 = vadd.f32 %v2674, %v4636
    %v4638 = vpop.f32.mrb[0].mxu0
    %4639 = vmatprep.mubr.f32.mxu0 0.0
    %4640 = vmatmul.mubr.f32.gmra.mrb[0].mxu0 %v3356
    %v4641 = vpop.f32.mrb[0].mxu0
    %v4642 = vadd.f32 %v2674, %v4641
    %v4643 = vpop.f32.mrb[0].mxu0
    %4644 = vmatprep.mubr.f32.mxu0 0.0
    %4645 = vmatmul.mubr.f32.gmra.mrb[0].mxu0 %v3359
    %v4646 = vpop.f32.mrb[0].mxu0
    %v4647 = vadd.f32 %v2674, %v4646
    %v4648 = vpop.f32.mrb[0].mxu0
    %4649 = vmatprep.mubr.f32.mxu0 0.0
    %4650 = vmatmul.mubr.f32.gmra.mrb[0].mxu0 %v3362
    %v4651 = vpop.f32.mrb[0].mxu0
    %v4652 = vadd.f32 %v2674, %v4651
    %v4653 = vpop.f32.mrb[0].mxu0
    %4654 = vmatprep.mubr.f32.mxu0 0.0
    %4655 = vmatmul.mubr.f32.gmra.mrb[0].mxu0 %v3365
    %v4656 = vpop.f32.mrb[0].mxu0
    %v4657 = vadd.f32 %v2674, %v4656
    %v4658 = vpop.f32.mrb[0].mxu0
    %4659 = vmatprep.mubr.f32.mxu0 0.0
    %4660 = vmatmul.mubr.f32.gmra.mrb[0].mxu0 %v3368
    %v4661 = vpop.f32.mrb[0].mxu0
    %v4662 = vadd.f32 %v2674, %v4661
    %v4663 = vpop.f32.mrb[0].mxu0
    %4664 = vmatprep.mubr.f32.mxu0 0.0
    %4665 = vmatmul.mubr.f32.gmra.mrb[0].mxu0 %v3371
    %v4666 = vpop.f32.mrb[0].mxu0
    %v4667 = vadd.f32 %v2674, %v4666
    %v4668 = vpop.f32.mrb[0].mxu0
    %4669 = vmatprep.mubr.f32.mxu0 0.0
    %4670 = vmatmul.mubr.f32.gmra.mrb[0].mxu0 %v3374
    %v4671 = vpop.f32.mrb[0].mxu0
    %v4672 = vadd.f32 %v2674, %v4671
    %v4673 = vpop.f32.mrb[0].mxu0
    %4674 = vmatprep.mubr.f32.mxu0 0.0
    %4675 = vmatmul.mubr.f32.gmra.mrb[0].mxu0 %v3377
    %v4676 = vpop.f32.mrb[0].mxu0
    %v4677 = vadd.f32 %v2674, %v4676
    %v4678 = vpop.f32.mrb[0].mxu0
    %4679 = vmatprep.mubr.f32.mxu0 0.0
    %4680 = vmatmul.mubr.f32.gmra.mrb[0].mxu0 %v3380
    %v4681 = vpop.f32.mrb[0].mxu0
    %v4682 = vadd.f32 %v2674, %v4681
    %v4683 = vpop.f32.mrb[0].mxu0
    %4684 = vmatprep.mubr.f32.mxu0 0.0
    %4685 = vmatmul.mubr.f32.gmra.mrb[0].mxu0 %v3383
    %v4686 = vpop.f32.mrb[0].mxu0
    %v4687 = vadd.f32 %v2674, %v4686
    %v4688 = vpop.f32.mrb[0].mxu0
    %4689 = vmatprep.mubr.f32.mxu0 0.0
    %4690 = vmatmul.mubr.f32.gmra.mrb[0].mxu0 %v3386
    %v4691 = vpop.f32.mrb[0].mxu0
    %v4692 = vadd.f32 %v2674, %v4691
    %v4693 = vpop.f32.mrb[0].mxu0
    %4694 = vmatprep.mubr.f32.mxu0 0.0
    %4695 = vmatmul.mubr.f32.gmra.mrb[0].mxu0 %v3389
    %v4696 = vpop.f32.mrb[0].mxu0
    %v4697 = vadd.f32 %v2674, %v4696
    %v4698 = vpop.f32.mrb[0].mxu0
    %4699 = vmatprep.mubr.f32.mxu0 0.0
    %4700 = vmatmul.mubr.f32.gmra.mrb[0].mxu0 %v3392
    %v4701 = vpop.f32.mrb[0].mxu0
    %v4702 = vadd.f32 %v2674, %v4701
    %v4703 = vpop.f32.mrb[0].mxu0
    %4704 = vmatprep.mubr.f32.mxu0 0.0
    %4705 = vmatmul.mubr.f32.gmra.mrb[0].mxu0 %v3395
    %v4706 = vpop.f32.mrb[0].mxu0
    %v4707 = vadd.f32 %v2674, %v4706
    %v4708 = vpop.f32.mrb[0].mxu0
    %4709 = vmatprep.mubr.f32.mxu0 0.0
    %4710 = vmatmul.mubr.f32.gmra.mrb[0].mxu0 %v3398
    %v4711 = vpop.f32.mrb[0].mxu0
    %v4712 = vadd.f32 %v2674, %v4711
    %v4713 = vpop.f32.mrb[0].mxu0
    %4714 = vmatprep.mubr.f32.mxu0 0.0
    %4715 = vmatmul.mubr.f32.gmra.mrb[0].mxu0 %v3401
    %v4716 = vpop.f32.mrb[0].mxu0
    %v4717 = vadd.f32 %v2674, %v4716
    %v4718 = vpop.f32.mrb[0].mxu0
    %4719 = vmatprep.mubr.f32.mxu0 0.0
    %4720 = vmatmul.mubr.f32.gmra.mrb[0].mxu0 %v3404
    %v4721 = vpop.f32.mrb[0].mxu0
    %v4722 = vadd.f32 %v2674, %v4721
    %v4723 = vpop.f32.mrb[0].mxu0
    %4724 = vmatprep.mubr.f32.mxu0 0.0
    %4725 = vmatmul.mubr.f32.gmra.mrb[0].mxu0 %v3407
    %v4726 = vpop.f32.mrb[0].mxu0
    %v4727 = vadd.f32 %v2674, %v4726
    %v4728 = vpop.f32.mrb[0].mxu0
    %4729 = vmatprep.mubr.f32.mxu0 0.0
    %4730 = vmatmul.mubr.f32.gmra.mrb[0].mxu0 %v3410
    %v4731 = vpop.f32.mrb[0].mxu0
    %v4732 = vadd.f32 %v2674, %v4731
    %v4733 = vpop.f32.mrb[0].mxu0
    %4734 = vmatprep.mubr.f32.mxu0 0.0
    %4735 = vmatmul.mubr.f32.gmra.mrb[0].mxu0 %v3413
    %v4736 = vpop.f32.mrb[0].mxu0
    %v4737 = vadd.f32 %v2674, %v4736
    %v4738 = vpop.f32.mrb[0].mxu0
    %4739 = vmatprep.mubr.f32.mxu0 0.0
    %4740 = vmatmul.mubr.f32.gmra.mrb[0].mxu0 %v3416
    %v4741 = vpop.f32.mrb[0].mxu0
    %v4742 = vadd.f32 %v2674, %v4741
    %v4743 = vpop.f32.mrb[0].mxu0
    %4744 = vmatprep.mubr.f32.mxu0 0.0
    %4745 = vmatmul.mubr.f32.gmra.mrb[0].mxu0 %v3419
    %v4746 = vpop.f32.mrb[0].mxu0
    %v4747 = vadd.f32 %v2674, %v4746
    %v4748 = vpop.f32.mrb[0].mxu0
    %4749 = vmatprep.mubr.f32.mxu0 0.0
    %4750 = vmatmul.mubr.f32.gmra.mrb[0].mxu0 %v3422
    %v4751 = vpop.f32.mrb[0].mxu0
    %v4752 = vadd.f32 %v2674, %v4751
    %v4753 = vpop.f32.mrb[0].mxu0
    %4754 = vmatprep.mubr.f32.mxu0 0.0
    %4755 = vmatmul.mubr.f32.gmra.mrb[0].mxu0 %v3425
    %v4756 = vpop.f32.mrb[0].mxu0
    %v4757 = vadd.f32 %v2674, %v4756
    %v4758 = vpop.f32.mrb[0].mxu0
    %4759 = vmatprep.mubr.f32.mxu0 0.0
    %4760 = vmatmul.mubr.f32.gmra.mrb[0].mxu0 %v3428
    %v4761 = vpop.f32.mrb[0].mxu0
    %v4762 = vadd.f32 %v2674, %v4761
    %v4763 = vpop.f32.mrb[0].mxu0
    %4764 = vmatprep.mubr.f32.mxu0 0.0
    %4765 = vmatmul.mubr.f32.gmra.mrb[0].mxu0 %v3431
    %v4766 = vpop.f32.mrb[0].mxu0
    %v4767 = vadd.f32 %v2674, %v4766
    %v4768 = vpop.f32.mrb[0].mxu0
    %4769 = vmatprep.mubr.f32.mxu0 0.0
    %4770 = vmatmul.mubr.f32.gmra.mrb[0].mxu0 %v3434
    %v4771 = vpop.f32.mrb[0].mxu0
    %v4772 = vadd.f32 %v2674, %v4771
    %v4773 = vpop.f32.mrb[0].mxu0
    %4774 = vmatprep.mubr.f32.mxu0 0.0
    %4775 = vmatmul.mubr.f32.gmra.mrb[0].mxu0 %v3437
    %v4776 = vpop.f32.mrb[0].mxu0
    %v4777 = vadd.f32 %v2674, %v4776
    %v4778 = vpop.f32.mrb[0].mxu0
    %4779 = vmatprep.mubr.f32.mxu0 0.0
    %4780 = vmatmul.mubr.f32.gmra.mrb[0].mxu0 %v3440
    %v4781 = vpop.f32.mrb[0].mxu0
    %v4782 = vadd.f32 %v2674, %v4781
    %v4783 = vpop.f32.mrb[0].mxu0
    %4784 = vmatprep.mubr.f32.mxu0 0.0
    %4785 = vmatmul.mubr.f32.gmra.mrb[0].mxu0 %v3443
    %v4786 = vpop.f32.mrb[0].mxu0
    %v4787 = vadd.f32 %v2674, %v4786
    %v4788 = vpop.f32.mrb[0].mxu0
    %4789 = vdwg.mxu0
    %v4790 = vmax.f32 %v3512, 0.0
    %v4791 = vmax.f32 %v3517, 0.0
    %v4792 = vmax.f32 %v3522, 0.0
    %v4793 = vmax.f32 %v3527, 0.0
    %v4794 = vmax.f32 %v3532, 0.0
    %v4795 = vmax.f32 %v3537, 0.0
    %v4796 = vmax.f32 %v3542, 0.0
    %v4797 = vmax.f32 %v3547, 0.0
    %v4798 = vmax.f32 %v3552, 0.0
    %v4799 = vmax.f32 %v3557, 0.0
    %v4800 = vmax.f32 %v3562, 0.0
    %v4801 = vmax.f32 %v3567, 0.0
    %v4802 = vmax.f32 %v3572, 0.0
    %v4803 = vmax.f32 %v3577, 0.0
    %v4804 = vmax.f32 %v3582, 0.0
    %v4805 = vmax.f32 %v3587, 0.0
    %v4806 = vmax.f32 %v3592, 0.0
    %v4807 = vmax.f32 %v3597, 0.0
    %v4808 = vmax.f32 %v3602, 0.0
    %v4809 = vmax.f32 %v3607, 0.0
    %v4810 = vmax.f32 %v3612, 0.0
    %v4811 = vmax.f32 %v3617, 0.0
    %v4812 = vmax.f32 %v3622, 0.0
    %v4813 = vmax.f32 %v3627, 0.0
    %v4814 = vmax.f32 %v3632, 0.0
    %v4815 = vmax.f32 %v3637, 0.0
    %v4816 = vmax.f32 %v3642, 0.0
    %v4817 = vmax.f32 %v3647, 0.0
    %v4818 = vmax.f32 %v3652, 0.0
    %v4819 = vmax.f32 %v3657, 0.0
    %v4820 = vmax.f32 %v3662, 0.0
    %v4821 = vmax.f32 %v3667, 0.0
    %v4822 = vmax.f32 %v3672, 0.0
    %v4823 = vmax.f32 %v3677, 0.0
    %v4824 = vmax.f32 %v3682, 0.0
    %v4825 = vmax.f32 %v3687, 0.0
    %v4826 = vmax.f32 %v3692, 0.0
    %v4827 = vmax.f32 %v3697, 0.0
    %v4828 = vmax.f32 %v3702, 0.0
    %v4829 = vmax.f32 %v3707, 0.0
    %v4830 = vmax.f32 %v3712, 0.0
    %v4831 = vmax.f32 %v3717, 0.0
    %v4832 = vmax.f32 %v3722, 0.0
    %v4833 = vmax.f32 %v3727, 0.0
    %v4834 = vmax.f32 %v3732, 0.0
    %v4835 = vmax.f32 %v3737, 0.0
    %v4836 = vmax.f32 %v3742, 0.0
    %v4837 = vmax.f32 %v3747, 0.0
    %v4838 = vmax.f32 %v3752, 0.0
    %v4839 = vmax.f32 %v3757, 0.0
    %v4840 = vmax.f32 %v3762, 0.0
    %v4841 = vmax.f32 %v3767, 0.0
    %v4842 = vmax.f32 %v3772, 0.0
    %v4843 = vmax.f32 %v3777, 0.0
    %v4844 = vmax.f32 %v3782, 0.0
    %v4845 = vmax.f32 %v3787, 0.0
    %v4846 = vmax.f32 %v3792, 0.0
    %v4847 = vmax.f32 %v3797, 0.0
    %v4848 = vmax.f32 %v3802, 0.0
    %v4849 = vmax.f32 %v3807, 0.0
    %v4850 = vmax.f32 %v3812, 0.0
    %v4851 = vmax.f32 %v3817, 0.0
    %v4852 = vmax.f32 %v3822, 0.0
    %v4853 = vmax.f32 %v3827, 0.0
    %v4854 = vmax.f32 %v3832, 0.0
    %v4855 = vmax.f32 %v3837, 0.0
    %v4856 = vmax.f32 %v3842, 0.0
    %v4857 = vmax.f32 %v3847, 0.0
    %v4858 = vmax.f32 %v3852, 0.0
    %v4859 = vmax.f32 %v3857, 0.0
    %v4860 = vmax.f32 %v3862, 0.0
    %v4861 = vmax.f32 %v3867, 0.0
    %v4862 = vmax.f32 %v3872, 0.0
    %v4863 = vmax.f32 %v3877, 0.0
    %v4864 = vmax.f32 %v3882, 0.0
    %v4865 = vmax.f32 %v3887, 0.0
    %v4866 = vmax.f32 %v3892, 0.0
    %v4867 = vmax.f32 %v3897, 0.0
    %v4868 = vmax.f32 %v3902, 0.0
    %v4869 = vmax.f32 %v3907, 0.0
    %v4870 = vmax.f32 %v3912, 0.0
    %v4871 = vmax.f32 %v3917, 0.0
    %v4872 = vmax.f32 %v3922, 0.0
    %v4873 = vmax.f32 %v3927, 0.0
    %v4874 = vmax.f32 %v3932, 0.0
    %v4875 = vmax.f32 %v3937, 0.0
    %v4876 = vmax.f32 %v3942, 0.0
    %v4877 = vmax.f32 %v3947, 0.0
    %v4878 = vmax.f32 %v3952, 0.0
    %v4879 = vmax.f32 %v3957, 0.0
    %v4880 = vmax.f32 %v3962, 0.0
    %v4881 = vmax.f32 %v3967, 0.0
    %v4882 = vmax.f32 %v3972, 0.0
    %v4883 = vmax.f32 %v3977, 0.0
    %v4884 = vmax.f32 %v3982, 0.0
    %v4885 = vmax.f32 %v3987, 0.0
    %v4886 = vmax.f32 %v3992, 0.0
    %v4887 = vmax.f32 %v3997, 0.0
    %v4888 = vmax.f32 %v4002, 0.0
    %v4889 = vmax.f32 %v4007, 0.0
    %v4890 = vmax.f32 %v4012, 0.0
    %v4891 = vmax.f32 %v4017, 0.0
    %v4892 = vmax.f32 %v4022, 0.0
    %v4893 = vmax.f32 %v4027, 0.0
    %v4894 = vmax.f32 %v4032, 0.0
    %v4895 = vmax.f32 %v4037, 0.0
    %v4896 = vmax.f32 %v4042, 0.0
    %v4897 = vmax.f32 %v4047, 0.0
    %v4898 = vmax.f32 %v4052, 0.0
    %v4899 = vmax.f32 %v4057, 0.0
    %v4900 = vmax.f32 %v4062, 0.0
    %v4901 = vmax.f32 %v4067, 0.0
    %v4902 = vmax.f32 %v4072, 0.0
    %v4903 = vmax.f32 %v4077, 0.0
    %v4904 = vmax.f32 %v4082, 0.0
    %v4905 = vmax.f32 %v4087, 0.0
    %v4906 = vmax.f32 %v4092, 0.0
    %v4907 = vmax.f32 %v4097, 0.0
    %v4908 = vmax.f32 %v4102, 0.0
    %v4909 = vmax.f32 %v4107, 0.0
    %v4910 = vmax.f32 %v4112, 0.0
    %v4911 = vmax.f32 %v4117, 0.0
    %v4912 = vmax.f32 %v4122, 0.0
    %v4913 = vmax.f32 %v4127, 0.0
    %v4914 = vmax.f32 %v4132, 0.0
    %v4915 = vmax.f32 %v4137, 0.0
    %v4916 = vmax.f32 %v4142, 0.0
    %v4917 = vmax.f32 %v4147, 0.0
    %v4918 = vmax.f32 %v4152, 0.0
    %v4919 = vmax.f32 %v4157, 0.0
    %v4920 = vmax.f32 %v4162, 0.0
    %v4921 = vmax.f32 %v4167, 0.0
    %v4922 = vmax.f32 %v4172, 0.0
    %v4923 = vmax.f32 %v4177, 0.0
    %v4924 = vmax.f32 %v4182, 0.0
    %v4925 = vmax.f32 %v4187, 0.0
    %v4926 = vmax.f32 %v4192, 0.0
    %v4927 = vmax.f32 %v4197, 0.0
    %v4928 = vmax.f32 %v4202, 0.0
    %v4929 = vmax.f32 %v4207, 0.0
    %v4930 = vmax.f32 %v4212, 0.0
    %v4931 = vmax.f32 %v4217, 0.0
    %v4932 = vmax.f32 %v4222, 0.0
    %v4933 = vmax.f32 %v4227, 0.0
    %v4934 = vmax.f32 %v4232, 0.0
    %v4935 = vmax.f32 %v4237, 0.0
    %v4936 = vmax.f32 %v4242, 0.0
    %v4937 = vmax.f32 %v4247, 0.0
    %v4938 = vmax.f32 %v4252, 0.0
    %v4939 = vmax.f32 %v4257, 0.0
    %v4940 = vmax.f32 %v4262, 0.0
    %v4941 = vmax.f32 %v4267, 0.0
    %v4942 = vmax.f32 %v4272, 0.0
    %v4943 = vmax.f32 %v4277, 0.0
    %v4944 = vmax.f32 %v4282, 0.0
    %v4945 = vmax.f32 %v4287, 0.0
    %v4946 = vmax.f32 %v4292, 0.0
    %v4947 = vmax.f32 %v4297, 0.0
    %v4948 = vmax.f32 %v4302, 0.0
    %v4949 = vmax.f32 %v4307, 0.0
    %v4950 = vmax.f32 %v4312, 0.0
    %v4951 = vmax.f32 %v4317, 0.0
    %v4952 = vmax.f32 %v4322, 0.0
    %v4953 = vmax.f32 %v4327, 0.0
    %v4954 = vmax.f32 %v4332, 0.0
    %v4955 = vmax.f32 %v4337, 0.0
    %v4956 = vmax.f32 %v4342, 0.0
    %v4957 = vmax.f32 %v4347, 0.0
    %v4958 = vmax.f32 %v4352, 0.0
    %v4959 = vmax.f32 %v4357, 0.0
    %v4960 = vmax.f32 %v4362, 0.0
    %v4961 = vmax.f32 %v4367, 0.0
    %v4962 = vmax.f32 %v4372, 0.0
    %v4963 = vmax.f32 %v4377, 0.0
    %v4964 = vmax.f32 %v4382, 0.0
    %v4965 = vmax.f32 %v4387, 0.0
    %v4966 = vmax.f32 %v4392, 0.0
    %v4967 = vmax.f32 %v4397, 0.0
    %v4968 = vmax.f32 %v4402, 0.0
    %v4969 = vmax.f32 %v4407, 0.0
    %v4970 = vmax.f32 %v4412, 0.0
    %v4971 = vmax.f32 %v4417, 0.0
    %v4972 = vmax.f32 %v4422, 0.0
    %v4973 = vmax.f32 %v4427, 0.0
    %v4974 = vmax.f32 %v4432, 0.0
    %v4975 = vmax.f32 %v4437, 0.0
    %v4976 = vmax.f32 %v4442, 0.0
    %v4977 = vmax.f32 %v4447, 0.0
    %v4978 = vmax.f32 %v4452, 0.0
    %v4979 = vmax.f32 %v4457, 0.0
    %v4980 = vmax.f32 %v4462, 0.0
    %v4981 = vmax.f32 %v4467, 0.0
    %v4982 = vmax.f32 %v4472, 0.0
    %v4983 = vmax.f32 %v4477, 0.0
    %v4984 = vmax.f32 %v4482, 0.0
    %v4985 = vmax.f32 %v4487, 0.0
    %v4986 = vmax.f32 %v4492, 0.0
    %v4987 = vmax.f32 %v4497, 0.0
    %v4988 = vmax.f32 %v4502, 0.0
    %v4989 = vmax.f32 %v4507, 0.0
    %v4990 = vmax.f32 %v4512, 0.0
    %v4991 = vmax.f32 %v4517, 0.0
    %v4992 = vmax.f32 %v4522, 0.0
    %v4993 = vmax.f32 %v4527, 0.0
    %v4994 = vmax.f32 %v4532, 0.0
    %v4995 = vmax.f32 %v4537, 0.0
    %v4996 = vmax.f32 %v4542, 0.0
    %v4997 = vmax.f32 %v4547, 0.0
    %v4998 = vmax.f32 %v4552, 0.0
    %v4999 = vmax.f32 %v4557, 0.0
    %v5000 = vmax.f32 %v4562, 0.0
    %v5001 = vmax.f32 %v4567, 0.0
    %v5002 = vmax.f32 %v4572, 0.0
    %v5003 = vmax.f32 %v4577, 0.0
    %v5004 = vmax.f32 %v4582, 0.0
    %v5005 = vmax.f32 %v4587, 0.0
    %v5006 = vmax.f32 %v4592, 0.0
    %v5007 = vmax.f32 %v4597, 0.0
    %v5008 = vmax.f32 %v4602, 0.0
    %v5009 = vmax.f32 %v4607, 0.0
    %v5010 = vmax.f32 %v4612, 0.0
    %v5011 = vmax.f32 %v4617, 0.0
    %v5012 = vmax.f32 %v4622, 0.0
    %v5013 = vmax.f32 %v4627, 0.0
    %v5014 = vmax.f32 %v4632, 0.0
    %v5015 = vmax.f32 %v4637, 0.0
    %v5016 = vmax.f32 %v4642, 0.0
    %v5017 = vmax.f32 %v4647, 0.0
    %v5018 = vmax.f32 %v4652, 0.0
    %v5019 = vmax.f32 %v4657, 0.0
    %v5020 = vmax.f32 %v4662, 0.0
    %v5021 = vmax.f32 %v4667, 0.0
    %v5022 = vmax.f32 %v4672, 0.0
    %v5023 = vmax.f32 %v4677, 0.0
    %v5024 = vmax.f32 %v4682, 0.0
    %v5025 = vmax.f32 %v4687, 0.0
    %v5026 = vmax.f32 %v4692, 0.0
    %v5027 = vmax.f32 %v4697, 0.0
    %v5028 = vmax.f32 %v4702, 0.0
    %v5029 = vmax.f32 %v4707, 0.0
    %v5030 = vmax.f32 %v4712, 0.0
    %v5031 = vmax.f32 %v4717, 0.0
    %v5032 = vmax.f32 %v4722, 0.0
    %v5033 = vmax.f32 %v4727, 0.0
    %v5034 = vmax.f32 %v4732, 0.0
    %v5035 = vmax.f32 %v4737, 0.0
    %v5036 = vmax.f32 %v4742, 0.0
    %v5037 = vmax.f32 %v4747, 0.0
    %v5038 = vmax.f32 %v4752, 0.0
    %v5039 = vmax.f32 %v4757, 0.0
    %v5040 = vmax.f32 %v4762, 0.0
    %v5041 = vmax.f32 %v4767, 0.0
    %v5042 = vmax.f32 %v4772, 0.0
    %v5043 = vmax.f32 %v4777, 0.0
    %v5044 = vmax.f32 %v4782, 0.0
    %v5045 = vmax.f32 %v4787, 0.0
    %v5046 = vld [vmem:[%s5] sm:$0xff]
    %v5047 = vld [vmem:[%s5 + $0x8] sm:$0xff]
    %v5048 = vld [vmem:[%s5 + $0x10] sm:$0xff]
    %v5049 = vld [vmem:[%s5 + $0x18] sm:$0xff]
    %v5050 = vld [vmem:[%s5 + $0x20] sm:$0xff]
    %v5051 = vld [vmem:[%s5 + $0x28] sm:$0xff]
    %v5052 = vld [vmem:[%s5 + $0x30] sm:$0xff]
    %v5053 = vld [vmem:[%s5 + $0x38] sm:$0xff]
    %v5054 = vld [vmem:[%s5 + $0x40] sm:$0xff]
    %v5055 = vld [vmem:[%s5 + $0x48] sm:$0xff]
    %v5056 = vld [vmem:[%s5 + $0x50] sm:$0xff]
    %v5057 = vld [vmem:[%s5 + $0x58] sm:$0xff]
    %v5058 = vld [vmem:[%s5 + $0x60] sm:$0xff]
    %v5059 = vld [vmem:[%s5 + $0x68] sm:$0xff]
    %v5060 = vld [vmem:[%s5 + $0x70] sm:$0xff]
    %v5061 = vld [vmem:[%s5 + $0x78] sm:$0xff]
    %v5062 = vld [vmem:[%s5 + $0x80] sm:$0xff]
    %v5063 = vld [vmem:[%s5 + $0x88] sm:$0xff]
    %v5064 = vld [vmem:[%s5 + $0x90] sm:$0xff]
    %v5065 = vld [vmem:[%s5 + $0x98] sm:$0xff]
    %v5066 = vld [vmem:[%s5 + $0xa0] sm:$0xff]
    %v5067 = vld [vmem:[%s5 + $0xa8] sm:$0xff]
    %v5068 = vld [vmem:[%s5 + $0xb0] sm:$0xff]
    %v5069 = vld [vmem:[%s5 + $0xb8] sm:$0xff]
    %v5070 = vld [vmem:[%s5 + $0xc0] sm:$0xff]
    %v5071 = vld [vmem:[%s5 + $0xc8] sm:$0xff]
    %v5072 = vld [vmem:[%s5 + $0xd0] sm:$0xff]
    %v5073 = vld [vmem:[%s5 + $0xd8] sm:$0xff]
    %v5074 = vld [vmem:[%s5 + $0xe0] sm:$0xff]
    %v5075 = vld [vmem:[%s5 + $0xe8] sm:$0xff]
    %v5076 = vld [vmem:[%s5 + $0xf0] sm:$0xff]
    %v5077 = vld [vmem:[%s5 + $0xf8] sm:$0xff]
    %v5078 = vld [vmem:[%s6] sm:$0x3]
    %v5080 = vlaneseq
    %v5081 = vshrl.u32 %v5080, 7
    %v5082 = vsub.s32 0, %v5081
    %v5083 = vrot.slane %v5078, %v5082
    %v5084 = vlaneseq
    %v5085 = vshrl.u32 %v5084, 7
    %v5086 = vsub.s32 1, %v5085
    %v5087 = vrot.slane %v5078, %v5086
    %5090 = vmatprep.subr.mxu0 %v5047
    %5091 = vmatpush1.msra.mxu0 %v5046
    %5092 = vmatprep.subr.mxu0 %v5049
    %5093 = vmatpush1.msra.mxu0 %v5048
    %5094 = vmatprep.subr.mxu0 %v5051
    %5095 = vmatpush1.msra.mxu0 %v5050
    %5096 = vmatprep.subr.mxu0 %v5053
    %5097 = vmatpush1.msra.mxu0 %v5052
    %5098 = vmatprep.subr.mxu0 %v5055
    %5099 = vmatpush1.msra.mxu0 %v5054
    %5100 = vmatprep.subr.mxu0 %v5057
    %5101 = vmatpush1.msra.mxu0 %v5056
    %5102 = vmatprep.subr.mxu0 %v5059
    %5103 = vmatpush1.msra.mxu0 %v5058
    %5104 = vmatprep.subr.mxu0 %v5061
    %5105 = vmatpush1.msra.mxu0 %v5060
    %5106 = vmatprep.subr.mxu0 %v5063
    %5107 = vmatpush1.msra.mxu0 %v5062
    %5108 = vmatprep.subr.mxu0 %v5065
    %5109 = vmatpush1.msra.mxu0 %v5064
    %5110 = vmatprep.subr.mxu0 %v5067
    %5111 = vmatpush1.msra.mxu0 %v5066
    %5112 = vmatprep.subr.mxu0 %v5069
    %5113 = vmatpush1.msra.mxu0 %v5068
    %5114 = vmatprep.subr.mxu0 %v5071
    %5115 = vmatpush1.msra.mxu0 %v5070
    %5116 = vmatprep.subr.mxu0 %v5073
    %5117 = vmatpush1.msra.mxu0 %v5072
    %5118 = vmatprep.subr.mxu0 %v5075
    %5119 = vmatpush1.msra.mxu0 %v5074
    %5120 = vmatprep.subr.mxu0 %v5077
    %5121 = vmatpush1.msra.mxu0 %v5076
    %5122 = vmatprep.subr.mxu0 0.0
    %5123 = vmatpush1.msra.mxu0 0.0
    %5124 = vmatprep.subr.mxu0 0.0
    %5125 = vmatpush1.msra.mxu0 0.0
    %5126 = vmatprep.subr.mxu0 0.0
    %5127 = vmatpush1.msra.mxu0 0.0
    %5128 = vmatprep.subr.mxu0 0.0
    %5129 = vmatpush1.msra.mxu0 0.0
    %5130 = vmatprep.subr.mxu0 0.0
    %5131 = vmatpush1.msra.mxu0 0.0
    %5132 = vmatprep.subr.mxu0 0.0
    %5133 = vmatpush1.msra.mxu0 0.0
    %5134 = vmatprep.subr.mxu0 0.0
    %5135 = vmatpush1.msra.mxu0 0.0
    %5136 = vmatprep.subr.mxu0 0.0
    %5137 = vmatpush1.msra.mxu0 0.0
    %5138 = vmatprep.subr.mxu0 0.0
    %5139 = vmatpush1.msra.mxu0 0.0
    %5140 = vmatprep.subr.mxu0 0.0
    %5141 = vmatpush1.msra.mxu0 0.0
    %5142 = vmatprep.subr.mxu0 0.0
    %5143 = vmatpush1.msra.mxu0 0.0
    %5144 = vmatprep.subr.mxu0 0.0
    %5145 = vmatpush1.msra.mxu0 0.0
    %5146 = vmatprep.subr.mxu0 0.0
    %5147 = vmatpush1.msra.mxu0 0.0
    %5148 = vmatprep.subr.mxu0 0.0
    %5149 = vmatpush1.msra.mxu0 0.0
    %5150 = vmatprep.subr.mxu0 0.0
    %5151 = vmatpush1.msra.mxu0 0.0
    %5152 = vmatprep.subr.mxu0 0.0
    %5153 = vmatpush1.msra.mxu0 0.0
    %5154 = vmatprep.mubr.f32.mxu0 0.0
    %5155 = vmatmul.mubr.f32.gmra.mrb[0].mxu0 %v4790
    %v5156 = vpop.f32.mrb[0].mxu0
    %v5157 = vadd.f32 %v5083, %v5156
    %v5158 = vpop.f32.mrb[0].mxu0
    %v5159 = vadd.f32 %v5087, %v5158
    %5160 = vmatprep.mubr.f32.mxu0 0.0
    %5161 = vmatmul.mubr.f32.gmra.mrb[0].mxu0 %v4791
    %v5162 = vpop.f32.mrb[0].mxu0
    %v5163 = vadd.f32 %v5083, %v5162
    %v5164 = vpop.f32.mrb[0].mxu0
    %v5165 = vadd.f32 %v5087, %v5164
    %5166 = vmatprep.mubr.f32.mxu0 0.0
    %5167 = vmatmul.mubr.f32.gmra.mrb[0].mxu0 %v4792
    %v5168 = vpop.f32.mrb[0].mxu0
    %v5169 = vadd.f32 %v5083, %v5168
    %v5170 = vpop.f32.mrb[0].mxu0
    %v5171 = vadd.f32 %v5087, %v5170
    %5172 = vmatprep.mubr.f32.mxu0 0.0
    %5173 = vmatmul.mubr.f32.gmra.mrb[0].mxu0 %v4793
    %v5174 = vpop.f32.mrb[0].mxu0
    %v5175 = vadd.f32 %v5083, %v5174
    %v5176 = vpop.f32.mrb[0].mxu0
    %v5177 = vadd.f32 %v5087, %v5176
    %5178 = vmatprep.mubr.f32.mxu0 0.0
    %5179 = vmatmul.mubr.f32.gmra.mrb[0].mxu0 %v4794
    %v5180 = vpop.f32.mrb[0].mxu0
    %v5181 = vadd.f32 %v5083, %v5180
    %v5182 = vpop.f32.mrb[0].mxu0
    %v5183 = vadd.f32 %v5087, %v5182
    %5184 = vmatprep.mubr.f32.mxu0 0.0
    %5185 = vmatmul.mubr.f32.gmra.mrb[0].mxu0 %v4795
    %v5186 = vpop.f32.mrb[0].mxu0
    %v5187 = vadd.f32 %v5083, %v5186
    %v5188 = vpop.f32.mrb[0].mxu0
    %v5189 = vadd.f32 %v5087, %v5188
    %5190 = vmatprep.mubr.f32.mxu0 0.0
    %5191 = vmatmul.mubr.f32.gmra.mrb[0].mxu0 %v4796
    %v5192 = vpop.f32.mrb[0].mxu0
    %v5193 = vadd.f32 %v5083, %v5192
    %v5194 = vpop.f32.mrb[0].mxu0
    %v5195 = vadd.f32 %v5087, %v5194
    %5196 = vmatprep.mubr.f32.mxu0 0.0
    %5197 = vmatmul.mubr.f32.gmra.mrb[0].mxu0 %v4797
    %v5198 = vpop.f32.mrb[0].mxu0
    %v5199 = vadd.f32 %v5083, %v5198
    %v5200 = vpop.f32.mrb[0].mxu0
    %v5201 = vadd.f32 %v5087, %v5200
    %5202 = vmatprep.mubr.f32.mxu0 0.0
    %5203 = vmatmul.mubr.f32.gmra.mrb[0].mxu0 %v4798
    %v5204 = vpop.f32.mrb[0].mxu0
    %v5205 = vadd.f32 %v5083, %v5204
    %v5206 = vpop.f32.mrb[0].mxu0
    %v5207 = vadd.f32 %v5087, %v5206
    %5208 = vmatprep.mubr.f32.mxu0 0.0
    %5209 = vmatmul.mubr.f32.gmra.mrb[0].mxu0 %v4799
    %v5210 = vpop.f32.mrb[0].mxu0
    %v5211 = vadd.f32 %v5083, %v5210
    %v5212 = vpop.f32.mrb[0].mxu0
    %v5213 = vadd.f32 %v5087, %v5212
    %5214 = vmatprep.mubr.f32.mxu0 0.0
    %5215 = vmatmul.mubr.f32.gmra.mrb[0].mxu0 %v4800
    %v5216 = vpop.f32.mrb[0].mxu0
    %v5217 = vadd.f32 %v5083, %v5216
    %v5218 = vpop.f32.mrb[0].mxu0
    %v5219 = vadd.f32 %v5087, %v5218
    %5220 = vmatprep.mubr.f32.mxu0 0.0
    %5221 = vmatmul.mubr.f32.gmra.mrb[0].mxu0 %v4801
    %v5222 = vpop.f32.mrb[0].mxu0
    %v5223 = vadd.f32 %v5083, %v5222
    %v5224 = vpop.f32.mrb[0].mxu0
    %v5225 = vadd.f32 %v5087, %v5224
    %5226 = vmatprep.mubr.f32.mxu0 0.0
    %5227 = vmatmul.mubr.f32.gmra.mrb[0].mxu0 %v4802
    %v5228 = vpop.f32.mrb[0].mxu0
    %v5229 = vadd.f32 %v5083, %v5228
    %v5230 = vpop.f32.mrb[0].mxu0
    %v5231 = vadd.f32 %v5087, %v5230
    %5232 = vmatprep.mubr.f32.mxu0 0.0
    %5233 = vmatmul.mubr.f32.gmra.mrb[0].mxu0 %v4803
    %v5234 = vpop.f32.mrb[0].mxu0
    %v5235 = vadd.f32 %v5083, %v5234
    %v5236 = vpop.f32.mrb[0].mxu0
    %v5237 = vadd.f32 %v5087, %v5236
    %5238 = vmatprep.mubr.f32.mxu0 0.0
    %5239 = vmatmul.mubr.f32.gmra.mrb[0].mxu0 %v4804
    %v5240 = vpop.f32.mrb[0].mxu0
    %v5241 = vadd.f32 %v5083, %v5240
    %v5242 = vpop.f32.mrb[0].mxu0
    %v5243 = vadd.f32 %v5087, %v5242
    %5244 = vmatprep.mubr.f32.mxu0 0.0
    %5245 = vmatmul.mubr.f32.gmra.mrb[0].mxu0 %v4805
    %v5246 = vpop.f32.mrb[0].mxu0
    %v5247 = vadd.f32 %v5083, %v5246
    %v5248 = vpop.f32.mrb[0].mxu0
    %v5249 = vadd.f32 %v5087, %v5248
    %5250 = vmatprep.mubr.f32.mxu0 0.0
    %5251 = vmatmul.mubr.f32.gmra.mrb[0].mxu0 %v4806
    %v5252 = vpop.f32.mrb[0].mxu0
    %v5253 = vadd.f32 %v5083, %v5252
    %v5254 = vpop.f32.mrb[0].mxu0
    %v5255 = vadd.f32 %v5087, %v5254
    %5256 = vmatprep.mubr.f32.mxu0 0.0
    %5257 = vmatmul.mubr.f32.gmra.mrb[0].mxu0 %v4807
    %v5258 = vpop.f32.mrb[0].mxu0
    %v5259 = vadd.f32 %v5083, %v5258
    %v5260 = vpop.f32.mrb[0].mxu0
    %v5261 = vadd.f32 %v5087, %v5260
    %5262 = vmatprep.mubr.f32.mxu0 0.0
    %5263 = vmatmul.mubr.f32.gmra.mrb[0].mxu0 %v4808
    %v5264 = vpop.f32.mrb[0].mxu0
    %v5265 = vadd.f32 %v5083, %v5264
    %v5266 = vpop.f32.mrb[0].mxu0
    %v5267 = vadd.f32 %v5087, %v5266
    %5268 = vmatprep.mubr.f32.mxu0 0.0
    %5269 = vmatmul.mubr.f32.gmra.mrb[0].mxu0 %v4809
    %v5270 = vpop.f32.mrb[0].mxu0
    %v5271 = vadd.f32 %v5083, %v5270
    %v5272 = vpop.f32.mrb[0].mxu0
    %v5273 = vadd.f32 %v5087, %v5272
    %5274 = vmatprep.mubr.f32.mxu0 0.0
    %5275 = vmatmul.mubr.f32.gmra.mrb[0].mxu0 %v4810
    %v5276 = vpop.f32.mrb[0].mxu0
    %v5277 = vadd.f32 %v5083, %v5276
    %v5278 = vpop.f32.mrb[0].mxu0
    %v5279 = vadd.f32 %v5087, %v5278
    %5280 = vmatprep.mubr.f32.mxu0 0.0
    %5281 = vmatmul.mubr.f32.gmra.mrb[0].mxu0 %v4811
    %v5282 = vpop.f32.mrb[0].mxu0
    %v5283 = vadd.f32 %v5083, %v5282
    %v5284 = vpop.f32.mrb[0].mxu0
    %v5285 = vadd.f32 %v5087, %v5284
    %5286 = vmatprep.mubr.f32.mxu0 0.0
    %5287 = vmatmul.mubr.f32.gmra.mrb[0].mxu0 %v4812
    %v5288 = vpop.f32.mrb[0].mxu0
    %v5289 = vadd.f32 %v5083, %v5288
    %v5290 = vpop.f32.mrb[0].mxu0
    %v5291 = vadd.f32 %v5087, %v5290
    %5292 = vmatprep.mubr.f32.mxu0 0.0
    %5293 = vmatmul.mubr.f32.gmra.mrb[0].mxu0 %v4813
    %v5294 = vpop.f32.mrb[0].mxu0
    %v5295 = vadd.f32 %v5083, %v5294
    %v5296 = vpop.f32.mrb[0].mxu0
    %v5297 = vadd.f32 %v5087, %v5296
    %5298 = vmatprep.mubr.f32.mxu0 0.0
    %5299 = vmatmul.mubr.f32.gmra.mrb[0].mxu0 %v4814
    %v5300 = vpop.f32.mrb[0].mxu0
    %v5301 = vadd.f32 %v5083, %v5300
    %v5302 = vpop.f32.mrb[0].mxu0
    %v5303 = vadd.f32 %v5087, %v5302
    %5304 = vmatprep.mubr.f32.mxu0 0.0
    %5305 = vmatmul.mubr.f32.gmra.mrb[0].mxu0 %v4815
    %v5306 = vpop.f32.mrb[0].mxu0
    %v5307 = vadd.f32 %v5083, %v5306
    %v5308 = vpop.f32.mrb[0].mxu0
    %v5309 = vadd.f32 %v5087, %v5308
    %5310 = vmatprep.mubr.f32.mxu0 0.0
    %5311 = vmatmul.mubr.f32.gmra.mrb[0].mxu0 %v4816
    %v5312 = vpop.f32.mrb[0].mxu0
    %v5313 = vadd.f32 %v5083, %v5312
    %v5314 = vpop.f32.mrb[0].mxu0
    %v5315 = vadd.f32 %v5087, %v5314
    %5316 = vmatprep.mubr.f32.mxu0 0.0
    %5317 = vmatmul.mubr.f32.gmra.mrb[0].mxu0 %v4817
    %v5318 = vpop.f32.mrb[0].mxu0
    %v5319 = vadd.f32 %v5083, %v5318
    %v5320 = vpop.f32.mrb[0].mxu0
    %v5321 = vadd.f32 %v5087, %v5320
    %5322 = vmatprep.mubr.f32.mxu0 0.0
    %5323 = vmatmul.mubr.f32.gmra.mrb[0].mxu0 %v4818
    %v5324 = vpop.f32.mrb[0].mxu0
    %v5325 = vadd.f32 %v5083, %v5324
    %v5326 = vpop.f32.mrb[0].mxu0
    %v5327 = vadd.f32 %v5087, %v5326
    %5328 = vmatprep.mubr.f32.mxu0 0.0
    %5329 = vmatmul.mubr.f32.gmra.mrb[0].mxu0 %v4819
    %v5330 = vpop.f32.mrb[0].mxu0
    %v5331 = vadd.f32 %v5083, %v5330
    %v5332 = vpop.f32.mrb[0].mxu0
    %v5333 = vadd.f32 %v5087, %v5332
    %5334 = vmatprep.mubr.f32.mxu0 0.0
    %5335 = vmatmul.mubr.f32.gmra.mrb[0].mxu0 %v4820
    %v5336 = vpop.f32.mrb[0].mxu0
    %v5337 = vadd.f32 %v5083, %v5336
    %v5338 = vpop.f32.mrb[0].mxu0
    %v5339 = vadd.f32 %v5087, %v5338
    %5340 = vmatprep.mubr.f32.mxu0 0.0
    %5341 = vmatmul.mubr.f32.gmra.mrb[0].mxu0 %v4821
    %v5342 = vpop.f32.mrb[0].mxu0
    %v5343 = vadd.f32 %v5083, %v5342
    %v5344 = vpop.f32.mrb[0].mxu0
    %v5345 = vadd.f32 %v5087, %v5344
    %5346 = vmatprep.mubr.f32.mxu0 0.0
    %5347 = vmatmul.mubr.f32.gmra.mrb[0].mxu0 %v4822
    %v5348 = vpop.f32.mrb[0].mxu0
    %v5349 = vadd.f32 %v5083, %v5348
    %v5350 = vpop.f32.mrb[0].mxu0
    %v5351 = vadd.f32 %v5087, %v5350
    %5352 = vmatprep.mubr.f32.mxu0 0.0
    %5353 = vmatmul.mubr.f32.gmra.mrb[0].mxu0 %v4823
    %v5354 = vpop.f32.mrb[0].mxu0
    %v5355 = vadd.f32 %v5083, %v5354
    %v5356 = vpop.f32.mrb[0].mxu0
    %v5357 = vadd.f32 %v5087, %v5356
    %5358 = vmatprep.mubr.f32.mxu0 0.0
    %5359 = vmatmul.mubr.f32.gmra.mrb[0].mxu0 %v4824
    %v5360 = vpop.f32.mrb[0].mxu0
    %v5361 = vadd.f32 %v5083, %v5360
    %v5362 = vpop.f32.mrb[0].mxu0
    %v5363 = vadd.f32 %v5087, %v5362
    %5364 = vmatprep.mubr.f32.mxu0 0.0
    %5365 = vmatmul.mubr.f32.gmra.mrb[0].mxu0 %v4825
    %v5366 = vpop.f32.mrb[0].mxu0
    %v5367 = vadd.f32 %v5083, %v5366
    %v5368 = vpop.f32.mrb[0].mxu0
    %v5369 = vadd.f32 %v5087, %v5368
    %5370 = vmatprep.mubr.f32.mxu0 0.0
    %5371 = vmatmul.mubr.f32.gmra.mrb[0].mxu0 %v4826
    %v5372 = vpop.f32.mrb[0].mxu0
    %v5373 = vadd.f32 %v5083, %v5372
    %v5374 = vpop.f32.mrb[0].mxu0
    %v5375 = vadd.f32 %v5087, %v5374
    %5376 = vmatprep.mubr.f32.mxu0 0.0
    %5377 = vmatmul.mubr.f32.gmra.mrb[0].mxu0 %v4827
    %v5378 = vpop.f32.mrb[0].mxu0
    %v5379 = vadd.f32 %v5083, %v5378
    %v5380 = vpop.f32.mrb[0].mxu0
    %v5381 = vadd.f32 %v5087, %v5380
    %5382 = vmatprep.mubr.f32.mxu0 0.0
    %5383 = vmatmul.mubr.f32.gmra.mrb[0].mxu0 %v4828
    %v5384 = vpop.f32.mrb[0].mxu0
    %v5385 = vadd.f32 %v5083, %v5384
    %v5386 = vpop.f32.mrb[0].mxu0
    %v5387 = vadd.f32 %v5087, %v5386
    %5388 = vmatprep.mubr.f32.mxu0 0.0
    %5389 = vmatmul.mubr.f32.gmra.mrb[0].mxu0 %v4829
    %v5390 = vpop.f32.mrb[0].mxu0
    %v5391 = vadd.f32 %v5083, %v5390
    %v5392 = vpop.f32.mrb[0].mxu0
    %v5393 = vadd.f32 %v5087, %v5392
    %5394 = vmatprep.mubr.f32.mxu0 0.0
    %5395 = vmatmul.mubr.f32.gmra.mrb[0].mxu0 %v4830
    %v5396 = vpop.f32.mrb[0].mxu0
    %v5397 = vadd.f32 %v5083, %v5396
    %v5398 = vpop.f32.mrb[0].mxu0
    %v5399 = vadd.f32 %v5087, %v5398
    %5400 = vmatprep.mubr.f32.mxu0 0.0
    %5401 = vmatmul.mubr.f32.gmra.mrb[0].mxu0 %v4831
    %v5402 = vpop.f32.mrb[0].mxu0
    %v5403 = vadd.f32 %v5083, %v5402
    %v5404 = vpop.f32.mrb[0].mxu0
    %v5405 = vadd.f32 %v5087, %v5404
    %5406 = vmatprep.mubr.f32.mxu0 0.0
    %5407 = vmatmul.mubr.f32.gmra.mrb[0].mxu0 %v4832
    %v5408 = vpop.f32.mrb[0].mxu0
    %v5409 = vadd.f32 %v5083, %v5408
    %v5410 = vpop.f32.mrb[0].mxu0
    %v5411 = vadd.f32 %v5087, %v5410
    %5412 = vmatprep.mubr.f32.mxu0 0.0
    %5413 = vmatmul.mubr.f32.gmra.mrb[0].mxu0 %v4833
    %v5414 = vpop.f32.mrb[0].mxu0
    %v5415 = vadd.f32 %v5083, %v5414
    %v5416 = vpop.f32.mrb[0].mxu0
    %v5417 = vadd.f32 %v5087, %v5416
    %5418 = vmatprep.mubr.f32.mxu0 0.0
    %5419 = vmatmul.mubr.f32.gmra.mrb[0].mxu0 %v4834
    %v5420 = vpop.f32.mrb[0].mxu0
    %v5421 = vadd.f32 %v5083, %v5420
    %v5422 = vpop.f32.mrb[0].mxu0
    %v5423 = vadd.f32 %v5087, %v5422
    %5424 = vmatprep.mubr.f32.mxu0 0.0
    %5425 = vmatmul.mubr.f32.gmra.mrb[0].mxu0 %v4835
    %v5426 = vpop.f32.mrb[0].mxu0
    %v5427 = vadd.f32 %v5083, %v5426
    %v5428 = vpop.f32.mrb[0].mxu0
    %v5429 = vadd.f32 %v5087, %v5428
    %5430 = vmatprep.mubr.f32.mxu0 0.0
    %5431 = vmatmul.mubr.f32.gmra.mrb[0].mxu0 %v4836
    %v5432 = vpop.f32.mrb[0].mxu0
    %v5433 = vadd.f32 %v5083, %v5432
    %v5434 = vpop.f32.mrb[0].mxu0
    %v5435 = vadd.f32 %v5087, %v5434
    %5436 = vmatprep.mubr.f32.mxu0 0.0
    %5437 = vmatmul.mubr.f32.gmra.mrb[0].mxu0 %v4837
    %v5438 = vpop.f32.mrb[0].mxu0
    %v5439 = vadd.f32 %v5083, %v5438
    %v5440 = vpop.f32.mrb[0].mxu0
    %v5441 = vadd.f32 %v5087, %v5440
    %5442 = vmatprep.mubr.f32.mxu0 0.0
    %5443 = vmatmul.mubr.f32.gmra.mrb[0].mxu0 %v4838
    %v5444 = vpop.f32.mrb[0].mxu0
    %v5445 = vadd.f32 %v5083, %v5444
    %v5446 = vpop.f32.mrb[0].mxu0
    %v5447 = vadd.f32 %v5087, %v5446
    %5448 = vmatprep.mubr.f32.mxu0 0.0
    %5449 = vmatmul.mubr.f32.gmra.mrb[0].mxu0 %v4839
    %v5450 = vpop.f32.mrb[0].mxu0
    %v5451 = vadd.f32 %v5083, %v5450
    %v5452 = vpop.f32.mrb[0].mxu0
    %v5453 = vadd.f32 %v5087, %v5452
    %5454 = vmatprep.mubr.f32.mxu0 0.0
    %5455 = vmatmul.mubr.f32.gmra.mrb[0].mxu0 %v4840
    %v5456 = vpop.f32.mrb[0].mxu0
    %v5457 = vadd.f32 %v5083, %v5456
    %v5458 = vpop.f32.mrb[0].mxu0
    %v5459 = vadd.f32 %v5087, %v5458
    %5460 = vmatprep.mubr.f32.mxu0 0.0
    %5461 = vmatmul.mubr.f32.gmra.mrb[0].mxu0 %v4841
    %v5462 = vpop.f32.mrb[0].mxu0
    %v5463 = vadd.f32 %v5083, %v5462
    %v5464 = vpop.f32.mrb[0].mxu0
    %v5465 = vadd.f32 %v5087, %v5464
    %5466 = vmatprep.mubr.f32.mxu0 0.0
    %5467 = vmatmul.mubr.f32.gmra.mrb[0].mxu0 %v4842
    %v5468 = vpop.f32.mrb[0].mxu0
    %v5469 = vadd.f32 %v5083, %v5468
    %v5470 = vpop.f32.mrb[0].mxu0
    %v5471 = vadd.f32 %v5087, %v5470
    %5472 = vmatprep.mubr.f32.mxu0 0.0
    %5473 = vmatmul.mubr.f32.gmra.mrb[0].mxu0 %v4843
    %v5474 = vpop.f32.mrb[0].mxu0
    %v5475 = vadd.f32 %v5083, %v5474
    %v5476 = vpop.f32.mrb[0].mxu0
    %v5477 = vadd.f32 %v5087, %v5476
    %5478 = vmatprep.mubr.f32.mxu0 0.0
    %5479 = vmatmul.mubr.f32.gmra.mrb[0].mxu0 %v4844
    %v5480 = vpop.f32.mrb[0].mxu0
    %v5481 = vadd.f32 %v5083, %v5480
    %v5482 = vpop.f32.mrb[0].mxu0
    %v5483 = vadd.f32 %v5087, %v5482
    %5484 = vmatprep.mubr.f32.mxu0 0.0
    %5485 = vmatmul.mubr.f32.gmra.mrb[0].mxu0 %v4845
    %v5486 = vpop.f32.mrb[0].mxu0
    %v5487 = vadd.f32 %v5083, %v5486
    %v5488 = vpop.f32.mrb[0].mxu0
    %v5489 = vadd.f32 %v5087, %v5488
    %5490 = vmatprep.mubr.f32.mxu0 0.0
    %5491 = vmatmul.mubr.f32.gmra.mrb[0].mxu0 %v4846
    %v5492 = vpop.f32.mrb[0].mxu0
    %v5493 = vadd.f32 %v5083, %v5492
    %v5494 = vpop.f32.mrb[0].mxu0
    %v5495 = vadd.f32 %v5087, %v5494
    %5496 = vmatprep.mubr.f32.mxu0 0.0
    %5497 = vmatmul.mubr.f32.gmra.mrb[0].mxu0 %v4847
    %v5498 = vpop.f32.mrb[0].mxu0
    %v5499 = vadd.f32 %v5083, %v5498
    %v5500 = vpop.f32.mrb[0].mxu0
    %v5501 = vadd.f32 %v5087, %v5500
    %5502 = vmatprep.mubr.f32.mxu0 0.0
    %5503 = vmatmul.mubr.f32.gmra.mrb[0].mxu0 %v4848
    %v5504 = vpop.f32.mrb[0].mxu0
    %v5505 = vadd.f32 %v5083, %v5504
    %v5506 = vpop.f32.mrb[0].mxu0
    %v5507 = vadd.f32 %v5087, %v5506
    %5508 = vmatprep.mubr.f32.mxu0 0.0
    %5509 = vmatmul.mubr.f32.gmra.mrb[0].mxu0 %v4849
    %v5510 = vpop.f32.mrb[0].mxu0
    %v5511 = vadd.f32 %v5083, %v5510
    %v5512 = vpop.f32.mrb[0].mxu0
    %v5513 = vadd.f32 %v5087, %v5512
    %5514 = vmatprep.mubr.f32.mxu0 0.0
    %5515 = vmatmul.mubr.f32.gmra.mrb[0].mxu0 %v4850
    %v5516 = vpop.f32.mrb[0].mxu0
    %v5517 = vadd.f32 %v5083, %v5516
    %v5518 = vpop.f32.mrb[0].mxu0
    %v5519 = vadd.f32 %v5087, %v5518
    %5520 = vmatprep.mubr.f32.mxu0 0.0
    %5521 = vmatmul.mubr.f32.gmra.mrb[0].mxu0 %v4851
    %v5522 = vpop.f32.mrb[0].mxu0
    %v5523 = vadd.f32 %v5083, %v5522
    %v5524 = vpop.f32.mrb[0].mxu0
    %v5525 = vadd.f32 %v5087, %v5524
    %5526 = vmatprep.mubr.f32.mxu0 0.0
    %5527 = vmatmul.mubr.f32.gmra.mrb[0].mxu0 %v4852
    %v5528 = vpop.f32.mrb[0].mxu0
    %v5529 = vadd.f32 %v5083, %v5528
    %v5530 = vpop.f32.mrb[0].mxu0
    %v5531 = vadd.f32 %v5087, %v5530
    %5532 = vmatprep.mubr.f32.mxu0 0.0
    %5533 = vmatmul.mubr.f32.gmra.mrb[0].mxu0 %v4853
    %v5534 = vpop.f32.mrb[0].mxu0
    %v5535 = vadd.f32 %v5083, %v5534
    %v5536 = vpop.f32.mrb[0].mxu0
    %v5537 = vadd.f32 %v5087, %v5536
    %5538 = vmatprep.mubr.f32.mxu0 0.0
    %5539 = vmatmul.mubr.f32.gmra.mrb[0].mxu0 %v4854
    %v5540 = vpop.f32.mrb[0].mxu0
    %v5541 = vadd.f32 %v5083, %v5540
    %v5542 = vpop.f32.mrb[0].mxu0
    %v5543 = vadd.f32 %v5087, %v5542
    %5544 = vmatprep.mubr.f32.mxu0 0.0
    %5545 = vmatmul.mubr.f32.gmra.mrb[0].mxu0 %v4855
    %v5546 = vpop.f32.mrb[0].mxu0
    %v5547 = vadd.f32 %v5083, %v5546
    %v5548 = vpop.f32.mrb[0].mxu0
    %v5549 = vadd.f32 %v5087, %v5548
    %5550 = vmatprep.mubr.f32.mxu0 0.0
    %5551 = vmatmul.mubr.f32.gmra.mrb[0].mxu0 %v4856
    %v5552 = vpop.f32.mrb[0].mxu0
    %v5553 = vadd.f32 %v5083, %v5552
    %v5554 = vpop.f32.mrb[0].mxu0
    %v5555 = vadd.f32 %v5087, %v5554
    %5556 = vmatprep.mubr.f32.mxu0 0.0
    %5557 = vmatmul.mubr.f32.gmra.mrb[0].mxu0 %v4857
    %v5558 = vpop.f32.mrb[0].mxu0
    %v5559 = vadd.f32 %v5083, %v5558
    %v5560 = vpop.f32.mrb[0].mxu0
    %v5561 = vadd.f32 %v5087, %v5560
    %5562 = vmatprep.mubr.f32.mxu0 0.0
    %5563 = vmatmul.mubr.f32.gmra.mrb[0].mxu0 %v4858
    %v5564 = vpop.f32.mrb[0].mxu0
    %v5565 = vadd.f32 %v5083, %v5564
    %v5566 = vpop.f32.mrb[0].mxu0
    %v5567 = vadd.f32 %v5087, %v5566
    %5568 = vmatprep.mubr.f32.mxu0 0.0
    %5569 = vmatmul.mubr.f32.gmra.mrb[0].mxu0 %v4859
    %v5570 = vpop.f32.mrb[0].mxu0
    %v5571 = vadd.f32 %v5083, %v5570
    %v5572 = vpop.f32.mrb[0].mxu0
    %v5573 = vadd.f32 %v5087, %v5572
    %5574 = vmatprep.mubr.f32.mxu0 0.0
    %5575 = vmatmul.mubr.f32.gmra.mrb[0].mxu0 %v4860
    %v5576 = vpop.f32.mrb[0].mxu0
    %v5577 = vadd.f32 %v5083, %v5576
    %v5578 = vpop.f32.mrb[0].mxu0
    %v5579 = vadd.f32 %v5087, %v5578
    %5580 = vmatprep.mubr.f32.mxu0 0.0
    %5581 = vmatmul.mubr.f32.gmra.mrb[0].mxu0 %v4861
    %v5582 = vpop.f32.mrb[0].mxu0
    %v5583 = vadd.f32 %v5083, %v5582
    %v5584 = vpop.f32.mrb[0].mxu0
    %v5585 = vadd.f32 %v5087, %v5584
    %5586 = vmatprep.mubr.f32.mxu0 0.0
    %5587 = vmatmul.mubr.f32.gmra.mrb[0].mxu0 %v4862
    %v5588 = vpop.f32.mrb[0].mxu0
    %v5589 = vadd.f32 %v5083, %v5588
    %v5590 = vpop.f32.mrb[0].mxu0
    %v5591 = vadd.f32 %v5087, %v5590
    %5592 = vmatprep.mubr.f32.mxu0 0.0
    %5593 = vmatmul.mubr.f32.gmra.mrb[0].mxu0 %v4863
    %v5594 = vpop.f32.mrb[0].mxu0
    %v5595 = vadd.f32 %v5083, %v5594
    %v5596 = vpop.f32.mrb[0].mxu0
    %v5597 = vadd.f32 %v5087, %v5596
    %5598 = vmatprep.mubr.f32.mxu0 0.0
    %5599 = vmatmul.mubr.f32.gmra.mrb[0].mxu0 %v4864
    %v5600 = vpop.f32.mrb[0].mxu0
    %v5601 = vadd.f32 %v5083, %v5600
    %v5602 = vpop.f32.mrb[0].mxu0
    %v5603 = vadd.f32 %v5087, %v5602
    %5604 = vmatprep.mubr.f32.mxu0 0.0
    %5605 = vmatmul.mubr.f32.gmra.mrb[0].mxu0 %v4865
    %v5606 = vpop.f32.mrb[0].mxu0
    %v5607 = vadd.f32 %v5083, %v5606
    %v5608 = vpop.f32.mrb[0].mxu0
    %v5609 = vadd.f32 %v5087, %v5608
    %5610 = vmatprep.mubr.f32.mxu0 0.0
    %5611 = vmatmul.mubr.f32.gmra.mrb[0].mxu0 %v4866
    %v5612 = vpop.f32.mrb[0].mxu0
    %v5613 = vadd.f32 %v5083, %v5612
    %v5614 = vpop.f32.mrb[0].mxu0
    %v5615 = vadd.f32 %v5087, %v5614
    %5616 = vmatprep.mubr.f32.mxu0 0.0
    %5617 = vmatmul.mubr.f32.gmra.mrb[0].mxu0 %v4867
    %v5618 = vpop.f32.mrb[0].mxu0
    %v5619 = vadd.f32 %v5083, %v5618
    %v5620 = vpop.f32.mrb[0].mxu0
    %v5621 = vadd.f32 %v5087, %v5620
    %5622 = vmatprep.mubr.f32.mxu0 0.0
    %5623 = vmatmul.mubr.f32.gmra.mrb[0].mxu0 %v4868
    %v5624 = vpop.f32.mrb[0].mxu0
    %v5625 = vadd.f32 %v5083, %v5624
    %v5626 = vpop.f32.mrb[0].mxu0
    %v5627 = vadd.f32 %v5087, %v5626
    %5628 = vmatprep.mubr.f32.mxu0 0.0
    %5629 = vmatmul.mubr.f32.gmra.mrb[0].mxu0 %v4869
    %v5630 = vpop.f32.mrb[0].mxu0
    %v5631 = vadd.f32 %v5083, %v5630
    %v5632 = vpop.f32.mrb[0].mxu0
    %v5633 = vadd.f32 %v5087, %v5632
    %5634 = vmatprep.mubr.f32.mxu0 0.0
    %5635 = vmatmul.mubr.f32.gmra.mrb[0].mxu0 %v4870
    %v5636 = vpop.f32.mrb[0].mxu0
    %v5637 = vadd.f32 %v5083, %v5636
    %v5638 = vpop.f32.mrb[0].mxu0
    %v5639 = vadd.f32 %v5087, %v5638
    %5640 = vmatprep.mubr.f32.mxu0 0.0
    %5641 = vmatmul.mubr.f32.gmra.mrb[0].mxu0 %v4871
    %v5642 = vpop.f32.mrb[0].mxu0
    %v5643 = vadd.f32 %v5083, %v5642
    %v5644 = vpop.f32.mrb[0].mxu0
    %v5645 = vadd.f32 %v5087, %v5644
    %5646 = vmatprep.mubr.f32.mxu0 0.0
    %5647 = vmatmul.mubr.f32.gmra.mrb[0].mxu0 %v4872
    %v5648 = vpop.f32.mrb[0].mxu0
    %v5649 = vadd.f32 %v5083, %v5648
    %v5650 = vpop.f32.mrb[0].mxu0
    %v5651 = vadd.f32 %v5087, %v5650
    %5652 = vmatprep.mubr.f32.mxu0 0.0
    %5653 = vmatmul.mubr.f32.gmra.mrb[0].mxu0 %v4873
    %v5654 = vpop.f32.mrb[0].mxu0
    %v5655 = vadd.f32 %v5083, %v5654
    %v5656 = vpop.f32.mrb[0].mxu0
    %v5657 = vadd.f32 %v5087, %v5656
    %5658 = vmatprep.mubr.f32.mxu0 0.0
    %5659 = vmatmul.mubr.f32.gmra.mrb[0].mxu0 %v4874
    %v5660 = vpop.f32.mrb[0].mxu0
    %v5661 = vadd.f32 %v5083, %v5660
    %v5662 = vpop.f32.mrb[0].mxu0
    %v5663 = vadd.f32 %v5087, %v5662
    %5664 = vmatprep.mubr.f32.mxu0 0.0
    %5665 = vmatmul.mubr.f32.gmra.mrb[0].mxu0 %v4875
    %v5666 = vpop.f32.mrb[0].mxu0
    %v5667 = vadd.f32 %v5083, %v5666
    %v5668 = vpop.f32.mrb[0].mxu0
    %v5669 = vadd.f32 %v5087, %v5668
    %5670 = vmatprep.mubr.f32.mxu0 0.0
    %5671 = vmatmul.mubr.f32.gmra.mrb[0].mxu0 %v4876
    %v5672 = vpop.f32.mrb[0].mxu0
    %v5673 = vadd.f32 %v5083, %v5672
    %v5674 = vpop.f32.mrb[0].mxu0
    %v5675 = vadd.f32 %v5087, %v5674
    %5676 = vmatprep.mubr.f32.mxu0 0.0
    %5677 = vmatmul.mubr.f32.gmra.mrb[0].mxu0 %v4877
    %v5678 = vpop.f32.mrb[0].mxu0
    %v5679 = vadd.f32 %v5083, %v5678
    %v5680 = vpop.f32.mrb[0].mxu0
    %v5681 = vadd.f32 %v5087, %v5680
    %5682 = vmatprep.mubr.f32.mxu0 0.0
    %5683 = vmatmul.mubr.f32.gmra.mrb[0].mxu0 %v4878
    %v5684 = vpop.f32.mrb[0].mxu0
    %v5685 = vadd.f32 %v5083, %v5684
    %v5686 = vpop.f32.mrb[0].mxu0
    %v5687 = vadd.f32 %v5087, %v5686
    %5688 = vmatprep.mubr.f32.mxu0 0.0
    %5689 = vmatmul.mubr.f32.gmra.mrb[0].mxu0 %v4879
    %v5690 = vpop.f32.mrb[0].mxu0
    %v5691 = vadd.f32 %v5083, %v5690
    %v5692 = vpop.f32.mrb[0].mxu0
    %v5693 = vadd.f32 %v5087, %v5692
    %5694 = vmatprep.mubr.f32.mxu0 0.0
    %5695 = vmatmul.mubr.f32.gmra.mrb[0].mxu0 %v4880
    %v5696 = vpop.f32.mrb[0].mxu0
    %v5697 = vadd.f32 %v5083, %v5696
    %v5698 = vpop.f32.mrb[0].mxu0
    %v5699 = vadd.f32 %v5087, %v5698
    %5700 = vmatprep.mubr.f32.mxu0 0.0
    %5701 = vmatmul.mubr.f32.gmra.mrb[0].mxu0 %v4881
    %v5702 = vpop.f32.mrb[0].mxu0
    %v5703 = vadd.f32 %v5083, %v5702
    %v5704 = vpop.f32.mrb[0].mxu0
    %v5705 = vadd.f32 %v5087, %v5704
    %5706 = vmatprep.mubr.f32.mxu0 0.0
    %5707 = vmatmul.mubr.f32.gmra.mrb[0].mxu0 %v4882
    %v5708 = vpop.f32.mrb[0].mxu0
    %v5709 = vadd.f32 %v5083, %v5708
    %v5710 = vpop.f32.mrb[0].mxu0
    %v5711 = vadd.f32 %v5087, %v5710
    %5712 = vmatprep.mubr.f32.mxu0 0.0
    %5713 = vmatmul.mubr.f32.gmra.mrb[0].mxu0 %v4883
    %v5714 = vpop.f32.mrb[0].mxu0
    %v5715 = vadd.f32 %v5083, %v5714
    %v5716 = vpop.f32.mrb[0].mxu0
    %v5717 = vadd.f32 %v5087, %v5716
    %5718 = vmatprep.mubr.f32.mxu0 0.0
    %5719 = vmatmul.mubr.f32.gmra.mrb[0].mxu0 %v4884
    %v5720 = vpop.f32.mrb[0].mxu0
    %v5721 = vadd.f32 %v5083, %v5720
    %v5722 = vpop.f32.mrb[0].mxu0
    %v5723 = vadd.f32 %v5087, %v5722
    %5724 = vmatprep.mubr.f32.mxu0 0.0
    %5725 = vmatmul.mubr.f32.gmra.mrb[0].mxu0 %v4885
    %v5726 = vpop.f32.mrb[0].mxu0
    %v5727 = vadd.f32 %v5083, %v5726
    %v5728 = vpop.f32.mrb[0].mxu0
    %v5729 = vadd.f32 %v5087, %v5728
    %5730 = vmatprep.mubr.f32.mxu0 0.0
    %5731 = vmatmul.mubr.f32.gmra.mrb[0].mxu0 %v4886
    %v5732 = vpop.f32.mrb[0].mxu0
    %v5733 = vadd.f32 %v5083, %v5732
    %v5734 = vpop.f32.mrb[0].mxu0
    %v5735 = vadd.f32 %v5087, %v5734
    %5736 = vmatprep.mubr.f32.mxu0 0.0
    %5737 = vmatmul.mubr.f32.gmra.mrb[0].mxu0 %v4887
    %v5738 = vpop.f32.mrb[0].mxu0
    %v5739 = vadd.f32 %v5083, %v5738
    %v5740 = vpop.f32.mrb[0].mxu0
    %v5741 = vadd.f32 %v5087, %v5740
    %5742 = vmatprep.mubr.f32.mxu0 0.0
    %5743 = vmatmul.mubr.f32.gmra.mrb[0].mxu0 %v4888
    %v5744 = vpop.f32.mrb[0].mxu0
    %v5745 = vadd.f32 %v5083, %v5744
    %v5746 = vpop.f32.mrb[0].mxu0
    %v5747 = vadd.f32 %v5087, %v5746
    %5748 = vmatprep.mubr.f32.mxu0 0.0
    %5749 = vmatmul.mubr.f32.gmra.mrb[0].mxu0 %v4889
    %v5750 = vpop.f32.mrb[0].mxu0
    %v5751 = vadd.f32 %v5083, %v5750
    %v5752 = vpop.f32.mrb[0].mxu0
    %v5753 = vadd.f32 %v5087, %v5752
    %5754 = vmatprep.mubr.f32.mxu0 0.0
    %5755 = vmatmul.mubr.f32.gmra.mrb[0].mxu0 %v4890
    %v5756 = vpop.f32.mrb[0].mxu0
    %v5757 = vadd.f32 %v5083, %v5756
    %v5758 = vpop.f32.mrb[0].mxu0
    %v5759 = vadd.f32 %v5087, %v5758
    %5760 = vmatprep.mubr.f32.mxu0 0.0
    %5761 = vmatmul.mubr.f32.gmra.mrb[0].mxu0 %v4891
    %v5762 = vpop.f32.mrb[0].mxu0
    %v5763 = vadd.f32 %v5083, %v5762
    %v5764 = vpop.f32.mrb[0].mxu0
    %v5765 = vadd.f32 %v5087, %v5764
    %5766 = vmatprep.mubr.f32.mxu0 0.0
    %5767 = vmatmul.mubr.f32.gmra.mrb[0].mxu0 %v4892
    %v5768 = vpop.f32.mrb[0].mxu0
    %v5769 = vadd.f32 %v5083, %v5768
    %v5770 = vpop.f32.mrb[0].mxu0
    %v5771 = vadd.f32 %v5087, %v5770
    %5772 = vmatprep.mubr.f32.mxu0 0.0
    %5773 = vmatmul.mubr.f32.gmra.mrb[0].mxu0 %v4893
    %v5774 = vpop.f32.mrb[0].mxu0
    %v5775 = vadd.f32 %v5083, %v5774
    %v5776 = vpop.f32.mrb[0].mxu0
    %v5777 = vadd.f32 %v5087, %v5776
    %5778 = vmatprep.mubr.f32.mxu0 0.0
    %5779 = vmatmul.mubr.f32.gmra.mrb[0].mxu0 %v4894
    %v5780 = vpop.f32.mrb[0].mxu0
    %v5781 = vadd.f32 %v5083, %v5780
    %v5782 = vpop.f32.mrb[0].mxu0
    %v5783 = vadd.f32 %v5087, %v5782
    %5784 = vmatprep.mubr.f32.mxu0 0.0
    %5785 = vmatmul.mubr.f32.gmra.mrb[0].mxu0 %v4895
    %v5786 = vpop.f32.mrb[0].mxu0
    %v5787 = vadd.f32 %v5083, %v5786
    %v5788 = vpop.f32.mrb[0].mxu0
    %v5789 = vadd.f32 %v5087, %v5788
    %5790 = vmatprep.mubr.f32.mxu0 0.0
    %5791 = vmatmul.mubr.f32.gmra.mrb[0].mxu0 %v4896
    %v5792 = vpop.f32.mrb[0].mxu0
    %v5793 = vadd.f32 %v5083, %v5792
    %v5794 = vpop.f32.mrb[0].mxu0
    %v5795 = vadd.f32 %v5087, %v5794
    %5796 = vmatprep.mubr.f32.mxu0 0.0
    %5797 = vmatmul.mubr.f32.gmra.mrb[0].mxu0 %v4897
    %v5798 = vpop.f32.mrb[0].mxu0
    %v5799 = vadd.f32 %v5083, %v5798
    %v5800 = vpop.f32.mrb[0].mxu0
    %v5801 = vadd.f32 %v5087, %v5800
    %5802 = vmatprep.mubr.f32.mxu0 0.0
    %5803 = vmatmul.mubr.f32.gmra.mrb[0].mxu0 %v4898
    %v5804 = vpop.f32.mrb[0].mxu0
    %v5805 = vadd.f32 %v5083, %v5804
    %v5806 = vpop.f32.mrb[0].mxu0
    %v5807 = vadd.f32 %v5087, %v5806
    %5808 = vmatprep.mubr.f32.mxu0 0.0
    %5809 = vmatmul.mubr.f32.gmra.mrb[0].mxu0 %v4899
    %v5810 = vpop.f32.mrb[0].mxu0
    %v5811 = vadd.f32 %v5083, %v5810
    %v5812 = vpop.f32.mrb[0].mxu0
    %v5813 = vadd.f32 %v5087, %v5812
    %5814 = vmatprep.mubr.f32.mxu0 0.0
    %5815 = vmatmul.mubr.f32.gmra.mrb[0].mxu0 %v4900
    %v5816 = vpop.f32.mrb[0].mxu0
    %v5817 = vadd.f32 %v5083, %v5816
    %v5818 = vpop.f32.mrb[0].mxu0
    %v5819 = vadd.f32 %v5087, %v5818
    %5820 = vmatprep.mubr.f32.mxu0 0.0
    %5821 = vmatmul.mubr.f32.gmra.mrb[0].mxu0 %v4901
    %v5822 = vpop.f32.mrb[0].mxu0
    %v5823 = vadd.f32 %v5083, %v5822
    %v5824 = vpop.f32.mrb[0].mxu0
    %v5825 = vadd.f32 %v5087, %v5824
    %5826 = vmatprep.mubr.f32.mxu0 0.0
    %5827 = vmatmul.mubr.f32.gmra.mrb[0].mxu0 %v4902
    %v5828 = vpop.f32.mrb[0].mxu0
    %v5829 = vadd.f32 %v5083, %v5828
    %v5830 = vpop.f32.mrb[0].mxu0
    %v5831 = vadd.f32 %v5087, %v5830
    %5832 = vmatprep.mubr.f32.mxu0 0.0
    %5833 = vmatmul.mubr.f32.gmra.mrb[0].mxu0 %v4903
    %v5834 = vpop.f32.mrb[0].mxu0
    %v5835 = vadd.f32 %v5083, %v5834
    %v5836 = vpop.f32.mrb[0].mxu0
    %v5837 = vadd.f32 %v5087, %v5836
    %5838 = vmatprep.mubr.f32.mxu0 0.0
    %5839 = vmatmul.mubr.f32.gmra.mrb[0].mxu0 %v4904
    %v5840 = vpop.f32.mrb[0].mxu0
    %v5841 = vadd.f32 %v5083, %v5840
    %v5842 = vpop.f32.mrb[0].mxu0
    %v5843 = vadd.f32 %v5087, %v5842
    %5844 = vmatprep.mubr.f32.mxu0 0.0
    %5845 = vmatmul.mubr.f32.gmra.mrb[0].mxu0 %v4905
    %v5846 = vpop.f32.mrb[0].mxu0
    %v5847 = vadd.f32 %v5083, %v5846
    %v5848 = vpop.f32.mrb[0].mxu0
    %v5849 = vadd.f32 %v5087, %v5848
    %5850 = vmatprep.mubr.f32.mxu0 0.0
    %5851 = vmatmul.mubr.f32.gmra.mrb[0].mxu0 %v4906
    %v5852 = vpop.f32.mrb[0].mxu0
    %v5853 = vadd.f32 %v5083, %v5852
    %v5854 = vpop.f32.mrb[0].mxu0
    %v5855 = vadd.f32 %v5087, %v5854
    %5856 = vmatprep.mubr.f32.mxu0 0.0
    %5857 = vmatmul.mubr.f32.gmra.mrb[0].mxu0 %v4907
    %v5858 = vpop.f32.mrb[0].mxu0
    %v5859 = vadd.f32 %v5083, %v5858
    %v5860 = vpop.f32.mrb[0].mxu0
    %v5861 = vadd.f32 %v5087, %v5860
    %5862 = vmatprep.mubr.f32.mxu0 0.0
    %5863 = vmatmul.mubr.f32.gmra.mrb[0].mxu0 %v4908
    %v5864 = vpop.f32.mrb[0].mxu0
    %v5865 = vadd.f32 %v5083, %v5864
    %v5866 = vpop.f32.mrb[0].mxu0
    %v5867 = vadd.f32 %v5087, %v5866
    %5868 = vmatprep.mubr.f32.mxu0 0.0
    %5869 = vmatmul.mubr.f32.gmra.mrb[0].mxu0 %v4909
    %v5870 = vpop.f32.mrb[0].mxu0
    %v5871 = vadd.f32 %v5083, %v5870
    %v5872 = vpop.f32.mrb[0].mxu0
    %v5873 = vadd.f32 %v5087, %v5872
    %5874 = vmatprep.mubr.f32.mxu0 0.0
    %5875 = vmatmul.mubr.f32.gmra.mrb[0].mxu0 %v4910
    %v5876 = vpop.f32.mrb[0].mxu0
    %v5877 = vadd.f32 %v5083, %v5876
    %v5878 = vpop.f32.mrb[0].mxu0
    %v5879 = vadd.f32 %v5087, %v5878
    %5880 = vmatprep.mubr.f32.mxu0 0.0
    %5881 = vmatmul.mubr.f32.gmra.mrb[0].mxu0 %v4911
    %v5882 = vpop.f32.mrb[0].mxu0
    %v5883 = vadd.f32 %v5083, %v5882
    %v5884 = vpop.f32.mrb[0].mxu0
    %v5885 = vadd.f32 %v5087, %v5884
    %5886 = vmatprep.mubr.f32.mxu0 0.0
    %5887 = vmatmul.mubr.f32.gmra.mrb[0].mxu0 %v4912
    %v5888 = vpop.f32.mrb[0].mxu0
    %v5889 = vadd.f32 %v5083, %v5888
    %v5890 = vpop.f32.mrb[0].mxu0
    %v5891 = vadd.f32 %v5087, %v5890
    %5892 = vmatprep.mubr.f32.mxu0 0.0
    %5893 = vmatmul.mubr.f32.gmra.mrb[0].mxu0 %v4913
    %v5894 = vpop.f32.mrb[0].mxu0
    %v5895 = vadd.f32 %v5083, %v5894
    %v5896 = vpop.f32.mrb[0].mxu0
    %v5897 = vadd.f32 %v5087, %v5896
    %5898 = vmatprep.mubr.f32.mxu0 0.0
    %5899 = vmatmul.mubr.f32.gmra.mrb[0].mxu0 %v4914
    %v5900 = vpop.f32.mrb[0].mxu0
    %v5901 = vadd.f32 %v5083, %v5900
    %v5902 = vpop.f32.mrb[0].mxu0
    %v5903 = vadd.f32 %v5087, %v5902
    %5904 = vmatprep.mubr.f32.mxu0 0.0
    %5905 = vmatmul.mubr.f32.gmra.mrb[0].mxu0 %v4915
    %v5906 = vpop.f32.mrb[0].mxu0
    %v5907 = vadd.f32 %v5083, %v5906
    %v5908 = vpop.f32.mrb[0].mxu0
    %v5909 = vadd.f32 %v5087, %v5908
    %5910 = vmatprep.mubr.f32.mxu0 0.0
    %5911 = vmatmul.mubr.f32.gmra.mrb[0].mxu0 %v4916
    %v5912 = vpop.f32.mrb[0].mxu0
    %v5913 = vadd.f32 %v5083, %v5912
    %v5914 = vpop.f32.mrb[0].mxu0
    %v5915 = vadd.f32 %v5087, %v5914
    %5916 = vmatprep.mubr.f32.mxu0 0.0
    %5917 = vmatmul.mubr.f32.gmra.mrb[0].mxu0 %v4917
    %v5918 = vpop.f32.mrb[0].mxu0
    %v5919 = vadd.f32 %v5083, %v5918
    %v5920 = vpop.f32.mrb[0].mxu0
    %v5921 = vadd.f32 %v5087, %v5920
    %5922 = vmatprep.mubr.f32.mxu0 0.0
    %5923 = vmatmul.mubr.f32.gmra.mrb[0].mxu0 %v4918
    %v5924 = vpop.f32.mrb[0].mxu0
    %v5925 = vadd.f32 %v5083, %v5924
    %v5926 = vpop.f32.mrb[0].mxu0
    %v5927 = vadd.f32 %v5087, %v5926
    %5928 = vmatprep.mubr.f32.mxu0 0.0
    %5929 = vmatmul.mubr.f32.gmra.mrb[0].mxu0 %v4919
    %v5930 = vpop.f32.mrb[0].mxu0
    %v5931 = vadd.f32 %v5083, %v5930
    %v5932 = vpop.f32.mrb[0].mxu0
    %v5933 = vadd.f32 %v5087, %v5932
    %5934 = vmatprep.mubr.f32.mxu0 0.0
    %5935 = vmatmul.mubr.f32.gmra.mrb[0].mxu0 %v4920
    %v5936 = vpop.f32.mrb[0].mxu0
    %v5937 = vadd.f32 %v5083, %v5936
    %v5938 = vpop.f32.mrb[0].mxu0
    %v5939 = vadd.f32 %v5087, %v5938
    %5940 = vmatprep.mubr.f32.mxu0 0.0
    %5941 = vmatmul.mubr.f32.gmra.mrb[0].mxu0 %v4921
    %v5942 = vpop.f32.mrb[0].mxu0
    %v5943 = vadd.f32 %v5083, %v5942
    %v5944 = vpop.f32.mrb[0].mxu0
    %v5945 = vadd.f32 %v5087, %v5944
    %5946 = vmatprep.mubr.f32.mxu0 0.0
    %5947 = vmatmul.mubr.f32.gmra.mrb[0].mxu0 %v4922
    %v5948 = vpop.f32.mrb[0].mxu0
    %v5949 = vadd.f32 %v5083, %v5948
    %v5950 = vpop.f32.mrb[0].mxu0
    %v5951 = vadd.f32 %v5087, %v5950
    %5952 = vmatprep.mubr.f32.mxu0 0.0
    %5953 = vmatmul.mubr.f32.gmra.mrb[0].mxu0 %v4923
    %v5954 = vpop.f32.mrb[0].mxu0
    %v5955 = vadd.f32 %v5083, %v5954
    %v5956 = vpop.f32.mrb[0].mxu0
    %v5957 = vadd.f32 %v5087, %v5956
    %5958 = vmatprep.mubr.f32.mxu0 0.0
    %5959 = vmatmul.mubr.f32.gmra.mrb[0].mxu0 %v4924
    %v5960 = vpop.f32.mrb[0].mxu0
    %v5961 = vadd.f32 %v5083, %v5960
    %v5962 = vpop.f32.mrb[0].mxu0
    %v5963 = vadd.f32 %v5087, %v5962
    %5964 = vmatprep.mubr.f32.mxu0 0.0
    %5965 = vmatmul.mubr.f32.gmra.mrb[0].mxu0 %v4925
    %v5966 = vpop.f32.mrb[0].mxu0
    %v5967 = vadd.f32 %v5083, %v5966
    %v5968 = vpop.f32.mrb[0].mxu0
    %v5969 = vadd.f32 %v5087, %v5968
    %5970 = vmatprep.mubr.f32.mxu0 0.0
    %5971 = vmatmul.mubr.f32.gmra.mrb[0].mxu0 %v4926
    %v5972 = vpop.f32.mrb[0].mxu0
    %v5973 = vadd.f32 %v5083, %v5972
    %v5974 = vpop.f32.mrb[0].mxu0
    %v5975 = vadd.f32 %v5087, %v5974
    %5976 = vmatprep.mubr.f32.mxu0 0.0
    %5977 = vmatmul.mubr.f32.gmra.mrb[0].mxu0 %v4927
    %v5978 = vpop.f32.mrb[0].mxu0
    %v5979 = vadd.f32 %v5083, %v5978
    %v5980 = vpop.f32.mrb[0].mxu0
    %v5981 = vadd.f32 %v5087, %v5980
    %5982 = vmatprep.mubr.f32.mxu0 0.0
    %5983 = vmatmul.mubr.f32.gmra.mrb[0].mxu0 %v4928
    %v5984 = vpop.f32.mrb[0].mxu0
    %v5985 = vadd.f32 %v5083, %v5984
    %v5986 = vpop.f32.mrb[0].mxu0
    %v5987 = vadd.f32 %v5087, %v5986
    %5988 = vmatprep.mubr.f32.mxu0 0.0
    %5989 = vmatmul.mubr.f32.gmra.mrb[0].mxu0 %v4929
    %v5990 = vpop.f32.mrb[0].mxu0
    %v5991 = vadd.f32 %v5083, %v5990
    %v5992 = vpop.f32.mrb[0].mxu0
    %v5993 = vadd.f32 %v5087, %v5992
    %5994 = vmatprep.mubr.f32.mxu0 0.0
    %5995 = vmatmul.mubr.f32.gmra.mrb[0].mxu0 %v4930
    %v5996 = vpop.f32.mrb[0].mxu0
    %v5997 = vadd.f32 %v5083, %v5996
    %v5998 = vpop.f32.mrb[0].mxu0
    %v5999 = vadd.f32 %v5087, %v5998
    %6000 = vmatprep.mubr.f32.mxu0 0.0
    %6001 = vmatmul.mubr.f32.gmra.mrb[0].mxu0 %v4931
    %v6002 = vpop.f32.mrb[0].mxu0
    %v6003 = vadd.f32 %v5083, %v6002
    %v6004 = vpop.f32.mrb[0].mxu0
    %v6005 = vadd.f32 %v5087, %v6004
    %6006 = vmatprep.mubr.f32.mxu0 0.0
    %6007 = vmatmul.mubr.f32.gmra.mrb[0].mxu0 %v4932
    %v6008 = vpop.f32.mrb[0].mxu0
    %v6009 = vadd.f32 %v5083, %v6008
    %v6010 = vpop.f32.mrb[0].mxu0
    %v6011 = vadd.f32 %v5087, %v6010
    %6012 = vmatprep.mubr.f32.mxu0 0.0
    %6013 = vmatmul.mubr.f32.gmra.mrb[0].mxu0 %v4933
    %v6014 = vpop.f32.mrb[0].mxu0
    %v6015 = vadd.f32 %v5083, %v6014
    %v6016 = vpop.f32.mrb[0].mxu0
    %v6017 = vadd.f32 %v5087, %v6016
    %6018 = vmatprep.mubr.f32.mxu0 0.0
    %6019 = vmatmul.mubr.f32.gmra.mrb[0].mxu0 %v4934
    %v6020 = vpop.f32.mrb[0].mxu0
    %v6021 = vadd.f32 %v5083, %v6020
    %v6022 = vpop.f32.mrb[0].mxu0
    %v6023 = vadd.f32 %v5087, %v6022
    %6024 = vmatprep.mubr.f32.mxu0 0.0
    %6025 = vmatmul.mubr.f32.gmra.mrb[0].mxu0 %v4935
    %v6026 = vpop.f32.mrb[0].mxu0
    %v6027 = vadd.f32 %v5083, %v6026
    %v6028 = vpop.f32.mrb[0].mxu0
    %v6029 = vadd.f32 %v5087, %v6028
    %6030 = vmatprep.mubr.f32.mxu0 0.0
    %6031 = vmatmul.mubr.f32.gmra.mrb[0].mxu0 %v4936
    %v6032 = vpop.f32.mrb[0].mxu0
    %v6033 = vadd.f32 %v5083, %v6032
    %v6034 = vpop.f32.mrb[0].mxu0
    %v6035 = vadd.f32 %v5087, %v6034
    %6036 = vmatprep.mubr.f32.mxu0 0.0
    %6037 = vmatmul.mubr.f32.gmra.mrb[0].mxu0 %v4937
    %v6038 = vpop.f32.mrb[0].mxu0
    %v6039 = vadd.f32 %v5083, %v6038
    %v6040 = vpop.f32.mrb[0].mxu0
    %v6041 = vadd.f32 %v5087, %v6040
    %6042 = vmatprep.mubr.f32.mxu0 0.0
    %6043 = vmatmul.mubr.f32.gmra.mrb[0].mxu0 %v4938
    %v6044 = vpop.f32.mrb[0].mxu0
    %v6045 = vadd.f32 %v5083, %v6044
    %v6046 = vpop.f32.mrb[0].mxu0
    %v6047 = vadd.f32 %v5087, %v6046
    %6048 = vmatprep.mubr.f32.mxu0 0.0
    %6049 = vmatmul.mubr.f32.gmra.mrb[0].mxu0 %v4939
    %v6050 = vpop.f32.mrb[0].mxu0
    %v6051 = vadd.f32 %v5083, %v6050
    %v6052 = vpop.f32.mrb[0].mxu0
    %v6053 = vadd.f32 %v5087, %v6052
    %6054 = vmatprep.mubr.f32.mxu0 0.0
    %6055 = vmatmul.mubr.f32.gmra.mrb[0].mxu0 %v4940
    %v6056 = vpop.f32.mrb[0].mxu0
    %v6057 = vadd.f32 %v5083, %v6056
    %v6058 = vpop.f32.mrb[0].mxu0
    %v6059 = vadd.f32 %v5087, %v6058
    %6060 = vmatprep.mubr.f32.mxu0 0.0
    %6061 = vmatmul.mubr.f32.gmra.mrb[0].mxu0 %v4941
    %v6062 = vpop.f32.mrb[0].mxu0
    %v6063 = vadd.f32 %v5083, %v6062
    %v6064 = vpop.f32.mrb[0].mxu0
    %v6065 = vadd.f32 %v5087, %v6064
    %6066 = vmatprep.mubr.f32.mxu0 0.0
    %6067 = vmatmul.mubr.f32.gmra.mrb[0].mxu0 %v4942
    %v6068 = vpop.f32.mrb[0].mxu0
    %v6069 = vadd.f32 %v5083, %v6068
    %v6070 = vpop.f32.mrb[0].mxu0
    %v6071 = vadd.f32 %v5087, %v6070
    %6072 = vmatprep.mubr.f32.mxu0 0.0
    %6073 = vmatmul.mubr.f32.gmra.mrb[0].mxu0 %v4943
    %v6074 = vpop.f32.mrb[0].mxu0
    %v6075 = vadd.f32 %v5083, %v6074
    %v6076 = vpop.f32.mrb[0].mxu0
    %v6077 = vadd.f32 %v5087, %v6076
    %6078 = vmatprep.mubr.f32.mxu0 0.0
    %6079 = vmatmul.mubr.f32.gmra.mrb[0].mxu0 %v4944
    %v6080 = vpop.f32.mrb[0].mxu0
    %v6081 = vadd.f32 %v5083, %v6080
    %v6082 = vpop.f32.mrb[0].mxu0
    %v6083 = vadd.f32 %v5087, %v6082
    %6084 = vmatprep.mubr.f32.mxu0 0.0
    %6085 = vmatmul.mubr.f32.gmra.mrb[0].mxu0 %v4945
    %v6086 = vpop.f32.mrb[0].mxu0
    %v6087 = vadd.f32 %v5083, %v6086
    %v6088 = vpop.f32.mrb[0].mxu0
    %v6089 = vadd.f32 %v5087, %v6088
    %6090 = vmatprep.mubr.f32.mxu0 0.0
    %6091 = vmatmul.mubr.f32.gmra.mrb[0].mxu0 %v4946
    %v6092 = vpop.f32.mrb[0].mxu0
    %v6093 = vadd.f32 %v5083, %v6092
    %v6094 = vpop.f32.mrb[0].mxu0
    %v6095 = vadd.f32 %v5087, %v6094
    %6096 = vmatprep.mubr.f32.mxu0 0.0
    %6097 = vmatmul.mubr.f32.gmra.mrb[0].mxu0 %v4947
    %v6098 = vpop.f32.mrb[0].mxu0
    %v6099 = vadd.f32 %v5083, %v6098
    %v6100 = vpop.f32.mrb[0].mxu0
    %v6101 = vadd.f32 %v5087, %v6100
    %6102 = vmatprep.mubr.f32.mxu0 0.0
    %6103 = vmatmul.mubr.f32.gmra.mrb[0].mxu0 %v4948
    %v6104 = vpop.f32.mrb[0].mxu0
    %v6105 = vadd.f32 %v5083, %v6104
    %v6106 = vpop.f32.mrb[0].mxu0
    %v6107 = vadd.f32 %v5087, %v6106
    %6108 = vmatprep.mubr.f32.mxu0 0.0
    %6109 = vmatmul.mubr.f32.gmra.mrb[0].mxu0 %v4949
    %v6110 = vpop.f32.mrb[0].mxu0
    %v6111 = vadd.f32 %v5083, %v6110
    %v6112 = vpop.f32.mrb[0].mxu0
    %v6113 = vadd.f32 %v5087, %v6112
    %6114 = vmatprep.mubr.f32.mxu0 0.0
    %6115 = vmatmul.mubr.f32.gmra.mrb[0].mxu0 %v4950
    %v6116 = vpop.f32.mrb[0].mxu0
    %v6117 = vadd.f32 %v5083, %v6116
    %v6118 = vpop.f32.mrb[0].mxu0
    %v6119 = vadd.f32 %v5087, %v6118
    %6120 = vmatprep.mubr.f32.mxu0 0.0
    %6121 = vmatmul.mubr.f32.gmra.mrb[0].mxu0 %v4951
    %v6122 = vpop.f32.mrb[0].mxu0
    %v6123 = vadd.f32 %v5083, %v6122
    %v6124 = vpop.f32.mrb[0].mxu0
    %v6125 = vadd.f32 %v5087, %v6124
    %6126 = vmatprep.mubr.f32.mxu0 0.0
    %6127 = vmatmul.mubr.f32.gmra.mrb[0].mxu0 %v4952
    %v6128 = vpop.f32.mrb[0].mxu0
    %v6129 = vadd.f32 %v5083, %v6128
    %v6130 = vpop.f32.mrb[0].mxu0
    %v6131 = vadd.f32 %v5087, %v6130
    %6132 = vmatprep.mubr.f32.mxu0 0.0
    %6133 = vmatmul.mubr.f32.gmra.mrb[0].mxu0 %v4953
    %v6134 = vpop.f32.mrb[0].mxu0
    %v6135 = vadd.f32 %v5083, %v6134
    %v6136 = vpop.f32.mrb[0].mxu0
    %v6137 = vadd.f32 %v5087, %v6136
    %6138 = vmatprep.mubr.f32.mxu0 0.0
    %6139 = vmatmul.mubr.f32.gmra.mrb[0].mxu0 %v4954
    %v6140 = vpop.f32.mrb[0].mxu0
    %v6141 = vadd.f32 %v5083, %v6140
    %v6142 = vpop.f32.mrb[0].mxu0
    %v6143 = vadd.f32 %v5087, %v6142
    %6144 = vmatprep.mubr.f32.mxu0 0.0
    %6145 = vmatmul.mubr.f32.gmra.mrb[0].mxu0 %v4955
    %v6146 = vpop.f32.mrb[0].mxu0
    %v6147 = vadd.f32 %v5083, %v6146
    %v6148 = vpop.f32.mrb[0].mxu0
    %v6149 = vadd.f32 %v5087, %v6148
    %6150 = vmatprep.mubr.f32.mxu0 0.0
    %6151 = vmatmul.mubr.f32.gmra.mrb[0].mxu0 %v4956
    %v6152 = vpop.f32.mrb[0].mxu0
    %v6153 = vadd.f32 %v5083, %v6152
    %v6154 = vpop.f32.mrb[0].mxu0
    %v6155 = vadd.f32 %v5087, %v6154
    %6156 = vmatprep.mubr.f32.mxu0 0.0
    %6157 = vmatmul.mubr.f32.gmra.mrb[0].mxu0 %v4957
    %v6158 = vpop.f32.mrb[0].mxu0
    %v6159 = vadd.f32 %v5083, %v6158
    %v6160 = vpop.f32.mrb[0].mxu0
    %v6161 = vadd.f32 %v5087, %v6160
    %6162 = vmatprep.mubr.f32.mxu0 0.0
    %6163 = vmatmul.mubr.f32.gmra.mrb[0].mxu0 %v4958
    %v6164 = vpop.f32.mrb[0].mxu0
    %v6165 = vadd.f32 %v5083, %v6164
    %v6166 = vpop.f32.mrb[0].mxu0
    %v6167 = vadd.f32 %v5087, %v6166
    %6168 = vmatprep.mubr.f32.mxu0 0.0
    %6169 = vmatmul.mubr.f32.gmra.mrb[0].mxu0 %v4959
    %v6170 = vpop.f32.mrb[0].mxu0
    %v6171 = vadd.f32 %v5083, %v6170
    %v6172 = vpop.f32.mrb[0].mxu0
    %v6173 = vadd.f32 %v5087, %v6172
    %6174 = vmatprep.mubr.f32.mxu0 0.0
    %6175 = vmatmul.mubr.f32.gmra.mrb[0].mxu0 %v4960
    %v6176 = vpop.f32.mrb[0].mxu0
    %v6177 = vadd.f32 %v5083, %v6176
    %v6178 = vpop.f32.mrb[0].mxu0
    %v6179 = vadd.f32 %v5087, %v6178
    %6180 = vmatprep.mubr.f32.mxu0 0.0
    %6181 = vmatmul.mubr.f32.gmra.mrb[0].mxu0 %v4961
    %v6182 = vpop.f32.mrb[0].mxu0
    %v6183 = vadd.f32 %v5083, %v6182
    %v6184 = vpop.f32.mrb[0].mxu0
    %v6185 = vadd.f32 %v5087, %v6184
    %6186 = vmatprep.mubr.f32.mxu0 0.0
    %6187 = vmatmul.mubr.f32.gmra.mrb[0].mxu0 %v4962
    %v6188 = vpop.f32.mrb[0].mxu0
    %v6189 = vadd.f32 %v5083, %v6188
    %v6190 = vpop.f32.mrb[0].mxu0
    %v6191 = vadd.f32 %v5087, %v6190
    %6192 = vmatprep.mubr.f32.mxu0 0.0
    %6193 = vmatmul.mubr.f32.gmra.mrb[0].mxu0 %v4963
    %v6194 = vpop.f32.mrb[0].mxu0
    %v6195 = vadd.f32 %v5083, %v6194
    %v6196 = vpop.f32.mrb[0].mxu0
    %v6197 = vadd.f32 %v5087, %v6196
    %6198 = vmatprep.mubr.f32.mxu0 0.0
    %6199 = vmatmul.mubr.f32.gmra.mrb[0].mxu0 %v4964
    %v6200 = vpop.f32.mrb[0].mxu0
    %v6201 = vadd.f32 %v5083, %v6200
    %v6202 = vpop.f32.mrb[0].mxu0
    %v6203 = vadd.f32 %v5087, %v6202
    %6204 = vmatprep.mubr.f32.mxu0 0.0
    %6205 = vmatmul.mubr.f32.gmra.mrb[0].mxu0 %v4965
    %v6206 = vpop.f32.mrb[0].mxu0
    %v6207 = vadd.f32 %v5083, %v6206
    %v6208 = vpop.f32.mrb[0].mxu0
    %v6209 = vadd.f32 %v5087, %v6208
    %6210 = vmatprep.mubr.f32.mxu0 0.0
    %6211 = vmatmul.mubr.f32.gmra.mrb[0].mxu0 %v4966
    %v6212 = vpop.f32.mrb[0].mxu0
    %v6213 = vadd.f32 %v5083, %v6212
    %v6214 = vpop.f32.mrb[0].mxu0
    %v6215 = vadd.f32 %v5087, %v6214
    %6216 = vmatprep.mubr.f32.mxu0 0.0
    %6217 = vmatmul.mubr.f32.gmra.mrb[0].mxu0 %v4967
    %v6218 = vpop.f32.mrb[0].mxu0
    %v6219 = vadd.f32 %v5083, %v6218
    %v6220 = vpop.f32.mrb[0].mxu0
    %v6221 = vadd.f32 %v5087, %v6220
    %6222 = vmatprep.mubr.f32.mxu0 0.0
    %6223 = vmatmul.mubr.f32.gmra.mrb[0].mxu0 %v4968
    %v6224 = vpop.f32.mrb[0].mxu0
    %v6225 = vadd.f32 %v5083, %v6224
    %v6226 = vpop.f32.mrb[0].mxu0
    %v6227 = vadd.f32 %v5087, %v6226
    %6228 = vmatprep.mubr.f32.mxu0 0.0
    %6229 = vmatmul.mubr.f32.gmra.mrb[0].mxu0 %v4969
    %v6230 = vpop.f32.mrb[0].mxu0
    %v6231 = vadd.f32 %v5083, %v6230
    %v6232 = vpop.f32.mrb[0].mxu0
    %v6233 = vadd.f32 %v5087, %v6232
    %6234 = vmatprep.mubr.f32.mxu0 0.0
    %6235 = vmatmul.mubr.f32.gmra.mrb[0].mxu0 %v4970
    %v6236 = vpop.f32.mrb[0].mxu0
    %v6237 = vadd.f32 %v5083, %v6236
    %v6238 = vpop.f32.mrb[0].mxu0
    %v6239 = vadd.f32 %v5087, %v6238
    %6240 = vmatprep.mubr.f32.mxu0 0.0
    %6241 = vmatmul.mubr.f32.gmra.mrb[0].mxu0 %v4971
    %v6242 = vpop.f32.mrb[0].mxu0
    %v6243 = vadd.f32 %v5083, %v6242
    %v6244 = vpop.f32.mrb[0].mxu0
    %v6245 = vadd.f32 %v5087, %v6244
    %6246 = vmatprep.mubr.f32.mxu0 0.0
    %6247 = vmatmul.mubr.f32.gmra.mrb[0].mxu0 %v4972
    %v6248 = vpop.f32.mrb[0].mxu0
    %v6249 = vadd.f32 %v5083, %v6248
    %v6250 = vpop.f32.mrb[0].mxu0
    %v6251 = vadd.f32 %v5087, %v6250
    %6252 = vmatprep.mubr.f32.mxu0 0.0
    %6253 = vmatmul.mubr.f32.gmra.mrb[0].mxu0 %v4973
    %v6254 = vpop.f32.mrb[0].mxu0
    %v6255 = vadd.f32 %v5083, %v6254
    %v6256 = vpop.f32.mrb[0].mxu0
    %v6257 = vadd.f32 %v5087, %v6256
    %6258 = vmatprep.mubr.f32.mxu0 0.0
    %6259 = vmatmul.mubr.f32.gmra.mrb[0].mxu0 %v4974
    %v6260 = vpop.f32.mrb[0].mxu0
    %v6261 = vadd.f32 %v5083, %v6260
    %v6262 = vpop.f32.mrb[0].mxu0
    %v6263 = vadd.f32 %v5087, %v6262
    %6264 = vmatprep.mubr.f32.mxu0 0.0
    %6265 = vmatmul.mubr.f32.gmra.mrb[0].mxu0 %v4975
    %v6266 = vpop.f32.mrb[0].mxu0
    %v6267 = vadd.f32 %v5083, %v6266
    %v6268 = vpop.f32.mrb[0].mxu0
    %v6269 = vadd.f32 %v5087, %v6268
    %6270 = vmatprep.mubr.f32.mxu0 0.0
    %6271 = vmatmul.mubr.f32.gmra.mrb[0].mxu0 %v4976
    %v6272 = vpop.f32.mrb[0].mxu0
    %v6273 = vadd.f32 %v5083, %v6272
    %v6274 = vpop.f32.mrb[0].mxu0
    %v6275 = vadd.f32 %v5087, %v6274
    %6276 = vmatprep.mubr.f32.mxu0 0.0
    %6277 = vmatmul.mubr.f32.gmra.mrb[0].mxu0 %v4977
    %v6278 = vpop.f32.mrb[0].mxu0
    %v6279 = vadd.f32 %v5083, %v6278
    %v6280 = vpop.f32.mrb[0].mxu0
    %v6281 = vadd.f32 %v5087, %v6280
    %6282 = vmatprep.mubr.f32.mxu0 0.0
    %6283 = vmatmul.mubr.f32.gmra.mrb[0].mxu0 %v4978
    %v6284 = vpop.f32.mrb[0].mxu0
    %v6285 = vadd.f32 %v5083, %v6284
    %v6286 = vpop.f32.mrb[0].mxu0
    %v6287 = vadd.f32 %v5087, %v6286
    %6288 = vmatprep.mubr.f32.mxu0 0.0
    %6289 = vmatmul.mubr.f32.gmra.mrb[0].mxu0 %v4979
    %v6290 = vpop.f32.mrb[0].mxu0
    %v6291 = vadd.f32 %v5083, %v6290
    %v6292 = vpop.f32.mrb[0].mxu0
    %v6293 = vadd.f32 %v5087, %v6292
    %6294 = vmatprep.mubr.f32.mxu0 0.0
    %6295 = vmatmul.mubr.f32.gmra.mrb[0].mxu0 %v4980
    %v6296 = vpop.f32.mrb[0].mxu0
    %v6297 = vadd.f32 %v5083, %v6296
    %v6298 = vpop.f32.mrb[0].mxu0
    %v6299 = vadd.f32 %v5087, %v6298
    %6300 = vmatprep.mubr.f32.mxu0 0.0
    %6301 = vmatmul.mubr.f32.gmra.mrb[0].mxu0 %v4981
    %v6302 = vpop.f32.mrb[0].mxu0
    %v6303 = vadd.f32 %v5083, %v6302
    %v6304 = vpop.f32.mrb[0].mxu0
    %v6305 = vadd.f32 %v5087, %v6304
    %6306 = vmatprep.mubr.f32.mxu0 0.0
    %6307 = vmatmul.mubr.f32.gmra.mrb[0].mxu0 %v4982
    %v6308 = vpop.f32.mrb[0].mxu0
    %v6309 = vadd.f32 %v5083, %v6308
    %v6310 = vpop.f32.mrb[0].mxu0
    %v6311 = vadd.f32 %v5087, %v6310
    %6312 = vmatprep.mubr.f32.mxu0 0.0
    %6313 = vmatmul.mubr.f32.gmra.mrb[0].mxu0 %v4983
    %v6314 = vpop.f32.mrb[0].mxu0
    %v6315 = vadd.f32 %v5083, %v6314
    %v6316 = vpop.f32.mrb[0].mxu0
    %v6317 = vadd.f32 %v5087, %v6316
    %6318 = vmatprep.mubr.f32.mxu0 0.0
    %6319 = vmatmul.mubr.f32.gmra.mrb[0].mxu0 %v4984
    %v6320 = vpop.f32.mrb[0].mxu0
    %v6321 = vadd.f32 %v5083, %v6320
    %v6322 = vpop.f32.mrb[0].mxu0
    %v6323 = vadd.f32 %v5087, %v6322
    %6324 = vmatprep.mubr.f32.mxu0 0.0
    %6325 = vmatmul.mubr.f32.gmra.mrb[0].mxu0 %v4985
    %v6326 = vpop.f32.mrb[0].mxu0
    %v6327 = vadd.f32 %v5083, %v6326
    %v6328 = vpop.f32.mrb[0].mxu0
    %v6329 = vadd.f32 %v5087, %v6328
    %6330 = vmatprep.mubr.f32.mxu0 0.0
    %6331 = vmatmul.mubr.f32.gmra.mrb[0].mxu0 %v4986
    %v6332 = vpop.f32.mrb[0].mxu0
    %v6333 = vadd.f32 %v5083, %v6332
    %v6334 = vpop.f32.mrb[0].mxu0
    %v6335 = vadd.f32 %v5087, %v6334
    %6336 = vmatprep.mubr.f32.mxu0 0.0
    %6337 = vmatmul.mubr.f32.gmra.mrb[0].mxu0 %v4987
    %v6338 = vpop.f32.mrb[0].mxu0
    %v6339 = vadd.f32 %v5083, %v6338
    %v6340 = vpop.f32.mrb[0].mxu0
    %v6341 = vadd.f32 %v5087, %v6340
    %6342 = vmatprep.mubr.f32.mxu0 0.0
    %6343 = vmatmul.mubr.f32.gmra.mrb[0].mxu0 %v4988
    %v6344 = vpop.f32.mrb[0].mxu0
    %v6345 = vadd.f32 %v5083, %v6344
    %v6346 = vpop.f32.mrb[0].mxu0
    %v6347 = vadd.f32 %v5087, %v6346
    %6348 = vmatprep.mubr.f32.mxu0 0.0
    %6349 = vmatmul.mubr.f32.gmra.mrb[0].mxu0 %v4989
    %v6350 = vpop.f32.mrb[0].mxu0
    %v6351 = vadd.f32 %v5083, %v6350
    %v6352 = vpop.f32.mrb[0].mxu0
    %v6353 = vadd.f32 %v5087, %v6352
    %6354 = vmatprep.mubr.f32.mxu0 0.0
    %6355 = vmatmul.mubr.f32.gmra.mrb[0].mxu0 %v4990
    %v6356 = vpop.f32.mrb[0].mxu0
    %v6357 = vadd.f32 %v5083, %v6356
    %v6358 = vpop.f32.mrb[0].mxu0
    %v6359 = vadd.f32 %v5087, %v6358
    %6360 = vmatprep.mubr.f32.mxu0 0.0
    %6361 = vmatmul.mubr.f32.gmra.mrb[0].mxu0 %v4991
    %v6362 = vpop.f32.mrb[0].mxu0
    %v6363 = vadd.f32 %v5083, %v6362
    %v6364 = vpop.f32.mrb[0].mxu0
    %v6365 = vadd.f32 %v5087, %v6364
    %6366 = vmatprep.mubr.f32.mxu0 0.0
    %6367 = vmatmul.mubr.f32.gmra.mrb[0].mxu0 %v4992
    %v6368 = vpop.f32.mrb[0].mxu0
    %v6369 = vadd.f32 %v5083, %v6368
    %v6370 = vpop.f32.mrb[0].mxu0
    %v6371 = vadd.f32 %v5087, %v6370
    %6372 = vmatprep.mubr.f32.mxu0 0.0
    %6373 = vmatmul.mubr.f32.gmra.mrb[0].mxu0 %v4993
    %v6374 = vpop.f32.mrb[0].mxu0
    %v6375 = vadd.f32 %v5083, %v6374
    %v6376 = vpop.f32.mrb[0].mxu0
    %v6377 = vadd.f32 %v5087, %v6376
    %6378 = vmatprep.mubr.f32.mxu0 0.0
    %6379 = vmatmul.mubr.f32.gmra.mrb[0].mxu0 %v4994
    %v6380 = vpop.f32.mrb[0].mxu0
    %v6381 = vadd.f32 %v5083, %v6380
    %v6382 = vpop.f32.mrb[0].mxu0
    %v6383 = vadd.f32 %v5087, %v6382
    %6384 = vmatprep.mubr.f32.mxu0 0.0
    %6385 = vmatmul.mubr.f32.gmra.mrb[0].mxu0 %v4995
    %v6386 = vpop.f32.mrb[0].mxu0
    %v6387 = vadd.f32 %v5083, %v6386
    %v6388 = vpop.f32.mrb[0].mxu0
    %v6389 = vadd.f32 %v5087, %v6388
    %6390 = vmatprep.mubr.f32.mxu0 0.0
    %6391 = vmatmul.mubr.f32.gmra.mrb[0].mxu0 %v4996
    %v6392 = vpop.f32.mrb[0].mxu0
    %v6393 = vadd.f32 %v5083, %v6392
    %v6394 = vpop.f32.mrb[0].mxu0
    %v6395 = vadd.f32 %v5087, %v6394
    %6396 = vmatprep.mubr.f32.mxu0 0.0
    %6397 = vmatmul.mubr.f32.gmra.mrb[0].mxu0 %v4997
    %v6398 = vpop.f32.mrb[0].mxu0
    %v6399 = vadd.f32 %v5083, %v6398
    %v6400 = vpop.f32.mrb[0].mxu0
    %v6401 = vadd.f32 %v5087, %v6400
    %6402 = vmatprep.mubr.f32.mxu0 0.0
    %6403 = vmatmul.mubr.f32.gmra.mrb[0].mxu0 %v4998
    %v6404 = vpop.f32.mrb[0].mxu0
    %v6405 = vadd.f32 %v5083, %v6404
    %v6406 = vpop.f32.mrb[0].mxu0
    %v6407 = vadd.f32 %v5087, %v6406
    %6408 = vmatprep.mubr.f32.mxu0 0.0
    %6409 = vmatmul.mubr.f32.gmra.mrb[0].mxu0 %v4999
    %v6410 = vpop.f32.mrb[0].mxu0
    %v6411 = vadd.f32 %v5083, %v6410
    %v6412 = vpop.f32.mrb[0].mxu0
    %v6413 = vadd.f32 %v5087, %v6412
    %6414 = vmatprep.mubr.f32.mxu0 0.0
    %6415 = vmatmul.mubr.f32.gmra.mrb[0].mxu0 %v5000
    %v6416 = vpop.f32.mrb[0].mxu0
    %v6417 = vadd.f32 %v5083, %v6416
    %v6418 = vpop.f32.mrb[0].mxu0
    %v6419 = vadd.f32 %v5087, %v6418
    %6420 = vmatprep.mubr.f32.mxu0 0.0
    %6421 = vmatmul.mubr.f32.gmra.mrb[0].mxu0 %v5001
    %v6422 = vpop.f32.mrb[0].mxu0
    %v6423 = vadd.f32 %v5083, %v6422
    %v6424 = vpop.f32.mrb[0].mxu0
    %v6425 = vadd.f32 %v5087, %v6424
    %6426 = vmatprep.mubr.f32.mxu0 0.0
    %6427 = vmatmul.mubr.f32.gmra.mrb[0].mxu0 %v5002
    %v6428 = vpop.f32.mrb[0].mxu0
    %v6429 = vadd.f32 %v5083, %v6428
    %v6430 = vpop.f32.mrb[0].mxu0
    %v6431 = vadd.f32 %v5087, %v6430
    %6432 = vmatprep.mubr.f32.mxu0 0.0
    %6433 = vmatmul.mubr.f32.gmra.mrb[0].mxu0 %v5003
    %v6434 = vpop.f32.mrb[0].mxu0
    %v6435 = vadd.f32 %v5083, %v6434
    %v6436 = vpop.f32.mrb[0].mxu0
    %v6437 = vadd.f32 %v5087, %v6436
    %6438 = vmatprep.mubr.f32.mxu0 0.0
    %6439 = vmatmul.mubr.f32.gmra.mrb[0].mxu0 %v5004
    %v6440 = vpop.f32.mrb[0].mxu0
    %v6441 = vadd.f32 %v5083, %v6440
    %v6442 = vpop.f32.mrb[0].mxu0
    %v6443 = vadd.f32 %v5087, %v6442
    %6444 = vmatprep.mubr.f32.mxu0 0.0
    %6445 = vmatmul.mubr.f32.gmra.mrb[0].mxu0 %v5005
    %v6446 = vpop.f32.mrb[0].mxu0
    %v6447 = vadd.f32 %v5083, %v6446
    %v6448 = vpop.f32.mrb[0].mxu0
    %v6449 = vadd.f32 %v5087, %v6448
    %6450 = vmatprep.mubr.f32.mxu0 0.0
    %6451 = vmatmul.mubr.f32.gmra.mrb[0].mxu0 %v5006
    %v6452 = vpop.f32.mrb[0].mxu0
    %v6453 = vadd.f32 %v5083, %v6452
    %v6454 = vpop.f32.mrb[0].mxu0
    %v6455 = vadd.f32 %v5087, %v6454
    %6456 = vmatprep.mubr.f32.mxu0 0.0
    %6457 = vmatmul.mubr.f32.gmra.mrb[0].mxu0 %v5007
    %v6458 = vpop.f32.mrb[0].mxu0
    %v6459 = vadd.f32 %v5083, %v6458
    %v6460 = vpop.f32.mrb[0].mxu0
    %v6461 = vadd.f32 %v5087, %v6460
    %6462 = vmatprep.mubr.f32.mxu0 0.0
    %6463 = vmatmul.mubr.f32.gmra.mrb[0].mxu0 %v5008
    %v6464 = vpop.f32.mrb[0].mxu0
    %v6465 = vadd.f32 %v5083, %v6464
    %v6466 = vpop.f32.mrb[0].mxu0
    %v6467 = vadd.f32 %v5087, %v6466
    %6468 = vmatprep.mubr.f32.mxu0 0.0
    %6469 = vmatmul.mubr.f32.gmra.mrb[0].mxu0 %v5009
    %v6470 = vpop.f32.mrb[0].mxu0
    %v6471 = vadd.f32 %v5083, %v6470
    %v6472 = vpop.f32.mrb[0].mxu0
    %v6473 = vadd.f32 %v5087, %v6472
    %6474 = vmatprep.mubr.f32.mxu0 0.0
    %6475 = vmatmul.mubr.f32.gmra.mrb[0].mxu0 %v5010
    %v6476 = vpop.f32.mrb[0].mxu0
    %v6477 = vadd.f32 %v5083, %v6476
    %v6478 = vpop.f32.mrb[0].mxu0
    %v6479 = vadd.f32 %v5087, %v6478
    %6480 = vmatprep.mubr.f32.mxu0 0.0
    %6481 = vmatmul.mubr.f32.gmra.mrb[0].mxu0 %v5011
    %v6482 = vpop.f32.mrb[0].mxu0
    %v6483 = vadd.f32 %v5083, %v6482
    %v6484 = vpop.f32.mrb[0].mxu0
    %v6485 = vadd.f32 %v5087, %v6484
    %6486 = vmatprep.mubr.f32.mxu0 0.0
    %6487 = vmatmul.mubr.f32.gmra.mrb[0].mxu0 %v5012
    %v6488 = vpop.f32.mrb[0].mxu0
    %v6489 = vadd.f32 %v5083, %v6488
    %v6490 = vpop.f32.mrb[0].mxu0
    %v6491 = vadd.f32 %v5087, %v6490
    %6492 = vmatprep.mubr.f32.mxu0 0.0
    %6493 = vmatmul.mubr.f32.gmra.mrb[0].mxu0 %v5013
    %v6494 = vpop.f32.mrb[0].mxu0
    %v6495 = vadd.f32 %v5083, %v6494
    %v6496 = vpop.f32.mrb[0].mxu0
    %v6497 = vadd.f32 %v5087, %v6496
    %6498 = vmatprep.mubr.f32.mxu0 0.0
    %6499 = vmatmul.mubr.f32.gmra.mrb[0].mxu0 %v5014
    %v6500 = vpop.f32.mrb[0].mxu0
    %v6501 = vadd.f32 %v5083, %v6500
    %v6502 = vpop.f32.mrb[0].mxu0
    %v6503 = vadd.f32 %v5087, %v6502
    %6504 = vmatprep.mubr.f32.mxu0 0.0
    %6505 = vmatmul.mubr.f32.gmra.mrb[0].mxu0 %v5015
    %v6506 = vpop.f32.mrb[0].mxu0
    %v6507 = vadd.f32 %v5083, %v6506
    %v6508 = vpop.f32.mrb[0].mxu0
    %v6509 = vadd.f32 %v5087, %v6508
    %6510 = vmatprep.mubr.f32.mxu0 0.0
    %6511 = vmatmul.mubr.f32.gmra.mrb[0].mxu0 %v5016
    %v6512 = vpop.f32.mrb[0].mxu0
    %v6513 = vadd.f32 %v5083, %v6512
    %v6514 = vpop.f32.mrb[0].mxu0
    %v6515 = vadd.f32 %v5087, %v6514
    %6516 = vmatprep.mubr.f32.mxu0 0.0
    %6517 = vmatmul.mubr.f32.gmra.mrb[0].mxu0 %v5017
    %v6518 = vpop.f32.mrb[0].mxu0
    %v6519 = vadd.f32 %v5083, %v6518
    %v6520 = vpop.f32.mrb[0].mxu0
    %v6521 = vadd.f32 %v5087, %v6520
    %6522 = vmatprep.mubr.f32.mxu0 0.0
    %6523 = vmatmul.mubr.f32.gmra.mrb[0].mxu0 %v5018
    %v6524 = vpop.f32.mrb[0].mxu0
    %v6525 = vadd.f32 %v5083, %v6524
    %v6526 = vpop.f32.mrb[0].mxu0
    %v6527 = vadd.f32 %v5087, %v6526
    %6528 = vmatprep.mubr.f32.mxu0 0.0
    %6529 = vmatmul.mubr.f32.gmra.mrb[0].mxu0 %v5019
    %v6530 = vpop.f32.mrb[0].mxu0
    %v6531 = vadd.f32 %v5083, %v6530
    %v6532 = vpop.f32.mrb[0].mxu0
    %v6533 = vadd.f32 %v5087, %v6532
    %6534 = vmatprep.mubr.f32.mxu0 0.0
    %6535 = vmatmul.mubr.f32.gmra.mrb[0].mxu0 %v5020
    %v6536 = vpop.f32.mrb[0].mxu0
    %v6537 = vadd.f32 %v5083, %v6536
    %v6538 = vpop.f32.mrb[0].mxu0
    %v6539 = vadd.f32 %v5087, %v6538
    %6540 = vmatprep.mubr.f32.mxu0 0.0
    %6541 = vmatmul.mubr.f32.gmra.mrb[0].mxu0 %v5021
    %v6542 = vpop.f32.mrb[0].mxu0
    %v6543 = vadd.f32 %v5083, %v6542
    %v6544 = vpop.f32.mrb[0].mxu0
    %v6545 = vadd.f32 %v5087, %v6544
    %6546 = vmatprep.mubr.f32.mxu0 0.0
    %6547 = vmatmul.mubr.f32.gmra.mrb[0].mxu0 %v5022
    %v6548 = vpop.f32.mrb[0].mxu0
    %v6549 = vadd.f32 %v5083, %v6548
    %v6550 = vpop.f32.mrb[0].mxu0
    %v6551 = vadd.f32 %v5087, %v6550
    %6552 = vmatprep.mubr.f32.mxu0 0.0
    %6553 = vmatmul.mubr.f32.gmra.mrb[0].mxu0 %v5023
    %v6554 = vpop.f32.mrb[0].mxu0
    %v6555 = vadd.f32 %v5083, %v6554
    %v6556 = vpop.f32.mrb[0].mxu0
    %v6557 = vadd.f32 %v5087, %v6556
    %6558 = vmatprep.mubr.f32.mxu0 0.0
    %6559 = vmatmul.mubr.f32.gmra.mrb[0].mxu0 %v5024
    %v6560 = vpop.f32.mrb[0].mxu0
    %v6561 = vadd.f32 %v5083, %v6560
    %v6562 = vpop.f32.mrb[0].mxu0
    %v6563 = vadd.f32 %v5087, %v6562
    %6564 = vmatprep.mubr.f32.mxu0 0.0
    %6565 = vmatmul.mubr.f32.gmra.mrb[0].mxu0 %v5025
    %v6566 = vpop.f32.mrb[0].mxu0
    %v6567 = vadd.f32 %v5083, %v6566
    %v6568 = vpop.f32.mrb[0].mxu0
    %v6569 = vadd.f32 %v5087, %v6568
    %6570 = vmatprep.mubr.f32.mxu0 0.0
    %6571 = vmatmul.mubr.f32.gmra.mrb[0].mxu0 %v5026
    %v6572 = vpop.f32.mrb[0].mxu0
    %v6573 = vadd.f32 %v5083, %v6572
    %v6574 = vpop.f32.mrb[0].mxu0
    %v6575 = vadd.f32 %v5087, %v6574
    %6576 = vmatprep.mubr.f32.mxu0 0.0
    %6577 = vmatmul.mubr.f32.gmra.mrb[0].mxu0 %v5027
    %v6578 = vpop.f32.mrb[0].mxu0
    %v6579 = vadd.f32 %v5083, %v6578
    %v6580 = vpop.f32.mrb[0].mxu0
    %v6581 = vadd.f32 %v5087, %v6580
    %6582 = vmatprep.mubr.f32.mxu0 0.0
    %6583 = vmatmul.mubr.f32.gmra.mrb[0].mxu0 %v5028
    %v6584 = vpop.f32.mrb[0].mxu0
    %v6585 = vadd.f32 %v5083, %v6584
    %v6586 = vpop.f32.mrb[0].mxu0
    %v6587 = vadd.f32 %v5087, %v6586
    %6588 = vmatprep.mubr.f32.mxu0 0.0
    %6589 = vmatmul.mubr.f32.gmra.mrb[0].mxu0 %v5029
    %v6590 = vpop.f32.mrb[0].mxu0
    %v6591 = vadd.f32 %v5083, %v6590
    %v6592 = vpop.f32.mrb[0].mxu0
    %v6593 = vadd.f32 %v5087, %v6592
    %6594 = vmatprep.mubr.f32.mxu0 0.0
    %6595 = vmatmul.mubr.f32.gmra.mrb[0].mxu0 %v5030
    %v6596 = vpop.f32.mrb[0].mxu0
    %v6597 = vadd.f32 %v5083, %v6596
    %v6598 = vpop.f32.mrb[0].mxu0
    %v6599 = vadd.f32 %v5087, %v6598
    %6600 = vmatprep.mubr.f32.mxu0 0.0
    %6601 = vmatmul.mubr.f32.gmra.mrb[0].mxu0 %v5031
    %v6602 = vpop.f32.mrb[0].mxu0
    %v6603 = vadd.f32 %v5083, %v6602
    %v6604 = vpop.f32.mrb[0].mxu0
    %v6605 = vadd.f32 %v5087, %v6604
    %6606 = vmatprep.mubr.f32.mxu0 0.0
    %6607 = vmatmul.mubr.f32.gmra.mrb[0].mxu0 %v5032
    %v6608 = vpop.f32.mrb[0].mxu0
    %v6609 = vadd.f32 %v5083, %v6608
    %v6610 = vpop.f32.mrb[0].mxu0
    %v6611 = vadd.f32 %v5087, %v6610
    %6612 = vmatprep.mubr.f32.mxu0 0.0
    %6613 = vmatmul.mubr.f32.gmra.mrb[0].mxu0 %v5033
    %v6614 = vpop.f32.mrb[0].mxu0
    %v6615 = vadd.f32 %v5083, %v6614
    %v6616 = vpop.f32.mrb[0].mxu0
    %v6617 = vadd.f32 %v5087, %v6616
    %6618 = vmatprep.mubr.f32.mxu0 0.0
    %6619 = vmatmul.mubr.f32.gmra.mrb[0].mxu0 %v5034
    %v6620 = vpop.f32.mrb[0].mxu0
    %v6621 = vadd.f32 %v5083, %v6620
    %v6622 = vpop.f32.mrb[0].mxu0
    %v6623 = vadd.f32 %v5087, %v6622
    %6624 = vmatprep.mubr.f32.mxu0 0.0
    %6625 = vmatmul.mubr.f32.gmra.mrb[0].mxu0 %v5035
    %v6626 = vpop.f32.mrb[0].mxu0
    %v6627 = vadd.f32 %v5083, %v6626
    %v6628 = vpop.f32.mrb[0].mxu0
    %v6629 = vadd.f32 %v5087, %v6628
    %6630 = vmatprep.mubr.f32.mxu0 0.0
    %6631 = vmatmul.mubr.f32.gmra.mrb[0].mxu0 %v5036
    %v6632 = vpop.f32.mrb[0].mxu0
    %v6633 = vadd.f32 %v5083, %v6632
    %v6634 = vpop.f32.mrb[0].mxu0
    %v6635 = vadd.f32 %v5087, %v6634
    %6636 = vmatprep.mubr.f32.mxu0 0.0
    %6637 = vmatmul.mubr.f32.gmra.mrb[0].mxu0 %v5037
    %v6638 = vpop.f32.mrb[0].mxu0
    %v6639 = vadd.f32 %v5083, %v6638
    %v6640 = vpop.f32.mrb[0].mxu0
    %v6641 = vadd.f32 %v5087, %v6640
    %6642 = vmatprep.mubr.f32.mxu0 0.0
    %6643 = vmatmul.mubr.f32.gmra.mrb[0].mxu0 %v5038
    %v6644 = vpop.f32.mrb[0].mxu0
    %v6645 = vadd.f32 %v5083, %v6644
    %v6646 = vpop.f32.mrb[0].mxu0
    %v6647 = vadd.f32 %v5087, %v6646
    %6648 = vmatprep.mubr.f32.mxu0 0.0
    %6649 = vmatmul.mubr.f32.gmra.mrb[0].mxu0 %v5039
    %v6650 = vpop.f32.mrb[0].mxu0
    %v6651 = vadd.f32 %v5083, %v6650
    %v6652 = vpop.f32.mrb[0].mxu0
    %v6653 = vadd.f32 %v5087, %v6652
    %6654 = vmatprep.mubr.f32.mxu0 0.0
    %6655 = vmatmul.mubr.f32.gmra.mrb[0].mxu0 %v5040
    %v6656 = vpop.f32.mrb[0].mxu0
    %v6657 = vadd.f32 %v5083, %v6656
    %v6658 = vpop.f32.mrb[0].mxu0
    %v6659 = vadd.f32 %v5087, %v6658
    %6660 = vmatprep.mubr.f32.mxu0 0.0
    %6661 = vmatmul.mubr.f32.gmra.mrb[0].mxu0 %v5041
    %v6662 = vpop.f32.mrb[0].mxu0
    %v6663 = vadd.f32 %v5083, %v6662
    %v6664 = vpop.f32.mrb[0].mxu0
    %v6665 = vadd.f32 %v5087, %v6664
    %6666 = vmatprep.mubr.f32.mxu0 0.0
    %6667 = vmatmul.mubr.f32.gmra.mrb[0].mxu0 %v5042
    %v6668 = vpop.f32.mrb[0].mxu0
    %v6669 = vadd.f32 %v5083, %v6668
    %v6670 = vpop.f32.mrb[0].mxu0
    %v6671 = vadd.f32 %v5087, %v6670
    %6672 = vmatprep.mubr.f32.mxu0 0.0
    %6673 = vmatmul.mubr.f32.gmra.mrb[0].mxu0 %v5043
    %v6674 = vpop.f32.mrb[0].mxu0
    %v6675 = vadd.f32 %v5083, %v6674
    %v6676 = vpop.f32.mrb[0].mxu0
    %v6677 = vadd.f32 %v5087, %v6676
    %6678 = vmatprep.mubr.f32.mxu0 0.0
    %6679 = vmatmul.mubr.f32.gmra.mrb[0].mxu0 %v5044
    %v6680 = vpop.f32.mrb[0].mxu0
    %v6681 = vadd.f32 %v5083, %v6680
    %v6682 = vpop.f32.mrb[0].mxu0
    %v6683 = vadd.f32 %v5087, %v6682
    %6684 = vmatprep.mubr.f32.mxu0 0.0
    %6685 = vmatmul.mubr.f32.gmra.mrb[0].mxu0 %v5045
    %v6686 = vpop.f32.mrb[0].mxu0
    %v6687 = vadd.f32 %v5083, %v6686
    %v6688 = vpop.f32.mrb[0].mxu0
    %v6689 = vadd.f32 %v5087, %v6688
    %6690 = vdwg.mxu0
    %v6691 = vmax.f32 %v5157, 0.0
    %v6692 = vmax.f32 %v5159, 0.0
    %v6693 = vmax.f32 %v5163, 0.0
    %v6694 = vmax.f32 %v5165, 0.0
    %v6695 = vmax.f32 %v5169, 0.0
    %v6696 = vmax.f32 %v5171, 0.0
    %v6697 = vmax.f32 %v5175, 0.0
    %v6698 = vmax.f32 %v5177, 0.0
    %v6699 = vmax.f32 %v5181, 0.0
    %v6700 = vmax.f32 %v5183, 0.0
    %v6701 = vmax.f32 %v5187, 0.0
    %v6702 = vmax.f32 %v5189, 0.0
    %v6703 = vmax.f32 %v5193, 0.0
    %v6704 = vmax.f32 %v5195, 0.0
    %v6705 = vmax.f32 %v5199, 0.0
    %v6706 = vmax.f32 %v5201, 0.0
    %v6707 = vmax.f32 %v5205, 0.0
    %v6708 = vmax.f32 %v5207, 0.0
    %v6709 = vmax.f32 %v5211, 0.0
    %v6710 = vmax.f32 %v5213, 0.0
    %v6711 = vmax.f32 %v5217, 0.0
    %v6712 = vmax.f32 %v5219, 0.0
    %v6713 = vmax.f32 %v5223, 0.0
    %v6714 = vmax.f32 %v5225, 0.0
    %v6715 = vmax.f32 %v5229, 0.0
    %v6716 = vmax.f32 %v5231, 0.0
    %v6717 = vmax.f32 %v5235, 0.0
    %v6718 = vmax.f32 %v5237, 0.0
    %v6719 = vmax.f32 %v5241, 0.0
    %v6720 = vmax.f32 %v5243, 0.0
    %v6721 = vmax.f32 %v5247, 0.0
    %v6722 = vmax.f32 %v5249, 0.0
    %v6723 = vmax.f32 %v5253, 0.0
    %v6724 = vmax.f32 %v5255, 0.0
    %v6725 = vmax.f32 %v5259, 0.0
    %v6726 = vmax.f32 %v5261, 0.0
    %v6727 = vmax.f32 %v5265, 0.0
    %v6728 = vmax.f32 %v5267, 0.0
    %v6729 = vmax.f32 %v5271, 0.0
    %v6730 = vmax.f32 %v5273, 0.0
    %v6731 = vmax.f32 %v5277, 0.0
    %v6732 = vmax.f32 %v5279, 0.0
    %v6733 = vmax.f32 %v5283, 0.0
    %v6734 = vmax.f32 %v5285, 0.0
    %v6735 = vmax.f32 %v5289, 0.0
    %v6736 = vmax.f32 %v5291, 0.0
    %v6737 = vmax.f32 %v5295, 0.0
    %v6738 = vmax.f32 %v5297, 0.0
    %v6739 = vmax.f32 %v5301, 0.0
    %v6740 = vmax.f32 %v5303, 0.0
    %v6741 = vmax.f32 %v5307, 0.0
    %v6742 = vmax.f32 %v5309, 0.0
    %v6743 = vmax.f32 %v5313, 0.0
    %v6744 = vmax.f32 %v5315, 0.0
    %v6745 = vmax.f32 %v5319, 0.0
    %v6746 = vmax.f32 %v5321, 0.0
    %v6747 = vmax.f32 %v5325, 0.0
    %v6748 = vmax.f32 %v5327, 0.0
    %v6749 = vmax.f32 %v5331, 0.0
    %v6750 = vmax.f32 %v5333, 0.0
    %v6751 = vmax.f32 %v5337, 0.0
    %v6752 = vmax.f32 %v5339, 0.0
    %v6753 = vmax.f32 %v5343, 0.0
    %v6754 = vmax.f32 %v5345, 0.0
    %v6755 = vmax.f32 %v5349, 0.0
    %v6756 = vmax.f32 %v5351, 0.0
    %v6757 = vmax.f32 %v5355, 0.0
    %v6758 = vmax.f32 %v5357, 0.0
    %v6759 = vmax.f32 %v5361, 0.0
    %v6760 = vmax.f32 %v5363, 0.0
    %v6761 = vmax.f32 %v5367, 0.0
    %v6762 = vmax.f32 %v5369, 0.0
    %v6763 = vmax.f32 %v5373, 0.0
    %v6764 = vmax.f32 %v5375, 0.0
    %v6765 = vmax.f32 %v5379, 0.0
    %v6766 = vmax.f32 %v5381, 0.0
    %v6767 = vmax.f32 %v5385, 0.0
    %v6768 = vmax.f32 %v5387, 0.0
    %v6769 = vmax.f32 %v5391, 0.0
    %v6770 = vmax.f32 %v5393, 0.0
    %v6771 = vmax.f32 %v5397, 0.0
    %v6772 = vmax.f32 %v5399, 0.0
    %v6773 = vmax.f32 %v5403, 0.0
    %v6774 = vmax.f32 %v5405, 0.0
    %v6775 = vmax.f32 %v5409, 0.0
    %v6776 = vmax.f32 %v5411, 0.0
    %v6777 = vmax.f32 %v5415, 0.0
    %v6778 = vmax.f32 %v5417, 0.0
    %v6779 = vmax.f32 %v5421, 0.0
    %v6780 = vmax.f32 %v5423, 0.0
    %v6781 = vmax.f32 %v5427, 0.0
    %v6782 = vmax.f32 %v5429, 0.0
    %v6783 = vmax.f32 %v5433, 0.0
    %v6784 = vmax.f32 %v5435, 0.0
    %v6785 = vmax.f32 %v5439, 0.0
    %v6786 = vmax.f32 %v5441, 0.0
    %v6787 = vmax.f32 %v5445, 0.0
    %v6788 = vmax.f32 %v5447, 0.0
    %v6789 = vmax.f32 %v5451, 0.0
    %v6790 = vmax.f32 %v5453, 0.0
    %v6791 = vmax.f32 %v5457, 0.0
    %v6792 = vmax.f32 %v5459, 0.0
    %v6793 = vmax.f32 %v5463, 0.0
    %v6794 = vmax.f32 %v5465, 0.0
    %v6795 = vmax.f32 %v5469, 0.0
    %v6796 = vmax.f32 %v5471, 0.0
    %v6797 = vmax.f32 %v5475, 0.0
    %v6798 = vmax.f32 %v5477, 0.0
    %v6799 = vmax.f32 %v5481, 0.0
    %v6800 = vmax.f32 %v5483, 0.0
    %v6801 = vmax.f32 %v5487, 0.0
    %v6802 = vmax.f32 %v5489, 0.0
    %v6803 = vmax.f32 %v5493, 0.0
    %v6804 = vmax.f32 %v5495, 0.0
    %v6805 = vmax.f32 %v5499, 0.0
    %v6806 = vmax.f32 %v5501, 0.0
    %v6807 = vmax.f32 %v5505, 0.0
    %v6808 = vmax.f32 %v5507, 0.0
    %v6809 = vmax.f32 %v5511, 0.0
    %v6810 = vmax.f32 %v5513, 0.0
    %v6811 = vmax.f32 %v5517, 0.0
    %v6812 = vmax.f32 %v5519, 0.0
    %v6813 = vmax.f32 %v5523, 0.0
    %v6814 = vmax.f32 %v5525, 0.0
    %v6815 = vmax.f32 %v5529, 0.0
    %v6816 = vmax.f32 %v5531, 0.0
    %v6817 = vmax.f32 %v5535, 0.0
    %v6818 = vmax.f32 %v5537, 0.0
    %v6819 = vmax.f32 %v5541, 0.0
    %v6820 = vmax.f32 %v5543, 0.0
    %v6821 = vmax.f32 %v5547, 0.0
    %v6822 = vmax.f32 %v5549, 0.0
    %v6823 = vmax.f32 %v5553, 0.0
    %v6824 = vmax.f32 %v5555, 0.0
    %v6825 = vmax.f32 %v5559, 0.0
    %v6826 = vmax.f32 %v5561, 0.0
    %v6827 = vmax.f32 %v5565, 0.0
    %v6828 = vmax.f32 %v5567, 0.0
    %v6829 = vmax.f32 %v5571, 0.0
    %v6830 = vmax.f32 %v5573, 0.0
    %v6831 = vmax.f32 %v5577, 0.0
    %v6832 = vmax.f32 %v5579, 0.0
    %v6833 = vmax.f32 %v5583, 0.0
    %v6834 = vmax.f32 %v5585, 0.0
    %v6835 = vmax.f32 %v5589, 0.0
    %v6836 = vmax.f32 %v5591, 0.0
    %v6837 = vmax.f32 %v5595, 0.0
    %v6838 = vmax.f32 %v5597, 0.0
    %v6839 = vmax.f32 %v5601, 0.0
    %v6840 = vmax.f32 %v5603, 0.0
    %v6841 = vmax.f32 %v5607, 0.0
    %v6842 = vmax.f32 %v5609, 0.0
    %v6843 = vmax.f32 %v5613, 0.0
    %v6844 = vmax.f32 %v5615, 0.0
    %v6845 = vmax.f32 %v5619, 0.0
    %v6846 = vmax.f32 %v5621, 0.0
    %v6847 = vmax.f32 %v5625, 0.0
    %v6848 = vmax.f32 %v5627, 0.0
    %v6849 = vmax.f32 %v5631, 0.0
    %v6850 = vmax.f32 %v5633, 0.0
    %v6851 = vmax.f32 %v5637, 0.0
    %v6852 = vmax.f32 %v5639, 0.0
    %v6853 = vmax.f32 %v5643, 0.0
    %v6854 = vmax.f32 %v5645, 0.0
    %v6855 = vmax.f32 %v5649, 0.0
    %v6856 = vmax.f32 %v5651, 0.0
    %v6857 = vmax.f32 %v5655, 0.0
    %v6858 = vmax.f32 %v5657, 0.0
    %v6859 = vmax.f32 %v5661, 0.0
    %v6860 = vmax.f32 %v5663, 0.0
    %v6861 = vmax.f32 %v5667, 0.0
    %v6862 = vmax.f32 %v5669, 0.0
    %v6863 = vmax.f32 %v5673, 0.0
    %v6864 = vmax.f32 %v5675, 0.0
    %v6865 = vmax.f32 %v5679, 0.0
    %v6866 = vmax.f32 %v5681, 0.0
    %v6867 = vmax.f32 %v5685, 0.0
    %v6868 = vmax.f32 %v5687, 0.0
    %v6869 = vmax.f32 %v5691, 0.0
    %v6870 = vmax.f32 %v5693, 0.0
    %v6871 = vmax.f32 %v5697, 0.0
    %v6872 = vmax.f32 %v5699, 0.0
    %v6873 = vmax.f32 %v5703, 0.0
    %v6874 = vmax.f32 %v5705, 0.0
    %v6875 = vmax.f32 %v5709, 0.0
    %v6876 = vmax.f32 %v5711, 0.0
    %v6877 = vmax.f32 %v5715, 0.0
    %v6878 = vmax.f32 %v5717, 0.0
    %v6879 = vmax.f32 %v5721, 0.0
    %v6880 = vmax.f32 %v5723, 0.0
    %v6881 = vmax.f32 %v5727, 0.0
    %v6882 = vmax.f32 %v5729, 0.0
    %v6883 = vmax.f32 %v5733, 0.0
    %v6884 = vmax.f32 %v5735, 0.0
    %v6885 = vmax.f32 %v5739, 0.0
    %v6886 = vmax.f32 %v5741, 0.0
    %v6887 = vmax.f32 %v5745, 0.0
    %v6888 = vmax.f32 %v5747, 0.0
    %v6889 = vmax.f32 %v5751, 0.0
    %v6890 = vmax.f32 %v5753, 0.0
    %v6891 = vmax.f32 %v5757, 0.0
    %v6892 = vmax.f32 %v5759, 0.0
    %v6893 = vmax.f32 %v5763, 0.0
    %v6894 = vmax.f32 %v5765, 0.0
    %v6895 = vmax.f32 %v5769, 0.0
    %v6896 = vmax.f32 %v5771, 0.0
    %v6897 = vmax.f32 %v5775, 0.0
    %v6898 = vmax.f32 %v5777, 0.0
    %v6899 = vmax.f32 %v5781, 0.0
    %v6900 = vmax.f32 %v5783, 0.0
    %v6901 = vmax.f32 %v5787, 0.0
    %v6902 = vmax.f32 %v5789, 0.0
    %v6903 = vmax.f32 %v5793, 0.0
    %v6904 = vmax.f32 %v5795, 0.0
    %v6905 = vmax.f32 %v5799, 0.0
    %v6906 = vmax.f32 %v5801, 0.0
    %v6907 = vmax.f32 %v5805, 0.0
    %v6908 = vmax.f32 %v5807, 0.0
    %v6909 = vmax.f32 %v5811, 0.0
    %v6910 = vmax.f32 %v5813, 0.0
    %v6911 = vmax.f32 %v5817, 0.0
    %v6912 = vmax.f32 %v5819, 0.0
    %v6913 = vmax.f32 %v5823, 0.0
    %v6914 = vmax.f32 %v5825, 0.0
    %v6915 = vmax.f32 %v5829, 0.0
    %v6916 = vmax.f32 %v5831, 0.0
    %v6917 = vmax.f32 %v5835, 0.0
    %v6918 = vmax.f32 %v5837, 0.0
    %v6919 = vmax.f32 %v5841, 0.0
    %v6920 = vmax.f32 %v5843, 0.0
    %v6921 = vmax.f32 %v5847, 0.0
    %v6922 = vmax.f32 %v5849, 0.0
    %v6923 = vmax.f32 %v5853, 0.0
    %v6924 = vmax.f32 %v5855, 0.0
    %v6925 = vmax.f32 %v5859, 0.0
    %v6926 = vmax.f32 %v5861, 0.0
    %v6927 = vmax.f32 %v5865, 0.0
    %v6928 = vmax.f32 %v5867, 0.0
    %v6929 = vmax.f32 %v5871, 0.0
    %v6930 = vmax.f32 %v5873, 0.0
    %v6931 = vmax.f32 %v5877, 0.0
    %v6932 = vmax.f32 %v5879, 0.0
    %v6933 = vmax.f32 %v5883, 0.0
    %v6934 = vmax.f32 %v5885, 0.0
    %v6935 = vmax.f32 %v5889, 0.0
    %v6936 = vmax.f32 %v5891, 0.0
    %v6937 = vmax.f32 %v5895, 0.0
    %v6938 = vmax.f32 %v5897, 0.0
    %v6939 = vmax.f32 %v5901, 0.0
    %v6940 = vmax.f32 %v5903, 0.0
    %v6941 = vmax.f32 %v5907, 0.0
    %v6942 = vmax.f32 %v5909, 0.0
    %v6943 = vmax.f32 %v5913, 0.0
    %v6944 = vmax.f32 %v5915, 0.0
    %v6945 = vmax.f32 %v5919, 0.0
    %v6946 = vmax.f32 %v5921, 0.0
    %v6947 = vmax.f32 %v5925, 0.0
    %v6948 = vmax.f32 %v5927, 0.0
    %v6949 = vmax.f32 %v5931, 0.0
    %v6950 = vmax.f32 %v5933, 0.0
    %v6951 = vmax.f32 %v5937, 0.0
    %v6952 = vmax.f32 %v5939, 0.0
    %v6953 = vmax.f32 %v5943, 0.0
    %v6954 = vmax.f32 %v5945, 0.0
    %v6955 = vmax.f32 %v5949, 0.0
    %v6956 = vmax.f32 %v5951, 0.0
    %v6957 = vmax.f32 %v5955, 0.0
    %v6958 = vmax.f32 %v5957, 0.0
    %v6959 = vmax.f32 %v5961, 0.0
    %v6960 = vmax.f32 %v5963, 0.0
    %v6961 = vmax.f32 %v5967, 0.0
    %v6962 = vmax.f32 %v5969, 0.0
    %v6963 = vmax.f32 %v5973, 0.0
    %v6964 = vmax.f32 %v5975, 0.0
    %v6965 = vmax.f32 %v5979, 0.0
    %v6966 = vmax.f32 %v5981, 0.0
    %v6967 = vmax.f32 %v5985, 0.0
    %v6968 = vmax.f32 %v5987, 0.0
    %v6969 = vmax.f32 %v5991, 0.0
    %v6970 = vmax.f32 %v5993, 0.0
    %v6971 = vmax.f32 %v5997, 0.0
    %v6972 = vmax.f32 %v5999, 0.0
    %v6973 = vmax.f32 %v6003, 0.0
    %v6974 = vmax.f32 %v6005, 0.0
    %v6975 = vmax.f32 %v6009, 0.0
    %v6976 = vmax.f32 %v6011, 0.0
    %v6977 = vmax.f32 %v6015, 0.0
    %v6978 = vmax.f32 %v6017, 0.0
    %v6979 = vmax.f32 %v6021, 0.0
    %v6980 = vmax.f32 %v6023, 0.0
    %v6981 = vmax.f32 %v6027, 0.0
    %v6982 = vmax.f32 %v6029, 0.0
    %v6983 = vmax.f32 %v6033, 0.0
    %v6984 = vmax.f32 %v6035, 0.0
    %v6985 = vmax.f32 %v6039, 0.0
    %v6986 = vmax.f32 %v6041, 0.0
    %v6987 = vmax.f32 %v6045, 0.0
    %v6988 = vmax.f32 %v6047, 0.0
    %v6989 = vmax.f32 %v6051, 0.0
    %v6990 = vmax.f32 %v6053, 0.0
    %v6991 = vmax.f32 %v6057, 0.0
    %v6992 = vmax.f32 %v6059, 0.0
    %v6993 = vmax.f32 %v6063, 0.0
    %v6994 = vmax.f32 %v6065, 0.0
    %v6995 = vmax.f32 %v6069, 0.0
    %v6996 = vmax.f32 %v6071, 0.0
    %v6997 = vmax.f32 %v6075, 0.0
    %v6998 = vmax.f32 %v6077, 0.0
    %v6999 = vmax.f32 %v6081, 0.0
    %v7000 = vmax.f32 %v6083, 0.0
    %v7001 = vmax.f32 %v6087, 0.0
    %v7002 = vmax.f32 %v6089, 0.0
    %v7003 = vmax.f32 %v6093, 0.0
    %v7004 = vmax.f32 %v6095, 0.0
    %v7005 = vmax.f32 %v6099, 0.0
    %v7006 = vmax.f32 %v6101, 0.0
    %v7007 = vmax.f32 %v6105, 0.0
    %v7008 = vmax.f32 %v6107, 0.0
    %v7009 = vmax.f32 %v6111, 0.0
    %v7010 = vmax.f32 %v6113, 0.0
    %v7011 = vmax.f32 %v6117, 0.0
    %v7012 = vmax.f32 %v6119, 0.0
    %v7013 = vmax.f32 %v6123, 0.0
    %v7014 = vmax.f32 %v6125, 0.0
    %v7015 = vmax.f32 %v6129, 0.0
    %v7016 = vmax.f32 %v6131, 0.0
    %v7017 = vmax.f32 %v6135, 0.0
    %v7018 = vmax.f32 %v6137, 0.0
    %v7019 = vmax.f32 %v6141, 0.0
    %v7020 = vmax.f32 %v6143, 0.0
    %v7021 = vmax.f32 %v6147, 0.0
    %v7022 = vmax.f32 %v6149, 0.0
    %v7023 = vmax.f32 %v6153, 0.0
    %v7024 = vmax.f32 %v6155, 0.0
    %v7025 = vmax.f32 %v6159, 0.0
    %v7026 = vmax.f32 %v6161, 0.0
    %v7027 = vmax.f32 %v6165, 0.0
    %v7028 = vmax.f32 %v6167, 0.0
    %v7029 = vmax.f32 %v6171, 0.0
    %v7030 = vmax.f32 %v6173, 0.0
    %v7031 = vmax.f32 %v6177, 0.0
    %v7032 = vmax.f32 %v6179, 0.0
    %v7033 = vmax.f32 %v6183, 0.0
    %v7034 = vmax.f32 %v6185, 0.0
    %v7035 = vmax.f32 %v6189, 0.0
    %v7036 = vmax.f32 %v6191, 0.0
    %v7037 = vmax.f32 %v6195, 0.0
    %v7038 = vmax.f32 %v6197, 0.0
    %v7039 = vmax.f32 %v6201, 0.0
    %v7040 = vmax.f32 %v6203, 0.0
    %v7041 = vmax.f32 %v6207, 0.0
    %v7042 = vmax.f32 %v6209, 0.0
    %v7043 = vmax.f32 %v6213, 0.0
    %v7044 = vmax.f32 %v6215, 0.0
    %v7045 = vmax.f32 %v6219, 0.0
    %v7046 = vmax.f32 %v6221, 0.0
    %v7047 = vmax.f32 %v6225, 0.0
    %v7048 = vmax.f32 %v6227, 0.0
    %v7049 = vmax.f32 %v6231, 0.0
    %v7050 = vmax.f32 %v6233, 0.0
    %v7051 = vmax.f32 %v6237, 0.0
    %v7052 = vmax.f32 %v6239, 0.0
    %v7053 = vmax.f32 %v6243, 0.0
    %v7054 = vmax.f32 %v6245, 0.0
    %v7055 = vmax.f32 %v6249, 0.0
    %v7056 = vmax.f32 %v6251, 0.0
    %v7057 = vmax.f32 %v6255, 0.0
    %v7058 = vmax.f32 %v6257, 0.0
    %v7059 = vmax.f32 %v6261, 0.0
    %v7060 = vmax.f32 %v6263, 0.0
    %v7061 = vmax.f32 %v6267, 0.0
    %v7062 = vmax.f32 %v6269, 0.0
    %v7063 = vmax.f32 %v6273, 0.0
    %v7064 = vmax.f32 %v6275, 0.0
    %v7065 = vmax.f32 %v6279, 0.0
    %v7066 = vmax.f32 %v6281, 0.0
    %v7067 = vmax.f32 %v6285, 0.0
    %v7068 = vmax.f32 %v6287, 0.0
    %v7069 = vmax.f32 %v6291, 0.0
    %v7070 = vmax.f32 %v6293, 0.0
    %v7071 = vmax.f32 %v6297, 0.0
    %v7072 = vmax.f32 %v6299, 0.0
    %v7073 = vmax.f32 %v6303, 0.0
    %v7074 = vmax.f32 %v6305, 0.0
    %v7075 = vmax.f32 %v6309, 0.0
    %v7076 = vmax.f32 %v6311, 0.0
    %v7077 = vmax.f32 %v6315, 0.0
    %v7078 = vmax.f32 %v6317, 0.0
    %v7079 = vmax.f32 %v6321, 0.0
    %v7080 = vmax.f32 %v6323, 0.0
    %v7081 = vmax.f32 %v6327, 0.0
    %v7082 = vmax.f32 %v6329, 0.0
    %v7083 = vmax.f32 %v6333, 0.0
    %v7084 = vmax.f32 %v6335, 0.0
    %v7085 = vmax.f32 %v6339, 0.0
    %v7086 = vmax.f32 %v6341, 0.0
    %v7087 = vmax.f32 %v6345, 0.0
    %v7088 = vmax.f32 %v6347, 0.0
    %v7089 = vmax.f32 %v6351, 0.0
    %v7090 = vmax.f32 %v6353, 0.0
    %v7091 = vmax.f32 %v6357, 0.0
    %v7092 = vmax.f32 %v6359, 0.0
    %v7093 = vmax.f32 %v6363, 0.0
    %v7094 = vmax.f32 %v6365, 0.0
    %v7095 = vmax.f32 %v6369, 0.0
    %v7096 = vmax.f32 %v6371, 0.0
    %v7097 = vmax.f32 %v6375, 0.0
    %v7098 = vmax.f32 %v6377, 0.0
    %v7099 = vmax.f32 %v6381, 0.0
    %v7100 = vmax.f32 %v6383, 0.0
    %v7101 = vmax.f32 %v6387, 0.0
    %v7102 = vmax.f32 %v6389, 0.0
    %v7103 = vmax.f32 %v6393, 0.0
    %v7104 = vmax.f32 %v6395, 0.0
    %v7105 = vmax.f32 %v6399, 0.0
    %v7106 = vmax.f32 %v6401, 0.0
    %v7107 = vmax.f32 %v6405, 0.0
    %v7108 = vmax.f32 %v6407, 0.0
    %v7109 = vmax.f32 %v6411, 0.0
    %v7110 = vmax.f32 %v6413, 0.0
    %v7111 = vmax.f32 %v6417, 0.0
    %v7112 = vmax.f32 %v6419, 0.0
    %v7113 = vmax.f32 %v6423, 0.0
    %v7114 = vmax.f32 %v6425, 0.0
    %v7115 = vmax.f32 %v6429, 0.0
    %v7116 = vmax.f32 %v6431, 0.0
    %v7117 = vmax.f32 %v6435, 0.0
    %v7118 = vmax.f32 %v6437, 0.0
    %v7119 = vmax.f32 %v6441, 0.0
    %v7120 = vmax.f32 %v6443, 0.0
    %v7121 = vmax.f32 %v6447, 0.0
    %v7122 = vmax.f32 %v6449, 0.0
    %v7123 = vmax.f32 %v6453, 0.0
    %v7124 = vmax.f32 %v6455, 0.0
    %v7125 = vmax.f32 %v6459, 0.0
    %v7126 = vmax.f32 %v6461, 0.0
    %v7127 = vmax.f32 %v6465, 0.0
    %v7128 = vmax.f32 %v6467, 0.0
    %v7129 = vmax.f32 %v6471, 0.0
    %v7130 = vmax.f32 %v6473, 0.0
    %v7131 = vmax.f32 %v6477, 0.0
    %v7132 = vmax.f32 %v6479, 0.0
    %v7133 = vmax.f32 %v6483, 0.0
    %v7134 = vmax.f32 %v6485, 0.0
    %v7135 = vmax.f32 %v6489, 0.0
    %v7136 = vmax.f32 %v6491, 0.0
    %v7137 = vmax.f32 %v6495, 0.0
    %v7138 = vmax.f32 %v6497, 0.0
    %v7139 = vmax.f32 %v6501, 0.0
    %v7140 = vmax.f32 %v6503, 0.0
    %v7141 = vmax.f32 %v6507, 0.0
    %v7142 = vmax.f32 %v6509, 0.0
    %v7143 = vmax.f32 %v6513, 0.0
    %v7144 = vmax.f32 %v6515, 0.0
    %v7145 = vmax.f32 %v6519, 0.0
    %v7146 = vmax.f32 %v6521, 0.0
    %v7147 = vmax.f32 %v6525, 0.0
    %v7148 = vmax.f32 %v6527, 0.0
    %v7149 = vmax.f32 %v6531, 0.0
    %v7150 = vmax.f32 %v6533, 0.0
    %v7151 = vmax.f32 %v6537, 0.0
    %v7152 = vmax.f32 %v6539, 0.0
    %v7153 = vmax.f32 %v6543, 0.0
    %v7154 = vmax.f32 %v6545, 0.0
    %v7155 = vmax.f32 %v6549, 0.0
    %v7156 = vmax.f32 %v6551, 0.0
    %v7157 = vmax.f32 %v6555, 0.0
    %v7158 = vmax.f32 %v6557, 0.0
    %v7159 = vmax.f32 %v6561, 0.0
    %v7160 = vmax.f32 %v6563, 0.0
    %v7161 = vmax.f32 %v6567, 0.0
    %v7162 = vmax.f32 %v6569, 0.0
    %v7163 = vmax.f32 %v6573, 0.0
    %v7164 = vmax.f32 %v6575, 0.0
    %v7165 = vmax.f32 %v6579, 0.0
    %v7166 = vmax.f32 %v6581, 0.0
    %v7167 = vmax.f32 %v6585, 0.0
    %v7168 = vmax.f32 %v6587, 0.0
    %v7169 = vmax.f32 %v6591, 0.0
    %v7170 = vmax.f32 %v6593, 0.0
    %v7171 = vmax.f32 %v6597, 0.0
    %v7172 = vmax.f32 %v6599, 0.0
    %v7173 = vmax.f32 %v6603, 0.0
    %v7174 = vmax.f32 %v6605, 0.0
    %v7175 = vmax.f32 %v6609, 0.0
    %v7176 = vmax.f32 %v6611, 0.0
    %v7177 = vmax.f32 %v6615, 0.0
    %v7178 = vmax.f32 %v6617, 0.0
    %v7179 = vmax.f32 %v6621, 0.0
    %v7180 = vmax.f32 %v6623, 0.0
    %v7181 = vmax.f32 %v6627, 0.0
    %v7182 = vmax.f32 %v6629, 0.0
    %v7183 = vmax.f32 %v6633, 0.0
    %v7184 = vmax.f32 %v6635, 0.0
    %v7185 = vmax.f32 %v6639, 0.0
    %v7186 = vmax.f32 %v6641, 0.0
    %v7187 = vmax.f32 %v6645, 0.0
    %v7188 = vmax.f32 %v6647, 0.0
    %v7189 = vmax.f32 %v6651, 0.0
    %v7190 = vmax.f32 %v6653, 0.0
    %v7191 = vmax.f32 %v6657, 0.0
    %v7192 = vmax.f32 %v6659, 0.0
    %v7193 = vmax.f32 %v6663, 0.0
    %v7194 = vmax.f32 %v6665, 0.0
    %v7195 = vmax.f32 %v6669, 0.0
    %v7196 = vmax.f32 %v6671, 0.0
    %v7197 = vmax.f32 %v6675, 0.0
    %v7198 = vmax.f32 %v6677, 0.0
    %v7199 = vmax.f32 %v6681, 0.0
    %v7200 = vmax.f32 %v6683, 0.0
    %v7201 = vmax.f32 %v6687, 0.0
    %v7202 = vmax.f32 %v6689, 0.0
    %v7203 = vmax.f32 %v6691, %v6723
    %v7204 = vmax.f32 %v6692, %v6724
    %v7205 = vmax.f32 %v6693, %v6725
    %v7206 = vmax.f32 %v6694, %v6726
    %v7207 = vmax.f32 %v6695, %v6727
    %v7208 = vmax.f32 %v6696, %v6728
    %v7209 = vmax.f32 %v6697, %v6729
    %v7210 = vmax.f32 %v6698, %v6730
    %v7211 = vmax.f32 %v6699, %v6731
    %v7212 = vmax.f32 %v6700, %v6732
    %v7213 = vmax.f32 %v6701, %v6733
    %v7214 = vmax.f32 %v6702, %v6734
    %v7215 = vmax.f32 %v6703, %v6735
    %v7216 = vmax.f32 %v6704, %v6736
    %v7217 = vmax.f32 %v6705, %v6737
    %v7218 = vmax.f32 %v6706, %v6738
    %v7219 = vmax.f32 %v6707, %v6739
    %v7220 = vmax.f32 %v6708, %v6740
    %v7221 = vmax.f32 %v6709, %v6741
    %v7222 = vmax.f32 %v6710, %v6742
    %v7223 = vmax.f32 %v6711, %v6743
    %v7224 = vmax.f32 %v6712, %v6744
    %v7225 = vmax.f32 %v6713, %v6745
    %v7226 = vmax.f32 %v6714, %v6746
    %v7227 = vmax.f32 %v6715, %v6747
    %v7228 = vmax.f32 %v6716, %v6748
    %v7229 = vmax.f32 %v6717, %v6749
    %v7230 = vmax.f32 %v6718, %v6750
    %v7231 = vmax.f32 %v6719, %v6751
    %v7232 = vmax.f32 %v6720, %v6752
    %v7233 = vmax.f32 %v6721, %v6753
    %v7234 = vmax.f32 %v6722, %v6754
    %v7235 = vmax.f32 %v7203, %v6755
    %v7236 = vmax.f32 %v7204, %v6756
    %v7237 = vmax.f32 %v7205, %v6757
    %v7238 = vmax.f32 %v7206, %v6758
    %v7239 = vmax.f32 %v7207, %v6759
    %v7240 = vmax.f32 %v7208, %v6760
    %v7241 = vmax.f32 %v7209, %v6761
    %v7242 = vmax.f32 %v7210, %v6762
    %v7243 = vmax.f32 %v7211, %v6763
    %v7244 = vmax.f32 %v7212, %v6764
    %v7245 = vmax.f32 %v7213, %v6765
    %v7246 = vmax.f32 %v7214, %v6766
    %v7247 = vmax.f32 %v7215, %v6767
    %v7248 = vmax.f32 %v7216, %v6768
    %v7249 = vmax.f32 %v7217, %v6769
    %v7250 = vmax.f32 %v7218, %v6770
    %v7251 = vmax.f32 %v7219, %v6771
    %v7252 = vmax.f32 %v7220, %v6772
    %v7253 = vmax.f32 %v7221, %v6773
    %v7254 = vmax.f32 %v7222, %v6774
    %v7255 = vmax.f32 %v7223, %v6775
    %v7256 = vmax.f32 %v7224, %v6776
    %v7257 = vmax.f32 %v7225, %v6777
    %v7258 = vmax.f32 %v7226, %v6778
    %v7259 = vmax.f32 %v7227, %v6779
    %v7260 = vmax.f32 %v7228, %v6780
    %v7261 = vmax.f32 %v7229, %v6781
    %v7262 = vmax.f32 %v7230, %v6782
    %v7263 = vmax.f32 %v7231, %v6783
    %v7264 = vmax.f32 %v7232, %v6784
    %v7265 = vmax.f32 %v7233, %v6785
    %v7266 = vmax.f32 %v7234, %v6786
    %v7267 = vmax.f32 %v7235, %v6787
    %v7268 = vmax.f32 %v7236, %v6788
    %v7269 = vmax.f32 %v7237, %v6789
    %v7270 = vmax.f32 %v7238, %v6790
    %v7271 = vmax.f32 %v7239, %v6791
    %v7272 = vmax.f32 %v7240, %v6792
    %v7273 = vmax.f32 %v7241, %v6793
    %v7274 = vmax.f32 %v7242, %v6794
    %v7275 = vmax.f32 %v7243, %v6795
    %v7276 = vmax.f32 %v7244, %v6796
    %v7277 = vmax.f32 %v7245, %v6797
    %v7278 = vmax.f32 %v7246, %v6798
    %v7279 = vmax.f32 %v7247, %v6799
    %v7280 = vmax.f32 %v7248, %v6800
    %v7281 = vmax.f32 %v7249, %v6801
    %v7282 = vmax.f32 %v7250, %v6802
    %v7283 = vmax.f32 %v7251, %v6803
    %v7284 = vmax.f32 %v7252, %v6804
    %v7285 = vmax.f32 %v7253, %v6805
    %v7286 = vmax.f32 %v7254, %v6806
    %v7287 = vmax.f32 %v7255, %v6807
    %v7288 = vmax.f32 %v7256, %v6808
    %v7289 = vmax.f32 %v7257, %v6809
    %v7290 = vmax.f32 %v7258, %v6810
    %v7291 = vmax.f32 %v7259, %v6811
    %v7292 = vmax.f32 %v7260, %v6812
    %v7293 = vmax.f32 %v7261, %v6813
    %v7294 = vmax.f32 %v7262, %v6814
    %v7295 = vmax.f32 %v7263, %v6815
    %v7296 = vmax.f32 %v7264, %v6816
    %v7297 = vmax.f32 %v7265, %v6817
    %v7298 = vmax.f32 %v7266, %v6818
    %v7299 = vmax.f32 %v7267, %v6819
    %v7300 = vmax.f32 %v7268, %v6820
    %v7301 = vmax.f32 %v7269, %v6821
    %v7302 = vmax.f32 %v7270, %v6822
    %v7303 = vmax.f32 %v7271, %v6823
    %v7304 = vmax.f32 %v7272, %v6824
    %v7305 = vmax.f32 %v7273, %v6825
    %v7306 = vmax.f32 %v7274, %v6826
    %v7307 = vmax.f32 %v7275, %v6827
    %v7308 = vmax.f32 %v7276, %v6828
    %v7309 = vmax.f32 %v7277, %v6829
    %v7310 = vmax.f32 %v7278, %v6830
    %v7311 = vmax.f32 %v7279, %v6831
    %v7312 = vmax.f32 %v7280, %v6832
    %v7313 = vmax.f32 %v7281, %v6833
    %v7314 = vmax.f32 %v7282, %v6834
    %v7315 = vmax.f32 %v7283, %v6835
    %v7316 = vmax.f32 %v7284, %v6836
    %v7317 = vmax.f32 %v7285, %v6837
    %v7318 = vmax.f32 %v7286, %v6838
    %v7319 = vmax.f32 %v7287, %v6839
    %v7320 = vmax.f32 %v7288, %v6840
    %v7321 = vmax.f32 %v7289, %v6841
    %v7322 = vmax.f32 %v7290, %v6842
    %v7323 = vmax.f32 %v7291, %v6843
    %v7324 = vmax.f32 %v7292, %v6844
    %v7325 = vmax.f32 %v7293, %v6845
    %v7326 = vmax.f32 %v7294, %v6846
    %v7327 = vmax.f32 %v7295, %v6847
    %v7328 = vmax.f32 %v7296, %v6848
    %v7329 = vmax.f32 %v7297, %v6849
    %v7330 = vmax.f32 %v7298, %v6850
    %v7331 = vmax.f32 %v7299, %v6851
    %v7332 = vmax.f32 %v7300, %v6852
    %v7333 = vmax.f32 %v7301, %v6853
    %v7334 = vmax.f32 %v7302, %v6854
    %v7335 = vmax.f32 %v7303, %v6855
    %v7336 = vmax.f32 %v7304, %v6856
    %v7337 = vmax.f32 %v7305, %v6857
    %v7338 = vmax.f32 %v7306, %v6858
    %v7339 = vmax.f32 %v7307, %v6859
    %v7340 = vmax.f32 %v7308, %v6860
    %v7341 = vmax.f32 %v7309, %v6861
    %v7342 = vmax.f32 %v7310, %v6862
    %v7343 = vmax.f32 %v7311, %v6863
    %v7344 = vmax.f32 %v7312, %v6864
    %v7345 = vmax.f32 %v7313, %v6865
    %v7346 = vmax.f32 %v7314, %v6866
    %v7347 = vmax.f32 %v7315, %v6867
    %v7348 = vmax.f32 %v7316, %v6868
    %v7349 = vmax.f32 %v7317, %v6869
    %v7350 = vmax.f32 %v7318, %v6870
    %v7351 = vmax.f32 %v7319, %v6871
    %v7352 = vmax.f32 %v7320, %v6872
    %v7353 = vmax.f32 %v7321, %v6873
    %v7354 = vmax.f32 %v7322, %v6874
    %v7355 = vmax.f32 %v7323, %v6875
    %v7356 = vmax.f32 %v7324, %v6876
    %v7357 = vmax.f32 %v7325, %v6877
    %v7358 = vmax.f32 %v7326, %v6878
    %v7359 = vmax.f32 %v7327, %v6879
    %v7360 = vmax.f32 %v7328, %v6880
    %v7361 = vmax.f32 %v7329, %v6881
    %v7362 = vmax.f32 %v7330, %v6882
    %v7363 = vmax.f32 %v7331, %v6883
    %v7364 = vmax.f32 %v7332, %v6884
    %v7365 = vmax.f32 %v7333, %v6885
    %v7366 = vmax.f32 %v7334, %v6886
    %v7367 = vmax.f32 %v7335, %v6887
    %v7368 = vmax.f32 %v7336, %v6888
    %v7369 = vmax.f32 %v7337, %v6889
    %v7370 = vmax.f32 %v7338, %v6890
    %v7371 = vmax.f32 %v7339, %v6891
    %v7372 = vmax.f32 %v7340, %v6892
    %v7373 = vmax.f32 %v7341, %v6893
    %v7374 = vmax.f32 %v7342, %v6894
    %v7375 = vmax.f32 %v7343, %v6895
    %v7376 = vmax.f32 %v7344, %v6896
    %v7377 = vmax.f32 %v7345, %v6897
    %v7378 = vmax.f32 %v7346, %v6898
    %v7379 = vmax.f32 %v7347, %v6899
    %v7380 = vmax.f32 %v7348, %v6900
    %v7381 = vmax.f32 %v7349, %v6901
    %v7382 = vmax.f32 %v7350, %v6902
    %v7383 = vmax.f32 %v7351, %v6903
    %v7384 = vmax.f32 %v7352, %v6904
    %v7385 = vmax.f32 %v7353, %v6905
    %v7386 = vmax.f32 %v7354, %v6906
    %v7387 = vmax.f32 %v7355, %v6907
    %v7388 = vmax.f32 %v7356, %v6908
    %v7389 = vmax.f32 %v7357, %v6909
    %v7390 = vmax.f32 %v7358, %v6910
    %v7391 = vmax.f32 %v7359, %v6911
    %v7392 = vmax.f32 %v7360, %v6912
    %v7393 = vmax.f32 %v7361, %v6913
    %v7394 = vmax.f32 %v7362, %v6914
    %v7395 = vmax.f32 %v7363, %v6915
    %v7396 = vmax.f32 %v7364, %v6916
    %v7397 = vmax.f32 %v7365, %v6917
    %v7398 = vmax.f32 %v7366, %v6918
    %v7399 = vmax.f32 %v7367, %v6919
    %v7400 = vmax.f32 %v7368, %v6920
    %v7401 = vmax.f32 %v7369, %v6921
    %v7402 = vmax.f32 %v7370, %v6922
    %v7403 = vmax.f32 %v7371, %v6923
    %v7404 = vmax.f32 %v7372, %v6924
    %v7405 = vmax.f32 %v7373, %v6925
    %v7406 = vmax.f32 %v7374, %v6926
    %v7407 = vmax.f32 %v7375, %v6927
    %v7408 = vmax.f32 %v7376, %v6928
    %v7409 = vmax.f32 %v7377, %v6929
    %v7410 = vmax.f32 %v7378, %v6930
    %v7411 = vmax.f32 %v7379, %v6931
    %v7412 = vmax.f32 %v7380, %v6932
    %v7413 = vmax.f32 %v7381, %v6933
    %v7414 = vmax.f32 %v7382, %v6934
    %v7415 = vmax.f32 %v7383, %v6935
    %v7416 = vmax.f32 %v7384, %v6936
    %v7417 = vmax.f32 %v7385, %v6937
    %v7418 = vmax.f32 %v7386, %v6938
    %v7419 = vmax.f32 %v7387, %v6939
    %v7420 = vmax.f32 %v7388, %v6940
    %v7421 = vmax.f32 %v7389, %v6941
    %v7422 = vmax.f32 %v7390, %v6942
    %v7423 = vmax.f32 %v7391, %v6943
    %v7424 = vmax.f32 %v7392, %v6944
    %v7425 = vmax.f32 %v7393, %v6945
    %v7426 = vmax.f32 %v7394, %v6946
    %v7427 = vmax.f32 %v7395, %v6947
    %v7428 = vmax.f32 %v7396, %v6948
    %v7429 = vmax.f32 %v7397, %v6949
    %v7430 = vmax.f32 %v7398, %v6950
    %v7431 = vmax.f32 %v7399, %v6951
    %v7432 = vmax.f32 %v7400, %v6952
    %v7433 = vmax.f32 %v7401, %v6953
    %v7434 = vmax.f32 %v7402, %v6954
    %v7435 = vmax.f32 %v7403, %v6955
    %v7436 = vmax.f32 %v7404, %v6956
    %v7437 = vmax.f32 %v7405, %v6957
    %v7438 = vmax.f32 %v7406, %v6958
    %v7439 = vmax.f32 %v7407, %v6959
    %v7440 = vmax.f32 %v7408, %v6960
    %v7441 = vmax.f32 %v7409, %v6961
    %v7442 = vmax.f32 %v7410, %v6962
    %v7443 = vmax.f32 %v7411, %v6963
    %v7444 = vmax.f32 %v7412, %v6964
    %v7445 = vmax.f32 %v7413, %v6965
    %v7446 = vmax.f32 %v7414, %v6966
    %v7447 = vmax.f32 %v7415, %v6967
    %v7448 = vmax.f32 %v7416, %v6968
    %v7449 = vmax.f32 %v7417, %v6969
    %v7450 = vmax.f32 %v7418, %v6970
    %v7451 = vmax.f32 %v7419, %v6971
    %v7452 = vmax.f32 %v7420, %v6972
    %v7453 = vmax.f32 %v7421, %v6973
    %v7454 = vmax.f32 %v7422, %v6974
    %v7455 = vmax.f32 %v7423, %v6975
    %v7456 = vmax.f32 %v7424, %v6976
    %v7457 = vmax.f32 %v7425, %v6977
    %v7458 = vmax.f32 %v7426, %v6978
    %v7459 = vmax.f32 %v7427, %v6979
    %v7460 = vmax.f32 %v7428, %v6980
    %v7461 = vmax.f32 %v7429, %v6981
    %v7462 = vmax.f32 %v7430, %v6982
    %v7463 = vmax.f32 %v7431, %v6983
    %v7464 = vmax.f32 %v7432, %v6984
    %v7465 = vmax.f32 %v7433, %v6985
    %v7466 = vmax.f32 %v7434, %v6986
    %v7467 = vmax.f32 %v7435, %v6987
    %v7468 = vmax.f32 %v7436, %v6988
    %v7469 = vmax.f32 %v7437, %v6989
    %v7470 = vmax.f32 %v7438, %v6990
    %v7471 = vmax.f32 %v7439, %v6991
    %v7472 = vmax.f32 %v7440, %v6992
    %v7473 = vmax.f32 %v7441, %v6993
    %v7474 = vmax.f32 %v7442, %v6994
    %v7475 = vmax.f32 %v7443, %v6995
    %v7476 = vmax.f32 %v7444, %v6996
    %v7477 = vmax.f32 %v7445, %v6997
    %v7478 = vmax.f32 %v7446, %v6998
    %v7479 = vmax.f32 %v7447, %v6999
    %v7480 = vmax.f32 %v7448, %v7000
    %v7481 = vmax.f32 %v7449, %v7001
    %v7482 = vmax.f32 %v7450, %v7002
    %v7483 = vmax.f32 %v7451, %v7003
    %v7484 = vmax.f32 %v7452, %v7004
    %v7485 = vmax.f32 %v7453, %v7005
    %v7486 = vmax.f32 %v7454, %v7006
    %v7487 = vmax.f32 %v7455, %v7007
    %v7488 = vmax.f32 %v7456, %v7008
    %v7489 = vmax.f32 %v7457, %v7009
    %v7490 = vmax.f32 %v7458, %v7010
    %v7491 = vmax.f32 %v7459, %v7011
    %v7492 = vmax.f32 %v7460, %v7012
    %v7493 = vmax.f32 %v7461, %v7013
    %v7494 = vmax.f32 %v7462, %v7014
    %v7495 = vmax.f32 %v7463, %v7015
    %v7496 = vmax.f32 %v7464, %v7016
    %v7497 = vmax.f32 %v7465, %v7017
    %v7498 = vmax.f32 %v7466, %v7018
    %v7499 = vmax.f32 %v7467, %v7019
    %v7500 = vmax.f32 %v7468, %v7020
    %v7501 = vmax.f32 %v7469, %v7021
    %v7502 = vmax.f32 %v7470, %v7022
    %v7503 = vmax.f32 %v7471, %v7023
    %v7504 = vmax.f32 %v7472, %v7024
    %v7505 = vmax.f32 %v7473, %v7025
    %v7506 = vmax.f32 %v7474, %v7026
    %v7507 = vmax.f32 %v7475, %v7027
    %v7508 = vmax.f32 %v7476, %v7028
    %v7509 = vmax.f32 %v7477, %v7029
    %v7510 = vmax.f32 %v7478, %v7030
    %v7511 = vmax.f32 %v7479, %v7031
    %v7512 = vmax.f32 %v7480, %v7032
    %v7513 = vmax.f32 %v7481, %v7033
    %v7514 = vmax.f32 %v7482, %v7034
    %v7515 = vmax.f32 %v7483, %v7035
    %v7516 = vmax.f32 %v7484, %v7036
    %v7517 = vmax.f32 %v7485, %v7037
    %v7518 = vmax.f32 %v7486, %v7038
    %v7519 = vmax.f32 %v7487, %v7039
    %v7520 = vmax.f32 %v7488, %v7040
    %v7521 = vmax.f32 %v7489, %v7041
    %v7522 = vmax.f32 %v7490, %v7042
    %v7523 = vmax.f32 %v7491, %v7043
    %v7524 = vmax.f32 %v7492, %v7044
    %v7525 = vmax.f32 %v7493, %v7045
    %v7526 = vmax.f32 %v7494, %v7046
    %v7527 = vmax.f32 %v7495, %v7047
    %v7528 = vmax.f32 %v7496, %v7048
    %v7529 = vmax.f32 %v7497, %v7049
    %v7530 = vmax.f32 %v7498, %v7050
    %v7531 = vmax.f32 %v7499, %v7051
    %v7532 = vmax.f32 %v7500, %v7052
    %v7533 = vmax.f32 %v7501, %v7053
    %v7534 = vmax.f32 %v7502, %v7054
    %v7535 = vmax.f32 %v7503, %v7055
    %v7536 = vmax.f32 %v7504, %v7056
    %v7537 = vmax.f32 %v7505, %v7057
    %v7538 = vmax.f32 %v7506, %v7058
    %v7539 = vmax.f32 %v7507, %v7059
    %v7540 = vmax.f32 %v7508, %v7060
    %v7541 = vmax.f32 %v7509, %v7061
    %v7542 = vmax.f32 %v7510, %v7062
    %v7543 = vmax.f32 %v7511, %v7063
    %v7544 = vmax.f32 %v7512, %v7064
    %v7545 = vmax.f32 %v7513, %v7065
    %v7546 = vmax.f32 %v7514, %v7066
    %v7547 = vmax.f32 %v7515, %v7067
    %v7548 = vmax.f32 %v7516, %v7068
    %v7549 = vmax.f32 %v7517, %v7069
    %v7550 = vmax.f32 %v7518, %v7070
    %v7551 = vmax.f32 %v7519, %v7071
    %v7552 = vmax.f32 %v7520, %v7072
    %v7553 = vmax.f32 %v7521, %v7073
    %v7554 = vmax.f32 %v7522, %v7074
    %v7555 = vmax.f32 %v7523, %v7075
    %v7556 = vmax.f32 %v7524, %v7076
    %v7557 = vmax.f32 %v7525, %v7077
    %v7558 = vmax.f32 %v7526, %v7078
    %v7559 = vmax.f32 %v7527, %v7079
    %v7560 = vmax.f32 %v7528, %v7080
    %v7561 = vmax.f32 %v7529, %v7081
    %v7562 = vmax.f32 %v7530, %v7082
    %v7563 = vmax.f32 %v7531, %v7083
    %v7564 = vmax.f32 %v7532, %v7084
    %v7565 = vmax.f32 %v7533, %v7085
    %v7566 = vmax.f32 %v7534, %v7086
    %v7567 = vmax.f32 %v7535, %v7087
    %v7568 = vmax.f32 %v7536, %v7088
    %v7569 = vmax.f32 %v7537, %v7089
    %v7570 = vmax.f32 %v7538, %v7090
    %v7571 = vmax.f32 %v7539, %v7091
    %v7572 = vmax.f32 %v7540, %v7092
    %v7573 = vmax.f32 %v7541, %v7093
    %v7574 = vmax.f32 %v7542, %v7094
    %v7575 = vmax.f32 %v7543, %v7095
    %v7576 = vmax.f32 %v7544, %v7096
    %v7577 = vmax.f32 %v7545, %v7097
    %v7578 = vmax.f32 %v7546, %v7098
    %v7579 = vmax.f32 %v7547, %v7099
    %v7580 = vmax.f32 %v7548, %v7100
    %v7581 = vmax.f32 %v7549, %v7101
    %v7582 = vmax.f32 %v7550, %v7102
    %v7583 = vmax.f32 %v7551, %v7103
    %v7584 = vmax.f32 %v7552, %v7104
    %v7585 = vmax.f32 %v7553, %v7105
    %v7586 = vmax.f32 %v7554, %v7106
    %v7587 = vmax.f32 %v7555, %v7107
    %v7588 = vmax.f32 %v7556, %v7108
    %v7589 = vmax.f32 %v7557, %v7109
    %v7590 = vmax.f32 %v7558, %v7110
    %v7591 = vmax.f32 %v7559, %v7111
    %v7592 = vmax.f32 %v7560, %v7112
    %v7593 = vmax.f32 %v7561, %v7113
    %v7594 = vmax.f32 %v7562, %v7114
    %v7595 = vmax.f32 %v7563, %v7115
    %v7596 = vmax.f32 %v7564, %v7116
    %v7597 = vmax.f32 %v7565, %v7117
    %v7598 = vmax.f32 %v7566, %v7118
    %v7599 = vmax.f32 %v7567, %v7119
    %v7600 = vmax.f32 %v7568, %v7120
    %v7601 = vmax.f32 %v7569, %v7121
    %v7602 = vmax.f32 %v7570, %v7122
    %v7603 = vmax.f32 %v7571, %v7123
    %v7604 = vmax.f32 %v7572, %v7124
    %v7605 = vmax.f32 %v7573, %v7125
    %v7606 = vmax.f32 %v7574, %v7126
    %v7607 = vmax.f32 %v7575, %v7127
    %v7608 = vmax.f32 %v7576, %v7128
    %v7609 = vmax.f32 %v7577, %v7129
    %v7610 = vmax.f32 %v7578, %v7130
    %v7611 = vmax.f32 %v7579, %v7131
    %v7612 = vmax.f32 %v7580, %v7132
    %v7613 = vmax.f32 %v7581, %v7133
    %v7614 = vmax.f32 %v7582, %v7134
    %v7615 = vmax.f32 %v7583, %v7135
    %v7616 = vmax.f32 %v7584, %v7136
    %v7617 = vmax.f32 %v7585, %v7137
    %v7618 = vmax.f32 %v7586, %v7138
    %v7619 = vmax.f32 %v7587, %v7139
    %v7620 = vmax.f32 %v7588, %v7140
    %v7621 = vmax.f32 %v7589, %v7141
    %v7622 = vmax.f32 %v7590, %v7142
    %v7623 = vmax.f32 %v7591, %v7143
    %v7624 = vmax.f32 %v7592, %v7144
    %v7625 = vmax.f32 %v7593, %v7145
    %v7626 = vmax.f32 %v7594, %v7146
    %v7627 = vmax.f32 %v7595, %v7147
    %v7628 = vmax.f32 %v7596, %v7148
    %v7629 = vmax.f32 %v7597, %v7149
    %v7630 = vmax.f32 %v7598, %v7150
    %v7631 = vmax.f32 %v7599, %v7151
    %v7632 = vmax.f32 %v7600, %v7152
    %v7633 = vmax.f32 %v7601, %v7153
    %v7634 = vmax.f32 %v7602, %v7154
    %v7635 = vmax.f32 %v7603, %v7155
    %v7636 = vmax.f32 %v7604, %v7156
    %v7637 = vmax.f32 %v7605, %v7157
    %v7638 = vmax.f32 %v7606, %v7158
    %v7639 = vmax.f32 %v7607, %v7159
    %v7640 = vmax.f32 %v7608, %v7160
    %v7641 = vmax.f32 %v7609, %v7161
    %v7642 = vmax.f32 %v7610, %v7162
    %v7643 = vmax.f32 %v7611, %v7163
    %v7644 = vmax.f32 %v7612, %v7164
    %v7645 = vmax.f32 %v7613, %v7165
    %v7646 = vmax.f32 %v7614, %v7166
    %v7647 = vmax.f32 %v7615, %v7167
    %v7648 = vmax.f32 %v7616, %v7168
    %v7649 = vmax.f32 %v7617, %v7169
    %v7650 = vmax.f32 %v7618, %v7170
    %v7651 = vmax.f32 %v7619, %v7171
    %v7652 = vmax.f32 %v7620, %v7172
    %v7653 = vmax.f32 %v7621, %v7173
    %v7654 = vmax.f32 %v7622, %v7174
    %v7655 = vmax.f32 %v7623, %v7175
    %v7656 = vmax.f32 %v7624, %v7176
    %v7657 = vmax.f32 %v7625, %v7177
    %v7658 = vmax.f32 %v7626, %v7178
    %v7659 = vmax.f32 %v7627, %v7179
    %v7660 = vmax.f32 %v7628, %v7180
    %v7661 = vmax.f32 %v7629, %v7181
    %v7662 = vmax.f32 %v7630, %v7182
    %v7663 = vmax.f32 %v7631, %v7183
    %v7664 = vmax.f32 %v7632, %v7184
    %v7665 = vmax.f32 %v7633, %v7185
    %v7666 = vmax.f32 %v7634, %v7186
    %v7667 = vmax.f32 %v7635, %v7187
    %v7668 = vmax.f32 %v7636, %v7188
    %v7669 = vmax.f32 %v7637, %v7189
    %v7670 = vmax.f32 %v7638, %v7190
    %v7671 = vmax.f32 %v7639, %v7191
    %v7672 = vmax.f32 %v7640, %v7192
    %v7673 = vmax.f32 %v7641, %v7193
    %v7674 = vmax.f32 %v7642, %v7194
    %v7675 = vmax.f32 %v7643, %v7195
    %v7676 = vmax.f32 %v7644, %v7196
    %v7677 = vmax.f32 %v7645, %v7197
    %v7678 = vmax.f32 %v7646, %v7198
    %v7679 = vmax.f32 %v7647, %v7199
    %v7680 = vmax.f32 %v7648, %v7200
    %v7681 = vmax.f32 %v7649, %v7201
    %v7682 = vmax.f32 %v7650, %v7202
    %7683 = vst [vmem:[#allocation2] sm:$0xff] %v7651
    %7684 = vst [vmem:[#allocation2 + $0x8] sm:$0xff] %v7652
    %7685 = vst [vmem:[#allocation2 + $0x10] sm:$0xff] %v7653
    %7686 = vst [vmem:[#allocation2 + $0x18] sm:$0xff] %v7654
    %7687 = vst [vmem:[#allocation2 + $0x20] sm:$0xff] %v7655
    %7688 = vst [vmem:[#allocation2 + $0x28] sm:$0xff] %v7656
    %7689 = vst [vmem:[#allocation2 + $0x30] sm:$0xff] %v7657
    %7690 = vst [vmem:[#allocation2 + $0x38] sm:$0xff] %v7658
    %7691 = vst [vmem:[#allocation2 + $0x40] sm:$0xff] %v7659
    %7692 = vst [vmem:[#allocation2 + $0x48] sm:$0xff] %v7660
    %7693 = vst [vmem:[#allocation2 + $0x50] sm:$0xff] %v7661
    %7694 = vst [vmem:[#allocation2 + $0x58] sm:$0xff] %v7662
    %7695 = vst [vmem:[#allocation2 + $0x60] sm:$0xff] %v7663
    %7696 = vst [vmem:[#allocation2 + $0x68] sm:$0xff] %v7664
    %7697 = vst [vmem:[#allocation2 + $0x70] sm:$0xff] %v7665
    %7698 = vst [vmem:[#allocation2 + $0x78] sm:$0xff] %v7666
    %7699 = vst [vmem:[#allocation2 + $0x80] sm:$0xff] %v7667
    %7700 = vst [vmem:[#allocation2 + $0x88] sm:$0xff] %v7668
    %7701 = vst [vmem:[#allocation2 + $0x90] sm:$0xff] %v7669
    %7702 = vst [vmem:[#allocation2 + $0x98] sm:$0xff] %v7670
    %7703 = vst [vmem:[#allocation2 + $0xa0] sm:$0xff] %v7671
    %7704 = vst [vmem:[#allocation2 + $0xa8] sm:$0xff] %v7672
    %7705 = vst [vmem:[#allocation2 + $0xb0] sm:$0xff] %v7673
    %7706 = vst [vmem:[#allocation2 + $0xb8] sm:$0xff] %v7674
    %7707 = vst [vmem:[#allocation2 + $0xc0] sm:$0xff] %v7675
    %7708 = vst [vmem:[#allocation2 + $0xc8] sm:$0xff] %v7676
    %7709 = vst [vmem:[#allocation2 + $0xd0] sm:$0xff] %v7677
    %7710 = vst [vmem:[#allocation2 + $0xd8] sm:$0xff] %v7678
    %7711 = vst [vmem:[#allocation2 + $0xe0] sm:$0xff] %v7679
    %7712 = vst [vmem:[#allocation2 + $0xe8] sm:$0xff] %v7680
    %7713 = vst [vmem:[#allocation2 + $0xf0] sm:$0xff] %v7681
    %7714 = vst [vmem:[#allocation2 + $0xf8] sm:$0xff] %v7682
    // Predicated region
    $region30: #{tpu_custom_call.1} parent=1 // pred_check
      _
    $region31: #{tpu_custom_call.1} parent=1 // pred_check_branch
      %7716 = sbr.rel (0) target = $region33
    $region32: #{tpu_custom_call.1} parent=1 // pred_region
      %s7718 = ssub.s32 4096, 4096
      %7719 = vsyncadd [#allocation3], %s7718
      %s7720 = sshll.u32 [#allocation2], 4
      %s7721 = int_to_ptr.vmem [resolvable:$true] %s7720
      %7726 = dma.vmem_to_hbm [thread:$0]  %s7721, 4096, %s7, [#allocation3], 256, 256, 16
    $region33: #{tpu_custom_call.1} parent=1 // pred_fallthru
      _
    // Predicated region
    $region34: #{tpu_custom_call.1} parent=1 // pred_check
      _
    $region35: #{tpu_custom_call.1} parent=1 // pred_check_branch
      %7728 = sbr.rel (0) target = $region37
    $region36: #{tpu_custom_call.1} parent=1 // pred_region
      %7729 = dma.done [#allocation3], 4096
    $region37: #{tpu_custom_call.1} parent=1 // pred_fallthru
      _
    %7730 = vsyncpa [#allocation3], 1

</llo_original>
